<compile_context>
chip_gen: v5e
topology: v5e:2x2
jax: 0.10.0
libtpu: 0.0.40
codegen_flags: <defaults>
</compile_context>

<pallas_src>
import functools

import jax
import jax.numpy as jnp
from jax import lax
from jax.experimental import pallas as pl
from jax.experimental.pallas import tpu as pltpu

BN_EPS = 1e-5  # PyTorch BatchNorm1d default


def _round_up(x, m):
    return -(-x // m) * m


# ----------------------------- deterministic parameter init (PyTorch-shaped) -----------------------------

def init_params(key, c0, y_dim, F, bneck, kss, num_layers):
    C = 4 * F
    keys = list(jax.random.split(key, 1024))
    idx = [0]

    def nrm(shape, scale=0.1):
        k = keys[idx[0]]
        idx[0] += 1
        return scale * jax.random.normal(k, shape, dtype=jnp.float32)

    layers = []
    for d in range(num_layers):
        c_in = c0 if d == 0 else C
        # PyTorch: InceptionBlock passes bottleneck=0 for the first layer -> bottleneck is noop.
        has_bneck = (d > 0) and (bneck > 0) and (c_in > 1)
        mts = bneck if has_bneck else c_in
        layers.append(dict(
            bw=nrm((c_in, mts)) if has_bneck else None,
            bb=nrm((1, mts)) if has_bneck else None,
            convs=[(nrm((k, mts, F)), nrm((1, F))) for k in kss],
            mw=nrm((c_in, F)), mb=nrm((1, F)),
            gamma=1.0 + nrm((1, C)), beta=nrm((1, C)),
            rm=nrm((1, C)), rv=1.0 + jnp.abs(nrm((1, C))),
        ))

    shortcuts = {}
    res_count = 0
    for d in range(num_layers):
        if d % 3 == 2:
            c_res = c0 if res_count == 0 else C
            shortcuts[d] = dict(w=nrm((c_res, C)), b=nrm((1, C)),
                                gamma=1.0 + nrm((1, C)), beta=nrm((1, C)),
                                rm=nrm((1, C)), rv=1.0 + jnp.abs(nrm((1, C))))
            res_count += 1

    return dict(layers=layers, shortcuts=shortcuts,
                mean_w=nrm((C, y_dim)), mean_b=nrm((1, y_dim)),
                std_w=nrm((C, y_dim)), std_b=nrm((1, y_dim)))


# ----------------------------- fold BatchNorm + pack weights for the fused kernel -----------------------------

def pack_params(params, *, C, F, kss, y_dim, residual=True):
    """Fold eval-mode BatchNorm into conv weights/biases and pack everything into a few
    stacked kernel-friendly arrays (bf16 matmul weights, f32 biases)."""
    assert all(k % 2 == 1 for k in kss), "kernel sizes must be odd for 'same' padding"
    layers = params["layers"]
    kmax = max(kss)
    pmax = kmax // 2

    mts_list = [lp["convs"][0][0].shape[1] for lp in layers]
    mts_pad = max(mts_list)
    Kw = kmax * mts_pad                                  # im2col width

    bw_l, bb_l, wl_l, bl_l = [], [], [], []
    for lp, mts in zip(layers, mts_list):
        s = lp["gamma"][0] * lax.rsqrt(lp["rv"][0] + BN_EPS)            # (C,)
        t = lp["beta"][0] - lp["rm"][0] * s

        blocks, b3 = [], []
        for (w, b), k in zip(lp["convs"], kss):                          # w: (k, mts, F)
            off = pmax - k // 2                                          # center taps in kmax window
            wpad = jnp.pad(w, ((off, kmax - k - off), (0, mts_pad - mts), (0, 0)))
            blocks.append(wpad.reshape(Kw, F))
            b3.append(b[0])
        W3 = jnp.concatenate(blocks, axis=1)                             # (Kw, 3F)
        wmp = jnp.pad(lp["mw"], ((0, C - lp["mw"].shape[0]), (0, 0)))    # (C, F)
        Wl = jnp.concatenate([jnp.pad(W3, ((0, 0), (0, F))),
                              jnp.pad(wmp, ((0, 0), (3 * F, 0)))], axis=0)
        bl = jnp.concatenate(b3 + [lp["mb"][0]], axis=0)
        wl_l.append(Wl * s[None, :])                                     # (Kw + C, 4F), BN folded
        bl_l.append(bl * s + t)                                          # (4F,)

        if lp["bw"] is not None:
            bw = jnp.pad(lp["bw"], ((0, C - lp["bw"].shape[0]),
                                    (0, mts_pad - lp["bw"].shape[1])))
            bb = jnp.pad(lp["bb"][0], (0, mts_pad - lp["bb"].shape[1]))
        else:   # bottleneck == noop: pass the (zero-padded) input channels straight through
            bw = jnp.eye(C, mts_pad, dtype=jnp.float32)
            bb = jnp.zeros((mts_pad,), jnp.float32)
        bw_l.append(bw)
        bb_l.append(bb)

    sc_layers = tuple(sorted(params["shortcuts"])) if residual else ()
    wsc_l, bsc_l = [], []
    for d in sc_layers:
        sp = params["shortcuts"][d]
        s = sp["gamma"][0] * lax.rsqrt(sp["rv"][0] + BN_EPS)
        t = sp["beta"][0] - sp["rm"][0] * s
        wsc_l.append(jnp.pad(sp["w"], ((0, C - sp["w"].shape[0]), (0, 0))) * s[None, :])
        bsc_l.append(sp["b"][0] * s + t)
    if not wsc_l:                      # keep the kernel signature fixed when residual is off
        wsc_l = [jnp.zeros((C, C), jnp.float32)]
        bsc_l = [jnp.zeros((C,), jnp.float32)]

    n_head = _round_up(2 * y_dim, 128)          # lane-dense head slab: [mean | sigma | 0...]
    wh = jnp.zeros((C, n_head), jnp.float32)
    wh = wh.at[:, :y_dim].set(params["mean_w"]).at[:, y_dim:2 * y_dim].set(params["std_w"])
    bh = jnp.zeros((n_head,), jnp.float32)
    bh = bh.at[:y_dim].set(params["mean_b"][0]).at[y_dim:2 * y_dim].set(params["std_b"][0])

    packed = dict(
        bw=jnp.stack(bw_l).astype(jnp.bfloat16),          # (L, C, mts_pad)
        bb=jnp.stack(bb_l)[:, None, :],                   # (L, 1, mts_pad)  f32
        wl=jnp.stack(wl_l).astype(jnp.bfloat16),          # (L, Kw + C, 4F)
        bl=jnp.stack(bl_l)[:, None, :],                   # (L, 1, 4F)       f32
        wsc=jnp.stack(wsc_l).astype(jnp.bfloat16),        # (S, C, C)
        bsc=jnp.stack(bsc_l)[:, None, :],                 # (S, 1, C)        f32
        wh=wh.astype(jnp.bfloat16),                       # (C, n_head)
        bh=bh[None, :],                                   # (1, n_head)      f32
    )
    return packed, mts_pad, sc_layers


# ----------------------------- single fused pallas_call for the whole forward -----------------------------

def make_fused_call(packed, *, G, Bblk, T, S_past, S_fut, C, mts_pad, kmax,
                    sc_layers, y_dim, min_std, vmem_hint_bytes=0):
    L = packed["bw"].shape[0]
    Kw = kmax * mts_pad
    n_head = packed["wh"].shape[1]
    pmax = kmax // 2
    pad_top = _round_up(pmax, 8)          # 8-aligned -> the per-layer hp store is an unmasked vst
    M = Bblk * T                          # MXU rows per grid step (time-major: row = t*Bblk + b)
    Mf = Bblk * S_fut                     # rows fed to the head (future time steps only)
    row0 = pad_top * Bblk
    j0 = pad_top - pmax
    hp_rows = (pad_top + T + pmax) * Bblk
    # In-register lhs (40-way lane concat) is fine while it fits the vreg file; for larger
    # batch blocks stage it in a VMEM slab instead (perf review: avoid vreg spills).
    stage_lhs = (M * (Kw + C) * 2) > (128 * 1024)

    def kernel(x_ref, bw_ref, bb_ref, wl_ref, bl_ref, wsc_ref, bsc_ref,
               wh_ref, bh_ref, out_ref, hp_ref, res_ref, *opt):
        lhs_ref = opt[0] if opt else None

        # Zero once; only rows [row0, row0+M) are rewritten each layer, so the conv-padding
        # rows stay zero for every layer.
        hp_ref[...] = jnp.zeros((hp_rows, mts_pad), jnp.bfloat16)

        act = x_ref[0]                    # (M, C) f32, rows time-major: r = t*Bblk + b
        res_ref[...] = act                # running residual (pre-ReLU, as in the reference)

        for d in range(L):
            act_b = act.astype(jnp.bfloat16)

            # bottleneck 1x1 conv (layer 0 uses an identity-selection weight == PyTorch noop)
            h = jnp.dot(act_b, bw_ref[d], preferred_element_type=jnp.float32) + bb_ref[d]
            hp_ref[row0:row0 + M, :] = h.astype(jnp.bfloat16)      # aligned, bf16 store

            # MaxPool1d(3, stride=1, padding=1): one time step == Bblk flat rows; clamping to
            # the edge row equals PyTorch's implicit -inf padding for a 3-wide max.  Kept in
            # f32 (v5e has no bf16 VPU); cast to bf16 once.
            prev = jnp.concatenate([act[:Bblk], act[:M - Bblk]], axis=0)
            nxt = jnp.concatenate([act[Bblk:], act[M - Bblk:]], axis=0)
            mp_b = jnp.maximum(jnp.maximum(prev, act), nxt).astype(jnp.bfloat16)

            # All four inception branches (3 same-padded convs over h + 1x1 conv over the
            # maxpool) as ONE MXU matmul: lhs = [im2col(h_padded) | maxpool(act)], BN folded
            # into wl/bl.  hp is bf16, so the tap slices need no per-piece casts.
            if lhs_ref is None:
                pieces = [hp_ref[(j0 + j) * Bblk:(j0 + j) * Bblk + M, :] for j in range(kmax)]
                lhs = jnp.concatenate(pieces + [mp_b], axis=1)                 # (M, Kw + C)
            else:
                for j in range(kmax):
                    lhs_ref[:, j * mts_pad:(j + 1) * mts_pad] = \
                        hp_ref[(j0 + j) * Bblk:(j0 + j) * Bblk + M, :]
                lhs_ref[:, Kw:] = mp_b
                lhs = lhs_ref[...]
            inc = jnp.dot(lhs, wl_ref[d], preferred_element_type=jnp.float32) + bl_ref[d]
            x_out = jnp.maximum(inc, 0.0)                                      # ReLU(BN(inception))

            if d in sc_layers:                                                 # residual hookup
                si = sc_layers.index(d)
                sc = jnp.dot(res_ref[...].astype(jnp.bfloat16), wsc_ref[si],
                             preferred_element_type=jnp.float32) + bsc_ref[si]
                pre = x_out + sc               # x += shortcut(res)
                res_ref[...] = pre             # res = x   (pre-ReLU, matches the reference)
                x_out = jnp.maximum(pre, 0.0)  # x = relu(x)
            act = x_out

        # head on the FUTURE rows only (the wrapper discards the past rows anyway):
        # one lane-dense matmul producing [mean | log_sigma | pad].
        af = act[S_past * Bblk:, :].astype(jnp.bfloat16)                       # (Mf, C)
        yh = jnp.dot(af, wh_ref[...], preferred_element_type=jnp.float32) + bh_ref[...]
        # stable softplus; the <1e-7 difference vs log1p is far below min_std.
        sp = jnp.maximum(yh, 0.0) + jnp.log(1.0 + jnp.exp(-jnp.abs(yh)))
        sigma = min_std + (1.0 - min_std) * sp
        lane = lax.broadcasted_iota(jnp.int32, (Mf, n_head), 1)
        out_ref[0] = jnp.where(lane < y_dim, yh, sigma)

    def const_spec(shape):
        nd = len(shape)
        # NOTE(perf review): pipeline_mode=pl.Buffered(1) would halve buffering of these
        # constant-index weight blocks (~1 MiB here); left at default for portability.
        return pl.BlockSpec(shape, lambda g: (0,) * nd)

    w_bytes = sum(int(v.size) * v.dtype.itemsize for v in packed.values())
    flops = G * (L * (2 * M * C * mts_pad + 2 * M * (Kw + C) * C)
                 + len(sc_layers) * 2 * M * C * C + 2 * Mf * C * n_head)
    bytes_accessed = G * (M * C * 4 + Mf * n_head * 4) + w_bytes

    scratch = [pltpu.VMEM((hp_rows, mts_pad), jnp.bfloat16),   # zero-padded bottleneck act
               pltpu.VMEM((M, C), jnp.float32)]                # running residual
    if stage_lhs:
        scratch.append(pltpu.VMEM((M, Kw + C), jnp.bfloat16))  # staged im2col lhs

    cp = dict(dimension_semantics=("parallel",))   # batch blocks independent -> megacore split
    if vmem_hint_bytes > 30 * 2**20:
        cp["vmem_limit_bytes"] = int(min(vmem_hint_bytes + (8 << 20), 48 * 2**20))

    return pl.pallas_call(
        kernel,
        out_shape=jax.ShapeDtypeStruct((G, Mf, n_head), jnp.float32),
        grid=(G,),
        in_specs=[
            pl.BlockSpec((1, M, C), lambda g: (g, 0, 0)),
            const_spec(packed["bw"].shape), const_spec(packed["bb"].shape),
            const_spec(packed["wl"].shape), const_spec(packed["bl"].shape),
            const_spec(packed["wsc"].shape), const_spec(packed["bsc"].shape),
            const_spec(packed["wh"].shape), const_spec(packed["bh"].shape),
        ],
        out_specs=pl.BlockSpec((1, Mf, n_head), lambda g: (g, 0, 0)),
        scratch_shapes=scratch,
        compiler_params=pltpu.CompilerParams(**cp),
        cost_estimate=pl.CostEstimate(flops=int(flops),
                                      transcendentals=int(2 * G * Mf * n_head),
                                      bytes_accessed=int(bytes_accessed)),
    )


# ----------------------------- full forward (preprocessing + fused kernel) -----------------------------

def inception_time_seq_forward(params, past_x, past_y, future_x, *, hidden, kss,
                               residual=True, min_std=0.01, target_rows=256):
    B, S_past, y_dim = past_y.shape
    S_fut = future_x.shape[1]
    F = hidden
    C = 4 * F
    kmax = max(kss)

    # Same preprocessing as the PyTorch forward (the permute(0,2,1) pairs cancel).
    future_y_fake = jnp.repeat(past_y[:, -1:, :], S_fut, axis=1)
    context = jnp.concatenate([past_x, past_y], axis=-1)
    target = jnp.concatenate([future_x, future_y_fake], axis=-1)
    x = jnp.concatenate([context, target], axis=1).astype(jnp.float32)       # (B, T, c0)
    T, c0 = x.shape[1], x.shape[2]
    x = jnp.pad(x, ((0, 0), (0, 0), (0, C - c0)))                             # lane-dense channels

    packed, mts_pad, sc_layers = pack_params(params, C=C, F=F, kss=kss,
                                             y_dim=y_dim, residual=residual)
    Kw = kmax * mts_pad
    n_head = packed["wh"].shape[1]
    w_bytes = sum(int(v.size) * v.dtype.itemsize for v in packed.values())
    pmax = kmax // 2
    pad_top = _round_up(pmax, 8)

    def vmem_est(bblk):
        m = bblk * T
        hp = (pad_top + T + pmax) * bblk * mts_pad * 2
        return (2 * w_bytes + hp + m * C * 4 + m * (Kw + C) * 2
                + 2 * (m * C * 4 + bblk * S_fut * n_head * 4))

    # Batch block: target >= `target_rows` MXU rows per step (256 fills a v6e/v7x MXU tile,
    # >= 128 suffices on v5e); collapse to a single grid step when B is small; cap the block
    # so the working set stays well inside v7x's 64 MiB VMEM.
    Bblk = max(1, min(B, -(-target_rows // T)))
    while Bblk > 1 and vmem_est(Bblk) > 40 * 2**20:
        Bblk = -(-Bblk // 2)
    G = -(-B // Bblk)
    B_pad = G * Bblk
    if B_pad > B:
        x = jnp.pad(x, ((0, B_pad - B), (0, 0), (0, 0)))

    # Present each batch block to the kernel as time-major rows (r = t*Bblk + b): the conv-tap
    # shifts inside the kernel become contiguous 2-D slices, and this reshuffle is a few-KB
    # XLA transpose out here rather than an in-kernel relayout.
    x_g = x.reshape(G, Bblk, T, C).transpose(0, 2, 1, 3).reshape(G, T * Bblk, C)

    call = make_fused_call(packed, G=G, Bblk=Bblk, T=T, S_past=S_past, S_fut=S_fut,
                           C=C, mts_pad=mts_pad, kmax=kmax, sc_layers=sc_layers,
                           y_dim=y_dim, min_std=min_std, vmem_hint_bytes=vmem_est(Bblk))
    out_g = call(x_g, packed["bw"], packed["bb"], packed["wl"], packed["bl"],
                 packed["wsc"], packed["bsc"], packed["wh"], packed["bh"])

    out = (out_g.reshape(G, S_fut, Bblk, n_head).transpose(0, 2, 1, 3)
           .reshape(B_pad, S_fut, n_head)[:B])
    mean = out[..., :y_dim]
    sigma = out[..., y_dim:2 * y_dim]
    # TODO(synk): torch.distributions.Normal has no Pallas equivalent; we return (mean, sigma).
    return mean, sigma


# ----------------------------- pure-f32 jnp reference (for tolerance checking) -----------------------------

def reference_forward(params, past_x, past_y, future_x, *, hidden, kss,
                      residual=True, min_std=0.01):
    B, S_past, y_dim = past_y.shape
    S_fut = future_x.shape[1]
    future_y_fake = jnp.repeat(past_y[:, -1:, :], S_fut, axis=1)
    x = jnp.concatenate([jnp.concatenate([past_x, past_y], -1),
                         jnp.concatenate([future_x, future_y_fake], -1)], axis=1)
    x = x.astype(jnp.float32)

    def conv1d_same(h, w, b):                              # h (B,T,ci), w (k,ci,co), b (1,co)
        out = lax.conv_general_dilated(h, w, window_strides=(1,), padding="SAME",
                                       dimension_numbers=("NWC", "WIO", "NWC"))
        return out + b[0]

    def bn(z, p):
        return (z - p["rm"][0]) * lax.rsqrt(p["rv"][0] + BN_EPS) * p["gamma"][0] + p["beta"][0]

    act, res = x, x
    for d, lp in enumerate(params["layers"]):
        h = act if lp["bw"] is None else jnp.einsum("btc,cm->btm", act, lp["bw"]) + lp["bb"][0]
        outs = [conv1d_same(h, w, b) for (w, b) in lp["convs"]]
        prev = jnp.concatenate([act[:, :1], act[:, :-1]], axis=1)
        nxt = jnp.concatenate([act[:, 1:], act[:, -1:]], axis=1)
        mp = jnp.maximum(jnp.maximum(prev, act), nxt)
        outs.append(jnp.einsum("btc,cf->btf", mp, lp["mw"]) + lp["mb"][0])
        y = jnp.maximum(bn(jnp.concatenate(outs, axis=-1), lp), 0.0)
        if residual and d % 3 == 2:
            sp = params["shortcuts"][d]
            r = bn(jnp.einsum("btc,cf->btf", res, sp["w"]) + sp["b"][0], sp)
            y = y + r
            res = y
            y = jnp.maximum(y, 0.0)
        act = y
    mean = (jnp.einsum("btc,cy->bty", act, params["mean_w"]) + params["mean_b"][0])[:, S_past:]
    log_sigma = (jnp.einsum("btc,cy->bty", act, params["std_w"]) + params["std_b"][0])[:, S_past:]
    sigma = min_std + (1.0 - min_std) * jax.nn.softplus(log_sigma)
    return mean, sigma


# ----------------------------- demo -----------------------------

if __name__ == "__main__":
    B, S_past, S_fut = 2, 8, 8
    x_dim, y_dim = 3, 2
    hidden, bottleneck, layers, kernel_size = 32, 16, 6, 40

    # kss = [kernel_size // 2**i for i in range(3)], forced odd -> (39, 19, 9)
    kss = tuple(k if k % 2 != 0 else k - 1 for k in (kernel_size // (2 ** i) for i in range(3)))

    key = jax.random.PRNGKey(0)
    k_params, k_data = jax.random.split(key)
    params = init_params(k_params, x_dim + y_dim, y_dim, hidden, bottleneck, kss, layers)

    k1, k2, k3 = jax.random.split(k_data, 3)
    past_x = jax.random.normal(k1, (B, S_past, x_dim), dtype=jnp.float32)
    past_y = jax.random.normal(k2, (B, S_past, y_dim), dtype=jnp.float32)
    future_x = jax.random.normal(k3, (B, S_fut, x_dim), dtype=jnp.float32)

    fwd = jax.jit(functools.partial(inception_time_seq_forward, hidden=hidden, kss=kss))
    mean, sigma = fwd(params, past_x, past_y, future_x)
    jax.block_until_ready((mean, sigma))

    assert mean.shape == (B, S_fut, y_dim), mean.shape
    assert sigma.shape == (B, S_fut, y_dim), sigma.shape
    assert bool(jnp.all(sigma > 0.0))
    assert bool(jnp.all(jnp.isfinite(mean))) and bool(jnp.all(jnp.isfinite(sigma)))

    # Tolerance check against the pure-f32 jnp reference (bf16 MXU inputs -> loose rel tol).
    ref = jax.jit(functools.partial(reference_forward, hidden=hidden, kss=kss))
    mean_r, sigma_r = ref(params, past_x, past_y, future_x)
    jax.block_until_ready((mean_r, sigma_r))

    def rel_err(a, b):
        return float(jnp.max(jnp.abs(a - b)) / (jnp.max(jnp.abs(b)) + 1e-6))

    assert rel_err(mean, mean_r) < 0.08, ("mean mismatch", rel_err(mean, mean_r))
    assert rel_err(sigma, sigma_r) < 0.08, ("sigma mismatch", rel_err(sigma, sigma_r))

    print("KERNEL_OK")
</pallas_src>

<mosaic_0001>
module attributes {stable_mosaic.version = 11 : i64} {
  func.func @kernel(%arg0: i32, %arg1: memref<1x32x128xf32, #tpu.memory_space<vmem>>, %arg2: memref<6x128x16xbf16, #tpu.memory_space<vmem>>, %arg3: memref<6x1x16xf32, #tpu.memory_space<vmem>>, %arg4: memref<6x752x128xbf16, #tpu.memory_space<vmem>>, %arg5: memref<6x1x128xf32, #tpu.memory_space<vmem>>, %arg6: memref<2x128x128xbf16, #tpu.memory_space<vmem>>, %arg7: memref<2x1x128xf32, #tpu.memory_space<vmem>>, %arg8: memref<128x128xbf16, #tpu.memory_space<vmem>>, %arg9: memref<1x128xf32, #tpu.memory_space<vmem>>, %arg10: memref<1x16x128xf32, #tpu.memory_space<vmem>>, %arg11: memref<118x16xbf16, #tpu.memory_space<vmem>>, %arg12: memref<32x128xf32, #tpu.memory_space<vmem>>) attributes {dimension_semantics = [#tpu.dimension_semantics<parallel>], iteration_bounds = array<i64: 1>, scalar_prefetch = 0 : i64, scratch_operands = 2 : i64, tpu.core_type = #tpu.core_type<tc>, window_params = [{transform_indices = @transform_0, window_bounds = array<i64: 1, 32, 128>}, {pipeline_mode = #tpu.pipeline_mode<synchronous>, transform_indices = @transform_1, window_bounds = array<i64: 6, 128, 16>}, {pipeline_mode = #tpu.pipeline_mode<synchronous>, transform_indices = @transform_2, window_bounds = array<i64: 6, 1, 16>}, {pipeline_mode = #tpu.pipeline_mode<synchronous>, transform_indices = @transform_3, window_bounds = array<i64: 6, 752, 128>}, {pipeline_mode = #tpu.pipeline_mode<synchronous>, transform_indices = @transform_4, window_bounds = array<i64: 6, 1, 128>}, {pipeline_mode = #tpu.pipeline_mode<synchronous>, transform_indices = @transform_5, window_bounds = array<i64: 2, 128, 128>}, {pipeline_mode = #tpu.pipeline_mode<synchronous>, transform_indices = @transform_6, window_bounds = array<i64: 2, 1, 128>}, {pipeline_mode = #tpu.pipeline_mode<synchronous>, transform_indices = @transform_7, window_bounds = array<i64: 128, 128>}, {pipeline_mode = #tpu.pipeline_mode<synchronous>, transform_indices = @transform_8, window_bounds = array<i64: 1, 128>}, {transform_indices = @transform_9, window_bounds = array<i64: 1, 16, 128>}]} {
    %cst = arith.constant 0.000000e+00 : bf16
    %0 = vector.broadcast %cst : bf16 to vector<118x16xbf16>
    %c0 = arith.constant 0 : index
    %c0_0 = arith.constant 0 : index
    %1 = vector.load %arg11[%c0, %c0_0] : memref<118x16xbf16, #tpu.memory_space<vmem>>, vector<118x16xbf16>
    tpu.vector_store %arg11[%c0, %c0_0], %0 {strides = array<i32>} : memref<118x16xbf16, #tpu.memory_space<vmem>>, vector<118x16xbf16>,
    %c0_1 = arith.constant 0 : index
    %c0_2 = arith.constant 0 : index
    %c0_3 = arith.constant 0 : index
    %2 = vector.load %arg1[%c0_1, %c0_2, %c0_3] : memref<1x32x128xf32, #tpu.memory_space<vmem>>, vector<1x32x128xf32>
    %3 = vector.shape_cast %2 : vector<1x32x128xf32> to vector<32x128xf32>
    %c0_4 = arith.constant 0 : index
    %c0_5 = arith.constant 0 : index
    %4 = vector.load %arg12[%c0_4, %c0_5] : memref<32x128xf32, #tpu.memory_space<vmem>>, vector<32x128xf32>
    tpu.vector_store %arg12[%c0_4, %c0_5], %3 {strides = array<i32>} : memref<32x128xf32, #tpu.memory_space<vmem>>, vector<32x128xf32>,
    %5 = arith.truncf %3 : vector<32x128xf32> to vector<32x128xbf16>
    %c0_6 = arith.constant 0 : index
    %c0_7 = arith.constant 0 : index
    %c0_8 = arith.constant 0 : index
    %6 = vector.load %arg2[%c0_6, %c0_7, %c0_8] : memref<6x128x16xbf16, #tpu.memory_space<vmem>>, vector<1x128x16xbf16>
    %7 = vector.shape_cast %6 : vector<1x128x16xbf16> to vector<128x16xbf16>
    %cst_9 = arith.constant dense<0.000000e+00> : vector<32x16xf32>
    %8 = tpu.matmul %5, %7, %cst_9 {dimension_numbers = #tpu.dot_dimension_numbers<[1], [0], [0], [1], [0, 0, 1, 1], [], []>} : vector<32x128xbf16>, vector<128x16xbf16>, vector<32x16xf32> -> vector<32x16xf32>
    %c0_10 = arith.constant 0 : index
    %c0_11 = arith.constant 0 : index
    %c0_12 = arith.constant 0 : index
    %9 = vector.load %arg3[%c0_10, %c0_11, %c0_12] : memref<6x1x16xf32, #tpu.memory_space<vmem>>, vector<1x1x16xf32>
    %10 = vector.shape_cast %9 : vector<1x1x16xf32> to vector<1x16xf32>
    %11 = vector.broadcast %10 : vector<1x16xf32> to vector<32x16xf32>
    %12 = arith.addf %8, %11 : vector<32x16xf32>
    %13 = arith.truncf %12 : vector<32x16xf32> to vector<32x16xbf16>
    %c48 = arith.constant 48 : index
    %c0_13 = arith.constant 0 : index
    %14 = vector.load %arg11[%c48, %c0_13] : memref<118x16xbf16, #tpu.memory_space<vmem>>, vector<32x16xbf16>
    tpu.vector_store %arg11[%c48, %c0_13], %13 {strides = array<i32>} : memref<118x16xbf16, #tpu.memory_space<vmem>>, vector<32x16xbf16>,
    %15 = vector.extract_strided_slice %3 {offsets = [0, 0], sizes = [2, 128], strides = [1, 1]} : vector<32x128xf32> to vector<2x128xf32>
    %16 = vector.extract_strided_slice %3 {offsets = [0, 0], sizes = [30, 128], strides = [1, 1]} : vector<32x128xf32> to vector<30x128xf32>
    %17 = tpu.concatenate %15, %16 in 0 : vector<2x128xf32>, vector<30x128xf32> -> vector<32x128xf32>
    %18 = vector.extract_strided_slice %3 {offsets = [2, 0], sizes = [30, 128], strides = [1, 1]} : vector<32x128xf32> to vector<30x128xf32>
    %19 = vector.extract_strided_slice %3 {offsets = [30, 0], sizes = [2, 128], strides = [1, 1]} : vector<32x128xf32> to vector<2x128xf32>
    %20 = tpu.concatenate %18, %19 in 0 : vector<30x128xf32>, vector<2x128xf32> -> vector<32x128xf32>
    %21 = arith.maximumf %17, %3 : vector<32x128xf32>
    %22 = arith.maximumf %21, %20 : vector<32x128xf32>
    %23 = arith.truncf %22 : vector<32x128xf32> to vector<32x128xbf16>
    %c10 = arith.constant 10 : index
    %c0_14 = arith.constant 0 : index
    %24 = vector.load %arg11[%c10, %c0_14] : memref<118x16xbf16, #tpu.memory_space<vmem>>, vector<32x16xbf16>
    %c12 = arith.constant 12 : index
    %c0_15 = arith.constant 0 : index
    %25 = vector.load %arg11[%c12, %c0_15] : memref<118x16xbf16, #tpu.memory_space<vmem>>, vector<32x16xbf16>
    %c14 = arith.constant 14 : index
    %c0_16 = arith.constant 0 : index
    %26 = vector.load %arg11[%c14, %c0_16] : memref<118x16xbf16, #tpu.memory_space<vmem>>, vector<32x16xbf16>
    %c16 = arith.constant 16 : index
    %c0_17 = arith.constant 0 : index
    %27 = vector.load %arg11[%c16, %c0_17] : memref<118x16xbf16, #tpu.memory_space<vmem>>, vector<32x16xbf16>
    %c18 = arith.constant 18 : index
    %c0_18 = arith.constant 0 : index
    %28 = vector.load %arg11[%c18, %c0_18] : memref<118x16xbf16, #tpu.memory_space<vmem>>, vector<32x16xbf16>
    %c20 = arith.constant 20 : index
    %c0_19 = arith.constant 0 : index
    %29 = vector.load %arg11[%c20, %c0_19] : memref<118x16xbf16, #tpu.memory_space<vmem>>, vector<32x16xbf16>
    %c22 = arith.constant 22 : index
    %c0_20 = arith.constant 0 : index
    %30 = vector.load %arg11[%c22, %c0_20] : memref<118x16xbf16, #tpu.memory_space<vmem>>, vector<32x16xbf16>
    %c24 = arith.constant 24 : index
    %c0_21 = arith.constant 0 : index
    %31 = vector.load %arg11[%c24, %c0_21] : memref<118x16xbf16, #tpu.memory_space<vmem>>, vector<32x16xbf16>
    %c26 = arith.constant 26 : index
    %c0_22 = arith.constant 0 : index
    %32 = vector.load %arg11[%c26, %c0_22] : memref<118x16xbf16, #tpu.memory_space<vmem>>, vector<32x16xbf16>
    %c28 = arith.constant 28 : index
    %c0_23 = arith.constant 0 : index
    %33 = vector.load %arg11[%c28, %c0_23] : memref<118x16xbf16, #tpu.memory_space<vmem>>, vector<32x16xbf16>
    %c30 = arith.constant 30 : index
    %c0_24 = arith.constant 0 : index
    %34 = vector.load %arg11[%c30, %c0_24] : memref<118x16xbf16, #tpu.memory_space<vmem>>, vector<32x16xbf16>
    %c32 = arith.constant 32 : index
    %c0_25 = arith.constant 0 : index
    %35 = vector.load %arg11[%c32, %c0_25] : memref<118x16xbf16, #tpu.memory_space<vmem>>, vector<32x16xbf16>
    %c34 = arith.constant 34 : index
    %c0_26 = arith.constant 0 : index
    %36 = vector.load %arg11[%c34, %c0_26] : memref<118x16xbf16, #tpu.memory_space<vmem>>, vector<32x16xbf16>
    %c36 = arith.constant 36 : index
    %c0_27 = arith.constant 0 : index
    %37 = vector.load %arg11[%c36, %c0_27] : memref<118x16xbf16, #tpu.memory_space<vmem>>, vector<32x16xbf16>
    %c38 = arith.constant 38 : index
    %c0_28 = arith.constant 0 : index
    %38 = vector.load %arg11[%c38, %c0_28] : memref<118x16xbf16, #tpu.memory_space<vmem>>, vector<32x16xbf16>
    %c40 = arith.constant 40 : index
    %c0_29 = arith.constant 0 : index
    %39 = vector.load %arg11[%c40, %c0_29] : memref<118x16xbf16, #tpu.memory_space<vmem>>, vector<32x16xbf16>
    %c42 = arith.constant 42 : index
    %c0_30 = arith.constant 0 : index
    %40 = vector.load %arg11[%c42, %c0_30] : memref<118x16xbf16, #tpu.memory_space<vmem>>, vector<32x16xbf16>
    %c44 = arith.constant 44 : index
    %c0_31 = arith.constant 0 : index
    %41 = vector.load %arg11[%c44, %c0_31] : memref<118x16xbf16, #tpu.memory_space<vmem>>, vector<32x16xbf16>
    %c46 = arith.constant 46 : index
    %c0_32 = arith.constant 0 : index
    %42 = vector.load %arg11[%c46, %c0_32] : memref<118x16xbf16, #tpu.memory_space<vmem>>, vector<32x16xbf16>
    %c48_33 = arith.constant 48 : index
    %c0_34 = arith.constant 0 : index
    %43 = vector.load %arg11[%c48_33, %c0_34] : memref<118x16xbf16, #tpu.memory_space<vmem>>, vector<32x16xbf16>
    %c50 = arith.constant 50 : index
    %c0_35 = arith.constant 0 : index
    %44 = vector.load %arg11[%c50, %c0_35] : memref<118x16xbf16, #tpu.memory_space<vmem>>, vector<32x16xbf16>
    %c52 = arith.constant 52 : index
    %c0_36 = arith.constant 0 : index
    %45 = vector.load %arg11[%c52, %c0_36] : memref<118x16xbf16, #tpu.memory_space<vmem>>, vector<32x16xbf16>
    %c54 = arith.constant 54 : index
    %c0_37 = arith.constant 0 : index
    %46 = vector.load %arg11[%c54, %c0_37] : memref<118x16xbf16, #tpu.memory_space<vmem>>, vector<32x16xbf16>
    %c56 = arith.constant 56 : index
    %c0_38 = arith.constant 0 : index
    %47 = vector.load %arg11[%c56, %c0_38] : memref<118x16xbf16, #tpu.memory_space<vmem>>, vector<32x16xbf16>
    %c58 = arith.constant 58 : index
    %c0_39 = arith.constant 0 : index
    %48 = vector.load %arg11[%c58, %c0_39] : memref<118x16xbf16, #tpu.memory_space<vmem>>, vector<32x16xbf16>
    %c60 = arith.constant 60 : index
    %c0_40 = arith.constant 0 : index
    %49 = vector.load %arg11[%c60, %c0_40] : memref<118x16xbf16, #tpu.memory_space<vmem>>, vector<32x16xbf16>
    %c62 = arith.constant 62 : index
    %c0_41 = arith.constant 0 : index
    %50 = vector.load %arg11[%c62, %c0_41] : memref<118x16xbf16, #tpu.memory_space<vmem>>, vector<32x16xbf16>
    %c64 = arith.constant 64 : index
    %c0_42 = arith.constant 0 : index
    %51 = vector.load %arg11[%c64, %c0_42] : memref<118x16xbf16, #tpu.memory_space<vmem>>, vector<32x16xbf16>
    %c66 = arith.constant 66 : index
    %c0_43 = arith.constant 0 : index
    %52 = vector.load %arg11[%c66, %c0_43] : memref<118x16xbf16, #tpu.memory_space<vmem>>, vector<32x16xbf16>
    %c68 = arith.constant 68 : index
    %c0_44 = arith.constant 0 : index
    %53 = vector.load %arg11[%c68, %c0_44] : memref<118x16xbf16, #tpu.memory_space<vmem>>, vector<32x16xbf16>
    %c70 = arith.constant 70 : index
    %c0_45 = arith.constant 0 : index
    %54 = vector.load %arg11[%c70, %c0_45] : memref<118x16xbf16, #tpu.memory_space<vmem>>, vector<32x16xbf16>
    %c72 = arith.constant 72 : index
    %c0_46 = arith.constant 0 : index
    %55 = vector.load %arg11[%c72, %c0_46] : memref<118x16xbf16, #tpu.memory_space<vmem>>, vector<32x16xbf16>
    %c74 = arith.constant 74 : index
    %c0_47 = arith.constant 0 : index
    %56 = vector.load %arg11[%c74, %c0_47] : memref<118x16xbf16, #tpu.memory_space<vmem>>, vector<32x16xbf16>
    %c76 = arith.constant 76 : index
    %c0_48 = arith.constant 0 : index
    %57 = vector.load %arg11[%c76, %c0_48] : memref<118x16xbf16, #tpu.memory_space<vmem>>, vector<32x16xbf16>
    %c78 = arith.constant 78 : index
    %c0_49 = arith.constant 0 : index
    %58 = vector.load %arg11[%c78, %c0_49] : memref<118x16xbf16, #tpu.memory_space<vmem>>, vector<32x16xbf16>
    %c80 = arith.constant 80 : index
    %c0_50 = arith.constant 0 : index
    %59 = vector.load %arg11[%c80, %c0_50] : memref<118x16xbf16, #tpu.memory_space<vmem>>, vector<32x16xbf16>
    %c82 = arith.constant 82 : index
    %c0_51 = arith.constant 0 : index
    %60 = vector.load %arg11[%c82, %c0_51] : memref<118x16xbf16, #tpu.memory_space<vmem>>, vector<32x16xbf16>
    %c84 = arith.constant 84 : index
    %c0_52 = arith.constant 0 : index
    %61 = vector.load %arg11[%c84, %c0_52] : memref<118x16xbf16, #tpu.memory_space<vmem>>, vector<32x16xbf16>
    %c86 = arith.constant 86 : index
    %c0_53 = arith.constant 0 : index
    %62 = vector.load %arg11[%c86, %c0_53] : memref<118x16xbf16, #tpu.memory_space<vmem>>, vector<32x16xbf16>
    %63 = tpu.concatenate %24, %25, %26, %27, %28, %29, %30, %31, %32, %33, %34, %35, %36, %37, %38, %39 in 1 : vector<32x16xbf16>, vector<32x16xbf16>, vector<32x16xbf16>, vector<32x16xbf16>, vector<32x16xbf16>, vector<32x16xbf16>, vector<32x16xbf16>, vector<32x16xbf16>, vector<32x16xbf16>, vector<32x16xbf16>, vector<32x16xbf16>, vector<32x16xbf16>, vector<32x16xbf16>, vector<32x16xbf16>, vector<32x16xbf16>, vector<32x16xbf16> -> vector<32x256xbf16>
    %64 = tpu.concatenate %40, %41, %42, %43, %44, %45, %46, %47, %48, %49, %50, %51, %52, %53, %54, %55 in 1 : vector<32x16xbf16>, vector<32x16xbf16>, vector<32x16xbf16>, vector<32x16xbf16>, vector<32x16xbf16>, vector<32x16xbf16>, vector<32x16xbf16>, vector<32x16xbf16>, vector<32x16xbf16>, vector<32x16xbf16>, vector<32x16xbf16>, vector<32x16xbf16>, vector<32x16xbf16>, vector<32x16xbf16>, vector<32x16xbf16>, vector<32x16xbf16> -> vector<32x256xbf16>
    %65 = tpu.concatenate %56, %57, %58, %59, %60, %61, %62, %23 in 1 : vector<32x16xbf16>, vector<32x16xbf16>, vector<32x16xbf16>, vector<32x16xbf16>, vector<32x16xbf16>, vector<32x16xbf16>, vector<32x16xbf16>, vector<32x128xbf16> -> vector<32x240xbf16>
    %66 = tpu.concatenate %63, %64, %65 in 1 : vector<32x256xbf16>, vector<32x256xbf16>, vector<32x240xbf16> -> vector<32x752xbf16>
    %c0_54 = arith.constant 0 : index
    %c0_55 = arith.constant 0 : index
    %c0_56 = arith.constant 0 : index
    %67 = vector.load %arg4[%c0_54, %c0_55, %c0_56] : memref<6x752x128xbf16, #tpu.memory_space<vmem>>, vector<1x752x128xbf16>
    %68 = vector.shape_cast %67 : vector<1x752x128xbf16> to vector<752x128xbf16>
    %cst_57 = arith.constant dense<0.000000e+00> : vector<32x128xf32>
    %69 = tpu.matmul %66, %68, %cst_57 {dimension_numbers = #tpu.dot_dimension_numbers<[1], [0], [0], [1], [0, 0, 1, 1], [], []>} : vector<32x752xbf16>, vector<752x128xbf16>, vector<32x128xf32> -> vector<32x128xf32>
    %c0_58 = arith.constant 0 : index
    %c0_59 = arith.constant 0 : index
    %c0_60 = arith.constant 0 : index
    %70 = vector.load %arg5[%c0_58, %c0_59, %c0_60] : memref<6x1x128xf32, #tpu.memory_space<vmem>>, vector<1x1x128xf32>
    %71 = vector.shape_cast %70 : vector<1x1x128xf32> to vector<1x128xf32>
    %72 = vector.broadcast %71 : vector<1x128xf32> to vector<32x128xf32>
    %73 = arith.addf %69, %72 : vector<32x128xf32>
    %cst_61 = arith.constant 0.000000e+00 : f32
    %74 = vector.broadcast %cst_61 : f32 to vector<32x128xf32>
    %75 = arith.maximumf %73, %74 : vector<32x128xf32>
    %76 = arith.truncf %75 : vector<32x128xf32> to vector<32x128xbf16>
    %c1 = arith.constant 1 : index
    %c0_62 = arith.constant 0 : index
    %c0_63 = arith.constant 0 : index
    %77 = vector.load %arg2[%c1, %c0_62, %c0_63] : memref<6x128x16xbf16, #tpu.memory_space<vmem>>, vector<1x128x16xbf16>
    %78 = vector.shape_cast %77 : vector<1x128x16xbf16> to vector<128x16xbf16>
    %cst_64 = arith.constant dense<0.000000e+00> : vector<32x16xf32>
    %79 = tpu.matmul %76, %78, %cst_64 {dimension_numbers = #tpu.dot_dimension_numbers<[1], [0], [0], [1], [0, 0, 1, 1], [], []>} : vector<32x128xbf16>, vector<128x16xbf16>, vector<32x16xf32> -> vector<32x16xf32>
    %c1_65 = arith.constant 1 : index
    %c0_66 = arith.constant 0 : index
    %c0_67 = arith.constant 0 : index
    %80 = vector.load %arg3[%c1_65, %c0_66, %c0_67] : memref<6x1x16xf32, #tpu.memory_space<vmem>>, vector<1x1x16xf32>
    %81 = vector.shape_cast %80 : vector<1x1x16xf32> to vector<1x16xf32>
    %82 = vector.broadcast %81 : vector<1x16xf32> to vector<32x16xf32>
    %83 = arith.addf %79, %82 : vector<32x16xf32>
    %84 = arith.truncf %83 : vector<32x16xf32> to vector<32x16xbf16>
    %c48_68 = arith.constant 48 : index
    %c0_69 = arith.constant 0 : index
    %85 = vector.load %arg11[%c48_68, %c0_69] : memref<118x16xbf16, #tpu.memory_space<vmem>>, vector<32x16xbf16>
    tpu.vector_store %arg11[%c48_68, %c0_69], %84 {strides = array<i32>} : memref<118x16xbf16, #tpu.memory_space<vmem>>, vector<32x16xbf16>,
    %86 = vector.extract_strided_slice %75 {offsets = [0, 0], sizes = [2, 128], strides = [1, 1]} : vector<32x128xf32> to vector<2x128xf32>
    %87 = vector.extract_strided_slice %75 {offsets = [0, 0], sizes = [30, 128], strides = [1, 1]} : vector<32x128xf32> to vector<30x128xf32>
    %88 = tpu.concatenate %86, %87 in 0 : vector<2x128xf32>, vector<30x128xf32> -> vector<32x128xf32>
    %89 = vector.extract_strided_slice %75 {offsets = [2, 0], sizes = [30, 128], strides = [1, 1]} : vector<32x128xf32> to vector<30x128xf32>
    %90 = vector.extract_strided_slice %75 {offsets = [30, 0], sizes = [2, 128], strides = [1, 1]} : vector<32x128xf32> to vector<2x128xf32>
    %91 = tpu.concatenate %89, %90 in 0 : vector<30x128xf32>, vector<2x128xf32> -> vector<32x128xf32>
    %92 = arith.maximumf %88, %75 : vector<32x128xf32>
    %93 = arith.maximumf %92, %91 : vector<32x128xf32>
    %94 = arith.truncf %93 : vector<32x128xf32> to vector<32x128xbf16>
    %c10_70 = arith.constant 10 : index
    %c0_71 = arith.constant 0 : index
    %95 = vector.load %arg11[%c10_70, %c0_71] : memref<118x16xbf16, #tpu.memory_space<vmem>>, vector<32x16xbf16>
    %c12_72 = arith.constant 12 : index
    %c0_73 = arith.constant 0 : index
    %96 = vector.load %arg11[%c12_72, %c0_73] : memref<118x16xbf16, #tpu.memory_space<vmem>>, vector<32x16xbf16>
    %c14_74 = arith.constant 14 : index
    %c0_75 = arith.constant 0 : index
    %97 = vector.load %arg11[%c14_74, %c0_75] : memref<118x16xbf16, #tpu.memory_space<vmem>>, vector<32x16xbf16>
    %c16_76 = arith.constant 16 : index
    %c0_77 = arith.constant 0 : index
    %98 = vector.load %arg11[%c16_76, %c0_77] : memref<118x16xbf16, #tpu.memory_space<vmem>>, vector<32x16xbf16>
    %c18_78 = arith.constant 18 : index
    %c0_79 = arith.constant 0 : index
    %99 = vector.load %arg11[%c18_78, %c0_79] : memref<118x16xbf16, #tpu.memory_space<vmem>>, vector<32x16xbf16>
    %c20_80 = arith.constant 20 : index
    %c0_81 = arith.constant 0 : index
    %100 = vector.load %arg11[%c20_80, %c0_81] : memref<118x16xbf16, #tpu.memory_space<vmem>>, vector<32x16xbf16>
    %c22_82 = arith.constant 22 : index
    %c0_83 = arith.constant 0 : index
    %101 = vector.load %arg11[%c22_82, %c0_83] : memref<118x16xbf16, #tpu.memory_space<vmem>>, vector<32x16xbf16>
    %c24_84 = arith.constant 24 : index
    %c0_85 = arith.constant 0 : index
    %102 = vector.load %arg11[%c24_84, %c0_85] : memref<118x16xbf16, #tpu.memory_space<vmem>>, vector<32x16xbf16>
    %c26_86 = arith.constant 26 : index
    %c0_87 = arith.constant 0 : index
    %103 = vector.load %arg11[%c26_86, %c0_87] : memref<118x16xbf16, #tpu.memory_space<vmem>>, vector<32x16xbf16>
    %c28_88 = arith.constant 28 : index
    %c0_89 = arith.constant 0 : index
    %104 = vector.load %arg11[%c28_88, %c0_89] : memref<118x16xbf16, #tpu.memory_space<vmem>>, vector<32x16xbf16>
    %c30_90 = arith.constant 30 : index
    %c0_91 = arith.constant 0 : index
    %105 = vector.load %arg11[%c30_90, %c0_91] : memref<118x16xbf16, #tpu.memory_space<vmem>>, vector<32x16xbf16>
    %c32_92 = arith.constant 32 : index
    %c0_93 = arith.constant 0 : index
    %106 = vector.load %arg11[%c32_92, %c0_93] : memref<118x16xbf16, #tpu.memory_space<vmem>>, vector<32x16xbf16>
    %c34_94 = arith.constant 34 : index
    %c0_95 = arith.constant 0 : index
    %107 = vector.load %arg11[%c34_94, %c0_95] : memref<118x16xbf16, #tpu.memory_space<vmem>>, vector<32x16xbf16>
    %c36_96 = arith.constant 36 : index
    %c0_97 = arith.constant 0 : index
    %108 = vector.load %arg11[%c36_96, %c0_97] : memref<118x16xbf16, #tpu.memory_space<vmem>>, vector<32x16xbf16>
    %c38_98 = arith.constant 38 : index
    %c0_99 = arith.constant 0 : index
    %109 = vector.load %arg11[%c38_98, %c0_99] : memref<118x16xbf16, #tpu.memory_space<vmem>>, vector<32x16xbf16>
    %c40_100 = arith.constant 40 : index
    %c0_101 = arith.constant 0 : index
    %110 = vector.load %arg11[%c40_100, %c0_101] : memref<118x16xbf16, #tpu.memory_space<vmem>>, vector<32x16xbf16>
    %c42_102 = arith.constant 42 : index
    %c0_103 = arith.constant 0 : index
    %111 = vector.load %arg11[%c42_102, %c0_103] : memref<118x16xbf16, #tpu.memory_space<vmem>>, vector<32x16xbf16>
    %c44_104 = arith.constant 44 : index
    %c0_105 = arith.constant 0 : index
    %112 = vector.load %arg11[%c44_104, %c0_105] : memref<118x16xbf16, #tpu.memory_space<vmem>>, vector<32x16xbf16>
    %c46_106 = arith.constant 46 : index
    %c0_107 = arith.constant 0 : index
    %113 = vector.load %arg11[%c46_106, %c0_107] : memref<118x16xbf16, #tpu.memory_space<vmem>>, vector<32x16xbf16>
    %c48_108 = arith.constant 48 : index
    %c0_109 = arith.constant 0 : index
    %114 = vector.load %arg11[%c48_108, %c0_109] : memref<118x16xbf16, #tpu.memory_space<vmem>>, vector<32x16xbf16>
    %c50_110 = arith.constant 50 : index
    %c0_111 = arith.constant 0 : index
    %115 = vector.load %arg11[%c50_110, %c0_111] : memref<118x16xbf16, #tpu.memory_space<vmem>>, vector<32x16xbf16>
    %c52_112 = arith.constant 52 : index
    %c0_113 = arith.constant 0 : index
    %116 = vector.load %arg11[%c52_112, %c0_113] : memref<118x16xbf16, #tpu.memory_space<vmem>>, vector<32x16xbf16>
    %c54_114 = arith.constant 54 : index
    %c0_115 = arith.constant 0 : index
    %117 = vector.load %arg11[%c54_114, %c0_115] : memref<118x16xbf16, #tpu.memory_space<vmem>>, vector<32x16xbf16>
    %c56_116 = arith.constant 56 : index
    %c0_117 = arith.constant 0 : index
    %118 = vector.load %arg11[%c56_116, %c0_117] : memref<118x16xbf16, #tpu.memory_space<vmem>>, vector<32x16xbf16>
    %c58_118 = arith.constant 58 : index
    %c0_119 = arith.constant 0 : index
    %119 = vector.load %arg11[%c58_118, %c0_119] : memref<118x16xbf16, #tpu.memory_space<vmem>>, vector<32x16xbf16>
    %c60_120 = arith.constant 60 : index
    %c0_121 = arith.constant 0 : index
    %120 = vector.load %arg11[%c60_120, %c0_121] : memref<118x16xbf16, #tpu.memory_space<vmem>>, vector<32x16xbf16>
    %c62_122 = arith.constant 62 : index
    %c0_123 = arith.constant 0 : index
    %121 = vector.load %arg11[%c62_122, %c0_123] : memref<118x16xbf16, #tpu.memory_space<vmem>>, vector<32x16xbf16>
    %c64_124 = arith.constant 64 : index
    %c0_125 = arith.constant 0 : index
    %122 = vector.load %arg11[%c64_124, %c0_125] : memref<118x16xbf16, #tpu.memory_space<vmem>>, vector<32x16xbf16>
    %c66_126 = arith.constant 66 : index
    %c0_127 = arith.constant 0 : index
    %123 = vector.load %arg11[%c66_126, %c0_127] : memref<118x16xbf16, #tpu.memory_space<vmem>>, vector<32x16xbf16>
    %c68_128 = arith.constant 68 : index
    %c0_129 = arith.constant 0 : index
    %124 = vector.load %arg11[%c68_128, %c0_129] : memref<118x16xbf16, #tpu.memory_space<vmem>>, vector<32x16xbf16>
    %c70_130 = arith.constant 70 : index
    %c0_131 = arith.constant 0 : index
    %125 = vector.load %arg11[%c70_130, %c0_131] : memref<118x16xbf16, #tpu.memory_space<vmem>>, vector<32x16xbf16>
    %c72_132 = arith.constant 72 : index
    %c0_133 = arith.constant 0 : index
    %126 = vector.load %arg11[%c72_132, %c0_133] : memref<118x16xbf16, #tpu.memory_space<vmem>>, vector<32x16xbf16>
    %c74_134 = arith.constant 74 : index
    %c0_135 = arith.constant 0 : index
    %127 = vector.load %arg11[%c74_134, %c0_135] : memref<118x16xbf16, #tpu.memory_space<vmem>>, vector<32x16xbf16>
    %c76_136 = arith.constant 76 : index
    %c0_137 = arith.constant 0 : index
    %128 = vector.load %arg11[%c76_136, %c0_137] : memref<118x16xbf16, #tpu.memory_space<vmem>>, vector<32x16xbf16>
    %c78_138 = arith.constant 78 : index
    %c0_139 = arith.constant 0 : index
    %129 = vector.load %arg11[%c78_138, %c0_139] : memref<118x16xbf16, #tpu.memory_space<vmem>>, vector<32x16xbf16>
    %c80_140 = arith.constant 80 : index
    %c0_141 = arith.constant 0 : index
    %130 = vector.load %arg11[%c80_140, %c0_141] : memref<118x16xbf16, #tpu.memory_space<vmem>>, vector<32x16xbf16>
    %c82_142 = arith.constant 82 : index
    %c0_143 = arith.constant 0 : index
    %131 = vector.load %arg11[%c82_142, %c0_143] : memref<118x16xbf16, #tpu.memory_space<vmem>>, vector<32x16xbf16>
    %c84_144 = arith.constant 84 : index
    %c0_145 = arith.constant 0 : index
    %132 = vector.load %arg11[%c84_144, %c0_145] : memref<118x16xbf16, #tpu.memory_space<vmem>>, vector<32x16xbf16>
    %c86_146 = arith.constant 86 : index
    %c0_147 = arith.constant 0 : index
    %133 = vector.load %arg11[%c86_146, %c0_147] : memref<118x16xbf16, #tpu.memory_space<vmem>>, vector<32x16xbf16>
    %134 = tpu.concatenate %95, %96, %97, %98, %99, %100, %101, %102, %103, %104, %105, %106, %107, %108, %109, %110 in 1 : vector<32x16xbf16>, vector<32x16xbf16>, vector<32x16xbf16>, vector<32x16xbf16>, vector<32x16xbf16>, vector<32x16xbf16>, vector<32x16xbf16>, vector<32x16xbf16>, vector<32x16xbf16>, vector<32x16xbf16>, vector<32x16xbf16>, vector<32x16xbf16>, vector<32x16xbf16>, vector<32x16xbf16>, vector<32x16xbf16>, vector<32x16xbf16> -> vector<32x256xbf16>
    %135 = tpu.concatenate %111, %112, %113, %114, %115, %116, %117, %118, %119, %120, %121, %122, %123, %124, %125, %126 in 1 : vector<32x16xbf16>, vector<32x16xbf16>, vector<32x16xbf16>, vector<32x16xbf16>, vector<32x16xbf16>, vector<32x16xbf16>, vector<32x16xbf16>, vector<32x16xbf16>, vector<32x16xbf16>, vector<32x16xbf16>, vector<32x16xbf16>, vector<32x16xbf16>, vector<32x16xbf16>, vector<32x16xbf16>, vector<32x16xbf16>, vector<32x16xbf16> -> vector<32x256xbf16>
    %136 = tpu.concatenate %127, %128, %129, %130, %131, %132, %133, %94 in 1 : vector<32x16xbf16>, vector<32x16xbf16>, vector<32x16xbf16>, vector<32x16xbf16>, vector<32x16xbf16>, vector<32x16xbf16>, vector<32x16xbf16>, vector<32x128xbf16> -> vector<32x240xbf16>
    %137 = tpu.concatenate %134, %135, %136 in 1 : vector<32x256xbf16>, vector<32x256xbf16>, vector<32x240xbf16> -> vector<32x752xbf16>
    %c1_148 = arith.constant 1 : index
    %c0_149 = arith.constant 0 : index
    %c0_150 = arith.constant 0 : index
    %138 = vector.load %arg4[%c1_148, %c0_149, %c0_150] : memref<6x752x128xbf16, #tpu.memory_space<vmem>>, vector<1x752x128xbf16>
    %139 = vector.shape_cast %138 : vector<1x752x128xbf16> to vector<752x128xbf16>
    %cst_151 = arith.constant dense<0.000000e+00> : vector<32x128xf32>
    %140 = tpu.matmul %137, %139, %cst_151 {dimension_numbers = #tpu.dot_dimension_numbers<[1], [0], [0], [1], [0, 0, 1, 1], [], []>} : vector<32x752xbf16>, vector<752x128xbf16>, vector<32x128xf32> -> vector<32x128xf32>
    %c1_152 = arith.constant 1 : index
    %c0_153 = arith.constant 0 : index
    %c0_154 = arith.constant 0 : index
    %141 = vector.load %arg5[%c1_152, %c0_153, %c0_154] : memref<6x1x128xf32, #tpu.memory_space<vmem>>, vector<1x1x128xf32>
    %142 = vector.shape_cast %141 : vector<1x1x128xf32> to vector<1x128xf32>
    %143 = vector.broadcast %142 : vector<1x128xf32> to vector<32x128xf32>
    %144 = arith.addf %140, %143 : vector<32x128xf32>
    %cst_155 = arith.constant 0.000000e+00 : f32
    %145 = vector.broadcast %cst_155 : f32 to vector<32x128xf32>
    %146 = arith.maximumf %144, %145 : vector<32x128xf32>
    %147 = arith.truncf %146 : vector<32x128xf32> to vector<32x128xbf16>
    %c2 = arith.constant 2 : index
    %c0_156 = arith.constant 0 : index
    %c0_157 = arith.constant 0 : index
    %148 = vector.load %arg2[%c2, %c0_156, %c0_157] : memref<6x128x16xbf16, #tpu.memory_space<vmem>>, vector<1x128x16xbf16>
    %149 = vector.shape_cast %148 : vector<1x128x16xbf16> to vector<128x16xbf16>
    %cst_158 = arith.constant dense<0.000000e+00> : vector<32x16xf32>
    %150 = tpu.matmul %147, %149, %cst_158 {dimension_numbers = #tpu.dot_dimension_numbers<[1], [0], [0], [1], [0, 0, 1, 1], [], []>} : vector<32x128xbf16>, vector<128x16xbf16>, vector<32x16xf32> -> vector<32x16xf32>
    %c2_159 = arith.constant 2 : index
    %c0_160 = arith.constant 0 : index
    %c0_161 = arith.constant 0 : index
    %151 = vector.load %arg3[%c2_159, %c0_160, %c0_161] : memref<6x1x16xf32, #tpu.memory_space<vmem>>, vector<1x1x16xf32>
    %152 = vector.shape_cast %151 : vector<1x1x16xf32> to vector<1x16xf32>
    %153 = vector.broadcast %152 : vector<1x16xf32> to vector<32x16xf32>
    %154 = arith.addf %150, %153 : vector<32x16xf32>
    %155 = arith.truncf %154 : vector<32x16xf32> to vector<32x16xbf16>
    %c48_162 = arith.constant 48 : index
    %c0_163 = arith.constant 0 : index
    %156 = vector.load %arg11[%c48_162, %c0_163] : memref<118x16xbf16, #tpu.memory_space<vmem>>, vector<32x16xbf16>
    tpu.vector_store %arg11[%c48_162, %c0_163], %155 {strides = array<i32>} : memref<118x16xbf16, #tpu.memory_space<vmem>>, vector<32x16xbf16>,
    %157 = vector.extract_strided_slice %146 {offsets = [0, 0], sizes = [2, 128], strides = [1, 1]} : vector<32x128xf32> to vector<2x128xf32>
    %158 = vector.extract_strided_slice %146 {offsets = [0, 0], sizes = [30, 128], strides = [1, 1]} : vector<32x128xf32> to vector<30x128xf32>
    %159 = tpu.concatenate %157, %158 in 0 : vector<2x128xf32>, vector<30x128xf32> -> vector<32x128xf32>
    %160 = vector.extract_strided_slice %146 {offsets = [2, 0], sizes = [30, 128], strides = [1, 1]} : vector<32x128xf32> to vector<30x128xf32>
    %161 = vector.extract_strided_slice %146 {offsets = [30, 0], sizes = [2, 128], strides = [1, 1]} : vector<32x128xf32> to vector<2x128xf32>
    %162 = tpu.concatenate %160, %161 in 0 : vector<30x128xf32>, vector<2x128xf32> -> vector<32x128xf32>
    %163 = arith.maximumf %159, %146 : vector<32x128xf32>
    %164 = arith.maximumf %163, %162 : vector<32x128xf32>
    %165 = arith.truncf %164 : vector<32x128xf32> to vector<32x128xbf16>
    %c10_164 = arith.constant 10 : index
    %c0_165 = arith.constant 0 : index
    %166 = vector.load %arg11[%c10_164, %c0_165] : memref<118x16xbf16, #tpu.memory_space<vmem>>, vector<32x16xbf16>
    %c12_166 = arith.constant 12 : index
    %c0_167 = arith.constant 0 : index
    %167 = vector.load %arg11[%c12_166, %c0_167] : memref<118x16xbf16, #tpu.memory_space<vmem>>, vector<32x16xbf16>
    %c14_168 = arith.constant 14 : index
    %c0_169 = arith.constant 0 : index
    %168 = vector.load %arg11[%c14_168, %c0_169] : memref<118x16xbf16, #tpu.memory_space<vmem>>, vector<32x16xbf16>
    %c16_170 = arith.constant 16 : index
    %c0_171 = arith.constant 0 : index
    %169 = vector.load %arg11[%c16_170, %c0_171] : memref<118x16xbf16, #tpu.memory_space<vmem>>, vector<32x16xbf16>
    %c18_172 = arith.constant 18 : index
    %c0_173 = arith.constant 0 : index
    %170 = vector.load %arg11[%c18_172, %c0_173] : memref<118x16xbf16, #tpu.memory_space<vmem>>, vector<32x16xbf16>
    %c20_174 = arith.constant 20 : index
    %c0_175 = arith.constant 0 : index
    %171 = vector.load %arg11[%c20_174, %c0_175] : memref<118x16xbf16, #tpu.memory_space<vmem>>, vector<32x16xbf16>
    %c22_176 = arith.constant 22 : index
    %c0_177 = arith.constant 0 : index
    %172 = vector.load %arg11[%c22_176, %c0_177] : memref<118x16xbf16, #tpu.memory_space<vmem>>, vector<32x16xbf16>
    %c24_178 = arith.constant 24 : index
    %c0_179 = arith.constant 0 : index
    %173 = vector.load %arg11[%c24_178, %c0_179] : memref<118x16xbf16, #tpu.memory_space<vmem>>, vector<32x16xbf16>
    %c26_180 = arith.constant 26 : index
    %c0_181 = arith.constant 0 : index
    %174 = vector.load %arg11[%c26_180, %c0_181] : memref<118x16xbf16, #tpu.memory_space<vmem>>, vector<32x16xbf16>
    %c28_182 = arith.constant 28 : index
    %c0_183 = arith.constant 0 : index
    %175 = vector.load %arg11[%c28_182, %c0_183] : memref<118x16xbf16, #tpu.memory_space<vmem>>, vector<32x16xbf16>
    %c30_184 = arith.constant 30 : index
    %c0_185 = arith.constant 0 : index
    %176 = vector.load %arg11[%c30_184, %c0_185] : memref<118x16xbf16, #tpu.memory_space<vmem>>, vector<32x16xbf16>
    %c32_186 = arith.constant 32 : index
    %c0_187 = arith.constant 0 : index
    %177 = vector.load %arg11[%c32_186, %c0_187] : memref<118x16xbf16, #tpu.memory_space<vmem>>, vector<32x16xbf16>
    %c34_188 = arith.constant 34 : index
    %c0_189 = arith.constant 0 : index
    %178 = vector.load %arg11[%c34_188, %c0_189] : memref<118x16xbf16, #tpu.memory_space<vmem>>, vector<32x16xbf16>
    %c36_190 = arith.constant 36 : index
    %c0_191 = arith.constant 0 : index
    %179 = vector.load %arg11[%c36_190, %c0_191] : memref<118x16xbf16, #tpu.memory_space<vmem>>, vector<32x16xbf16>
    %c38_192 = arith.constant 38 : index
    %c0_193 = arith.constant 0 : index
    %180 = vector.load %arg11[%c38_192, %c0_193] : memref<118x16xbf16, #tpu.memory_space<vmem>>, vector<32x16xbf16>
    %c40_194 = arith.constant 40 : index
    %c0_195 = arith.constant 0 : index
    %181 = vector.load %arg11[%c40_194, %c0_195] : memref<118x16xbf16, #tpu.memory_space<vmem>>, vector<32x16xbf16>
    %c42_196 = arith.constant 42 : index
    %c0_197 = arith.constant 0 : index
    %182 = vector.load %arg11[%c42_196, %c0_197] : memref<118x16xbf16, #tpu.memory_space<vmem>>, vector<32x16xbf16>
    %c44_198 = arith.constant 44 : index
    %c0_199 = arith.constant 0 : index
    %183 = vector.load %arg11[%c44_198, %c0_199] : memref<118x16xbf16, #tpu.memory_space<vmem>>, vector<32x16xbf16>
    %c46_200 = arith.constant 46 : index
    %c0_201 = arith.constant 0 : index
    %184 = vector.load %arg11[%c46_200, %c0_201] : memref<118x16xbf16, #tpu.memory_space<vmem>>, vector<32x16xbf16>
    %c48_202 = arith.constant 48 : index
    %c0_203 = arith.constant 0 : index
    %185 = vector.load %arg11[%c48_202, %c0_203] : memref<118x16xbf16, #tpu.memory_space<vmem>>, vector<32x16xbf16>
    %c50_204 = arith.constant 50 : index
    %c0_205 = arith.constant 0 : index
    %186 = vector.load %arg11[%c50_204, %c0_205] : memref<118x16xbf16, #tpu.memory_space<vmem>>, vector<32x16xbf16>
    %c52_206 = arith.constant 52 : index
    %c0_207 = arith.constant 0 : index
    %187 = vector.load %arg11[%c52_206, %c0_207] : memref<118x16xbf16, #tpu.memory_space<vmem>>, vector<32x16xbf16>
    %c54_208 = arith.constant 54 : index
    %c0_209 = arith.constant 0 : index
    %188 = vector.load %arg11[%c54_208, %c0_209] : memref<118x16xbf16, #tpu.memory_space<vmem>>, vector<32x16xbf16>
    %c56_210 = arith.constant 56 : index
    %c0_211 = arith.constant 0 : index
    %189 = vector.load %arg11[%c56_210, %c0_211] : memref<118x16xbf16, #tpu.memory_space<vmem>>, vector<32x16xbf16>
    %c58_212 = arith.constant 58 : index
    %c0_213 = arith.constant 0 : index
    %190 = vector.load %arg11[%c58_212, %c0_213] : memref<118x16xbf16, #tpu.memory_space<vmem>>, vector<32x16xbf16>
    %c60_214 = arith.constant 60 : index
    %c0_215 = arith.constant 0 : index
    %191 = vector.load %arg11[%c60_214, %c0_215] : memref<118x16xbf16, #tpu.memory_space<vmem>>, vector<32x16xbf16>
    %c62_216 = arith.constant 62 : index
    %c0_217 = arith.constant 0 : index
    %192 = vector.load %arg11[%c62_216, %c0_217] : memref<118x16xbf16, #tpu.memory_space<vmem>>, vector<32x16xbf16>
    %c64_218 = arith.constant 64 : index
    %c0_219 = arith.constant 0 : index
    %193 = vector.load %arg11[%c64_218, %c0_219] : memref<118x16xbf16, #tpu.memory_space<vmem>>, vector<32x16xbf16>
    %c66_220 = arith.constant 66 : index
    %c0_221 = arith.constant 0 : index
    %194 = vector.load %arg11[%c66_220, %c0_221] : memref<118x16xbf16, #tpu.memory_space<vmem>>, vector<32x16xbf16>
    %c68_222 = arith.constant 68 : index
    %c0_223 = arith.constant 0 : index
    %195 = vector.load %arg11[%c68_222, %c0_223] : memref<118x16xbf16, #tpu.memory_space<vmem>>, vector<32x16xbf16>
    %c70_224 = arith.constant 70 : index
    %c0_225 = arith.constant 0 : index
    %196 = vector.load %arg11[%c70_224, %c0_225] : memref<118x16xbf16, #tpu.memory_space<vmem>>, vector<32x16xbf16>
    %c72_226 = arith.constant 72 : index
    %c0_227 = arith.constant 0 : index
    %197 = vector.load %arg11[%c72_226, %c0_227] : memref<118x16xbf16, #tpu.memory_space<vmem>>, vector<32x16xbf16>
    %c74_228 = arith.constant 74 : index
    %c0_229 = arith.constant 0 : index
    %198 = vector.load %arg11[%c74_228, %c0_229] : memref<118x16xbf16, #tpu.memory_space<vmem>>, vector<32x16xbf16>
    %c76_230 = arith.constant 76 : index
    %c0_231 = arith.constant 0 : index
    %199 = vector.load %arg11[%c76_230, %c0_231] : memref<118x16xbf16, #tpu.memory_space<vmem>>, vector<32x16xbf16>
    %c78_232 = arith.constant 78 : index
    %c0_233 = arith.constant 0 : index
    %200 = vector.load %arg11[%c78_232, %c0_233] : memref<118x16xbf16, #tpu.memory_space<vmem>>, vector<32x16xbf16>
    %c80_234 = arith.constant 80 : index
    %c0_235 = arith.constant 0 : index
    %201 = vector.load %arg11[%c80_234, %c0_235] : memref<118x16xbf16, #tpu.memory_space<vmem>>, vector<32x16xbf16>
    %c82_236 = arith.constant 82 : index
    %c0_237 = arith.constant 0 : index
    %202 = vector.load %arg11[%c82_236, %c0_237] : memref<118x16xbf16, #tpu.memory_space<vmem>>, vector<32x16xbf16>
    %c84_238 = arith.constant 84 : index
    %c0_239 = arith.constant 0 : index
    %203 = vector.load %arg11[%c84_238, %c0_239] : memref<118x16xbf16, #tpu.memory_space<vmem>>, vector<32x16xbf16>
    %c86_240 = arith.constant 86 : index
    %c0_241 = arith.constant 0 : index
    %204 = vector.load %arg11[%c86_240, %c0_241] : memref<118x16xbf16, #tpu.memory_space<vmem>>, vector<32x16xbf16>
    %205 = tpu.concatenate %166, %167, %168, %169, %170, %171, %172, %173, %174, %175, %176, %177, %178, %179, %180, %181 in 1 : vector<32x16xbf16>, vector<32x16xbf16>, vector<32x16xbf16>, vector<32x16xbf16>, vector<32x16xbf16>, vector<32x16xbf16>, vector<32x16xbf16>, vector<32x16xbf16>, vector<32x16xbf16>, vector<32x16xbf16>, vector<32x16xbf16>, vector<32x16xbf16>, vector<32x16xbf16>, vector<32x16xbf16>, vector<32x16xbf16>, vector<32x16xbf16> -> vector<32x256xbf16>
    %206 = tpu.concatenate %182, %183, %184, %185, %186, %187, %188, %189, %190, %191, %192, %193, %194, %195, %196, %197 in 1 : vector<32x16xbf16>, vector<32x16xbf16>, vector<32x16xbf16>, vector<32x16xbf16>, vector<32x16xbf16>, vector<32x16xbf16>, vector<32x16xbf16>, vector<32x16xbf16>, vector<32x16xbf16>, vector<32x16xbf16>, vector<32x16xbf16>, vector<32x16xbf16>, vector<32x16xbf16>, vector<32x16xbf16>, vector<32x16xbf16>, vector<32x16xbf16> -> vector<32x256xbf16>
    %207 = tpu.concatenate %198, %199, %200, %201, %202, %203, %204, %165 in 1 : vector<32x16xbf16>, vector<32x16xbf16>, vector<32x16xbf16>, vector<32x16xbf16>, vector<32x16xbf16>, vector<32x16xbf16>, vector<32x16xbf16>, vector<32x128xbf16> -> vector<32x240xbf16>
    %208 = tpu.concatenate %205, %206, %207 in 1 : vector<32x256xbf16>, vector<32x256xbf16>, vector<32x240xbf16> -> vector<32x752xbf16>
    %c2_242 = arith.constant 2 : index
    %c0_243 = arith.constant 0 : index
    %c0_244 = arith.constant 0 : index
    %209 = vector.load %arg4[%c2_242, %c0_243, %c0_244] : memref<6x752x128xbf16, #tpu.memory_space<vmem>>, vector<1x752x128xbf16>
    %210 = vector.shape_cast %209 : vector<1x752x128xbf16> to vector<752x128xbf16>
    %cst_245 = arith.constant dense<0.000000e+00> : vector<32x128xf32>
    %211 = tpu.matmul %208, %210, %cst_245 {dimension_numbers = #tpu.dot_dimension_numbers<[1], [0], [0], [1], [0, 0, 1, 1], [], []>} : vector<32x752xbf16>, vector<752x128xbf16>, vector<32x128xf32> -> vector<32x128xf32>
    %c2_246 = arith.constant 2 : index
    %c0_247 = arith.constant 0 : index
    %c0_248 = arith.constant 0 : index
    %212 = vector.load %arg5[%c2_246, %c0_247, %c0_248] : memref<6x1x128xf32, #tpu.memory_space<vmem>>, vector<1x1x128xf32>
    %213 = vector.shape_cast %212 : vector<1x1x128xf32> to vector<1x128xf32>
    %214 = vector.broadcast %213 : vector<1x128xf32> to vector<32x128xf32>
    %215 = arith.addf %211, %214 : vector<32x128xf32>
    %cst_249 = arith.constant 0.000000e+00 : f32
    %216 = vector.broadcast %cst_249 : f32 to vector<32x128xf32>
    %217 = arith.maximumf %215, %216 : vector<32x128xf32>
    %c0_250 = arith.constant 0 : index
    %c0_251 = arith.constant 0 : index
    %218 = vector.load %arg12[%c0_250, %c0_251] : memref<32x128xf32, #tpu.memory_space<vmem>>, vector<32x128xf32>
    %219 = arith.truncf %218 : vector<32x128xf32> to vector<32x128xbf16>
    %c0_252 = arith.constant 0 : index
    %c0_253 = arith.constant 0 : index
    %c0_254 = arith.constant 0 : index
    %220 = vector.load %arg6[%c0_252, %c0_253, %c0_254] : memref<2x128x128xbf16, #tpu.memory_space<vmem>>, vector<1x128x128xbf16>
    %221 = vector.shape_cast %220 : vector<1x128x128xbf16> to vector<128x128xbf16>
    %cst_255 = arith.constant dense<0.000000e+00> : vector<32x128xf32>
    %222 = tpu.matmul %219, %221, %cst_255 {dimension_numbers = #tpu.dot_dimension_numbers<[1], [0], [0], [1], [0, 0, 1, 1], [], []>} : vector<32x128xbf16>, vector<128x128xbf16>, vector<32x128xf32> -> vector<32x128xf32>
    %c0_256 = arith.constant 0 : index
    %c0_257 = arith.constant 0 : index
    %c0_258 = arith.constant 0 : index
    %223 = vector.load %arg7[%c0_256, %c0_257, %c0_258] : memref<2x1x128xf32, #tpu.memory_space<vmem>>, vector<1x1x128xf32>
    %224 = vector.shape_cast %223 : vector<1x1x128xf32> to vector<1x128xf32>
    %225 = vector.broadcast %224 : vector<1x128xf32> to vector<32x128xf32>
    %226 = arith.addf %222, %225 : vector<32x128xf32>
    %227 = arith.addf %217, %226 : vector<32x128xf32>
    %c0_259 = arith.constant 0 : index
    %c0_260 = arith.constant 0 : index
    %228 = vector.load %arg12[%c0_259, %c0_260] : memref<32x128xf32, #tpu.memory_space<vmem>>, vector<32x128xf32>
    tpu.vector_store %arg12[%c0_259, %c0_260], %227 {strides = array<i32>} : memref<32x128xf32, #tpu.memory_space<vmem>>, vector<32x128xf32>,
    %cst_261 = arith.constant 0.000000e+00 : f32
    %229 = vector.broadcast %cst_261 : f32 to vector<32x128xf32>
    %230 = arith.maximumf %227, %229 : vector<32x128xf32>
    %231 = arith.truncf %230 : vector<32x128xf32> to vector<32x128xbf16>
    %c3 = arith.constant 3 : index
    %c0_262 = arith.constant 0 : index
    %c0_263 = arith.constant 0 : index
    %232 = vector.load %arg2[%c3, %c0_262, %c0_263] : memref<6x128x16xbf16, #tpu.memory_space<vmem>>, vector<1x128x16xbf16>
    %233 = vector.shape_cast %232 : vector<1x128x16xbf16> to vector<128x16xbf16>
    %cst_264 = arith.constant dense<0.000000e+00> : vector<32x16xf32>
    %234 = tpu.matmul %231, %233, %cst_264 {dimension_numbers = #tpu.dot_dimension_numbers<[1], [0], [0], [1], [0, 0, 1, 1], [], []>} : vector<32x128xbf16>, vector<128x16xbf16>, vector<32x16xf32> -> vector<32x16xf32>
    %c3_265 = arith.constant 3 : index
    %c0_266 = arith.constant 0 : index
    %c0_267 = arith.constant 0 : index
    %235 = vector.load %arg3[%c3_265, %c0_266, %c0_267] : memref<6x1x16xf32, #tpu.memory_space<vmem>>, vector<1x1x16xf32>
    %236 = vector.shape_cast %235 : vector<1x1x16xf32> to vector<1x16xf32>
    %237 = vector.broadcast %236 : vector<1x16xf32> to vector<32x16xf32>
    %238 = arith.addf %234, %237 : vector<32x16xf32>
    %239 = arith.truncf %238 : vector<32x16xf32> to vector<32x16xbf16>
    %c48_268 = arith.constant 48 : index
    %c0_269 = arith.constant 0 : index
    %240 = vector.load %arg11[%c48_268, %c0_269] : memref<118x16xbf16, #tpu.memory_space<vmem>>, vector<32x16xbf16>
    tpu.vector_store %arg11[%c48_268, %c0_269], %239 {strides = array<i32>} : memref<118x16xbf16, #tpu.memory_space<vmem>>, vector<32x16xbf16>,
    %241 = vector.extract_strided_slice %230 {offsets = [0, 0], sizes = [2, 128], strides = [1, 1]} : vector<32x128xf32> to vector<2x128xf32>
    %242 = vector.extract_strided_slice %230 {offsets = [0, 0], sizes = [30, 128], strides = [1, 1]} : vector<32x128xf32> to vector<30x128xf32>
    %243 = tpu.concatenate %241, %242 in 0 : vector<2x128xf32>, vector<30x128xf32> -> vector<32x128xf32>
    %244 = vector.extract_strided_slice %230 {offsets = [2, 0], sizes = [30, 128], strides = [1, 1]} : vector<32x128xf32> to vector<30x128xf32>
    %245 = vector.extract_strided_slice %230 {offsets = [30, 0], sizes = [2, 128], strides = [1, 1]} : vector<32x128xf32> to vector<2x128xf32>
    %246 = tpu.concatenate %244, %245 in 0 : vector<30x128xf32>, vector<2x128xf32> -> vector<32x128xf32>
    %247 = arith.maximumf %243, %230 : vector<32x128xf32>
    %248 = arith.maximumf %247, %246 : vector<32x128xf32>
    %249 = arith.truncf %248 : vector<32x128xf32> to vector<32x128xbf16>
    %c10_270 = arith.constant 10 : index
    %c0_271 = arith.constant 0 : index
    %250 = vector.load %arg11[%c10_270, %c0_271] : memref<118x16xbf16, #tpu.memory_space<vmem>>, vector<32x16xbf16>
    %c12_272 = arith.constant 12 : index
    %c0_273 = arith.constant 0 : index
    %251 = vector.load %arg11[%c12_272, %c0_273] : memref<118x16xbf16, #tpu.memory_space<vmem>>, vector<32x16xbf16>
    %c14_274 = arith.constant 14 : index
    %c0_275 = arith.constant 0 : index
    %252 = vector.load %arg11[%c14_274, %c0_275] : memref<118x16xbf16, #tpu.memory_space<vmem>>, vector<32x16xbf16>
    %c16_276 = arith.constant 16 : index
    %c0_277 = arith.constant 0 : index
    %253 = vector.load %arg11[%c16_276, %c0_277] : memref<118x16xbf16, #tpu.memory_space<vmem>>, vector<32x16xbf16>
    %c18_278 = arith.constant 18 : index
    %c0_279 = arith.constant 0 : index
    %254 = vector.load %arg11[%c18_278, %c0_279] : memref<118x16xbf16, #tpu.memory_space<vmem>>, vector<32x16xbf16>
    %c20_280 = arith.constant 20 : index
    %c0_281 = arith.constant 0 : index
    %255 = vector.load %arg11[%c20_280, %c0_281] : memref<118x16xbf16, #tpu.memory_space<vmem>>, vector<32x16xbf16>
    %c22_282 = arith.constant 22 : index
    %c0_283 = arith.constant 0 : index
    %256 = vector.load %arg11[%c22_282, %c0_283] : memref<118x16xbf16, #tpu.memory_space<vmem>>, vector<32x16xbf16>
    %c24_284 = arith.constant 24 : index
    %c0_285 = arith.constant 0 : index
    %257 = vector.load %arg11[%c24_284, %c0_285] : memref<118x16xbf16, #tpu.memory_space<vmem>>, vector<32x16xbf16>
    %c26_286 = arith.constant 26 : index
    %c0_287 = arith.constant 0 : index
    %258 = vector.load %arg11[%c26_286, %c0_287] : memref<118x16xbf16, #tpu.memory_space<vmem>>, vector<32x16xbf16>
    %c28_288 = arith.constant 28 : index
    %c0_289 = arith.constant 0 : index
    %259 = vector.load %arg11[%c28_288, %c0_289] : memref<118x16xbf16, #tpu.memory_space<vmem>>, vector<32x16xbf16>
    %c30_290 = arith.constant 30 : index
    %c0_291 = arith.constant 0 : index
    %260 = vector.load %arg11[%c30_290, %c0_291] : memref<118x16xbf16, #tpu.memory_space<vmem>>, vector<32x16xbf16>
    %c32_292 = arith.constant 32 : index
    %c0_293 = arith.constant 0 : index
    %261 = vector.load %arg11[%c32_292, %c0_293] : memref<118x16xbf16, #tpu.memory_space<vmem>>, vector<32x16xbf16>
    %c34_294 = arith.constant 34 : index
    %c0_295 = arith.constant 0 : index
    %262 = vector.load %arg11[%c34_294, %c0_295] : memref<118x16xbf16, #tpu.memory_space<vmem>>, vector<32x16xbf16>
    %c36_296 = arith.constant 36 : index
    %c0_297 = arith.constant 0 : index
    %263 = vector.load %arg11[%c36_296, %c0_297] : memref<118x16xbf16, #tpu.memory_space<vmem>>, vector<32x16xbf16>
    %c38_298 = arith.constant 38 : index
    %c0_299 = arith.constant 0 : index
    %264 = vector.load %arg11[%c38_298, %c0_299] : memref<118x16xbf16, #tpu.memory_space<vmem>>, vector<32x16xbf16>
    %c40_300 = arith.constant 40 : index
    %c0_301 = arith.constant 0 : index
    %265 = vector.load %arg11[%c40_300, %c0_301] : memref<118x16xbf16, #tpu.memory_space<vmem>>, vector<32x16xbf16>
    %c42_302 = arith.constant 42 : index
    %c0_303 = arith.constant 0 : index
    %266 = vector.load %arg11[%c42_302, %c0_303] : memref<118x16xbf16, #tpu.memory_space<vmem>>, vector<32x16xbf16>
    %c44_304 = arith.constant 44 : index
    %c0_305 = arith.constant 0 : index
    %267 = vector.load %arg11[%c44_304, %c0_305] : memref<118x16xbf16, #tpu.memory_space<vmem>>, vector<32x16xbf16>
    %c46_306 = arith.constant 46 : index
    %c0_307 = arith.constant 0 : index
    %268 = vector.load %arg11[%c46_306, %c0_307] : memref<118x16xbf16, #tpu.memory_space<vmem>>, vector<32x16xbf16>
    %c48_308 = arith.constant 48 : index
    %c0_309 = arith.constant 0 : index
    %269 = vector.load %arg11[%c48_308, %c0_309] : memref<118x16xbf16, #tpu.memory_space<vmem>>, vector<32x16xbf16>
    %c50_310 = arith.constant 50 : index
    %c0_311 = arith.constant 0 : index
    %270 = vector.load %arg11[%c50_310, %c0_311] : memref<118x16xbf16, #tpu.memory_space<vmem>>, vector<32x16xbf16>
    %c52_312 = arith.constant 52 : index
    %c0_313 = arith.constant 0 : index
    %271 = vector.load %arg11[%c52_312, %c0_313] : memref<118x16xbf16, #tpu.memory_space<vmem>>, vector<32x16xbf16>
    %c54_314 = arith.constant 54 : index
    %c0_315 = arith.constant 0 : index
    %272 = vector.load %arg11[%c54_314, %c0_315] : memref<118x16xbf16, #tpu.memory_space<vmem>>, vector<32x16xbf16>
    %c56_316 = arith.constant 56 : index
    %c0_317 = arith.constant 0 : index
    %273 = vector.load %arg11[%c56_316, %c0_317] : memref<118x16xbf16, #tpu.memory_space<vmem>>, vector<32x16xbf16>
    %c58_318 = arith.constant 58 : index
    %c0_319 = arith.constant 0 : index
    %274 = vector.load %arg11[%c58_318, %c0_319] : memref<118x16xbf16, #tpu.memory_space<vmem>>, vector<32x16xbf16>
    %c60_320 = arith.constant 60 : index
    %c0_321 = arith.constant 0 : index
    %275 = vector.load %arg11[%c60_320, %c0_321] : memref<118x16xbf16, #tpu.memory_space<vmem>>, vector<32x16xbf16>
    %c62_322 = arith.constant 62 : index
    %c0_323 = arith.constant 0 : index
    %276 = vector.load %arg11[%c62_322, %c0_323] : memref<118x16xbf16, #tpu.memory_space<vmem>>, vector<32x16xbf16>
    %c64_324 = arith.constant 64 : index
    %c0_325 = arith.constant 0 : index
    %277 = vector.load %arg11[%c64_324, %c0_325] : memref<118x16xbf16, #tpu.memory_space<vmem>>, vector<32x16xbf16>
    %c66_326 = arith.constant 66 : index
    %c0_327 = arith.constant 0 : index
    %278 = vector.load %arg11[%c66_326, %c0_327] : memref<118x16xbf16, #tpu.memory_space<vmem>>, vector<32x16xbf16>
    %c68_328 = arith.constant 68 : index
    %c0_329 = arith.constant 0 : index
    %279 = vector.load %arg11[%c68_328, %c0_329] : memref<118x16xbf16, #tpu.memory_space<vmem>>, vector<32x16xbf16>
    %c70_330 = arith.constant 70 : index
    %c0_331 = arith.constant 0 : index
    %280 = vector.load %arg11[%c70_330, %c0_331] : memref<118x16xbf16, #tpu.memory_space<vmem>>, vector<32x16xbf16>
    %c72_332 = arith.constant 72 : index
    %c0_333 = arith.constant 0 : index
    %281 = vector.load %arg11[%c72_332, %c0_333] : memref<118x16xbf16, #tpu.memory_space<vmem>>, vector<32x16xbf16>
    %c74_334 = arith.constant 74 : index
    %c0_335 = arith.constant 0 : index
    %282 = vector.load %arg11[%c74_334, %c0_335] : memref<118x16xbf16, #tpu.memory_space<vmem>>, vector<32x16xbf16>
    %c76_336 = arith.constant 76 : index
    %c0_337 = arith.constant 0 : index
    %283 = vector.load %arg11[%c76_336, %c0_337] : memref<118x16xbf16, #tpu.memory_space<vmem>>, vector<32x16xbf16>
    %c78_338 = arith.constant 78 : index
    %c0_339 = arith.constant 0 : index
    %284 = vector.load %arg11[%c78_338, %c0_339] : memref<118x16xbf16, #tpu.memory_space<vmem>>, vector<32x16xbf16>
    %c80_340 = arith.constant 80 : index
    %c0_341 = arith.constant 0 : index
    %285 = vector.load %arg11[%c80_340, %c0_341] : memref<118x16xbf16, #tpu.memory_space<vmem>>, vector<32x16xbf16>
    %c82_342 = arith.constant 82 : index
    %c0_343 = arith.constant 0 : index
    %286 = vector.load %arg11[%c82_342, %c0_343] : memref<118x16xbf16, #tpu.memory_space<vmem>>, vector<32x16xbf16>
    %c84_344 = arith.constant 84 : index
    %c0_345 = arith.constant 0 : index
    %287 = vector.load %arg11[%c84_344, %c0_345] : memref<118x16xbf16, #tpu.memory_space<vmem>>, vector<32x16xbf16>
    %c86_346 = arith.constant 86 : index
    %c0_347 = arith.constant 0 : index
    %288 = vector.load %arg11[%c86_346, %c0_347] : memref<118x16xbf16, #tpu.memory_space<vmem>>, vector<32x16xbf16>
    %289 = tpu.concatenate %250, %251, %252, %253, %254, %255, %256, %257, %258, %259, %260, %261, %262, %263, %264, %265 in 1 : vector<32x16xbf16>, vector<32x16xbf16>, vector<32x16xbf16>, vector<32x16xbf16>, vector<32x16xbf16>, vector<32x16xbf16>, vector<32x16xbf16>, vector<32x16xbf16>, vector<32x16xbf16>, vector<32x16xbf16>, vector<32x16xbf16>, vector<32x16xbf16>, vector<32x16xbf16>, vector<32x16xbf16>, vector<32x16xbf16>, vector<32x16xbf16> -> vector<32x256xbf16>
    %290 = tpu.concatenate %266, %267, %268, %269, %270, %271, %272, %273, %274, %275, %276, %277, %278, %279, %280, %281 in 1 : vector<32x16xbf16>, vector<32x16xbf16>, vector<32x16xbf16>, vector<32x16xbf16>, vector<32x16xbf16>, vector<32x16xbf16>, vector<32x16xbf16>, vector<32x16xbf16>, vector<32x16xbf16>, vector<32x16xbf16>, vector<32x16xbf16>, vector<32x16xbf16>, vector<32x16xbf16>, vector<32x16xbf16>, vector<32x16xbf16>, vector<32x16xbf16> -> vector<32x256xbf16>
    %291 = tpu.concatenate %282, %283, %284, %285, %286, %287, %288, %249 in 1 : vector<32x16xbf16>, vector<32x16xbf16>, vector<32x16xbf16>, vector<32x16xbf16>, vector<32x16xbf16>, vector<32x16xbf16>, vector<32x16xbf16>, vector<32x128xbf16> -> vector<32x240xbf16>
    %292 = tpu.concatenate %289, %290, %291 in 1 : vector<32x256xbf16>, vector<32x256xbf16>, vector<32x240xbf16> -> vector<32x752xbf16>
    %c3_348 = arith.constant 3 : index
    %c0_349 = arith.constant 0 : index
    %c0_350 = arith.constant 0 : index
    %293 = vector.load %arg4[%c3_348, %c0_349, %c0_350] : memref<6x752x128xbf16, #tpu.memory_space<vmem>>, vector<1x752x128xbf16>
    %294 = vector.shape_cast %293 : vector<1x752x128xbf16> to vector<752x128xbf16>
    %cst_351 = arith.constant dense<0.000000e+00> : vector<32x128xf32>
    %295 = tpu.matmul %292, %294, %cst_351 {dimension_numbers = #tpu.dot_dimension_numbers<[1], [0], [0], [1], [0, 0, 1, 1], [], []>} : vector<32x752xbf16>, vector<752x128xbf16>, vector<32x128xf32> -> vector<32x128xf32>
    %c3_352 = arith.constant 3 : index
    %c0_353 = arith.constant 0 : index
    %c0_354 = arith.constant 0 : index
    %296 = vector.load %arg5[%c3_352, %c0_353, %c0_354] : memref<6x1x128xf32, #tpu.memory_space<vmem>>, vector<1x1x128xf32>
    %297 = vector.shape_cast %296 : vector<1x1x128xf32> to vector<1x128xf32>
    %298 = vector.broadcast %297 : vector<1x128xf32> to vector<32x128xf32>
    %299 = arith.addf %295, %298 : vector<32x128xf32>
    %cst_355 = arith.constant 0.000000e+00 : f32
    %300 = vector.broadcast %cst_355 : f32 to vector<32x128xf32>
    %301 = arith.maximumf %299, %300 : vector<32x128xf32>
    %302 = arith.truncf %301 : vector<32x128xf32> to vector<32x128xbf16>
    %c4 = arith.constant 4 : index
    %c0_356 = arith.constant 0 : index
    %c0_357 = arith.constant 0 : index
    %303 = vector.load %arg2[%c4, %c0_356, %c0_357] : memref<6x128x16xbf16, #tpu.memory_space<vmem>>, vector<1x128x16xbf16>
    %304 = vector.shape_cast %303 : vector<1x128x16xbf16> to vector<128x16xbf16>
    %cst_358 = arith.constant dense<0.000000e+00> : vector<32x16xf32>
    %305 = tpu.matmul %302, %304, %cst_358 {dimension_numbers = #tpu.dot_dimension_numbers<[1], [0], [0], [1], [0, 0, 1, 1], [], []>} : vector<32x128xbf16>, vector<128x16xbf16>, vector<32x16xf32> -> vector<32x16xf32>
    %c4_359 = arith.constant 4 : index
    %c0_360 = arith.constant 0 : index
    %c0_361 = arith.constant 0 : index
    %306 = vector.load %arg3[%c4_359, %c0_360, %c0_361] : memref<6x1x16xf32, #tpu.memory_space<vmem>>, vector<1x1x16xf32>
    %307 = vector.shape_cast %306 : vector<1x1x16xf32> to vector<1x16xf32>
    %308 = vector.broadcast %307 : vector<1x16xf32> to vector<32x16xf32>
    %309 = arith.addf %305, %308 : vector<32x16xf32>
    %310 = arith.truncf %309 : vector<32x16xf32> to vector<32x16xbf16>
    %c48_362 = arith.constant 48 : index
    %c0_363 = arith.constant 0 : index
    %311 = vector.load %arg11[%c48_362, %c0_363] : memref<118x16xbf16, #tpu.memory_space<vmem>>, vector<32x16xbf16>
    tpu.vector_store %arg11[%c48_362, %c0_363], %310 {strides = array<i32>} : memref<118x16xbf16, #tpu.memory_space<vmem>>, vector<32x16xbf16>,
    %312 = vector.extract_strided_slice %301 {offsets = [0, 0], sizes = [2, 128], strides = [1, 1]} : vector<32x128xf32> to vector<2x128xf32>
    %313 = vector.extract_strided_slice %301 {offsets = [0, 0], sizes = [30, 128], strides = [1, 1]} : vector<32x128xf32> to vector<30x128xf32>
    %314 = tpu.concatenate %312, %313 in 0 : vector<2x128xf32>, vector<30x128xf32> -> vector<32x128xf32>
    %315 = vector.extract_strided_slice %301 {offsets = [2, 0], sizes = [30, 128], strides = [1, 1]} : vector<32x128xf32> to vector<30x128xf32>
    %316 = vector.extract_strided_slice %301 {offsets = [30, 0], sizes = [2, 128], strides = [1, 1]} : vector<32x128xf32> to vector<2x128xf32>
    %317 = tpu.concatenate %315, %316 in 0 : vector<30x128xf32>, vector<2x128xf32> -> vector<32x128xf32>
    %318 = arith.maximumf %314, %301 : vector<32x128xf32>
    %319 = arith.maximumf %318, %317 : vector<32x128xf32>
    %320 = arith.truncf %319 : vector<32x128xf32> to vector<32x128xbf16>
    %c10_364 = arith.constant 10 : index
    %c0_365 = arith.constant 0 : index
    %321 = vector.load %arg11[%c10_364, %c0_365] : memref<118x16xbf16, #tpu.memory_space<vmem>>, vector<32x16xbf16>
    %c12_366 = arith.constant 12 : index
    %c0_367 = arith.constant 0 : index
    %322 = vector.load %arg11[%c12_366, %c0_367] : memref<118x16xbf16, #tpu.memory_space<vmem>>, vector<32x16xbf16>
    %c14_368 = arith.constant 14 : index
    %c0_369 = arith.constant 0 : index
    %323 = vector.load %arg11[%c14_368, %c0_369] : memref<118x16xbf16, #tpu.memory_space<vmem>>, vector<32x16xbf16>
    %c16_370 = arith.constant 16 : index
    %c0_371 = arith.constant 0 : index
    %324 = vector.load %arg11[%c16_370, %c0_371] : memref<118x16xbf16, #tpu.memory_space<vmem>>, vector<32x16xbf16>
    %c18_372 = arith.constant 18 : index
    %c0_373 = arith.constant 0 : index
    %325 = vector.load %arg11[%c18_372, %c0_373] : memref<118x16xbf16, #tpu.memory_space<vmem>>, vector<32x16xbf16>
    %c20_374 = arith.constant 20 : index
    %c0_375 = arith.constant 0 : index
    %326 = vector.load %arg11[%c20_374, %c0_375] : memref<118x16xbf16, #tpu.memory_space<vmem>>, vector<32x16xbf16>
    %c22_376 = arith.constant 22 : index
    %c0_377 = arith.constant 0 : index
    %327 = vector.load %arg11[%c22_376, %c0_377] : memref<118x16xbf16, #tpu.memory_space<vmem>>, vector<32x16xbf16>
    %c24_378 = arith.constant 24 : index
    %c0_379 = arith.constant 0 : index
    %328 = vector.load %arg11[%c24_378, %c0_379] : memref<118x16xbf16, #tpu.memory_space<vmem>>, vector<32x16xbf16>
    %c26_380 = arith.constant 26 : index
    %c0_381 = arith.constant 0 : index
    %329 = vector.load %arg11[%c26_380, %c0_381] : memref<118x16xbf16, #tpu.memory_space<vmem>>, vector<32x16xbf16>
    %c28_382 = arith.constant 28 : index
    %c0_383 = arith.constant 0 : index
    %330 = vector.load %arg11[%c28_382, %c0_383] : memref<118x16xbf16, #tpu.memory_space<vmem>>, vector<32x16xbf16>
    %c30_384 = arith.constant 30 : index
    %c0_385 = arith.constant 0 : index
    %331 = vector.load %arg11[%c30_384, %c0_385] : memref<118x16xbf16, #tpu.memory_space<vmem>>, vector<32x16xbf16>
    %c32_386 = arith.constant 32 : index
    %c0_387 = arith.constant 0 : index
    %332 = vector.load %arg11[%c32_386, %c0_387] : memref<118x16xbf16, #tpu.memory_space<vmem>>, vector<32x16xbf16>
    %c34_388 = arith.constant 34 : index
    %c0_389 = arith.constant 0 : index
    %333 = vector.load %arg11[%c34_388, %c0_389] : memref<118x16xbf16, #tpu.memory_space<vmem>>, vector<32x16xbf16>
    %c36_390 = arith.constant 36 : index
    %c0_391 = arith.constant 0 : index
    %334 = vector.load %arg11[%c36_390, %c0_391] : memref<118x16xbf16, #tpu.memory_space<vmem>>, vector<32x16xbf16>
    %c38_392 = arith.constant 38 : index
    %c0_393 = arith.constant 0 : index
    %335 = vector.load %arg11[%c38_392, %c0_393] : memref<118x16xbf16, #tpu.memory_space<vmem>>, vector<32x16xbf16>
    %c40_394 = arith.constant 40 : index
    %c0_395 = arith.constant 0 : index
    %336 = vector.load %arg11[%c40_394, %c0_395] : memref<118x16xbf16, #tpu.memory_space<vmem>>, vector<32x16xbf16>
    %c42_396 = arith.constant 42 : index
    %c0_397 = arith.constant 0 : index
    %337 = vector.load %arg11[%c42_396, %c0_397] : memref<118x16xbf16, #tpu.memory_space<vmem>>, vector<32x16xbf16>
    %c44_398 = arith.constant 44 : index
    %c0_399 = arith.constant 0 : index
    %338 = vector.load %arg11[%c44_398, %c0_399] : memref<118x16xbf16, #tpu.memory_space<vmem>>, vector<32x16xbf16>
    %c46_400 = arith.constant 46 : index
    %c0_401 = arith.constant 0 : index
    %339 = vector.load %arg11[%c46_400, %c0_401] : memref<118x16xbf16, #tpu.memory_space<vmem>>, vector<32x16xbf16>
    %c48_402 = arith.constant 48 : index
    %c0_403 = arith.constant 0 : index
    %340 = vector.load %arg11[%c48_402, %c0_403] : memref<118x16xbf16, #tpu.memory_space<vmem>>, vector<32x16xbf16>
    %c50_404 = arith.constant 50 : index
    %c0_405 = arith.constant 0 : index
    %341 = vector.load %arg11[%c50_404, %c0_405] : memref<118x16xbf16, #tpu.memory_space<vmem>>, vector<32x16xbf16>
    %c52_406 = arith.constant 52 : index
    %c0_407 = arith.constant 0 : index
    %342 = vector.load %arg11[%c52_406, %c0_407] : memref<118x16xbf16, #tpu.memory_space<vmem>>, vector<32x16xbf16>
    %c54_408 = arith.constant 54 : index
    %c0_409 = arith.constant 0 : index
    %343 = vector.load %arg11[%c54_408, %c0_409] : memref<118x16xbf16, #tpu.memory_space<vmem>>, vector<32x16xbf16>
    %c56_410 = arith.constant 56 : index
    %c0_411 = arith.constant 0 : index
    %344 = vector.load %arg11[%c56_410, %c0_411] : memref<118x16xbf16, #tpu.memory_space<vmem>>, vector<32x16xbf16>
    %c58_412 = arith.constant 58 : index
    %c0_413 = arith.constant 0 : index
    %345 = vector.load %arg11[%c58_412, %c0_413] : memref<118x16xbf16, #tpu.memory_space<vmem>>, vector<32x16xbf16>
    %c60_414 = arith.constant 60 : index
    %c0_415 = arith.constant 0 : index
    %346 = vector.load %arg11[%c60_414, %c0_415] : memref<118x16xbf16, #tpu.memory_space<vmem>>, vector<32x16xbf16>
    %c62_416 = arith.constant 62 : index
    %c0_417 = arith.constant 0 : index
    %347 = vector.load %arg11[%c62_416, %c0_417] : memref<118x16xbf16, #tpu.memory_space<vmem>>, vector<32x16xbf16>
    %c64_418 = arith.constant 64 : index
    %c0_419 = arith.constant 0 : index
    %348 = vector.load %arg11[%c64_418, %c0_419] : memref<118x16xbf16, #tpu.memory_space<vmem>>, vector<32x16xbf16>
    %c66_420 = arith.constant 66 : index
    %c0_421 = arith.constant 0 : index
    %349 = vector.load %arg11[%c66_420, %c0_421] : memref<118x16xbf16, #tpu.memory_space<vmem>>, vector<32x16xbf16>
    %c68_422 = arith.constant 68 : index
    %c0_423 = arith.constant 0 : index
    %350 = vector.load %arg11[%c68_422, %c0_423] : memref<118x16xbf16, #tpu.memory_space<vmem>>, vector<32x16xbf16>
    %c70_424 = arith.constant 70 : index
    %c0_425 = arith.constant 0 : index
    %351 = vector.load %arg11[%c70_424, %c0_425] : memref<118x16xbf16, #tpu.memory_space<vmem>>, vector<32x16xbf16>
    %c72_426 = arith.constant 72 : index
    %c0_427 = arith.constant 0 : index
    %352 = vector.load %arg11[%c72_426, %c0_427] : memref<118x16xbf16, #tpu.memory_space<vmem>>, vector<32x16xbf16>
    %c74_428 = arith.constant 74 : index
    %c0_429 = arith.constant 0 : index
    %353 = vector.load %arg11[%c74_428, %c0_429] : memref<118x16xbf16, #tpu.memory_space<vmem>>, vector<32x16xbf16>
    %c76_430 = arith.constant 76 : index
    %c0_431 = arith.constant 0 : index
    %354 = vector.load %arg11[%c76_430, %c0_431] : memref<118x16xbf16, #tpu.memory_space<vmem>>, vector<32x16xbf16>
    %c78_432 = arith.constant 78 : index
    %c0_433 = arith.constant 0 : index
    %355 = vector.load %arg11[%c78_432, %c0_433] : memref<118x16xbf16, #tpu.memory_space<vmem>>, vector<32x16xbf16>
    %c80_434 = arith.constant 80 : index
    %c0_435 = arith.constant 0 : index
    %356 = vector.load %arg11[%c80_434, %c0_435] : memref<118x16xbf16, #tpu.memory_space<vmem>>, vector<32x16xbf16>
    %c82_436 = arith.constant 82 : index
    %c0_437 = arith.constant 0 : index
    %357 = vector.load %arg11[%c82_436, %c0_437] : memref<118x16xbf16, #tpu.memory_space<vmem>>, vector<32x16xbf16>
    %c84_438 = arith.constant 84 : index
    %c0_439 = arith.constant 0 : index
    %358 = vector.load %arg11[%c84_438, %c0_439] : memref<118x16xbf16, #tpu.memory_space<vmem>>, vector<32x16xbf16>
    %c86_440 = arith.constant 86 : index
    %c0_441 = arith.constant 0 : index
    %359 = vector.load %arg11[%c86_440, %c0_441] : memref<118x16xbf16, #tpu.memory_space<vmem>>, vector<32x16xbf16>
    %360 = tpu.concatenate %321, %322, %323, %324, %325, %326, %327, %328, %329, %330, %331, %332, %333, %334, %335, %336 in 1 : vector<32x16xbf16>, vector<32x16xbf16>, vector<32x16xbf16>, vector<32x16xbf16>, vector<32x16xbf16>, vector<32x16xbf16>, vector<32x16xbf16>, vector<32x16xbf16>, vector<32x16xbf16>, vector<32x16xbf16>, vector<32x16xbf16>, vector<32x16xbf16>, vector<32x16xbf16>, vector<32x16xbf16>, vector<32x16xbf16>, vector<32x16xbf16> -> vector<32x256xbf16>
    %361 = tpu.concatenate %337, %338, %339, %340, %341, %342, %343, %344, %345, %346, %347, %348, %349, %350, %351, %352 in 1 : vector<32x16xbf16>, vector<32x16xbf16>, vector<32x16xbf16>, vector<32x16xbf16>, vector<32x16xbf16>, vector<32x16xbf16>, vector<32x16xbf16>, vector<32x16xbf16>, vector<32x16xbf16>, vector<32x16xbf16>, vector<32x16xbf16>, vector<32x16xbf16>, vector<32x16xbf16>, vector<32x16xbf16>, vector<32x16xbf16>, vector<32x16xbf16> -> vector<32x256xbf16>
    %362 = tpu.concatenate %353, %354, %355, %356, %357, %358, %359, %320 in 1 : vector<32x16xbf16>, vector<32x16xbf16>, vector<32x16xbf16>, vector<32x16xbf16>, vector<32x16xbf16>, vector<32x16xbf16>, vector<32x16xbf16>, vector<32x128xbf16> -> vector<32x240xbf16>
    %363 = tpu.concatenate %360, %361, %362 in 1 : vector<32x256xbf16>, vector<32x256xbf16>, vector<32x240xbf16> -> vector<32x752xbf16>
    %c4_442 = arith.constant 4 : index
    %c0_443 = arith.constant 0 : index
    %c0_444 = arith.constant 0 : index
    %364 = vector.load %arg4[%c4_442, %c0_443, %c0_444] : memref<6x752x128xbf16, #tpu.memory_space<vmem>>, vector<1x752x128xbf16>
    %365 = vector.shape_cast %364 : vector<1x752x128xbf16> to vector<752x128xbf16>
    %cst_445 = arith.constant dense<0.000000e+00> : vector<32x128xf32>
    %366 = tpu.matmul %363, %365, %cst_445 {dimension_numbers = #tpu.dot_dimension_numbers<[1], [0], [0], [1], [0, 0, 1, 1], [], []>} : vector<32x752xbf16>, vector<752x128xbf16>, vector<32x128xf32> -> vector<32x128xf32>
    %c4_446 = arith.constant 4 : index
    %c0_447 = arith.constant 0 : index
    %c0_448 = arith.constant 0 : index
    %367 = vector.load %arg5[%c4_446, %c0_447, %c0_448] : memref<6x1x128xf32, #tpu.memory_space<vmem>>, vector<1x1x128xf32>
    %368 = vector.shape_cast %367 : vector<1x1x128xf32> to vector<1x128xf32>
    %369 = vector.broadcast %368 : vector<1x128xf32> to vector<32x128xf32>
    %370 = arith.addf %366, %369 : vector<32x128xf32>
    %cst_449 = arith.constant 0.000000e+00 : f32
    %371 = vector.broadcast %cst_449 : f32 to vector<32x128xf32>
    %372 = arith.maximumf %370, %371 : vector<32x128xf32>
    %373 = arith.truncf %372 : vector<32x128xf32> to vector<32x128xbf16>
    %c5 = arith.constant 5 : index
    %c0_450 = arith.constant 0 : index
    %c0_451 = arith.constant 0 : index
    %374 = vector.load %arg2[%c5, %c0_450, %c0_451] : memref<6x128x16xbf16, #tpu.memory_space<vmem>>, vector<1x128x16xbf16>
    %375 = vector.shape_cast %374 : vector<1x128x16xbf16> to vector<128x16xbf16>
    %cst_452 = arith.constant dense<0.000000e+00> : vector<32x16xf32>
    %376 = tpu.matmul %373, %375, %cst_452 {dimension_numbers = #tpu.dot_dimension_numbers<[1], [0], [0], [1], [0, 0, 1, 1], [], []>} : vector<32x128xbf16>, vector<128x16xbf16>, vector<32x16xf32> -> vector<32x16xf32>
    %c5_453 = arith.constant 5 : index
    %c0_454 = arith.constant 0 : index
    %c0_455 = arith.constant 0 : index
    %377 = vector.load %arg3[%c5_453, %c0_454, %c0_455] : memref<6x1x16xf32, #tpu.memory_space<vmem>>, vector<1x1x16xf32>
    %378 = vector.shape_cast %377 : vector<1x1x16xf32> to vector<1x16xf32>
    %379 = vector.broadcast %378 : vector<1x16xf32> to vector<32x16xf32>
    %380 = arith.addf %376, %379 : vector<32x16xf32>
    %381 = arith.truncf %380 : vector<32x16xf32> to vector<32x16xbf16>
    %c48_456 = arith.constant 48 : index
    %c0_457 = arith.constant 0 : index
    %382 = vector.load %arg11[%c48_456, %c0_457] : memref<118x16xbf16, #tpu.memory_space<vmem>>, vector<32x16xbf16>
    tpu.vector_store %arg11[%c48_456, %c0_457], %381 {strides = array<i32>} : memref<118x16xbf16, #tpu.memory_space<vmem>>, vector<32x16xbf16>,
    %383 = vector.extract_strided_slice %372 {offsets = [0, 0], sizes = [2, 128], strides = [1, 1]} : vector<32x128xf32> to vector<2x128xf32>
    %384 = vector.extract_strided_slice %372 {offsets = [0, 0], sizes = [30, 128], strides = [1, 1]} : vector<32x128xf32> to vector<30x128xf32>
    %385 = tpu.concatenate %383, %384 in 0 : vector<2x128xf32>, vector<30x128xf32> -> vector<32x128xf32>
    %386 = vector.extract_strided_slice %372 {offsets = [2, 0], sizes = [30, 128], strides = [1, 1]} : vector<32x128xf32> to vector<30x128xf32>
    %387 = vector.extract_strided_slice %372 {offsets = [30, 0], sizes = [2, 128], strides = [1, 1]} : vector<32x128xf32> to vector<2x128xf32>
    %388 = tpu.concatenate %386, %387 in 0 : vector<30x128xf32>, vector<2x128xf32> -> vector<32x128xf32>
    %389 = arith.maximumf %385, %372 : vector<32x128xf32>
    %390 = arith.maximumf %389, %388 : vector<32x128xf32>
    %391 = arith.truncf %390 : vector<32x128xf32> to vector<32x128xbf16>
    %c10_458 = arith.constant 10 : index
    %c0_459 = arith.constant 0 : index
    %392 = vector.load %arg11[%c10_458, %c0_459] : memref<118x16xbf16, #tpu.memory_space<vmem>>, vector<32x16xbf16>
    %c12_460 = arith.constant 12 : index
    %c0_461 = arith.constant 0 : index
    %393 = vector.load %arg11[%c12_460, %c0_461] : memref<118x16xbf16, #tpu.memory_space<vmem>>, vector<32x16xbf16>
    %c14_462 = arith.constant 14 : index
    %c0_463 = arith.constant 0 : index
    %394 = vector.load %arg11[%c14_462, %c0_463] : memref<118x16xbf16, #tpu.memory_space<vmem>>, vector<32x16xbf16>
    %c16_464 = arith.constant 16 : index
    %c0_465 = arith.constant 0 : index
    %395 = vector.load %arg11[%c16_464, %c0_465] : memref<118x16xbf16, #tpu.memory_space<vmem>>, vector<32x16xbf16>
    %c18_466 = arith.constant 18 : index
    %c0_467 = arith.constant 0 : index
    %396 = vector.load %arg11[%c18_466, %c0_467] : memref<118x16xbf16, #tpu.memory_space<vmem>>, vector<32x16xbf16>
    %c20_468 = arith.constant 20 : index
    %c0_469 = arith.constant 0 : index
    %397 = vector.load %arg11[%c20_468, %c0_469] : memref<118x16xbf16, #tpu.memory_space<vmem>>, vector<32x16xbf16>
    %c22_470 = arith.constant 22 : index
    %c0_471 = arith.constant 0 : index
    %398 = vector.load %arg11[%c22_470, %c0_471] : memref<118x16xbf16, #tpu.memory_space<vmem>>, vector<32x16xbf16>
    %c24_472 = arith.constant 24 : index
    %c0_473 = arith.constant 0 : index
    %399 = vector.load %arg11[%c24_472, %c0_473] : memref<118x16xbf16, #tpu.memory_space<vmem>>, vector<32x16xbf16>
    %c26_474 = arith.constant 26 : index
    %c0_475 = arith.constant 0 : index
    %400 = vector.load %arg11[%c26_474, %c0_475] : memref<118x16xbf16, #tpu.memory_space<vmem>>, vector<32x16xbf16>
    %c28_476 = arith.constant 28 : index
    %c0_477 = arith.constant 0 : index
    %401 = vector.load %arg11[%c28_476, %c0_477] : memref<118x16xbf16, #tpu.memory_space<vmem>>, vector<32x16xbf16>
    %c30_478 = arith.constant 30 : index
    %c0_479 = arith.constant 0 : index
    %402 = vector.load %arg11[%c30_478, %c0_479] : memref<118x16xbf16, #tpu.memory_space<vmem>>, vector<32x16xbf16>
    %c32_480 = arith.constant 32 : index
    %c0_481 = arith.constant 0 : index
    %403 = vector.load %arg11[%c32_480, %c0_481] : memref<118x16xbf16, #tpu.memory_space<vmem>>, vector<32x16xbf16>
    %c34_482 = arith.constant 34 : index
    %c0_483 = arith.constant 0 : index
    %404 = vector.load %arg11[%c34_482, %c0_483] : memref<118x16xbf16, #tpu.memory_space<vmem>>, vector<32x16xbf16>
    %c36_484 = arith.constant 36 : index
    %c0_485 = arith.constant 0 : index
    %405 = vector.load %arg11[%c36_484, %c0_485] : memref<118x16xbf16, #tpu.memory_space<vmem>>, vector<32x16xbf16>
    %c38_486 = arith.constant 38 : index
    %c0_487 = arith.constant 0 : index
    %406 = vector.load %arg11[%c38_486, %c0_487] : memref<118x16xbf16, #tpu.memory_space<vmem>>, vector<32x16xbf16>
    %c40_488 = arith.constant 40 : index
    %c0_489 = arith.constant 0 : index
    %407 = vector.load %arg11[%c40_488, %c0_489] : memref<118x16xbf16, #tpu.memory_space<vmem>>, vector<32x16xbf16>
    %c42_490 = arith.constant 42 : index
    %c0_491 = arith.constant 0 : index
    %408 = vector.load %arg11[%c42_490, %c0_491] : memref<118x16xbf16, #tpu.memory_space<vmem>>, vector<32x16xbf16>
    %c44_492 = arith.constant 44 : index
    %c0_493 = arith.constant 0 : index
    %409 = vector.load %arg11[%c44_492, %c0_493] : memref<118x16xbf16, #tpu.memory_space<vmem>>, vector<32x16xbf16>
    %c46_494 = arith.constant 46 : index
    %c0_495 = arith.constant 0 : index
    %410 = vector.load %arg11[%c46_494, %c0_495] : memref<118x16xbf16, #tpu.memory_space<vmem>>, vector<32x16xbf16>
    %c48_496 = arith.constant 48 : index
    %c0_497 = arith.constant 0 : index
    %411 = vector.load %arg11[%c48_496, %c0_497] : memref<118x16xbf16, #tpu.memory_space<vmem>>, vector<32x16xbf16>
    %c50_498 = arith.constant 50 : index
    %c0_499 = arith.constant 0 : index
    %412 = vector.load %arg11[%c50_498, %c0_499] : memref<118x16xbf16, #tpu.memory_space<vmem>>, vector<32x16xbf16>
    %c52_500 = arith.constant 52 : index
    %c0_501 = arith.constant 0 : index
    %413 = vector.load %arg11[%c52_500, %c0_501] : memref<118x16xbf16, #tpu.memory_space<vmem>>, vector<32x16xbf16>
    %c54_502 = arith.constant 54 : index
    %c0_503 = arith.constant 0 : index
    %414 = vector.load %arg11[%c54_502, %c0_503] : memref<118x16xbf16, #tpu.memory_space<vmem>>, vector<32x16xbf16>
    %c56_504 = arith.constant 56 : index
    %c0_505 = arith.constant 0 : index
    %415 = vector.load %arg11[%c56_504, %c0_505] : memref<118x16xbf16, #tpu.memory_space<vmem>>, vector<32x16xbf16>
    %c58_506 = arith.constant 58 : index
    %c0_507 = arith.constant 0 : index
    %416 = vector.load %arg11[%c58_506, %c0_507] : memref<118x16xbf16, #tpu.memory_space<vmem>>, vector<32x16xbf16>
    %c60_508 = arith.constant 60 : index
    %c0_509 = arith.constant 0 : index
    %417 = vector.load %arg11[%c60_508, %c0_509] : memref<118x16xbf16, #tpu.memory_space<vmem>>, vector<32x16xbf16>
    %c62_510 = arith.constant 62 : index
    %c0_511 = arith.constant 0 : index
    %418 = vector.load %arg11[%c62_510, %c0_511] : memref<118x16xbf16, #tpu.memory_space<vmem>>, vector<32x16xbf16>
    %c64_512 = arith.constant 64 : index
    %c0_513 = arith.constant 0 : index
    %419 = vector.load %arg11[%c64_512, %c0_513] : memref<118x16xbf16, #tpu.memory_space<vmem>>, vector<32x16xbf16>
    %c66_514 = arith.constant 66 : index
    %c0_515 = arith.constant 0 : index
    %420 = vector.load %arg11[%c66_514, %c0_515] : memref<118x16xbf16, #tpu.memory_space<vmem>>, vector<32x16xbf16>
    %c68_516 = arith.constant 68 : index
    %c0_517 = arith.constant 0 : index
    %421 = vector.load %arg11[%c68_516, %c0_517] : memref<118x16xbf16, #tpu.memory_space<vmem>>, vector<32x16xbf16>
    %c70_518 = arith.constant 70 : index
    %c0_519 = arith.constant 0 : index
    %422 = vector.load %arg11[%c70_518, %c0_519] : memref<118x16xbf16, #tpu.memory_space<vmem>>, vector<32x16xbf16>
    %c72_520 = arith.constant 72 : index
    %c0_521 = arith.constant 0 : index
    %423 = vector.load %arg11[%c72_520, %c0_521] : memref<118x16xbf16, #tpu.memory_space<vmem>>, vector<32x16xbf16>
    %c74_522 = arith.constant 74 : index
    %c0_523 = arith.constant 0 : index
    %424 = vector.load %arg11[%c74_522, %c0_523] : memref<118x16xbf16, #tpu.memory_space<vmem>>, vector<32x16xbf16>
    %c76_524 = arith.constant 76 : index
    %c0_525 = arith.constant 0 : index
    %425 = vector.load %arg11[%c76_524, %c0_525] : memref<118x16xbf16, #tpu.memory_space<vmem>>, vector<32x16xbf16>
    %c78_526 = arith.constant 78 : index
    %c0_527 = arith.constant 0 : index
    %426 = vector.load %arg11[%c78_526, %c0_527] : memref<118x16xbf16, #tpu.memory_space<vmem>>, vector<32x16xbf16>
    %c80_528 = arith.constant 80 : index
    %c0_529 = arith.constant 0 : index
    %427 = vector.load %arg11[%c80_528, %c0_529] : memref<118x16xbf16, #tpu.memory_space<vmem>>, vector<32x16xbf16>
    %c82_530 = arith.constant 82 : index
    %c0_531 = arith.constant 0 : index
    %428 = vector.load %arg11[%c82_530, %c0_531] : memref<118x16xbf16, #tpu.memory_space<vmem>>, vector<32x16xbf16>
    %c84_532 = arith.constant 84 : index
    %c0_533 = arith.constant 0 : index
    %429 = vector.load %arg11[%c84_532, %c0_533] : memref<118x16xbf16, #tpu.memory_space<vmem>>, vector<32x16xbf16>
    %c86_534 = arith.constant 86 : index
    %c0_535 = arith.constant 0 : index
    %430 = vector.load %arg11[%c86_534, %c0_535] : memref<118x16xbf16, #tpu.memory_space<vmem>>, vector<32x16xbf16>
    %431 = tpu.concatenate %392, %393, %394, %395, %396, %397, %398, %399, %400, %401, %402, %403, %404, %405, %406, %407 in 1 : vector<32x16xbf16>, vector<32x16xbf16>, vector<32x16xbf16>, vector<32x16xbf16>, vector<32x16xbf16>, vector<32x16xbf16>, vector<32x16xbf16>, vector<32x16xbf16>, vector<32x16xbf16>, vector<32x16xbf16>, vector<32x16xbf16>, vector<32x16xbf16>, vector<32x16xbf16>, vector<32x16xbf16>, vector<32x16xbf16>, vector<32x16xbf16> -> vector<32x256xbf16>
    %432 = tpu.concatenate %408, %409, %410, %411, %412, %413, %414, %415, %416, %417, %418, %419, %420, %421, %422, %423 in 1 : vector<32x16xbf16>, vector<32x16xbf16>, vector<32x16xbf16>, vector<32x16xbf16>, vector<32x16xbf16>, vector<32x16xbf16>, vector<32x16xbf16>, vector<32x16xbf16>, vector<32x16xbf16>, vector<32x16xbf16>, vector<32x16xbf16>, vector<32x16xbf16>, vector<32x16xbf16>, vector<32x16xbf16>, vector<32x16xbf16>, vector<32x16xbf16> -> vector<32x256xbf16>
    %433 = tpu.concatenate %424, %425, %426, %427, %428, %429, %430, %391 in 1 : vector<32x16xbf16>, vector<32x16xbf16>, vector<32x16xbf16>, vector<32x16xbf16>, vector<32x16xbf16>, vector<32x16xbf16>, vector<32x16xbf16>, vector<32x128xbf16> -> vector<32x240xbf16>
    %434 = tpu.concatenate %431, %432, %433 in 1 : vector<32x256xbf16>, vector<32x256xbf16>, vector<32x240xbf16> -> vector<32x752xbf16>
    %c5_536 = arith.constant 5 : index
    %c0_537 = arith.constant 0 : index
    %c0_538 = arith.constant 0 : index
    %435 = vector.load %arg4[%c5_536, %c0_537, %c0_538] : memref<6x752x128xbf16, #tpu.memory_space<vmem>>, vector<1x752x128xbf16>
    %436 = vector.shape_cast %435 : vector<1x752x128xbf16> to vector<752x128xbf16>
    %cst_539 = arith.constant dense<0.000000e+00> : vector<32x128xf32>
    %437 = tpu.matmul %434, %436, %cst_539 {dimension_numbers = #tpu.dot_dimension_numbers<[1], [0], [0], [1], [0, 0, 1, 1], [], []>} : vector<32x752xbf16>, vector<752x128xbf16>, vector<32x128xf32> -> vector<32x128xf32>
    %c5_540 = arith.constant 5 : index
    %c0_541 = arith.constant 0 : index
    %c0_542 = arith.constant 0 : index
    %438 = vector.load %arg5[%c5_540, %c0_541, %c0_542] : memref<6x1x128xf32, #tpu.memory_space<vmem>>, vector<1x1x128xf32>
    %439 = vector.shape_cast %438 : vector<1x1x128xf32> to vector<1x128xf32>
    %440 = vector.broadcast %439 : vector<1x128xf32> to vector<32x128xf32>
    %441 = arith.addf %437, %440 : vector<32x128xf32>
    %cst_543 = arith.constant 0.000000e+00 : f32
    %442 = vector.broadcast %cst_543 : f32 to vector<32x128xf32>
    %443 = arith.maximumf %441, %442 : vector<32x128xf32>
    %c0_544 = arith.constant 0 : index
    %c0_545 = arith.constant 0 : index
    %444 = vector.load %arg12[%c0_544, %c0_545] : memref<32x128xf32, #tpu.memory_space<vmem>>, vector<32x128xf32>
    %445 = arith.truncf %444 : vector<32x128xf32> to vector<32x128xbf16>
    %c1_546 = arith.constant 1 : index
    %c0_547 = arith.constant 0 : index
    %c0_548 = arith.constant 0 : index
    %446 = vector.load %arg6[%c1_546, %c0_547, %c0_548] : memref<2x128x128xbf16, #tpu.memory_space<vmem>>, vector<1x128x128xbf16>
    %447 = vector.shape_cast %446 : vector<1x128x128xbf16> to vector<128x128xbf16>
    %cst_549 = arith.constant dense<0.000000e+00> : vector<32x128xf32>
    %448 = tpu.matmul %445, %447, %cst_549 {dimension_numbers = #tpu.dot_dimension_numbers<[1], [0], [0], [1], [0, 0, 1, 1], [], []>} : vector<32x128xbf16>, vector<128x128xbf16>, vector<32x128xf32> -> vector<32x128xf32>
    %c1_550 = arith.constant 1 : index
    %c0_551 = arith.constant 0 : index
    %c0_552 = arith.constant 0 : index
    %449 = vector.load %arg7[%c1_550, %c0_551, %c0_552] : memref<2x1x128xf32, #tpu.memory_space<vmem>>, vector<1x1x128xf32>
    %450 = vector.shape_cast %449 : vector<1x1x128xf32> to vector<1x128xf32>
    %451 = vector.broadcast %450 : vector<1x128xf32> to vector<32x128xf32>
    %452 = arith.addf %448, %451 : vector<32x128xf32>
    %453 = arith.addf %443, %452 : vector<32x128xf32>
    %c0_553 = arith.constant 0 : index
    %c0_554 = arith.constant 0 : index
    %454 = vector.load %arg12[%c0_553, %c0_554] : memref<32x128xf32, #tpu.memory_space<vmem>>, vector<32x128xf32>
    tpu.vector_store %arg12[%c0_553, %c0_554], %453 {strides = array<i32>} : memref<32x128xf32, #tpu.memory_space<vmem>>, vector<32x128xf32>,
    %cst_555 = arith.constant 0.000000e+00 : f32
    %455 = vector.broadcast %cst_555 : f32 to vector<32x128xf32>
    %456 = arith.maximumf %453, %455 : vector<32x128xf32>
    %457 = vector.extract_strided_slice %456 {offsets = [16, 0], sizes = [16, 128], strides = [1, 1]} : vector<32x128xf32> to vector<16x128xf32>
    %458 = arith.truncf %457 : vector<16x128xf32> to vector<16x128xbf16>
    %c0_556 = arith.constant 0 : index
    %c0_557 = arith.constant 0 : index
    %459 = vector.load %arg8[%c0_556, %c0_557] : memref<128x128xbf16, #tpu.memory_space<vmem>>, vector<128x128xbf16>
    %cst_558 = arith.constant dense<0.000000e+00> : vector<16x128xf32>
    %460 = tpu.matmul %458, %459, %cst_558 {dimension_numbers = #tpu.dot_dimension_numbers<[1], [0], [0], [1], [0, 0, 1, 1], [], []>} : vector<16x128xbf16>, vector<128x128xbf16>, vector<16x128xf32> -> vector<16x128xf32>
    %c0_559 = arith.constant 0 : index
    %c0_560 = arith.constant 0 : index
    %461 = vector.load %arg9[%c0_559, %c0_560] : memref<1x128xf32, #tpu.memory_space<vmem>>, vector<1x128xf32>
    %462 = vector.broadcast %461 : vector<1x128xf32> to vector<16x128xf32>
    %463 = arith.addf %460, %462 : vector<16x128xf32>
    %cst_561 = arith.constant 0.000000e+00 : f32
    %464 = vector.broadcast %cst_561 : f32 to vector<16x128xf32>
    %465 = arith.maximumf %463, %464 : vector<16x128xf32>
    %466 = math.absf %463 : vector<16x128xf32>
    %cst_562 = arith.constant 0.000000e+00 : f32
    %467 = vector.broadcast %cst_562 : f32 to vector<16x128xf32>
    %468 = arith.subf %467, %466 : vector<16x128xf32>
    %469 = math.exp %468 : vector<16x128xf32>
    %cst_563 = arith.constant 1.000000e+00 : f32
    %470 = vector.broadcast %cst_563 : f32 to vector<16x128xf32>
    %471 = arith.addf %470, %469 : vector<16x128xf32>
    %472 = math.log %471 : vector<16x128xf32>
    %473 = arith.addf %465, %472 : vector<16x128xf32>
    %cst_564 = arith.constant 9.900000e-01 : f32
    %474 = vector.broadcast %cst_564 : f32 to vector<16x128xf32>
    %475 = arith.mulf %474, %473 : vector<16x128xf32>
    %cst_565 = arith.constant 0.00999999977 : f32
    %476 = vector.broadcast %cst_565 : f32 to vector<16x128xf32>
    %477 = arith.addf %476, %475 : vector<16x128xf32>
    %478 = tpu.iota {dimensions = array<i32: 1>} : vector<16x128xi32>
    %c2_i32 = arith.constant 2 : i32
    %479 = vector.broadcast %c2_i32 : i32 to vector<16x128xi32>
    %480 = arith.cmpi slt, %478, %479 : vector<16x128xi32>
    %481 = arith.select %480, %463, %477 : vector<16x128xi1>, vector<16x128xf32>
    %c0_566 = arith.constant 0 : index
    %c0_567 = arith.constant 0 : index
    %c0_568 = arith.constant 0 : index
    %482 = vector.load %arg10[%c0_566, %c0_567, %c0_568] : memref<1x16x128xf32, #tpu.memory_space<vmem>>, vector<1x16x128xf32>
    %483 = vector.shape_cast %482 : vector<1x16x128xf32> to vector<16x128xf32>
    %484 = vector.shape_cast %481 : vector<16x128xf32> to vector<1x16x128xf32>
    tpu.vector_store %arg10[%c0_566, %c0_567, %c0_568], %484 {strides = array<i32>} : memref<1x16x128xf32, #tpu.memory_space<vmem>>, vector<1x16x128xf32>,
    return
  }
  func.func @transform_0(%arg0: i32) -> (i32, i32, i32) {
    %c0_i32 = arith.constant 0 : i32
    %c0_i32_0 = arith.constant 0 : i32
    %c0_i32_1 = arith.constant 0 : i32
    return %arg0, %c0_i32, %c0_i32_0 : i32, i32, i32
  }
  func.func @transform_1(%arg0: i32) -> (i32, i32, i32) {
    %c0_i32 = arith.constant 0 : i32
    %c0_i32_0 = arith.constant 0 : i32
    %c0_i32_1 = arith.constant 0 : i32
    %c0_i32_2 = arith.constant 0 : i32
    return %c0_i32, %c0_i32_0, %c0_i32_1 : i32, i32, i32
  }
  func.func @transform_2(%arg0: i32) -> (i32, i32, i32) {
    %c0_i32 = arith.constant 0 : i32
    %c0_i32_0 = arith.constant 0 : i32
    %c0_i32_1 = arith.constant 0 : i32
    %c0_i32_2 = arith.constant 0 : i32
    return %c0_i32, %c0_i32_0, %c0_i32_1 : i32, i32, i32
  }
  func.func @transform_3(%arg0: i32) -> (i32, i32, i32) {
    %c0_i32 = arith.constant 0 : i32
    %c0_i32_0 = arith.constant 0 : i32
    %c0_i32_1 = arith.constant 0 : i32
    %c0_i32_2 = arith.constant 0 : i32
    return %c0_i32, %c0_i32_0, %c0_i32_1 : i32, i32, i32
  }
  func.func @transform_4(%arg0: i32) -> (i32, i32, i32) {
    %c0_i32 = arith.constant 0 : i32
    %c0_i32_0 = arith.constant 0 : i32
    %c0_i32_1 = arith.constant 0 : i32
    %c0_i32_2 = arith.constant 0 : i32
    return %c0_i32, %c0_i32_0, %c0_i32_1 : i32, i32, i32
  }
  func.func @transform_5(%arg0: i32) -> (i32, i32, i32) {
    %c0_i32 = arith.constant 0 : i32
    %c0_i32_0 = arith.constant 0 : i32
    %c0_i32_1 = arith.constant 0 : i32
    %c0_i32_2 = arith.constant 0 : i32
    return %c0_i32, %c0_i32_0, %c0_i32_1 : i32, i32, i32
  }
  func.func @transform_6(%arg0: i32) -> (i32, i32, i32) {
    %c0_i32 = arith.constant 0 : i32
    %c0_i32_0 = arith.constant 0 : i32
    %c0_i32_1 = arith.constant 0 : i32
    %c0_i32_2 = arith.constant 0 : i32
    return %c0_i32, %c0_i32_0, %c0_i32_1 : i32, i32, i32
  }
  func.func @transform_7(%arg0: i32) -> (i32, i32) {
    %c0_i32 = arith.constant 0 : i32
    %c0_i32_0 = arith.constant 0 : i32
    %c0_i32_1 = arith.constant 0 : i32
    return %c0_i32, %c0_i32_0 : i32, i32
  }
  func.func @transform_8(%arg0: i32) -> (i32, i32) {
    %c0_i32 = arith.constant 0 : i32
    %c0_i32_0 = arith.constant 0 : i32
    %c0_i32_1 = arith.constant 0 : i32
    return %c0_i32, %c0_i32_0 : i32, i32
  }
  func.func @transform_9(%arg0: i32) -> (i32, i32, i32) {
    %c0_i32 = arith.constant 0 : i32
    %c0_i32_0 = arith.constant 0 : i32
    %c0_i32_1 = arith.constant 0 : i32
    return %arg0, %c0_i32, %c0_i32_0 : i32, i32, i32
  }
}

</mosaic_0001>

<llo_original>
// kernel: inception_time_seq_forward.1
$region0: #{inception_time_seq_forward.1}
  #allocation0 [shape = 'u32[]', space=smem, size = 0x4, offset = 0x4, fixed_abs, tag = 'smem constant byte address 0x4 - core index']
  #allocation1 [shape = 'u32[72,128]{1,0:T(1,128)}', space=vmem, size = 0x9000, scoped, tag = 'internal scratch']
  #allocation2 [shape = 'bf16[118,16]{1,0:T(8,128)(2,1)}', space=vmem, size = 0x7800, scoped, tag = 'scratch operand']
  #allocation3 [shape = 'f32[32,128]{1,0:T(8,128)}', space=vmem, size = 0x4000, scoped, tag = 'scratch operand']
  %s0 = inlined_call_operand.vmem [shape: f32[1,32,128], index: 0, kind: input, shape index: {}]
  %s1 = inlined_call_operand.vmem [shape: bf16[6,128,16], index: 1, kind: input, shape index: {}]
  %s2 = inlined_call_operand.vmem [shape: f32[6,1,16], index: 2, kind: input, shape index: {}]
  %s3 = inlined_call_operand.vmem [shape: bf16[6,752,128], index: 3, kind: input, shape index: {}]
  %s4 = inlined_call_operand.vmem [shape: f32[6,1,128], index: 4, kind: input, shape index: {}]
  %s5 = inlined_call_operand.vmem [shape: bf16[2,128,128], index: 5, kind: input, shape index: {}]
  %s6 = inlined_call_operand.vmem [shape: f32[2,1,128], index: 6, kind: input, shape index: {}]
  %s7 = inlined_call_operand.vmem [shape: bf16[128,128], index: 7, kind: input, shape index: {}]
  %s8 = inlined_call_operand.vmem [shape: f32[1,128], index: 8, kind: input, shape index: {}]
  %s9 = inlined_call_operand.vmem [shape: f32[1,16,128], index: 9, kind: output, shape index: {}]
  %s10 = sld [smem:[#allocation0]]
  $region46: #{inception_time_seq_forward.1} parent=0
    _
  %s12 = ssub.s32 1, %s10
  %s13 = scalar_select 0, %s12, %s10
  // Predicated region
  $region2: #{inception_time_seq_forward.1} parent=0 // pred_check
    _
  $region3: #{inception_time_seq_forward.1} parent=0 // pred_check_branch
    %15 = sbr.rel (0) target = $region5
  $region4: #{inception_time_seq_forward.1} parent=0 // pred_region
    _
  $region5: #{inception_time_seq_forward.1} parent=0 // pred_fallthru
    _
  // Predicated region
  $region6: #{inception_time_seq_forward.1} parent=0 // pred_check
    _
  $region7: #{inception_time_seq_forward.1} parent=0 // pred_check_branch
    %17 = sbr.rel (0) target = $region9
  $region8: #{inception_time_seq_forward.1} parent=0 // pred_region
    _
  $region9: #{inception_time_seq_forward.1} parent=0 // pred_fallthru
    _
  // Predicated region
  $region10: #{inception_time_seq_forward.1} parent=0 // pred_check
    _
  $region11: #{inception_time_seq_forward.1} parent=0 // pred_check_branch
    %19 = sbr.rel (0) target = $region13
  $region12: #{inception_time_seq_forward.1} parent=0 // pred_region
    _
  $region13: #{inception_time_seq_forward.1} parent=0 // pred_fallthru
    _
  // Predicated region
  $region14: #{inception_time_seq_forward.1} parent=0 // pred_check
    _
  $region15: #{inception_time_seq_forward.1} parent=0 // pred_check_branch
    %21 = sbr.rel (0) target = $region17
  $region16: #{inception_time_seq_forward.1} parent=0 // pred_region
    _
  $region17: #{inception_time_seq_forward.1} parent=0 // pred_fallthru
    _
  // Predicated region
  $region18: #{inception_time_seq_forward.1} parent=0 // pred_check
    _
  $region19: #{inception_time_seq_forward.1} parent=0 // pred_check_branch
    %23 = sbr.rel (0) target = $region21
  $region20: #{inception_time_seq_forward.1} parent=0 // pred_region
    _
  $region21: #{inception_time_seq_forward.1} parent=0 // pred_fallthru
    _
  // Predicated region
  $region22: #{inception_time_seq_forward.1} parent=0 // pred_check
    _
  $region23: #{inception_time_seq_forward.1} parent=0 // pred_check_branch
    %25 = sbr.rel (0) target = $region25
  $region24: #{inception_time_seq_forward.1} parent=0 // pred_region
    _
  $region25: #{inception_time_seq_forward.1} parent=0 // pred_fallthru
    _
  // Predicated region
  $region26: #{inception_time_seq_forward.1} parent=0 // pred_check
    _
  $region27: #{inception_time_seq_forward.1} parent=0 // pred_check_branch
    %27 = sbr.rel (0) target = $region29
  $region28: #{inception_time_seq_forward.1} parent=0 // pred_region
    _
  $region29: #{inception_time_seq_forward.1} parent=0 // pred_fallthru
    _
  // Predicated region
  $region30: #{inception_time_seq_forward.1} parent=0 // pred_check
    _
  $region31: #{inception_time_seq_forward.1} parent=0 // pred_check_branch
    %29 = sbr.rel (0) target = $region33
  $region32: #{inception_time_seq_forward.1} parent=0 // pred_region
    _
  $region33: #{inception_time_seq_forward.1} parent=0 // pred_fallthru
    _
  // Predicated region
  $region34: #{inception_time_seq_forward.1} parent=0 // pred_check
    _
  $region35: #{inception_time_seq_forward.1} parent=0 // pred_check_branch
    %31 = sbr.rel (0) target = $region37
  $region36: #{inception_time_seq_forward.1} parent=0 // pred_region
    _
  $region37: #{inception_time_seq_forward.1} parent=0 // pred_fallthru
    _
  %vm33 = vcmask 125952
  %34 = vst.msk [vmem:[#allocation2] sm:$0xf] %vm33, 0
  %35 = vst.msk [vmem:[#allocation2 + $0x4] sm:$0xf] %vm33, 0
  %36 = vst.msk [vmem:[#allocation2 + $0x8] sm:$0xf] %vm33, 0
  %37 = vst.msk [vmem:[#allocation2 + $0xc] sm:$0xf] %vm33, 0
  %38 = vst.msk [vmem:[#allocation2 + $0x10] sm:$0xf] %vm33, 0
  %39 = vst.msk [vmem:[#allocation2 + $0x14] sm:$0xf] %vm33, 0
  %40 = vst.msk [vmem:[#allocation2 + $0x18] sm:$0xf] %vm33, 0
  %41 = vst.msk [vmem:[#allocation2 + $0x1c] sm:$0xf] %vm33, 0
  %42 = vst.msk [vmem:[#allocation2 + $0x20] sm:$0xf] %vm33, 0
  %43 = vst.msk [vmem:[#allocation2 + $0x24] sm:$0xf] %vm33, 0
  %44 = vst.msk [vmem:[#allocation2 + $0x28] sm:$0xf] %vm33, 0
  %45 = vst.msk [vmem:[#allocation2 + $0x2c] sm:$0xf] %vm33, 0
  %46 = vst.msk [vmem:[#allocation2 + $0x30] sm:$0xf] %vm33, 0
  %47 = vst.msk [vmem:[#allocation2 + $0x34] sm:$0xf] %vm33, 0
  %vm48 = vcmask 124928
  %49 = vst.msk [vmem:[#allocation2 + $0x38] sm:$0x7] %vm48, 0
  %v50 = vld [vmem:[%s0] sm:$0xff]
  %v51 = vld [vmem:[%s0 + $0x8] sm:$0xff]
  %v52 = vld [vmem:[%s0 + $0x10] sm:$0xff]
  %v53 = vld [vmem:[%s0 + $0x18] sm:$0xff]
  %54 = vst [vmem:[#allocation3] sm:$0xff] %v50
  %55 = vst [vmem:[#allocation3 + $0x8] sm:$0xff] %v51
  %56 = vst [vmem:[#allocation3 + $0x10] sm:$0xff] %v52
  %57 = vst [vmem:[#allocation3 + $0x18] sm:$0xff] %v53
  %v58 = vpack.c.bf16 %v51, %v50
  %v59 = vpack.c.bf16 %v53, %v52
  %v60 = vld [vmem:[%s1] sm:$0xf]
  %v61 = vld [vmem:[%s1 + $0x4] sm:$0xf]
  %v62 = vld [vmem:[%s1 + $0x8] sm:$0xf]
  %v63 = vld [vmem:[%s1 + $0xc] sm:$0xf]
  %v64 = vld [vmem:[%s1 + $0x10] sm:$0xf]
  %v65 = vld [vmem:[%s1 + $0x14] sm:$0xf]
  %v66 = vld [vmem:[%s1 + $0x18] sm:$0xf]
  %v67 = vld [vmem:[%s1 + $0x1c] sm:$0xf]
  %v68 = vld [vmem:[%s1 + $0x20] sm:$0xf]
  %v69 = vld [vmem:[%s1 + $0x24] sm:$0xf]
  %v70 = vld [vmem:[%s1 + $0x28] sm:$0xf]
  %v71 = vld [vmem:[%s1 + $0x2c] sm:$0xf]
  %v72 = vld [vmem:[%s1 + $0x30] sm:$0xf]
  %v73 = vld [vmem:[%s1 + $0x34] sm:$0xf]
  %v74 = vld [vmem:[%s1 + $0x38] sm:$0xf]
  %v75 = vld [vmem:[%s1 + $0x3c] sm:$0xf]
  %v76 = vld [vmem:[%s2] sm:$0x1]
  %v78 = vperm.slane %v76, 0
  %v96 = vunpack.c.l.b16 %v60
  %v97 = vunpack.c.l.b16 %v61
  %v98 = vunpack.c.l.b16 %v62
  %v99 = vunpack.c.l.b16 %v63
  %v100 = vunpack.c.l.b16 %v64
  %v101 = vunpack.c.l.b16 %v65
  %v102 = vunpack.c.l.b16 %v66
  %v103 = vunpack.c.l.b16 %v67
  %v104 = vunpack.c.l.b16 %v68
  %v105 = vunpack.c.l.b16 %v69
  %v106 = vunpack.c.l.b16 %v70
  %v107 = vunpack.c.l.b16 %v71
  %v108 = vunpack.c.l.b16 %v72
  %v109 = vunpack.c.l.b16 %v73
  %v110 = vunpack.c.l.b16 %v74
  %v111 = vunpack.c.l.b16 %v75
  %v112 = vpack.c.b16 %v97, %v96
  %v113 = vpack.c.b16 %v99, %v98
  %v114 = vpack.c.b16 %v101, %v100
  %v115 = vpack.c.b16 %v103, %v102
  %v116 = vpack.c.b16 %v105, %v104
  %v117 = vpack.c.b16 %v107, %v106
  %v118 = vpack.c.b16 %v109, %v108
  %v119 = vpack.c.b16 %v111, %v110
  %128 = vmatpush.bf16.msra.mxu0 %v119
  %129 = vmatpush.bf16.msra.mxu0 %v118
  %130 = vmatpush.bf16.msra.mxu0 %v117
  %131 = vmatpush.bf16.msra.mxu0 %v116
  %132 = vmatpush.bf16.msra.mxu0 %v115
  %133 = vmatpush.bf16.msra.mxu0 %v114
  %134 = vmatpush.bf16.msra.mxu0 %v113
  %135 = vmatpush.bf16.msra.mxu0 %v112
  %136 = vmatmul.bf16.gmra.mxu0 %v58
  %v137 = vpop.f32.mrf.mxu0
  %v138 = vadd.f32 %v78, %v137
  %v139 = vpop.f32.mrf.mxu0
  %v140 = vadd.f32 %v78, %v139
  %141 = vmatmul.bf16.gmra.mxu0 %v59
  %v142 = vpop.f32.mrf.mxu0
  %v143 = vadd.f32 %v78, %v142
  %v144 = vpop.f32.mrf.mxu0
  %v145 = vadd.f32 %v78, %v144
  %146 = vdwg.mxu0
  %v147 = vpack.c.bf16 %v138, %v138
  %v148 = vpack.c.bf16 %v140, %v140
  %v149 = vpack.c.bf16 %v143, %v143
  %v150 = vpack.c.bf16 %v145, %v145
  %151 = vst.msk [vmem:[#allocation2 + $0x18] sm:$0xf] %vm33, %v147
  %152 = vst.msk [vmem:[#allocation2 + $0x1c] sm:$0xf] %vm33, %v148
  %153 = vst.msk [vmem:[#allocation2 + $0x20] sm:$0xf] %vm33, %v149
  %154 = vst.msk [vmem:[#allocation2 + $0x24] sm:$0xf] %vm33, %v150
  %vm159 = vcmask 1041408
  %v160 = vrot.slane %v50, 6
  %v161 = vrot.slane %v51, 6
  %v162 = vsel %vm159, %v160, %v161
  %v163 = vrot.slane %v52, 6
  %v164 = vsel %vm159, %v161, %v163
  %v165 = vrot.slane %v53, 6
  %v166 = vsel %vm159, %v163, %v165
  %v171 = vsel %vm159, %v50, %v160
  %vm172 = vcmask 1045504
  %v173 = vrot.slane %v50, 2
  %v174 = vrot.slane %v51, 2
  %v175 = vsel %vm172, %v173, %v174
  %v176 = vrot.slane %v52, 2
  %v177 = vsel %vm172, %v174, %v176
  %v178 = vrot.slane %v53, 2
  %v179 = vsel %vm172, %v176, %v178
  %v184 = vsel %vm172, %v178, %v53
  %v185 = vmax.f32 %v171, %v50
  %v186 = vmax.f32 %v162, %v51
  %v187 = vmax.f32 %v164, %v52
  %v188 = vmax.f32 %v166, %v53
  %v189 = vmax.f32 %v185, %v175
  %v190 = vmax.f32 %v186, %v177
  %v191 = vmax.f32 %v187, %v179
  %v192 = vmax.f32 %v188, %v184
  %v193 = vpack.c.bf16 %v189, %v189
  %v194 = vpack.c.bf16 %v190, %v190
  %v195 = vpack.c.bf16 %v191, %v191
  %v196 = vpack.c.bf16 %v192, %v192
  %v197 = vld [vmem:[#allocation2 + $0x4] sm:$0xe]
  %v198 = vld [vmem:[#allocation2 + $0x8] sm:$0xf]
  %v199 = vld [vmem:[#allocation2 + $0xc] sm:$0xf]
  %v200 = vld [vmem:[#allocation2 + $0x10] sm:$0xf]
  %v201 = vld [vmem:[#allocation2 + $0x14] sm:$0x1]
  %v202 = vld [vmem:[#allocation2 + $0x4] sm:$0xc]
  %v203 = vld [vmem:[#allocation2 + $0x14] sm:$0x3]
  %v204 = vld [vmem:[#allocation2 + $0x4] sm:$0x8]
  %v205 = vld [vmem:[#allocation2 + $0x14] sm:$0x7]
  %v206 = vld [vmem:[#allocation2 + $0x14] sm:$0xf]
  %v207 = vld [vmem:[#allocation2 + $0x8] sm:$0xe]
  %v208 = vld [vmem:[#allocation2 + $0x18] sm:$0x1]
  %v209 = vld [vmem:[#allocation2 + $0x8] sm:$0xc]
  %v210 = vld [vmem:[#allocation2 + $0x18] sm:$0x3]
  %v211 = vld [vmem:[#allocation2 + $0x8] sm:$0x8]
  %v212 = vld [vmem:[#allocation2 + $0x18] sm:$0x7]
  %v213 = vld [vmem:[#allocation2 + $0x18] sm:$0xf]
  %v214 = vld [vmem:[#allocation2 + $0xc] sm:$0xe]
  %v215 = vld [vmem:[#allocation2 + $0x1c] sm:$0x1]
  %v216 = vld [vmem:[#allocation2 + $0xc] sm:$0xc]
  %v217 = vld [vmem:[#allocation2 + $0x1c] sm:$0x3]
  %v218 = vld [vmem:[#allocation2 + $0xc] sm:$0x8]
  %v219 = vld [vmem:[#allocation2 + $0x1c] sm:$0x7]
  %v220 = vld [vmem:[#allocation2 + $0x1c] sm:$0xf]
  %v221 = vld [vmem:[#allocation2 + $0x10] sm:$0xe]
  %v222 = vld [vmem:[#allocation2 + $0x20] sm:$0x1]
  %v223 = vld [vmem:[#allocation2 + $0x10] sm:$0xc]
  %v224 = vld [vmem:[#allocation2 + $0x20] sm:$0x3]
  %v225 = vld [vmem:[#allocation2 + $0x10] sm:$0x8]
  %v226 = vld [vmem:[#allocation2 + $0x20] sm:$0x7]
  %v227 = vld [vmem:[#allocation2 + $0x20] sm:$0xf]
  %v228 = vld [vmem:[#allocation2 + $0x14] sm:$0xe]
  %v229 = vld [vmem:[#allocation2 + $0x24] sm:$0x1]
  %v230 = vld [vmem:[#allocation2 + $0x14] sm:$0xc]
  %v231 = vld [vmem:[#allocation2 + $0x24] sm:$0x3]
  %v232 = vld [vmem:[#allocation2 + $0x14] sm:$0x8]
  %v233 = vld [vmem:[#allocation2 + $0x24] sm:$0x7]
  %v234 = vld [vmem:[#allocation2 + $0x24] sm:$0xf]
  %v235 = vld [vmem:[#allocation2 + $0x18] sm:$0xe]
  %v236 = vld [vmem:[#allocation2 + $0x28] sm:$0x1]
  %v237 = vld [vmem:[#allocation2 + $0x18] sm:$0xc]
  %v238 = vld [vmem:[#allocation2 + $0x28] sm:$0x3]
  %v239 = vld [vmem:[#allocation2 + $0x18] sm:$0x8]
  %v240 = vld [vmem:[#allocation2 + $0x28] sm:$0x7]
  %v241 = vld [vmem:[#allocation2 + $0x28] sm:$0xf]
  %v242 = vld [vmem:[#allocation2 + $0x1c] sm:$0xe]
  %v243 = vld [vmem:[#allocation2 + $0x2c] sm:$0x1]
  %v244 = vld [vmem:[#allocation2 + $0x1c] sm:$0xc]
  %v245 = vld [vmem:[#allocation2 + $0x2c] sm:$0x3]
  %v246 = vld [vmem:[#allocation2 + $0x1c] sm:$0x8]
  %v247 = vld [vmem:[#allocation2 + $0x2c] sm:$0x7]
  %v248 = vld [vmem:[#allocation2 + $0x2c] sm:$0xf]
  %v249 = vld [vmem:[#allocation2 + $0x20] sm:$0xe]
  %v250 = vld [vmem:[#allocation2 + $0x30] sm:$0x1]
  %v251 = vld [vmem:[#allocation2 + $0x20] sm:$0xc]
  %v252 = vld [vmem:[#allocation2 + $0x30] sm:$0x3]
  %v253 = vld [vmem:[#allocation2 + $0x20] sm:$0x8]
  %v254 = vld [vmem:[#allocation2 + $0x30] sm:$0x7]
  %v255 = vld [vmem:[#allocation2 + $0x30] sm:$0xf]
  %v256 = vld [vmem:[#allocation2 + $0x24] sm:$0xe]
  %v257 = vld [vmem:[#allocation2 + $0x34] sm:$0x1]
  %v258 = vld [vmem:[#allocation2 + $0x24] sm:$0xc]
  %v259 = vld [vmem:[#allocation2 + $0x34] sm:$0x3]
  %v260 = vld [vmem:[#allocation2 + $0x24] sm:$0x8]
  %v261 = vld [vmem:[#allocation2 + $0x34] sm:$0x7]
  %v262 = vld [vmem:[#allocation2 + $0x34] sm:$0xf]
  %v263 = vld [vmem:[#allocation2 + $0x28] sm:$0xe]
  %v264 = vld [vmem:[#allocation2 + $0x38] sm:$0x1]
  %v265 = vld [vmem:[#allocation2 + $0x28] sm:$0xc]
  %v266 = vld [vmem:[#allocation2 + $0x38] sm:$0x3]
  %v267 = vld [vmem:[#allocation2 + $0x28] sm:$0x8]
  %v268 = vld [vmem:[#allocation2 + $0x38] sm:$0x7]
  %v274 = vunpack.c.l.b16 %v197
  %v275 = vunpack.c.l.b16 %v198
  %v276 = vunpack.c.l.b16 %v199
  %v277 = vunpack.c.l.b16 %v200
  %v278 = vunpack.c.l.b16 %v201
  %v279 = vpack.c.b16 %v275, %v274
  %v280 = vpack.c.b16 %v277, %v276
  %v281 = vpack.c.b16 %v278, %v278
  %v284 = vunpack.c.l.b16 %v202
  %v285 = vunpack.c.l.b16 %v203
  %v286 = vpack.c.b16 %v275, %v284
  %v287 = vpack.c.b16 %v285, %v285
  %vm288 = vcmask 1046528
  %v289 = vrot.slane %v286, 1
  %v290 = vrot.slane %v280, 1
  %v291 = vsel %vm288, %v289, %v290
  %v292 = vrot.slane %v287, 1
  %v293 = vsel %vm288, %v290, %v292
  %294 = vrot.lane.b32.xlu0 %v291, 16
  %v295 = vpop.permute.xlu0 %294
  %296 = vrot.lane.b32.xlu0 %v293, 16
  %v297 = vpop.permute.xlu0 %296
  %298 = vrot.lane.b32.xlu0 %v292, 16
  %v299 = vpop.permute.xlu0 %298
  %v302 = vunpack.c.l.b16 %v204
  %v303 = vunpack.c.l.b16 %v205
  %v304 = vpack.c.b16 %v275, %v302
  %v305 = vpack.c.b16 %v303, %v303
  %vm306 = vcmask 1045504
  %v307 = vrot.slane %v304, 2
  %v308 = vrot.slane %v280, 2
  %v309 = vsel %vm306, %v307, %v308
  %v310 = vrot.slane %v305, 2
  %v311 = vsel %vm306, %v308, %v310
  %312 = vrot.lane.b32.xlu0 %v309, 32
  %v313 = vpop.permute.xlu0 %312
  %314 = vrot.lane.b32.xlu0 %v311, 32
  %v315 = vpop.permute.xlu0 %314
  %316 = vrot.lane.b32.xlu0 %v310, 32
  %v317 = vpop.permute.xlu0 %316
  %v319 = vunpack.c.l.b16 %v206
  %v320 = vpack.c.b16 %v276, %v275
  %v321 = vpack.c.b16 %v319, %v277
  %vm322 = vcmask 1040384
  %v323 = vrot.slane %v320, 7
  %v324 = vrot.slane %v321, 7
  %v325 = vsel %vm322, %v323, %v324
  %326 = vrot.lane.b32.xlu0 %v323, 48
  %v327 = vpop.permute.xlu0 %326
  %328 = vrot.lane.b32.xlu0 %v325, 48
  %v329 = vpop.permute.xlu0 %328
  %330 = vrot.lane.b32.xlu0 %v324, 48
  %v331 = vpop.permute.xlu0 %330
  %v334 = vunpack.c.l.b16 %v207
  %v335 = vunpack.c.l.b16 %v208
  %v336 = vpack.c.b16 %v276, %v334
  %v337 = vpack.c.b16 %v335, %v335
  %338 = vrot.lane.b32.xlu0 %v336, 64
  %v339 = vpop.permute.xlu0 %338
  %340 = vrot.lane.b32.xlu0 %v321, 64
  %v341 = vpop.permute.xlu0 %340
  %342 = vrot.lane.b32.xlu0 %v337, 64
  %v343 = vpop.permute.xlu0 %342
  %v346 = vunpack.c.l.b16 %v209
  %v347 = vunpack.c.l.b16 %v210
  %v348 = vpack.c.b16 %v276, %v346
  %v349 = vpack.c.b16 %v347, %v347
  %v350 = vrot.slane %v348, 1
  %v351 = vrot.slane %v321, 1
  %v352 = vsel %vm288, %v350, %v351
  %v353 = vrot.slane %v349, 1
  %v354 = vsel %vm288, %v351, %v353
  %355 = vrot.lane.b32.xlu0 %v352, 80
  %v356 = vpop.permute.xlu0 %355
  %357 = vrot.lane.b32.xlu0 %v354, 80
  %v358 = vpop.permute.xlu0 %357
  %359 = vrot.lane.b32.xlu0 %v353, 80
  %v360 = vpop.permute.xlu0 %359
  %v363 = vunpack.c.l.b16 %v211
  %v364 = vunpack.c.l.b16 %v212
  %v365 = vpack.c.b16 %v276, %v363
  %v366 = vpack.c.b16 %v364, %v364
  %v367 = vrot.slane %v365, 2
  %v368 = vrot.slane %v321, 2
  %v369 = vsel %vm306, %v367, %v368
  %v370 = vrot.slane %v366, 2
  %v371 = vsel %vm306, %v368, %v370
  %372 = vrot.lane.b32.xlu0 %v369, 96
  %v373 = vpop.permute.xlu0 %372
  %374 = vrot.lane.b32.xlu0 %v371, 96
  %v375 = vpop.permute.xlu0 %374
  %376 = vrot.lane.b32.xlu0 %v370, 96
  %v377 = vpop.permute.xlu0 %376
  %v379 = vunpack.c.l.b16 %v213
  %v380 = vpack.c.b16 %v379, %v319
  %v381 = vrot.slane %v280, 7
  %v382 = vrot.slane %v380, 7
  %v383 = vsel %vm322, %v381, %v382
  %384 = vrot.lane.b32.xlu0 %v381, 112
  %v385 = vpop.permute.xlu0 %384
  %386 = vrot.lane.b32.xlu0 %v383, 112
  %v387 = vpop.permute.xlu0 %386
  %388 = vrot.lane.b32.xlu0 %v382, 112
  %v389 = vpop.permute.xlu0 %388
  %v392 = vunpack.c.l.b16 %v214
  %v393 = vunpack.c.l.b16 %v215
  %v394 = vpack.c.b16 %v277, %v392
  %v395 = vpack.c.b16 %v393, %v393
  %v398 = vunpack.c.l.b16 %v216
  %v399 = vunpack.c.l.b16 %v217
  %v400 = vpack.c.b16 %v277, %v398
  %v401 = vpack.c.b16 %v399, %v399
  %v402 = vrot.slane %v400, 1
  %v403 = vrot.slane %v380, 1
  %v404 = vsel %vm288, %v402, %v403
  %v405 = vrot.slane %v401, 1
  %v406 = vsel %vm288, %v403, %v405
  %407 = vrot.lane.b32.xlu0 %v404, 16
  %v408 = vpop.permute.xlu0 %407
  %409 = vrot.lane.b32.xlu0 %v406, 16
  %v410 = vpop.permute.xlu0 %409
  %411 = vrot.lane.b32.xlu0 %v405, 16
  %v412 = vpop.permute.xlu0 %411
  %v415 = vunpack.c.l.b16 %v218
  %v416 = vunpack.c.l.b16 %v219
  %v417 = vpack.c.b16 %v277, %v415
  %v418 = vpack.c.b16 %v416, %v416
  %v419 = vrot.slane %v417, 2
  %v420 = vrot.slane %v380, 2
  %v421 = vsel %vm306, %v419, %v420
  %v422 = vrot.slane %v418, 2
  %v423 = vsel %vm306, %v420, %v422
  %424 = vrot.lane.b32.xlu0 %v421, 32
  %v425 = vpop.permute.xlu0 %424
  %426 = vrot.lane.b32.xlu0 %v423, 32
  %v427 = vpop.permute.xlu0 %426
  %428 = vrot.lane.b32.xlu0 %v422, 32
  %v429 = vpop.permute.xlu0 %428
  %v431 = vunpack.c.l.b16 %v220
  %v432 = vpack.c.b16 %v431, %v379
  %v433 = vrot.slane %v432, 7
  %v434 = vsel %vm322, %v324, %v433
  %435 = vrot.lane.b32.xlu0 %v434, 48
  %v436 = vpop.permute.xlu0 %435
  %437 = vrot.lane.b32.xlu0 %v433, 48
  %v438 = vpop.permute.xlu0 %437
  %v441 = vunpack.c.l.b16 %v221
  %v442 = vunpack.c.l.b16 %v222
  %v443 = vpack.c.b16 %v319, %v441
  %v444 = vpack.c.b16 %v442, %v442
  %445 = vrot.lane.b32.xlu0 %v443, 64
  %v446 = vpop.permute.xlu0 %445
  %447 = vrot.lane.b32.xlu0 %v432, 64
  %v448 = vpop.permute.xlu0 %447
  %449 = vrot.lane.b32.xlu0 %v444, 64
  %v450 = vpop.permute.xlu0 %449
  %v453 = vunpack.c.l.b16 %v223
  %v454 = vunpack.c.l.b16 %v224
  %v455 = vpack.c.b16 %v319, %v453
  %v456 = vpack.c.b16 %v454, %v454
  %v457 = vrot.slane %v455, 1
  %v458 = vrot.slane %v432, 1
  %v459 = vsel %vm288, %v457, %v458
  %v460 = vrot.slane %v456, 1
  %v461 = vsel %vm288, %v458, %v460
  %462 = vrot.lane.b32.xlu0 %v459, 80
  %v463 = vpop.permute.xlu0 %462
  %464 = vrot.lane.b32.xlu0 %v461, 80
  %v465 = vpop.permute.xlu0 %464
  %466 = vrot.lane.b32.xlu0 %v460, 80
  %v467 = vpop.permute.xlu0 %466
  %v470 = vunpack.c.l.b16 %v225
  %v471 = vunpack.c.l.b16 %v226
  %v472 = vpack.c.b16 %v319, %v470
  %v473 = vpack.c.b16 %v471, %v471
  %v474 = vrot.slane %v472, 2
  %v475 = vrot.slane %v432, 2
  %v476 = vsel %vm306, %v474, %v475
  %v477 = vrot.slane %v473, 2
  %v478 = vsel %vm306, %v475, %v477
  %479 = vrot.lane.b32.xlu0 %v476, 96
  %v480 = vpop.permute.xlu0 %479
  %481 = vrot.lane.b32.xlu0 %v478, 96
  %v482 = vpop.permute.xlu0 %481
  %483 = vrot.lane.b32.xlu0 %v477, 96
  %v484 = vpop.permute.xlu0 %483
  %v486 = vunpack.c.l.b16 %v227
  %v487 = vpack.c.b16 %v486, %v431
  %v488 = vrot.slane %v487, 7
  %v489 = vsel %vm322, %v382, %v488
  %490 = vrot.lane.b32.xlu0 %v489, 112
  %v491 = vpop.permute.xlu0 %490
  %492 = vrot.lane.b32.xlu0 %v488, 112
  %v493 = vpop.permute.xlu0 %492
  %vm494 = vcmask 130048
  %v497 = vsel %vm494, %v279, %v295
  %v500 = vsel %vm494, %v280, %v297
  %v503 = vsel %vm494, %v281, %v299
  %vm504 = vcmask 261120
  %v506 = vsel %vm504, %v497, %v313
  %v508 = vsel %vm504, %v500, %v315
  %v510 = vsel %vm504, %v503, %v317
  %vm511 = vcmask 392192
  %v513 = vsel %vm511, %v506, %v327
  %v515 = vsel %vm511, %v508, %v329
  %v517 = vsel %vm511, %v510, %v331
  %vm518 = vcmask 523264
  %v520 = vsel %vm518, %v513, %v339
  %v522 = vsel %vm518, %v515, %v341
  %v524 = vsel %vm518, %v517, %v343
  %vm525 = vcmask 654336
  %v527 = vsel %vm525, %v520, %v356
  %v529 = vsel %vm525, %v522, %v358
  %v531 = vsel %vm525, %v524, %v360
  %vm532 = vcmask 785408
  %v534 = vsel %vm532, %v527, %v373
  %v536 = vsel %vm532, %v529, %v375
  %v538 = vsel %vm532, %v531, %v377
  %vm539 = vcmask 916480
  %v541 = vsel %vm539, %v534, %v385
  %v543 = vsel %vm539, %v536, %v387
  %v545 = vsel %vm539, %v538, %v389
  %v548 = vsel %vm494, %v394, %v408
  %v551 = vsel %vm494, %v380, %v410
  %v554 = vsel %vm494, %v395, %v412
  %v556 = vsel %vm504, %v548, %v425
  %v558 = vsel %vm504, %v551, %v427
  %v560 = vsel %vm504, %v554, %v429
  %v561 = vsel %vm511, %v556, %v331
  %v563 = vsel %vm511, %v558, %v436
  %v565 = vsel %vm511, %v560, %v438
  %v567 = vsel %vm518, %v561, %v446
  %v569 = vsel %vm518, %v563, %v448
  %v571 = vsel %vm518, %v565, %v450
  %v573 = vsel %vm525, %v567, %v463
  %v575 = vsel %vm525, %v569, %v465
  %v577 = vsel %vm525, %v571, %v467
  %v579 = vsel %vm532, %v573, %v480
  %v581 = vsel %vm532, %v575, %v482
  %v583 = vsel %vm532, %v577, %v484
  %v584 = vsel %vm539, %v579, %v389
  %v586 = vsel %vm539, %v581, %v491
  %v588 = vsel %vm539, %v583, %v493
  %v591 = vunpack.c.l.b16 %v228
  %v592 = vunpack.c.l.b16 %v229
  %v593 = vpack.c.b16 %v379, %v591
  %v594 = vpack.c.b16 %v592, %v592
  %v597 = vunpack.c.l.b16 %v230
  %v598 = vunpack.c.l.b16 %v231
  %v599 = vpack.c.b16 %v379, %v597
  %v600 = vpack.c.b16 %v598, %v598
  %v601 = vrot.slane %v599, 1
  %v602 = vrot.slane %v487, 1
  %v603 = vsel %vm288, %v601, %v602
  %v604 = vrot.slane %v600, 1
  %v605 = vsel %vm288, %v602, %v604
  %606 = vrot.lane.b32.xlu0 %v603, 16
  %v607 = vpop.permute.xlu0 %606
  %608 = vrot.lane.b32.xlu0 %v605, 16
  %v609 = vpop.permute.xlu0 %608
  %610 = vrot.lane.b32.xlu0 %v604, 16
  %v611 = vpop.permute.xlu0 %610
  %v614 = vunpack.c.l.b16 %v232
  %v615 = vunpack.c.l.b16 %v233
  %v616 = vpack.c.b16 %v379, %v614
  %v617 = vpack.c.b16 %v615, %v615
  %v618 = vrot.slane %v616, 2
  %v619 = vrot.slane %v487, 2
  %v620 = vsel %vm306, %v618, %v619
  %v621 = vrot.slane %v617, 2
  %v622 = vsel %vm306, %v619, %v621
  %623 = vrot.lane.b32.xlu0 %v620, 32
  %v624 = vpop.permute.xlu0 %623
  %625 = vrot.lane.b32.xlu0 %v622, 32
  %v626 = vpop.permute.xlu0 %625
  %627 = vrot.lane.b32.xlu0 %v621, 32
  %v628 = vpop.permute.xlu0 %627
  %v630 = vunpack.c.l.b16 %v234
  %v631 = vpack.c.b16 %v630, %v486
  %v632 = vrot.slane %v631, 7
  %v633 = vsel %vm322, %v433, %v632
  %634 = vrot.lane.b32.xlu0 %v633, 48
  %v635 = vpop.permute.xlu0 %634
  %636 = vrot.lane.b32.xlu0 %v632, 48
  %v637 = vpop.permute.xlu0 %636
  %v640 = vunpack.c.l.b16 %v235
  %v641 = vunpack.c.l.b16 %v236
  %v642 = vpack.c.b16 %v431, %v640
  %v643 = vpack.c.b16 %v641, %v641
  %644 = vrot.lane.b32.xlu0 %v642, 64
  %v645 = vpop.permute.xlu0 %644
  %646 = vrot.lane.b32.xlu0 %v631, 64
  %v647 = vpop.permute.xlu0 %646
  %648 = vrot.lane.b32.xlu0 %v643, 64
  %v649 = vpop.permute.xlu0 %648
  %v652 = vunpack.c.l.b16 %v237
  %v653 = vunpack.c.l.b16 %v238
  %v654 = vpack.c.b16 %v431, %v652
  %v655 = vpack.c.b16 %v653, %v653
  %v656 = vrot.slane %v654, 1
  %v657 = vrot.slane %v631, 1
  %v658 = vsel %vm288, %v656, %v657
  %v659 = vrot.slane %v655, 1
  %v660 = vsel %vm288, %v657, %v659
  %661 = vrot.lane.b32.xlu0 %v658, 80
  %v662 = vpop.permute.xlu0 %661
  %663 = vrot.lane.b32.xlu0 %v660, 80
  %v664 = vpop.permute.xlu0 %663
  %665 = vrot.lane.b32.xlu0 %v659, 80
  %v666 = vpop.permute.xlu0 %665
  %v669 = vunpack.c.l.b16 %v239
  %v670 = vunpack.c.l.b16 %v240
  %v671 = vpack.c.b16 %v431, %v669
  %v672 = vpack.c.b16 %v670, %v670
  %v673 = vrot.slane %v671, 2
  %v674 = vrot.slane %v631, 2
  %v675 = vsel %vm306, %v673, %v674
  %v676 = vrot.slane %v672, 2
  %v677 = vsel %vm306, %v674, %v676
  %678 = vrot.lane.b32.xlu0 %v675, 96
  %v679 = vpop.permute.xlu0 %678
  %680 = vrot.lane.b32.xlu0 %v677, 96
  %v681 = vpop.permute.xlu0 %680
  %682 = vrot.lane.b32.xlu0 %v676, 96
  %v683 = vpop.permute.xlu0 %682
  %v685 = vunpack.c.l.b16 %v241
  %v686 = vpack.c.b16 %v685, %v630
  %v687 = vrot.slane %v686, 7
  %v688 = vsel %vm322, %v488, %v687
  %689 = vrot.lane.b32.xlu0 %v688, 112
  %v690 = vpop.permute.xlu0 %689
  %691 = vrot.lane.b32.xlu0 %v687, 112
  %v692 = vpop.permute.xlu0 %691
  %v695 = vunpack.c.l.b16 %v242
  %v696 = vunpack.c.l.b16 %v243
  %v697 = vpack.c.b16 %v486, %v695
  %v698 = vpack.c.b16 %v696, %v696
  %v701 = vunpack.c.l.b16 %v244
  %v702 = vunpack.c.l.b16 %v245
  %v703 = vpack.c.b16 %v486, %v701
  %v704 = vpack.c.b16 %v702, %v702
  %v705 = vrot.slane %v703, 1
  %v706 = vrot.slane %v686, 1
  %v707 = vsel %vm288, %v705, %v706
  %v708 = vrot.slane %v704, 1
  %v709 = vsel %vm288, %v706, %v708
  %710 = vrot.lane.b32.xlu0 %v707, 16
  %v711 = vpop.permute.xlu0 %710
  %712 = vrot.lane.b32.xlu0 %v709, 16
  %v713 = vpop.permute.xlu0 %712
  %714 = vrot.lane.b32.xlu0 %v708, 16
  %v715 = vpop.permute.xlu0 %714
  %v718 = vunpack.c.l.b16 %v246
  %v719 = vunpack.c.l.b16 %v247
  %v720 = vpack.c.b16 %v486, %v718
  %v721 = vpack.c.b16 %v719, %v719
  %v722 = vrot.slane %v720, 2
  %v723 = vrot.slane %v686, 2
  %v724 = vsel %vm306, %v722, %v723
  %v725 = vrot.slane %v721, 2
  %v726 = vsel %vm306, %v723, %v725
  %727 = vrot.lane.b32.xlu0 %v724, 32
  %v728 = vpop.permute.xlu0 %727
  %729 = vrot.lane.b32.xlu0 %v726, 32
  %v730 = vpop.permute.xlu0 %729
  %731 = vrot.lane.b32.xlu0 %v725, 32
  %v732 = vpop.permute.xlu0 %731
  %v734 = vunpack.c.l.b16 %v248
  %v735 = vpack.c.b16 %v734, %v685
  %v736 = vrot.slane %v735, 7
  %v737 = vsel %vm322, %v632, %v736
  %738 = vrot.lane.b32.xlu0 %v737, 48
  %v739 = vpop.permute.xlu0 %738
  %740 = vrot.lane.b32.xlu0 %v736, 48
  %v741 = vpop.permute.xlu0 %740
  %v744 = vunpack.c.l.b16 %v249
  %v745 = vunpack.c.l.b16 %v250
  %v746 = vpack.c.b16 %v630, %v744
  %v747 = vpack.c.b16 %v745, %v745
  %748 = vrot.lane.b32.xlu0 %v746, 64
  %v749 = vpop.permute.xlu0 %748
  %750 = vrot.lane.b32.xlu0 %v735, 64
  %v751 = vpop.permute.xlu0 %750
  %752 = vrot.lane.b32.xlu0 %v747, 64
  %v753 = vpop.permute.xlu0 %752
  %v756 = vunpack.c.l.b16 %v251
  %v757 = vunpack.c.l.b16 %v252
  %v758 = vpack.c.b16 %v630, %v756
  %v759 = vpack.c.b16 %v757, %v757
  %v760 = vrot.slane %v758, 1
  %v761 = vrot.slane %v735, 1
  %v762 = vsel %vm288, %v760, %v761
  %v763 = vrot.slane %v759, 1
  %v764 = vsel %vm288, %v761, %v763
  %765 = vrot.lane.b32.xlu0 %v762, 80
  %v766 = vpop.permute.xlu0 %765
  %767 = vrot.lane.b32.xlu0 %v764, 80
  %v768 = vpop.permute.xlu0 %767
  %769 = vrot.lane.b32.xlu0 %v763, 80
  %v770 = vpop.permute.xlu0 %769
  %v773 = vunpack.c.l.b16 %v253
  %v774 = vunpack.c.l.b16 %v254
  %v775 = vpack.c.b16 %v630, %v773
  %v776 = vpack.c.b16 %v774, %v774
  %v777 = vrot.slane %v775, 2
  %v778 = vrot.slane %v735, 2
  %v779 = vsel %vm306, %v777, %v778
  %v780 = vrot.slane %v776, 2
  %v781 = vsel %vm306, %v778, %v780
  %782 = vrot.lane.b32.xlu0 %v779, 96
  %v783 = vpop.permute.xlu0 %782
  %784 = vrot.lane.b32.xlu0 %v781, 96
  %v785 = vpop.permute.xlu0 %784
  %786 = vrot.lane.b32.xlu0 %v780, 96
  %v787 = vpop.permute.xlu0 %786
  %v789 = vunpack.c.l.b16 %v255
  %v790 = vpack.c.b16 %v789, %v734
  %v791 = vrot.slane %v790, 7
  %v792 = vsel %vm322, %v687, %v791
  %793 = vrot.lane.b32.xlu0 %v792, 112
  %v794 = vpop.permute.xlu0 %793
  %795 = vrot.lane.b32.xlu0 %v791, 112
  %v796 = vpop.permute.xlu0 %795
  %v799 = vsel %vm494, %v593, %v607
  %v802 = vsel %vm494, %v487, %v609
  %v805 = vsel %vm494, %v594, %v611
  %v807 = vsel %vm504, %v799, %v624
  %v809 = vsel %vm504, %v802, %v626
  %v811 = vsel %vm504, %v805, %v628
  %v812 = vsel %vm511, %v807, %v438
  %v814 = vsel %vm511, %v809, %v635
  %v816 = vsel %vm511, %v811, %v637
  %v818 = vsel %vm518, %v812, %v645
  %v820 = vsel %vm518, %v814, %v647
  %v822 = vsel %vm518, %v816, %v649
  %v824 = vsel %vm525, %v818, %v662
  %v826 = vsel %vm525, %v820, %v664
  %v828 = vsel %vm525, %v822, %v666
  %v830 = vsel %vm532, %v824, %v679
  %v832 = vsel %vm532, %v826, %v681
  %v834 = vsel %vm532, %v828, %v683
  %v835 = vsel %vm539, %v830, %v493
  %v837 = vsel %vm539, %v832, %v690
  %v839 = vsel %vm539, %v834, %v692
  %v842 = vsel %vm494, %v697, %v711
  %v845 = vsel %vm494, %v686, %v713
  %v848 = vsel %vm494, %v698, %v715
  %v850 = vsel %vm504, %v842, %v728
  %v852 = vsel %vm504, %v845, %v730
  %v854 = vsel %vm504, %v848, %v732
  %v855 = vsel %vm511, %v850, %v637
  %v857 = vsel %vm511, %v852, %v739
  %v859 = vsel %vm511, %v854, %v741
  %v861 = vsel %vm518, %v855, %v749
  %v863 = vsel %vm518, %v857, %v751
  %v865 = vsel %vm518, %v859, %v753
  %v867 = vsel %vm525, %v861, %v766
  %v869 = vsel %vm525, %v863, %v768
  %v871 = vsel %vm525, %v865, %v770
  %v873 = vsel %vm532, %v867, %v783
  %v875 = vsel %vm532, %v869, %v785
  %v877 = vsel %vm532, %v871, %v787
  %v878 = vsel %vm539, %v873, %v692
  %v880 = vsel %vm539, %v875, %v794
  %v882 = vsel %vm539, %v877, %v796
  %v885 = vunpack.c.l.b16 %v256
  %v886 = vunpack.c.l.b16 %v257
  %v887 = vpack.c.b16 %v685, %v885
  %v888 = vpack.c.b16 %v886, %v886
  %v891 = vunpack.c.l.b16 %v258
  %v892 = vunpack.c.l.b16 %v259
  %v893 = vpack.c.b16 %v685, %v891
  %v894 = vpack.c.b16 %v892, %v892
  %v895 = vrot.slane %v893, 1
  %v896 = vrot.slane %v790, 1
  %v897 = vsel %vm288, %v895, %v896
  %v898 = vrot.slane %v894, 1
  %v899 = vsel %vm288, %v896, %v898
  %900 = vrot.lane.b32.xlu0 %v897, 16
  %v901 = vpop.permute.xlu0 %900
  %902 = vrot.lane.b32.xlu0 %v899, 16
  %v903 = vpop.permute.xlu0 %902
  %904 = vrot.lane.b32.xlu0 %v898, 16
  %v905 = vpop.permute.xlu0 %904
  %v908 = vunpack.c.l.b16 %v260
  %v909 = vunpack.c.l.b16 %v261
  %v910 = vpack.c.b16 %v685, %v908
  %v911 = vpack.c.b16 %v909, %v909
  %v912 = vrot.slane %v910, 2
  %v913 = vrot.slane %v790, 2
  %v914 = vsel %vm306, %v912, %v913
  %v915 = vrot.slane %v911, 2
  %v916 = vsel %vm306, %v913, %v915
  %917 = vrot.lane.b32.xlu0 %v914, 32
  %v918 = vpop.permute.xlu0 %917
  %919 = vrot.lane.b32.xlu0 %v916, 32
  %v920 = vpop.permute.xlu0 %919
  %921 = vrot.lane.b32.xlu0 %v915, 32
  %v922 = vpop.permute.xlu0 %921
  %v924 = vunpack.c.l.b16 %v262
  %v925 = vpack.c.b16 %v924, %v789
  %v926 = vrot.slane %v925, 7
  %v927 = vsel %vm322, %v736, %v926
  %928 = vrot.lane.b32.xlu0 %v927, 48
  %v929 = vpop.permute.xlu0 %928
  %930 = vrot.lane.b32.xlu0 %v926, 48
  %v931 = vpop.permute.xlu0 %930
  %v934 = vunpack.c.l.b16 %v263
  %v935 = vunpack.c.l.b16 %v264
  %v936 = vpack.c.b16 %v734, %v934
  %v937 = vpack.c.b16 %v935, %v935
  %938 = vrot.lane.b32.xlu0 %v936, 64
  %v939 = vpop.permute.xlu0 %938
  %940 = vrot.lane.b32.xlu0 %v925, 64
  %v941 = vpop.permute.xlu0 %940
  %942 = vrot.lane.b32.xlu0 %v937, 64
  %v943 = vpop.permute.xlu0 %942
  %v946 = vunpack.c.l.b16 %v265
  %v947 = vunpack.c.l.b16 %v266
  %v948 = vpack.c.b16 %v734, %v946
  %v949 = vpack.c.b16 %v947, %v947
  %v950 = vrot.slane %v948, 1
  %v951 = vrot.slane %v925, 1
  %v952 = vsel %vm288, %v950, %v951
  %v953 = vrot.slane %v949, 1
  %v954 = vsel %vm288, %v951, %v953
  %955 = vrot.lane.b32.xlu0 %v952, 80
  %v956 = vpop.permute.xlu0 %955
  %957 = vrot.lane.b32.xlu0 %v954, 80
  %v958 = vpop.permute.xlu0 %957
  %959 = vrot.lane.b32.xlu0 %v953, 80
  %v960 = vpop.permute.xlu0 %959
  %v963 = vunpack.c.l.b16 %v267
  %v964 = vunpack.c.l.b16 %v268
  %v965 = vpack.c.b16 %v734, %v963
  %v966 = vpack.c.b16 %v964, %v964
  %v967 = vrot.slane %v965, 2
  %v968 = vrot.slane %v925, 2
  %v969 = vsel %vm306, %v967, %v968
  %v970 = vrot.slane %v966, 2
  %v971 = vsel %vm306, %v968, %v970
  %972 = vrot.lane.b32.xlu0 %v969, 96
  %v973 = vpop.permute.xlu0 %972
  %974 = vrot.lane.b32.xlu0 %v971, 96
  %v975 = vpop.permute.xlu0 %974
  %976 = vrot.lane.b32.xlu0 %v970, 96
  %v977 = vpop.permute.xlu0 %976
  %v982 = vunpack.c.l.b16 %v193
  %v983 = vunpack.c.l.b16 %v194
  %v984 = vunpack.c.l.b16 %v195
  %v985 = vunpack.c.l.b16 %v196
  %v986 = vpack.c.b16 %v983, %v982
  %v987 = vpack.c.b16 %v985, %v984
  %v988 = vrot.slane %v986, 7
  %v989 = vrot.slane %v987, 7
  %v990 = vsel %vm322, %v988, %v989
  %991 = vrot.lane.b32.xlu0 %v988, 112
  %v992 = vpop.permute.xlu0 %991
  %993 = vrot.lane.b32.xlu0 %v990, 112
  %v994 = vpop.permute.xlu0 %993
  %995 = vrot.lane.b32.xlu0 %v989, 112
  %v996 = vpop.permute.xlu0 %995
  %v999 = vsel %vm494, %v887, %v901
  %v1002 = vsel %vm494, %v790, %v903
  %v1005 = vsel %vm494, %v888, %v905
  %v1007 = vsel %vm504, %v999, %v918
  %v1009 = vsel %vm504, %v1002, %v920
  %v1011 = vsel %vm504, %v1005, %v922
  %v1012 = vsel %vm511, %v1007, %v741
  %v1014 = vsel %vm511, %v1009, %v929
  %v1016 = vsel %vm511, %v1011, %v931
  %v1018 = vsel %vm518, %v1012, %v939
  %v1020 = vsel %vm518, %v1014, %v941
  %v1022 = vsel %vm518, %v1016, %v943
  %v1024 = vsel %vm525, %v1018, %v956
  %v1026 = vsel %vm525, %v1020, %v958
  %v1028 = vsel %vm525, %v1022, %v960
  %v1030 = vsel %vm532, %v1024, %v973
  %v1032 = vsel %vm532, %v1026, %v975
  %v1034 = vsel %vm532, %v1028, %v977
  %v1036 = vsel %vm539, %v1030, %v992
  %v1038 = vsel %vm539, %v1032, %v994
  %v1040 = vsel %vm539, %v1034, %v996
  %v1041 = vld [vmem:[%s3] sm:$0xf]
  %v1042 = vld [vmem:[%s3 + $0x4] sm:$0xf]
  %v1043 = vld [vmem:[%s3 + $0x8] sm:$0xf]
  %v1044 = vld [vmem:[%s3 + $0xc] sm:$0xf]
  %v1045 = vld [vmem:[%s3 + $0x10] sm:$0xf]
  %v1046 = vld [vmem:[%s3 + $0x14] sm:$0xf]
  %v1047 = vld [vmem:[%s3 + $0x18] sm:$0xf]
  %v1048 = vld [vmem:[%s3 + $0x1c] sm:$0xf]
  %v1049 = vld [vmem:[%s3 + $0x20] sm:$0xf]
  %v1050 = vld [vmem:[%s3 + $0x24] sm:$0xf]
  %v1051 = vld [vmem:[%s3 + $0x28] sm:$0xf]
  %v1052 = vld [vmem:[%s3 + $0x2c] sm:$0xf]
  %v1053 = vld [vmem:[%s3 + $0x30] sm:$0xf]
  %v1054 = vld [vmem:[%s3 + $0x34] sm:$0xf]
  %v1055 = vld [vmem:[%s3 + $0x38] sm:$0xf]
  %v1056 = vld [vmem:[%s3 + $0x3c] sm:$0xf]
  %v1057 = vld [vmem:[%s3 + $0x40] sm:$0xf]
  %v1058 = vld [vmem:[%s3 + $0x44] sm:$0xf]
  %v1059 = vld [vmem:[%s3 + $0x48] sm:$0xf]
  %v1060 = vld [vmem:[%s3 + $0x4c] sm:$0xf]
  %v1061 = vld [vmem:[%s3 + $0x50] sm:$0xf]
  %v1062 = vld [vmem:[%s3 + $0x54] sm:$0xf]
  %v1063 = vld [vmem:[%s3 + $0x58] sm:$0xf]
  %v1064 = vld [vmem:[%s3 + $0x5c] sm:$0xf]
  %v1065 = vld [vmem:[%s3 + $0x60] sm:$0xf]
  %v1066 = vld [vmem:[%s3 + $0x64] sm:$0xf]
  %v1067 = vld [vmem:[%s3 + $0x68] sm:$0xf]
  %v1068 = vld [vmem:[%s3 + $0x6c] sm:$0xf]
  %v1069 = vld [vmem:[%s3 + $0x70] sm:$0xf]
  %v1070 = vld [vmem:[%s3 + $0x74] sm:$0xf]
  %v1071 = vld [vmem:[%s3 + $0x78] sm:$0xf]
  %v1072 = vld [vmem:[%s3 + $0x7c] sm:$0xf]
  %v1073 = vld [vmem:[%s3 + $0x80] sm:$0xf]
  %v1074 = vld [vmem:[%s3 + $0x84] sm:$0xf]
  %v1075 = vld [vmem:[%s3 + $0x88] sm:$0xf]
  %v1076 = vld [vmem:[%s3 + $0x8c] sm:$0xf]
  %v1077 = vld [vmem:[%s3 + $0x90] sm:$0xf]
  %v1078 = vld [vmem:[%s3 + $0x94] sm:$0xf]
  %v1079 = vld [vmem:[%s3 + $0x98] sm:$0xf]
  %v1080 = vld [vmem:[%s3 + $0x9c] sm:$0xf]
  %v1081 = vld [vmem:[%s3 + $0xa0] sm:$0xf]
  %v1082 = vld [vmem:[%s3 + $0xa4] sm:$0xf]
  %v1083 = vld [vmem:[%s3 + $0xa8] sm:$0xf]
  %v1084 = vld [vmem:[%s3 + $0xac] sm:$0xf]
  %v1085 = vld [vmem:[%s3 + $0xb0] sm:$0xf]
  %v1086 = vld [vmem:[%s3 + $0xb4] sm:$0xf]
  %v1087 = vld [vmem:[%s3 + $0xb8] sm:$0xf]
  %v1088 = vld [vmem:[%s3 + $0xbc] sm:$0xf]
  %v1089 = vld [vmem:[%s3 + $0xc0] sm:$0xf]
  %v1090 = vld [vmem:[%s3 + $0xc4] sm:$0xf]
  %v1091 = vld [vmem:[%s3 + $0xc8] sm:$0xf]
  %v1092 = vld [vmem:[%s3 + $0xcc] sm:$0xf]
  %v1093 = vld [vmem:[%s3 + $0xd0] sm:$0xf]
  %v1094 = vld [vmem:[%s3 + $0xd4] sm:$0xf]
  %v1095 = vld [vmem:[%s3 + $0xd8] sm:$0xf]
  %v1096 = vld [vmem:[%s3 + $0xdc] sm:$0xf]
  %v1097 = vld [vmem:[%s3 + $0xe0] sm:$0xf]
  %v1098 = vld [vmem:[%s3 + $0xe4] sm:$0xf]
  %v1099 = vld [vmem:[%s3 + $0xe8] sm:$0xf]
  %v1100 = vld [vmem:[%s3 + $0xec] sm:$0xf]
  %v1101 = vld [vmem:[%s3 + $0xf0] sm:$0xf]
  %v1102 = vld [vmem:[%s3 + $0xf4] sm:$0xf]
  %v1103 = vld [vmem:[%s3 + $0xf8] sm:$0xf]
  %v1104 = vld [vmem:[%s3 + $0xfc] sm:$0xf]
  %v1105 = vld [vmem:[%s3 + $0x100] sm:$0xf]
  %v1106 = vld [vmem:[%s3 + $0x104] sm:$0xf]
  %v1107 = vld [vmem:[%s3 + $0x108] sm:$0xf]
  %v1108 = vld [vmem:[%s3 + $0x10c] sm:$0xf]
  %v1109 = vld [vmem:[%s3 + $0x110] sm:$0xf]
  %v1110 = vld [vmem:[%s3 + $0x114] sm:$0xf]
  %v1111 = vld [vmem:[%s3 + $0x118] sm:$0xf]
  %v1112 = vld [vmem:[%s3 + $0x11c] sm:$0xf]
  %v1113 = vld [vmem:[%s3 + $0x120] sm:$0xf]
  %v1114 = vld [vmem:[%s3 + $0x124] sm:$0xf]
  %v1115 = vld [vmem:[%s3 + $0x128] sm:$0xf]
  %v1116 = vld [vmem:[%s3 + $0x12c] sm:$0xf]
  %v1117 = vld [vmem:[%s3 + $0x130] sm:$0xf]
  %v1118 = vld [vmem:[%s3 + $0x134] sm:$0xf]
  %v1119 = vld [vmem:[%s3 + $0x138] sm:$0xf]
  %v1120 = vld [vmem:[%s3 + $0x13c] sm:$0xf]
  %v1121 = vld [vmem:[%s3 + $0x140] sm:$0xf]
  %v1122 = vld [vmem:[%s3 + $0x144] sm:$0xf]
  %v1123 = vld [vmem:[%s3 + $0x148] sm:$0xf]
  %v1124 = vld [vmem:[%s3 + $0x14c] sm:$0xf]
  %v1125 = vld [vmem:[%s3 + $0x150] sm:$0xf]
  %v1126 = vld [vmem:[%s3 + $0x154] sm:$0xf]
  %v1127 = vld [vmem:[%s3 + $0x158] sm:$0xf]
  %v1128 = vld [vmem:[%s3 + $0x15c] sm:$0xf]
  %v1129 = vld [vmem:[%s3 + $0x160] sm:$0xf]
  %v1130 = vld [vmem:[%s3 + $0x164] sm:$0xf]
  %v1131 = vld [vmem:[%s3 + $0x168] sm:$0xf]
  %v1132 = vld [vmem:[%s3 + $0x16c] sm:$0xf]
  %v1133 = vld [vmem:[%s3 + $0x170] sm:$0xf]
  %v1134 = vld [vmem:[%s3 + $0x174] sm:$0xf]
  %v1135 = vld [vmem:[%s4] sm:$0x1]
  %v1137 = vperm.slane %v1135, 0
  %v1154 = vrot.slane %v541, 1
  %v1155 = vrot.slane %v543, 1
  %v1156 = vsel %vm288, %v1154, %v1155
  %v1157 = vrot.slane %v584, 1
  %v1158 = vrot.slane %v586, 1
  %v1159 = vsel %vm288, %v1157, %v1158
  %v1160 = vrot.slane %v835, 1
  %v1161 = vrot.slane %v837, 1
  %v1162 = vsel %vm288, %v1160, %v1161
  %v1163 = vrot.slane %v878, 1
  %v1164 = vrot.slane %v880, 1
  %v1165 = vsel %vm288, %v1163, %v1164
  %v1166 = vrot.slane %v1036, 1
  %v1167 = vrot.slane %v1038, 1
  %v1168 = vsel %vm288, %v1166, %v1167
  %v1169 = vrot.slane %v992, 1
  %v1170 = vrot.slane %v994, 1
  %v1171 = vsel %vm288, %v1169, %v1170
  %v1172 = vrot.slane %v545, 1
  %v1173 = vsel %vm288, %v1155, %v1172
  %v1174 = vrot.slane %v588, 1
  %v1175 = vsel %vm288, %v1158, %v1174
  %v1176 = vrot.slane %v839, 1
  %v1177 = vsel %vm288, %v1161, %v1176
  %v1178 = vrot.slane %v882, 1
  %v1179 = vsel %vm288, %v1164, %v1178
  %v1180 = vrot.slane %v1040, 1
  %v1181 = vsel %vm288, %v1167, %v1180
  %v1182 = vrot.slane %v996, 1
  %v1183 = vsel %vm288, %v1170, %v1182
  %v1288 = vunpack.c.l.b16 %v1041
  %v1289 = vunpack.c.l.b16 %v1042
  %v1290 = vunpack.c.l.b16 %v1043
  %v1291 = vunpack.c.l.b16 %v1044
  %v1292 = vunpack.c.l.b16 %v1045
  %v1293 = vunpack.c.l.b16 %v1046
  %v1294 = vunpack.c.l.b16 %v1047
  %v1295 = vunpack.c.l.b16 %v1048
  %v1296 = vunpack.c.l.b16 %v1049
  %v1297 = vunpack.c.l.b16 %v1050
  %v1298 = vunpack.c.l.b16 %v1051
  %v1299 = vunpack.c.l.b16 %v1052
  %v1300 = vunpack.c.l.b16 %v1053
  %v1301 = vunpack.c.l.b16 %v1054
  %v1302 = vunpack.c.l.b16 %v1055
  %v1303 = vunpack.c.l.b16 %v1056
  %v1304 = vunpack.c.l.b16 %v1057
  %v1305 = vunpack.c.l.b16 %v1058
  %v1306 = vunpack.c.l.b16 %v1059
  %v1307 = vunpack.c.l.b16 %v1060
  %v1308 = vunpack.c.l.b16 %v1061
  %v1309 = vunpack.c.l.b16 %v1062
  %v1310 = vunpack.c.l.b16 %v1063
  %v1311 = vunpack.c.l.b16 %v1064
  %v1312 = vunpack.c.l.b16 %v1065
  %v1313 = vunpack.c.l.b16 %v1066
  %v1314 = vunpack.c.l.b16 %v1067
  %v1315 = vunpack.c.l.b16 %v1068
  %v1316 = vunpack.c.l.b16 %v1069
  %v1317 = vunpack.c.l.b16 %v1070
  %v1318 = vunpack.c.l.b16 %v1071
  %v1319 = vunpack.c.l.b16 %v1072
  %v1320 = vunpack.c.l.b16 %v1073
  %v1321 = vunpack.c.l.b16 %v1074
  %v1322 = vunpack.c.l.b16 %v1075
  %v1323 = vunpack.c.l.b16 %v1076
  %v1324 = vunpack.c.l.b16 %v1077
  %v1325 = vunpack.c.l.b16 %v1078
  %v1326 = vunpack.c.l.b16 %v1079
  %v1327 = vunpack.c.l.b16 %v1080
  %v1328 = vunpack.c.l.b16 %v1081
  %v1329 = vunpack.c.l.b16 %v1082
  %v1330 = vunpack.c.l.b16 %v1083
  %v1331 = vunpack.c.l.b16 %v1084
  %v1332 = vunpack.c.l.b16 %v1085
  %v1333 = vunpack.c.l.b16 %v1086
  %v1334 = vunpack.c.l.b16 %v1087
  %v1335 = vunpack.c.l.b16 %v1088
  %v1336 = vunpack.c.l.b16 %v1089
  %v1337 = vunpack.c.l.b16 %v1090
  %v1338 = vunpack.c.l.b16 %v1091
  %v1339 = vunpack.c.l.b16 %v1092
  %v1340 = vunpack.c.l.b16 %v1093
  %v1341 = vunpack.c.l.b16 %v1094
  %v1342 = vunpack.c.l.b16 %v1095
  %v1343 = vunpack.c.l.b16 %v1096
  %v1344 = vunpack.c.l.b16 %v1097
  %v1345 = vunpack.c.l.b16 %v1098
  %v1346 = vunpack.c.l.b16 %v1099
  %v1347 = vunpack.c.l.b16 %v1100
  %v1348 = vunpack.c.l.b16 %v1101
  %v1349 = vunpack.c.l.b16 %v1102
  %v1350 = vunpack.c.l.b16 %v1103
  %v1351 = vunpack.c.l.b16 %v1104
  %v1352 = vunpack.c.l.b16 %v1105
  %v1353 = vunpack.c.l.b16 %v1106
  %v1354 = vunpack.c.l.b16 %v1107
  %v1355 = vunpack.c.l.b16 %v1108
  %v1356 = vunpack.c.l.b16 %v1109
  %v1357 = vunpack.c.l.b16 %v1110
  %v1358 = vunpack.c.l.b16 %v1111
  %v1359 = vunpack.c.l.b16 %v1112
  %v1360 = vunpack.c.l.b16 %v1113
  %v1361 = vunpack.c.l.b16 %v1114
  %v1362 = vunpack.c.l.b16 %v1115
  %v1363 = vunpack.c.l.b16 %v1116
  %v1364 = vunpack.c.l.b16 %v1117
  %v1365 = vunpack.c.l.b16 %v1118
  %v1366 = vunpack.c.l.b16 %v1119
  %v1367 = vunpack.c.l.b16 %v1120
  %v1368 = vunpack.c.l.b16 %v1121
  %v1369 = vunpack.c.l.b16 %v1122
  %v1370 = vunpack.c.l.b16 %v1123
  %v1371 = vunpack.c.l.b16 %v1124
  %v1372 = vunpack.c.l.b16 %v1125
  %v1373 = vunpack.c.l.b16 %v1126
  %v1374 = vunpack.c.l.b16 %v1127
  %v1375 = vunpack.c.l.b16 %v1128
  %v1376 = vunpack.c.l.b16 %v1129
  %v1377 = vunpack.c.l.b16 %v1130
  %v1378 = vunpack.c.l.b16 %v1131
  %v1379 = vunpack.c.l.b16 %v1132
  %v1380 = vunpack.c.l.b16 %v1133
  %v1381 = vunpack.c.l.b16 %v1134
  %v1382 = vpack.c.b16 %v1289, %v1288
  %v1383 = vpack.c.b16 %v1291, %v1290
  %v1384 = vpack.c.b16 %v1293, %v1292
  %v1385 = vpack.c.b16 %v1295, %v1294
  %v1386 = vpack.c.b16 %v1297, %v1296
  %v1387 = vpack.c.b16 %v1299, %v1298
  %v1388 = vpack.c.b16 %v1301, %v1300
  %v1389 = vpack.c.b16 %v1303, %v1302
  %v1390 = vpack.c.b16 %v1305, %v1304
  %v1391 = vpack.c.b16 %v1307, %v1306
  %v1392 = vpack.c.b16 %v1309, %v1308
  %v1393 = vpack.c.b16 %v1311, %v1310
  %v1394 = vpack.c.b16 %v1313, %v1312
  %v1395 = vpack.c.b16 %v1315, %v1314
  %v1396 = vpack.c.b16 %v1317, %v1316
  %v1397 = vpack.c.b16 %v1319, %v1318
  %v1398 = vpack.c.b16 %v1321, %v1320
  %v1399 = vpack.c.b16 %v1323, %v1322
  %v1400 = vpack.c.b16 %v1325, %v1324
  %v1401 = vpack.c.b16 %v1327, %v1326
  %v1402 = vpack.c.b16 %v1329, %v1328
  %v1403 = vpack.c.b16 %v1331, %v1330
  %v1404 = vpack.c.b16 %v1333, %v1332
  %v1405 = vpack.c.b16 %v1335, %v1334
  %v1406 = vpack.c.b16 %v1337, %v1336
  %v1407 = vpack.c.b16 %v1339, %v1338
  %v1408 = vpack.c.b16 %v1341, %v1340
  %v1409 = vpack.c.b16 %v1343, %v1342
  %v1410 = vpack.c.b16 %v1345, %v1344
  %v1411 = vpack.c.b16 %v1347, %v1346
  %v1412 = vpack.c.b16 %v1349, %v1348
  %v1413 = vpack.c.b16 %v1351, %v1350
  %v1414 = vpack.c.b16 %v1353, %v1352
  %v1415 = vpack.c.b16 %v1355, %v1354
  %v1416 = vpack.c.b16 %v1357, %v1356
  %v1417 = vpack.c.b16 %v1359, %v1358
  %v1418 = vpack.c.b16 %v1361, %v1360
  %v1419 = vpack.c.b16 %v1363, %v1362
  %v1420 = vpack.c.b16 %v1365, %v1364
  %v1421 = vpack.c.b16 %v1367, %v1366
  %v1422 = vpack.c.b16 %v1369, %v1368
  %v1423 = vpack.c.b16 %v1371, %v1370
  %v1424 = vpack.c.b16 %v1373, %v1372
  %v1425 = vpack.c.b16 %v1375, %v1374
  %v1426 = vpack.c.b16 %v1377, %v1376
  %v1427 = vpack.c.b16 %v1379, %v1378
  %v1428 = vpack.c.b16 %v1381, %v1380
  %v1477 = vsel %vm539, %v1171, 0
  %v1480 = vsel %vm539, %v1183, 0
  %1482 = vmatpush.bf16.msra.mxu0 %v1389
  %1483 = vmatpush.bf16.msra.mxu0 %v1388
  %1484 = vmatpush.bf16.msra.mxu0 %v1387
  %1485 = vmatpush.bf16.msra.mxu0 %v1386
  %1486 = vmatpush.bf16.msra.mxu0 %v1385
  %1487 = vmatpush.bf16.msra.mxu0 %v1384
  %1488 = vmatpush.bf16.msra.mxu0 %v1383
  %1489 = vmatpush.bf16.msra.mxu0 %v1382
  %1490 = vmatmul.bf16.gmra.mxu0 %v1156
  %v1491 = vpop.f32.mrf.mxu0
  %v1492 = vadd.f32 %v1137, %v1491
  %v1493 = vpop.f32.mrf.mxu0
  %v1494 = vadd.f32 %v1137, %v1493
  %1495 = vmatmul.bf16.gmra.mxu0 %v1173
  %v1496 = vpop.f32.mrf.mxu0
  %v1497 = vadd.f32 %v1137, %v1496
  %v1498 = vpop.f32.mrf.mxu0
  %v1499 = vadd.f32 %v1137, %v1498
  %1500 = vdwg.mxu0
  %1501 = vmatpush.bf16.msra.mxu0 %v1397
  %1502 = vmatpush.bf16.msra.mxu0 %v1396
  %1503 = vmatpush.bf16.msra.mxu0 %v1395
  %1504 = vmatpush.bf16.msra.mxu0 %v1394
  %1505 = vmatpush.bf16.msra.mxu0 %v1393
  %1506 = vmatpush.bf16.msra.mxu0 %v1392
  %1507 = vmatpush.bf16.msra.mxu0 %v1391
  %1508 = vmatpush.bf16.msra.mxu0 %v1390
  %1509 = vmatmul.bf16.gmra.mxu0 %v1159
  %v1510 = vpop.f32.mrf.mxu0
  %v1511 = vadd.f32 %v1492, %v1510
  %v1512 = vpop.f32.mrf.mxu0
  %v1513 = vadd.f32 %v1494, %v1512
  %1514 = vmatmul.bf16.gmra.mxu0 %v1175
  %v1515 = vpop.f32.mrf.mxu0
  %v1516 = vadd.f32 %v1497, %v1515
  %v1517 = vpop.f32.mrf.mxu0
  %v1518 = vadd.f32 %v1499, %v1517
  %1519 = vdwg.mxu0
  %1520 = vmatpush.bf16.msra.mxu0 %v1405
  %1521 = vmatpush.bf16.msra.mxu0 %v1404
  %1522 = vmatpush.bf16.msra.mxu0 %v1403
  %1523 = vmatpush.bf16.msra.mxu0 %v1402
  %1524 = vmatpush.bf16.msra.mxu0 %v1401
  %1525 = vmatpush.bf16.msra.mxu0 %v1400
  %1526 = vmatpush.bf16.msra.mxu0 %v1399
  %1527 = vmatpush.bf16.msra.mxu0 %v1398
  %1528 = vmatmul.bf16.gmra.mxu0 %v1162
  %v1529 = vpop.f32.mrf.mxu0
  %v1530 = vadd.f32 %v1511, %v1529
  %v1531 = vpop.f32.mrf.mxu0
  %v1532 = vadd.f32 %v1513, %v1531
  %1533 = vmatmul.bf16.gmra.mxu0 %v1177
  %v1534 = vpop.f32.mrf.mxu0
  %v1535 = vadd.f32 %v1516, %v1534
  %v1536 = vpop.f32.mrf.mxu0
  %v1537 = vadd.f32 %v1518, %v1536
  %1538 = vdwg.mxu0
  %1539 = vmatpush.bf16.msra.mxu0 %v1413
  %1540 = vmatpush.bf16.msra.mxu0 %v1412
  %1541 = vmatpush.bf16.msra.mxu0 %v1411
  %1542 = vmatpush.bf16.msra.mxu0 %v1410
  %1543 = vmatpush.bf16.msra.mxu0 %v1409
  %1544 = vmatpush.bf16.msra.mxu0 %v1408
  %1545 = vmatpush.bf16.msra.mxu0 %v1407
  %1546 = vmatpush.bf16.msra.mxu0 %v1406
  %1547 = vmatmul.bf16.gmra.mxu0 %v1165
  %v1548 = vpop.f32.mrf.mxu0
  %v1549 = vadd.f32 %v1530, %v1548
  %v1550 = vpop.f32.mrf.mxu0
  %v1551 = vadd.f32 %v1532, %v1550
  %1552 = vmatmul.bf16.gmra.mxu0 %v1179
  %v1553 = vpop.f32.mrf.mxu0
  %v1554 = vadd.f32 %v1535, %v1553
  %v1555 = vpop.f32.mrf.mxu0
  %v1556 = vadd.f32 %v1537, %v1555
  %1557 = vdwg.mxu0
  %1558 = vmatpush.bf16.msra.mxu0 %v1421
  %1559 = vmatpush.bf16.msra.mxu0 %v1420
  %1560 = vmatpush.bf16.msra.mxu0 %v1419
  %1561 = vmatpush.bf16.msra.mxu0 %v1418
  %1562 = vmatpush.bf16.msra.mxu0 %v1417
  %1563 = vmatpush.bf16.msra.mxu0 %v1416
  %1564 = vmatpush.bf16.msra.mxu0 %v1415
  %1565 = vmatpush.bf16.msra.mxu0 %v1414
  %1566 = vmatmul.bf16.gmra.mxu0 %v1168
  %v1567 = vpop.f32.mrf.mxu0
  %v1568 = vadd.f32 %v1549, %v1567
  %v1569 = vpop.f32.mrf.mxu0
  %v1570 = vadd.f32 %v1551, %v1569
  %1571 = vmatmul.bf16.gmra.mxu0 %v1181
  %v1572 = vpop.f32.mrf.mxu0
  %v1573 = vadd.f32 %v1554, %v1572
  %v1574 = vpop.f32.mrf.mxu0
  %v1575 = vadd.f32 %v1556, %v1574
  %1576 = vdwg.mxu0
  %1577 = vmatpush.bf16.msra.mxu0 0
  %1578 = vmatpush.bf16.msra.mxu0 %v1428
  %1579 = vmatpush.bf16.msra.mxu0 %v1427
  %1580 = vmatpush.bf16.msra.mxu0 %v1426
  %1581 = vmatpush.bf16.msra.mxu0 %v1425
  %1582 = vmatpush.bf16.msra.mxu0 %v1424
  %1583 = vmatpush.bf16.msra.mxu0 %v1423
  %1584 = vmatpush.bf16.msra.mxu0 %v1422
  %1585 = vmatmul.bf16.gmra.mxu0 %v1477
  %v1586 = vpop.f32.mrf.mxu0
  %v1587 = vadd.f32 %v1568, %v1586
  %v1588 = vpop.f32.mrf.mxu0
  %v1589 = vadd.f32 %v1570, %v1588
  %1590 = vmatmul.bf16.gmra.mxu0 %v1480
  %v1591 = vpop.f32.mrf.mxu0
  %v1592 = vadd.f32 %v1573, %v1591
  %v1593 = vpop.f32.mrf.mxu0
  %v1594 = vadd.f32 %v1575, %v1593
  %1595 = vdwg.mxu0
  %v1596 = vmax.f32 %v1587, 0.0
  %v1597 = vmax.f32 %v1589, 0.0
  %v1598 = vmax.f32 %v1592, 0.0
  %v1599 = vmax.f32 %v1594, 0.0
  %v1600 = vpack.c.bf16 %v1597, %v1596
  %v1601 = vpack.c.bf16 %v1599, %v1598
  %s1602 = scalar_lea.vmem %s1, 64
  %v1603 = vld [vmem:[%s1602] sm:$0xf]
  %v1604 = vld [vmem:[%s1602 + $0x4] sm:$0xf]
  %v1605 = vld [vmem:[%s1602 + $0x8] sm:$0xf]
  %v1606 = vld [vmem:[%s1602 + $0xc] sm:$0xf]
  %v1607 = vld [vmem:[%s1602 + $0x10] sm:$0xf]
  %v1608 = vld [vmem:[%s1602 + $0x14] sm:$0xf]
  %v1609 = vld [vmem:[%s1602 + $0x18] sm:$0xf]
  %v1610 = vld [vmem:[%s1602 + $0x1c] sm:$0xf]
  %v1611 = vld [vmem:[%s1602 + $0x20] sm:$0xf]
  %v1612 = vld [vmem:[%s1602 + $0x24] sm:$0xf]
  %v1613 = vld [vmem:[%s1602 + $0x28] sm:$0xf]
  %v1614 = vld [vmem:[%s1602 + $0x2c] sm:$0xf]
  %v1615 = vld [vmem:[%s1602 + $0x30] sm:$0xf]
  %v1616 = vld [vmem:[%s1602 + $0x34] sm:$0xf]
  %v1617 = vld [vmem:[%s1602 + $0x38] sm:$0xf]
  %v1618 = vld [vmem:[%s1602 + $0x3c] sm:$0xf]
  %s1619 = scalar_lea.vmem %s2, 1
  %v1620 = vld [vmem:[%s1619] sm:$0x1]
  %v1622 = vperm.slane %v1620, 0
  %v1640 = vunpack.c.l.b16 %v1603
  %v1641 = vunpack.c.l.b16 %v1604
  %v1642 = vunpack.c.l.b16 %v1605
  %v1643 = vunpack.c.l.b16 %v1606
  %v1644 = vunpack.c.l.b16 %v1607
  %v1645 = vunpack.c.l.b16 %v1608
  %v1646 = vunpack.c.l.b16 %v1609
  %v1647 = vunpack.c.l.b16 %v1610
  %v1648 = vunpack.c.l.b16 %v1611
  %v1649 = vunpack.c.l.b16 %v1612
  %v1650 = vunpack.c.l.b16 %v1613
  %v1651 = vunpack.c.l.b16 %v1614
  %v1652 = vunpack.c.l.b16 %v1615
  %v1653 = vunpack.c.l.b16 %v1616
  %v1654 = vunpack.c.l.b16 %v1617
  %v1655 = vunpack.c.l.b16 %v1618
  %v1656 = vpack.c.b16 %v1641, %v1640
  %v1657 = vpack.c.b16 %v1643, %v1642
  %v1658 = vpack.c.b16 %v1645, %v1644
  %v1659 = vpack.c.b16 %v1647, %v1646
  %v1660 = vpack.c.b16 %v1649, %v1648
  %v1661 = vpack.c.b16 %v1651, %v1650
  %v1662 = vpack.c.b16 %v1653, %v1652
  %v1663 = vpack.c.b16 %v1655, %v1654
  %1672 = vmatpush.bf16.msra.mxu0 %v1663
  %1673 = vmatpush.bf16.msra.mxu0 %v1662
  %1674 = vmatpush.bf16.msra.mxu0 %v1661
  %1675 = vmatpush.bf16.msra.mxu0 %v1660
  %1676 = vmatpush.bf16.msra.mxu0 %v1659
  %1677 = vmatpush.bf16.msra.mxu0 %v1658
  %1678 = vmatpush.bf16.msra.mxu0 %v1657
  %1679 = vmatpush.bf16.msra.mxu0 %v1656
  %1680 = vmatmul.bf16.gmra.mxu0 %v1600
  %v1681 = vpop.f32.mrf.mxu0
  %v1682 = vadd.f32 %v1622, %v1681
  %v1683 = vpop.f32.mrf.mxu0
  %v1684 = vadd.f32 %v1622, %v1683
  %1685 = vmatmul.bf16.gmra.mxu0 %v1601
  %v1686 = vpop.f32.mrf.mxu0
  %v1687 = vadd.f32 %v1622, %v1686
  %v1688 = vpop.f32.mrf.mxu0
  %v1689 = vadd.f32 %v1622, %v1688
  %1690 = vdwg.mxu0
  %v1691 = vpack.c.bf16 %v1682, %v1682
  %v1692 = vpack.c.bf16 %v1684, %v1684
  %v1693 = vpack.c.bf16 %v1687, %v1687
  %v1694 = vpack.c.bf16 %v1689, %v1689
  %1695 = vst.msk [vmem:[#allocation2 + $0x18] sm:$0xf] %vm33, %v1691
  %1696 = vst.msk [vmem:[#allocation2 + $0x1c] sm:$0xf] %vm33, %v1692
  %1697 = vst.msk [vmem:[#allocation2 + $0x20] sm:$0xf] %vm33, %v1693
  %1698 = vst.msk [vmem:[#allocation2 + $0x24] sm:$0xf] %vm33, %v1694
  %v1703 = vrot.slane %v1596, 6
  %v1704 = vrot.slane %v1597, 6
  %v1705 = vsel %vm159, %v1703, %v1704
  %v1706 = vrot.slane %v1598, 6
  %v1707 = vsel %vm159, %v1704, %v1706
  %v1708 = vrot.slane %v1599, 6
  %v1709 = vsel %vm159, %v1706, %v1708
  %v1714 = vsel %vm159, %v1596, %v1703
  %v1715 = vrot.slane %v1596, 2
  %v1716 = vrot.slane %v1597, 2
  %v1717 = vsel %vm172, %v1715, %v1716
  %v1718 = vrot.slane %v1598, 2
  %v1719 = vsel %vm172, %v1716, %v1718
  %v1720 = vrot.slane %v1599, 2
  %v1721 = vsel %vm172, %v1718, %v1720
  %v1726 = vsel %vm172, %v1720, %v1599
  %v1727 = vmax.f32 %v1714, %v1596
  %v1728 = vmax.f32 %v1705, %v1597
  %v1729 = vmax.f32 %v1707, %v1598
  %v1730 = vmax.f32 %v1709, %v1599
  %v1731 = vmax.f32 %v1727, %v1717
  %v1732 = vmax.f32 %v1728, %v1719
  %v1733 = vmax.f32 %v1729, %v1721
  %v1734 = vmax.f32 %v1730, %v1726
  %v1735 = vpack.c.bf16 %v1731, %v1731
  %v1736 = vpack.c.bf16 %v1732, %v1732
  %v1737 = vpack.c.bf16 %v1733, %v1733
  %v1738 = vpack.c.bf16 %v1734, %v1734
  %v1739 = vld [vmem:[#allocation2 + $0x4] sm:$0xe]
  %v1740 = vld [vmem:[#allocation2 + $0x8] sm:$0xf]
  %v1741 = vld [vmem:[#allocation2 + $0xc] sm:$0xf]
  %v1742 = vld [vmem:[#allocation2 + $0x10] sm:$0xf]
  %v1743 = vld [vmem:[#allocation2 + $0x14] sm:$0x1]
  %v1744 = vld [vmem:[#allocation2 + $0x4] sm:$0xc]
  %v1745 = vld [vmem:[#allocation2 + $0x14] sm:$0x3]
  %v1746 = vld [vmem:[#allocation2 + $0x4] sm:$0x8]
  %v1747 = vld [vmem:[#allocation2 + $0x14] sm:$0x7]
  %v1748 = vld [vmem:[#allocation2 + $0x14] sm:$0xf]
  %v1749 = vld [vmem:[#allocation2 + $0x8] sm:$0xe]
  %v1750 = vld [vmem:[#allocation2 + $0x18] sm:$0x1]
  %v1751 = vld [vmem:[#allocation2 + $0x8] sm:$0xc]
  %v1752 = vld [vmem:[#allocation2 + $0x18] sm:$0x3]
  %v1753 = vld [vmem:[#allocation2 + $0x8] sm:$0x8]
  %v1754 = vld [vmem:[#allocation2 + $0x18] sm:$0x7]
  %v1755 = vld [vmem:[#allocation2 + $0x18] sm:$0xf]
  %v1756 = vld [vmem:[#allocation2 + $0xc] sm:$0xe]
  %v1757 = vld [vmem:[#allocation2 + $0x1c] sm:$0x1]
  %v1758 = vld [vmem:[#allocation2 + $0xc] sm:$0xc]
  %v1759 = vld [vmem:[#allocation2 + $0x1c] sm:$0x3]
  %v1760 = vld [vmem:[#allocation2 + $0xc] sm:$0x8]
  %v1761 = vld [vmem:[#allocation2 + $0x1c] sm:$0x7]
  %v1762 = vld [vmem:[#allocation2 + $0x1c] sm:$0xf]
  %v1763 = vld [vmem:[#allocation2 + $0x10] sm:$0xe]
  %v1764 = vld [vmem:[#allocation2 + $0x20] sm:$0x1]
  %v1765 = vld [vmem:[#allocation2 + $0x10] sm:$0xc]
  %v1766 = vld [vmem:[#allocation2 + $0x20] sm:$0x3]
  %v1767 = vld [vmem:[#allocation2 + $0x10] sm:$0x8]
  %v1768 = vld [vmem:[#allocation2 + $0x20] sm:$0x7]
  %v1769 = vld [vmem:[#allocation2 + $0x20] sm:$0xf]
  %v1770 = vld [vmem:[#allocation2 + $0x14] sm:$0xe]
  %v1771 = vld [vmem:[#allocation2 + $0x24] sm:$0x1]
  %v1772 = vld [vmem:[#allocation2 + $0x14] sm:$0xc]
  %v1773 = vld [vmem:[#allocation2 + $0x24] sm:$0x3]
  %v1774 = vld [vmem:[#allocation2 + $0x14] sm:$0x8]
  %v1775 = vld [vmem:[#allocation2 + $0x24] sm:$0x7]
  %v1776 = vld [vmem:[#allocation2 + $0x24] sm:$0xf]
  %v1777 = vld [vmem:[#allocation2 + $0x18] sm:$0xe]
  %v1778 = vld [vmem:[#allocation2 + $0x28] sm:$0x1]
  %v1779 = vld [vmem:[#allocation2 + $0x18] sm:$0xc]
  %v1780 = vld [vmem:[#allocation2 + $0x28] sm:$0x3]
  %v1781 = vld [vmem:[#allocation2 + $0x18] sm:$0x8]
  %v1782 = vld [vmem:[#allocation2 + $0x28] sm:$0x7]
  %v1783 = vld [vmem:[#allocation2 + $0x28] sm:$0xf]
  %v1784 = vld [vmem:[#allocation2 + $0x1c] sm:$0xe]
  %v1785 = vld [vmem:[#allocation2 + $0x2c] sm:$0x1]
  %v1786 = vld [vmem:[#allocation2 + $0x1c] sm:$0xc]
  %v1787 = vld [vmem:[#allocation2 + $0x2c] sm:$0x3]
  %v1788 = vld [vmem:[#allocation2 + $0x1c] sm:$0x8]
  %v1789 = vld [vmem:[#allocation2 + $0x2c] sm:$0x7]
  %v1790 = vld [vmem:[#allocation2 + $0x2c] sm:$0xf]
  %v1791 = vld [vmem:[#allocation2 + $0x20] sm:$0xe]
  %v1792 = vld [vmem:[#allocation2 + $0x30] sm:$0x1]
  %v1793 = vld [vmem:[#allocation2 + $0x20] sm:$0xc]
  %v1794 = vld [vmem:[#allocation2 + $0x30] sm:$0x3]
  %v1795 = vld [vmem:[#allocation2 + $0x20] sm:$0x8]
  %v1796 = vld [vmem:[#allocation2 + $0x30] sm:$0x7]
  %v1797 = vld [vmem:[#allocation2 + $0x30] sm:$0xf]
  %v1798 = vld [vmem:[#allocation2 + $0x24] sm:$0xe]
  %v1799 = vld [vmem:[#allocation2 + $0x34] sm:$0x1]
  %v1800 = vld [vmem:[#allocation2 + $0x24] sm:$0xc]
  %v1801 = vld [vmem:[#allocation2 + $0x34] sm:$0x3]
  %v1802 = vld [vmem:[#allocation2 + $0x24] sm:$0x8]
  %v1803 = vld [vmem:[#allocation2 + $0x34] sm:$0x7]
  %v1804 = vld [vmem:[#allocation2 + $0x34] sm:$0xf]
  %v1805 = vld [vmem:[#allocation2 + $0x28] sm:$0xe]
  %v1806 = vld [vmem:[#allocation2 + $0x38] sm:$0x1]
  %v1807 = vld [vmem:[#allocation2 + $0x28] sm:$0xc]
  %v1808 = vld [vmem:[#allocation2 + $0x38] sm:$0x3]
  %v1809 = vld [vmem:[#allocation2 + $0x28] sm:$0x8]
  %v1810 = vld [vmem:[#allocation2 + $0x38] sm:$0x7]
  %v1816 = vunpack.c.l.b16 %v1739
  %v1817 = vunpack.c.l.b16 %v1740
  %v1818 = vunpack.c.l.b16 %v1741
  %v1819 = vunpack.c.l.b16 %v1742
  %v1820 = vunpack.c.l.b16 %v1743
  %v1821 = vpack.c.b16 %v1817, %v1816
  %v1822 = vpack.c.b16 %v1819, %v1818
  %v1823 = vpack.c.b16 %v1820, %v1820
  %v1826 = vunpack.c.l.b16 %v1744
  %v1827 = vunpack.c.l.b16 %v1745
  %v1828 = vpack.c.b16 %v1817, %v1826
  %v1829 = vpack.c.b16 %v1827, %v1827
  %v1830 = vrot.slane %v1828, 1
  %v1831 = vrot.slane %v1822, 1
  %v1832 = vsel %vm288, %v1830, %v1831
  %v1833 = vrot.slane %v1829, 1
  %v1834 = vsel %vm288, %v1831, %v1833
  %1835 = vrot.lane.b32.xlu0 %v1832, 16
  %v1836 = vpop.permute.xlu0 %1835
  %1837 = vrot.lane.b32.xlu0 %v1834, 16
  %v1838 = vpop.permute.xlu0 %1837
  %1839 = vrot.lane.b32.xlu0 %v1833, 16
  %v1840 = vpop.permute.xlu0 %1839
  %v1843 = vunpack.c.l.b16 %v1746
  %v1844 = vunpack.c.l.b16 %v1747
  %v1845 = vpack.c.b16 %v1817, %v1843
  %v1846 = vpack.c.b16 %v1844, %v1844
  %v1847 = vrot.slane %v1845, 2
  %v1848 = vrot.slane %v1822, 2
  %v1849 = vsel %vm306, %v1847, %v1848
  %v1850 = vrot.slane %v1846, 2
  %v1851 = vsel %vm306, %v1848, %v1850
  %1852 = vrot.lane.b32.xlu0 %v1849, 32
  %v1853 = vpop.permute.xlu0 %1852
  %1854 = vrot.lane.b32.xlu0 %v1851, 32
  %v1855 = vpop.permute.xlu0 %1854
  %1856 = vrot.lane.b32.xlu0 %v1850, 32
  %v1857 = vpop.permute.xlu0 %1856
  %v1859 = vunpack.c.l.b16 %v1748
  %v1860 = vpack.c.b16 %v1818, %v1817
  %v1861 = vpack.c.b16 %v1859, %v1819
  %v1862 = vrot.slane %v1860, 7
  %v1863 = vrot.slane %v1861, 7
  %v1864 = vsel %vm322, %v1862, %v1863
  %1865 = vrot.lane.b32.xlu0 %v1862, 48
  %v1866 = vpop.permute.xlu0 %1865
  %1867 = vrot.lane.b32.xlu0 %v1864, 48
  %v1868 = vpop.permute.xlu0 %1867
  %1869 = vrot.lane.b32.xlu0 %v1863, 48
  %v1870 = vpop.permute.xlu0 %1869
  %v1873 = vunpack.c.l.b16 %v1749
  %v1874 = vunpack.c.l.b16 %v1750
  %v1875 = vpack.c.b16 %v1818, %v1873
  %v1876 = vpack.c.b16 %v1874, %v1874
  %1877 = vrot.lane.b32.xlu0 %v1875, 64
  %v1878 = vpop.permute.xlu0 %1877
  %1879 = vrot.lane.b32.xlu0 %v1861, 64
  %v1880 = vpop.permute.xlu0 %1879
  %1881 = vrot.lane.b32.xlu0 %v1876, 64
  %v1882 = vpop.permute.xlu0 %1881
  %v1885 = vunpack.c.l.b16 %v1751
  %v1886 = vunpack.c.l.b16 %v1752
  %v1887 = vpack.c.b16 %v1818, %v1885
  %v1888 = vpack.c.b16 %v1886, %v1886
  %v1889 = vrot.slane %v1887, 1
  %v1890 = vrot.slane %v1861, 1
  %v1891 = vsel %vm288, %v1889, %v1890
  %v1892 = vrot.slane %v1888, 1
  %v1893 = vsel %vm288, %v1890, %v1892
  %1894 = vrot.lane.b32.xlu0 %v1891, 80
  %v1895 = vpop.permute.xlu0 %1894
  %1896 = vrot.lane.b32.xlu0 %v1893, 80
  %v1897 = vpop.permute.xlu0 %1896
  %1898 = vrot.lane.b32.xlu0 %v1892, 80
  %v1899 = vpop.permute.xlu0 %1898
  %v1902 = vunpack.c.l.b16 %v1753
  %v1903 = vunpack.c.l.b16 %v1754
  %v1904 = vpack.c.b16 %v1818, %v1902
  %v1905 = vpack.c.b16 %v1903, %v1903
  %v1906 = vrot.slane %v1904, 2
  %v1907 = vrot.slane %v1861, 2
  %v1908 = vsel %vm306, %v1906, %v1907
  %v1909 = vrot.slane %v1905, 2
  %v1910 = vsel %vm306, %v1907, %v1909
  %1911 = vrot.lane.b32.xlu0 %v1908, 96
  %v1912 = vpop.permute.xlu0 %1911
  %1913 = vrot.lane.b32.xlu0 %v1910, 96
  %v1914 = vpop.permute.xlu0 %1913
  %1915 = vrot.lane.b32.xlu0 %v1909, 96
  %v1916 = vpop.permute.xlu0 %1915
  %v1918 = vunpack.c.l.b16 %v1755
  %v1919 = vpack.c.b16 %v1918, %v1859
  %v1920 = vrot.slane %v1822, 7
  %v1921 = vrot.slane %v1919, 7
  %v1922 = vsel %vm322, %v1920, %v1921
  %1923 = vrot.lane.b32.xlu0 %v1920, 112
  %v1924 = vpop.permute.xlu0 %1923
  %1925 = vrot.lane.b32.xlu0 %v1922, 112
  %v1926 = vpop.permute.xlu0 %1925
  %1927 = vrot.lane.b32.xlu0 %v1921, 112
  %v1928 = vpop.permute.xlu0 %1927
  %v1931 = vunpack.c.l.b16 %v1756
  %v1932 = vunpack.c.l.b16 %v1757
  %v1933 = vpack.c.b16 %v1819, %v1931
  %v1934 = vpack.c.b16 %v1932, %v1932
  %v1937 = vunpack.c.l.b16 %v1758
  %v1938 = vunpack.c.l.b16 %v1759
  %v1939 = vpack.c.b16 %v1819, %v1937
  %v1940 = vpack.c.b16 %v1938, %v1938
  %v1941 = vrot.slane %v1939, 1
  %v1942 = vrot.slane %v1919, 1
  %v1943 = vsel %vm288, %v1941, %v1942
  %v1944 = vrot.slane %v1940, 1
  %v1945 = vsel %vm288, %v1942, %v1944
  %1946 = vrot.lane.b32.xlu0 %v1943, 16
  %v1947 = vpop.permute.xlu0 %1946
  %1948 = vrot.lane.b32.xlu0 %v1945, 16
  %v1949 = vpop.permute.xlu0 %1948
  %1950 = vrot.lane.b32.xlu0 %v1944, 16
  %v1951 = vpop.permute.xlu0 %1950
  %v1954 = vunpack.c.l.b16 %v1760
  %v1955 = vunpack.c.l.b16 %v1761
  %v1956 = vpack.c.b16 %v1819, %v1954
  %v1957 = vpack.c.b16 %v1955, %v1955
  %v1958 = vrot.slane %v1956, 2
  %v1959 = vrot.slane %v1919, 2
  %v1960 = vsel %vm306, %v1958, %v1959
  %v1961 = vrot.slane %v1957, 2
  %v1962 = vsel %vm306, %v1959, %v1961
  %1963 = vrot.lane.b32.xlu0 %v1960, 32
  %v1964 = vpop.permute.xlu0 %1963
  %1965 = vrot.lane.b32.xlu0 %v1962, 32
  %v1966 = vpop.permute.xlu0 %1965
  %1967 = vrot.lane.b32.xlu0 %v1961, 32
  %v1968 = vpop.permute.xlu0 %1967
  %v1970 = vunpack.c.l.b16 %v1762
  %v1971 = vpack.c.b16 %v1970, %v1918
  %v1972 = vrot.slane %v1971, 7
  %v1973 = vsel %vm322, %v1863, %v1972
  %1974 = vrot.lane.b32.xlu0 %v1973, 48
  %v1975 = vpop.permute.xlu0 %1974
  %1976 = vrot.lane.b32.xlu0 %v1972, 48
  %v1977 = vpop.permute.xlu0 %1976
  %v1980 = vunpack.c.l.b16 %v1763
  %v1981 = vunpack.c.l.b16 %v1764
  %v1982 = vpack.c.b16 %v1859, %v1980
  %v1983 = vpack.c.b16 %v1981, %v1981
  %1984 = vrot.lane.b32.xlu0 %v1982, 64
  %v1985 = vpop.permute.xlu0 %1984
  %1986 = vrot.lane.b32.xlu0 %v1971, 64
  %v1987 = vpop.permute.xlu0 %1986
  %1988 = vrot.lane.b32.xlu0 %v1983, 64
  %v1989 = vpop.permute.xlu0 %1988
  %v1992 = vunpack.c.l.b16 %v1765
  %v1993 = vunpack.c.l.b16 %v1766
  %v1994 = vpack.c.b16 %v1859, %v1992
  %v1995 = vpack.c.b16 %v1993, %v1993
  %v1996 = vrot.slane %v1994, 1
  %v1997 = vrot.slane %v1971, 1
  %v1998 = vsel %vm288, %v1996, %v1997
  %v1999 = vrot.slane %v1995, 1
  %v2000 = vsel %vm288, %v1997, %v1999
  %2001 = vrot.lane.b32.xlu0 %v1998, 80
  %v2002 = vpop.permute.xlu0 %2001
  %2003 = vrot.lane.b32.xlu0 %v2000, 80
  %v2004 = vpop.permute.xlu0 %2003
  %2005 = vrot.lane.b32.xlu0 %v1999, 80
  %v2006 = vpop.permute.xlu0 %2005
  %v2009 = vunpack.c.l.b16 %v1767
  %v2010 = vunpack.c.l.b16 %v1768
  %v2011 = vpack.c.b16 %v1859, %v2009
  %v2012 = vpack.c.b16 %v2010, %v2010
  %v2013 = vrot.slane %v2011, 2
  %v2014 = vrot.slane %v1971, 2
  %v2015 = vsel %vm306, %v2013, %v2014
  %v2016 = vrot.slane %v2012, 2
  %v2017 = vsel %vm306, %v2014, %v2016
  %2018 = vrot.lane.b32.xlu0 %v2015, 96
  %v2019 = vpop.permute.xlu0 %2018
  %2020 = vrot.lane.b32.xlu0 %v2017, 96
  %v2021 = vpop.permute.xlu0 %2020
  %2022 = vrot.lane.b32.xlu0 %v2016, 96
  %v2023 = vpop.permute.xlu0 %2022
  %v2025 = vunpack.c.l.b16 %v1769
  %v2026 = vpack.c.b16 %v2025, %v1970
  %v2027 = vrot.slane %v2026, 7
  %v2028 = vsel %vm322, %v1921, %v2027
  %2029 = vrot.lane.b32.xlu0 %v2028, 112
  %v2030 = vpop.permute.xlu0 %2029
  %2031 = vrot.lane.b32.xlu0 %v2027, 112
  %v2032 = vpop.permute.xlu0 %2031
  %v2035 = vsel %vm494, %v1821, %v1836
  %v2038 = vsel %vm494, %v1822, %v1838
  %v2041 = vsel %vm494, %v1823, %v1840
  %v2043 = vsel %vm504, %v2035, %v1853
  %v2045 = vsel %vm504, %v2038, %v1855
  %v2047 = vsel %vm504, %v2041, %v1857
  %v2049 = vsel %vm511, %v2043, %v1866
  %v2051 = vsel %vm511, %v2045, %v1868
  %v2053 = vsel %vm511, %v2047, %v1870
  %v2055 = vsel %vm518, %v2049, %v1878
  %v2057 = vsel %vm518, %v2051, %v1880
  %v2059 = vsel %vm518, %v2053, %v1882
  %v2061 = vsel %vm525, %v2055, %v1895
  %v2063 = vsel %vm525, %v2057, %v1897
  %v2065 = vsel %vm525, %v2059, %v1899
  %v2067 = vsel %vm532, %v2061, %v1912
  %v2069 = vsel %vm532, %v2063, %v1914
  %v2071 = vsel %vm532, %v2065, %v1916
  %v2073 = vsel %vm539, %v2067, %v1924
  %v2075 = vsel %vm539, %v2069, %v1926
  %v2077 = vsel %vm539, %v2071, %v1928
  %v2080 = vsel %vm494, %v1933, %v1947
  %v2083 = vsel %vm494, %v1919, %v1949
  %v2086 = vsel %vm494, %v1934, %v1951
  %v2088 = vsel %vm504, %v2080, %v1964
  %v2090 = vsel %vm504, %v2083, %v1966
  %v2092 = vsel %vm504, %v2086, %v1968
  %v2093 = vsel %vm511, %v2088, %v1870
  %v2095 = vsel %vm511, %v2090, %v1975
  %v2097 = vsel %vm511, %v2092, %v1977
  %v2099 = vsel %vm518, %v2093, %v1985
  %v2101 = vsel %vm518, %v2095, %v1987
  %v2103 = vsel %vm518, %v2097, %v1989
  %v2105 = vsel %vm525, %v2099, %v2002
  %v2107 = vsel %vm525, %v2101, %v2004
  %v2109 = vsel %vm525, %v2103, %v2006
  %v2111 = vsel %vm532, %v2105, %v2019
  %v2113 = vsel %vm532, %v2107, %v2021
  %v2115 = vsel %vm532, %v2109, %v2023
  %v2116 = vsel %vm539, %v2111, %v1928
  %v2118 = vsel %vm539, %v2113, %v2030
  %v2120 = vsel %vm539, %v2115, %v2032
  %v2123 = vunpack.c.l.b16 %v1770
  %v2124 = vunpack.c.l.b16 %v1771
  %v2125 = vpack.c.b16 %v1918, %v2123
  %v2126 = vpack.c.b16 %v2124, %v2124
  %v2129 = vunpack.c.l.b16 %v1772
  %v2130 = vunpack.c.l.b16 %v1773
  %v2131 = vpack.c.b16 %v1918, %v2129
  %v2132 = vpack.c.b16 %v2130, %v2130
  %v2133 = vrot.slane %v2131, 1
  %v2134 = vrot.slane %v2026, 1
  %v2135 = vsel %vm288, %v2133, %v2134
  %v2136 = vrot.slane %v2132, 1
  %v2137 = vsel %vm288, %v2134, %v2136
  %2138 = vrot.lane.b32.xlu0 %v2135, 16
  %v2139 = vpop.permute.xlu0 %2138
  %2140 = vrot.lane.b32.xlu0 %v2137, 16
  %v2141 = vpop.permute.xlu0 %2140
  %2142 = vrot.lane.b32.xlu0 %v2136, 16
  %v2143 = vpop.permute.xlu0 %2142
  %v2146 = vunpack.c.l.b16 %v1774
  %v2147 = vunpack.c.l.b16 %v1775
  %v2148 = vpack.c.b16 %v1918, %v2146
  %v2149 = vpack.c.b16 %v2147, %v2147
  %v2150 = vrot.slane %v2148, 2
  %v2151 = vrot.slane %v2026, 2
  %v2152 = vsel %vm306, %v2150, %v2151
  %v2153 = vrot.slane %v2149, 2
  %v2154 = vsel %vm306, %v2151, %v2153
  %2155 = vrot.lane.b32.xlu0 %v2152, 32
  %v2156 = vpop.permute.xlu0 %2155
  %2157 = vrot.lane.b32.xlu0 %v2154, 32
  %v2158 = vpop.permute.xlu0 %2157
  %2159 = vrot.lane.b32.xlu0 %v2153, 32
  %v2160 = vpop.permute.xlu0 %2159
  %v2162 = vunpack.c.l.b16 %v1776
  %v2163 = vpack.c.b16 %v2162, %v2025
  %v2164 = vrot.slane %v2163, 7
  %v2165 = vsel %vm322, %v1972, %v2164
  %2166 = vrot.lane.b32.xlu0 %v2165, 48
  %v2167 = vpop.permute.xlu0 %2166
  %2168 = vrot.lane.b32.xlu0 %v2164, 48
  %v2169 = vpop.permute.xlu0 %2168
  %v2172 = vunpack.c.l.b16 %v1777
  %v2173 = vunpack.c.l.b16 %v1778
  %v2174 = vpack.c.b16 %v1970, %v2172
  %v2175 = vpack.c.b16 %v2173, %v2173
  %2176 = vrot.lane.b32.xlu0 %v2174, 64
  %v2177 = vpop.permute.xlu0 %2176
  %2178 = vrot.lane.b32.xlu0 %v2163, 64
  %v2179 = vpop.permute.xlu0 %2178
  %2180 = vrot.lane.b32.xlu0 %v2175, 64
  %v2181 = vpop.permute.xlu0 %2180
  %v2184 = vunpack.c.l.b16 %v1779
  %v2185 = vunpack.c.l.b16 %v1780
  %v2186 = vpack.c.b16 %v1970, %v2184
  %v2187 = vpack.c.b16 %v2185, %v2185
  %v2188 = vrot.slane %v2186, 1
  %v2189 = vrot.slane %v2163, 1
  %v2190 = vsel %vm288, %v2188, %v2189
  %v2191 = vrot.slane %v2187, 1
  %v2192 = vsel %vm288, %v2189, %v2191
  %2193 = vrot.lane.b32.xlu0 %v2190, 80
  %v2194 = vpop.permute.xlu0 %2193
  %2195 = vrot.lane.b32.xlu0 %v2192, 80
  %v2196 = vpop.permute.xlu0 %2195
  %2197 = vrot.lane.b32.xlu0 %v2191, 80
  %v2198 = vpop.permute.xlu0 %2197
  %v2201 = vunpack.c.l.b16 %v1781
  %v2202 = vunpack.c.l.b16 %v1782
  %v2203 = vpack.c.b16 %v1970, %v2201
  %v2204 = vpack.c.b16 %v2202, %v2202
  %v2205 = vrot.slane %v2203, 2
  %v2206 = vrot.slane %v2163, 2
  %v2207 = vsel %vm306, %v2205, %v2206
  %v2208 = vrot.slane %v2204, 2
  %v2209 = vsel %vm306, %v2206, %v2208
  %2210 = vrot.lane.b32.xlu0 %v2207, 96
  %v2211 = vpop.permute.xlu0 %2210
  %2212 = vrot.lane.b32.xlu0 %v2209, 96
  %v2213 = vpop.permute.xlu0 %2212
  %2214 = vrot.lane.b32.xlu0 %v2208, 96
  %v2215 = vpop.permute.xlu0 %2214
  %v2217 = vunpack.c.l.b16 %v1783
  %v2218 = vpack.c.b16 %v2217, %v2162
  %v2219 = vrot.slane %v2218, 7
  %v2220 = vsel %vm322, %v2027, %v2219
  %2221 = vrot.lane.b32.xlu0 %v2220, 112
  %v2222 = vpop.permute.xlu0 %2221
  %2223 = vrot.lane.b32.xlu0 %v2219, 112
  %v2224 = vpop.permute.xlu0 %2223
  %v2227 = vunpack.c.l.b16 %v1784
  %v2228 = vunpack.c.l.b16 %v1785
  %v2229 = vpack.c.b16 %v2025, %v2227
  %v2230 = vpack.c.b16 %v2228, %v2228
  %v2233 = vunpack.c.l.b16 %v1786
  %v2234 = vunpack.c.l.b16 %v1787
  %v2235 = vpack.c.b16 %v2025, %v2233
  %v2236 = vpack.c.b16 %v2234, %v2234
  %v2237 = vrot.slane %v2235, 1
  %v2238 = vrot.slane %v2218, 1
  %v2239 = vsel %vm288, %v2237, %v2238
  %v2240 = vrot.slane %v2236, 1
  %v2241 = vsel %vm288, %v2238, %v2240
  %2242 = vrot.lane.b32.xlu0 %v2239, 16
  %v2243 = vpop.permute.xlu0 %2242
  %2244 = vrot.lane.b32.xlu0 %v2241, 16
  %v2245 = vpop.permute.xlu0 %2244
  %2246 = vrot.lane.b32.xlu0 %v2240, 16
  %v2247 = vpop.permute.xlu0 %2246
  %v2250 = vunpack.c.l.b16 %v1788
  %v2251 = vunpack.c.l.b16 %v1789
  %v2252 = vpack.c.b16 %v2025, %v2250
  %v2253 = vpack.c.b16 %v2251, %v2251
  %v2254 = vrot.slane %v2252, 2
  %v2255 = vrot.slane %v2218, 2
  %v2256 = vsel %vm306, %v2254, %v2255
  %v2257 = vrot.slane %v2253, 2
  %v2258 = vsel %vm306, %v2255, %v2257
  %2259 = vrot.lane.b32.xlu0 %v2256, 32
  %v2260 = vpop.permute.xlu0 %2259
  %2261 = vrot.lane.b32.xlu0 %v2258, 32
  %v2262 = vpop.permute.xlu0 %2261
  %2263 = vrot.lane.b32.xlu0 %v2257, 32
  %v2264 = vpop.permute.xlu0 %2263
  %v2266 = vunpack.c.l.b16 %v1790
  %v2267 = vpack.c.b16 %v2266, %v2217
  %v2268 = vrot.slane %v2267, 7
  %v2269 = vsel %vm322, %v2164, %v2268
  %2270 = vrot.lane.b32.xlu0 %v2269, 48
  %v2271 = vpop.permute.xlu0 %2270
  %2272 = vrot.lane.b32.xlu0 %v2268, 48
  %v2273 = vpop.permute.xlu0 %2272
  %v2276 = vunpack.c.l.b16 %v1791
  %v2277 = vunpack.c.l.b16 %v1792
  %v2278 = vpack.c.b16 %v2162, %v2276
  %v2279 = vpack.c.b16 %v2277, %v2277
  %2280 = vrot.lane.b32.xlu0 %v2278, 64
  %v2281 = vpop.permute.xlu0 %2280
  %2282 = vrot.lane.b32.xlu0 %v2267, 64
  %v2283 = vpop.permute.xlu0 %2282
  %2284 = vrot.lane.b32.xlu0 %v2279, 64
  %v2285 = vpop.permute.xlu0 %2284
  %v2288 = vunpack.c.l.b16 %v1793
  %v2289 = vunpack.c.l.b16 %v1794
  %v2290 = vpack.c.b16 %v2162, %v2288
  %v2291 = vpack.c.b16 %v2289, %v2289
  %v2292 = vrot.slane %v2290, 1
  %v2293 = vrot.slane %v2267, 1
  %v2294 = vsel %vm288, %v2292, %v2293
  %v2295 = vrot.slane %v2291, 1
  %v2296 = vsel %vm288, %v2293, %v2295
  %2297 = vrot.lane.b32.xlu0 %v2294, 80
  %v2298 = vpop.permute.xlu0 %2297
  %2299 = vrot.lane.b32.xlu0 %v2296, 80
  %v2300 = vpop.permute.xlu0 %2299
  %2301 = vrot.lane.b32.xlu0 %v2295, 80
  %v2302 = vpop.permute.xlu0 %2301
  %v2305 = vunpack.c.l.b16 %v1795
  %v2306 = vunpack.c.l.b16 %v1796
  %v2307 = vpack.c.b16 %v2162, %v2305
  %v2308 = vpack.c.b16 %v2306, %v2306
  %v2309 = vrot.slane %v2307, 2
  %v2310 = vrot.slane %v2267, 2
  %v2311 = vsel %vm306, %v2309, %v2310
  %v2312 = vrot.slane %v2308, 2
  %v2313 = vsel %vm306, %v2310, %v2312
  %2314 = vrot.lane.b32.xlu0 %v2311, 96
  %v2315 = vpop.permute.xlu0 %2314
  %2316 = vrot.lane.b32.xlu0 %v2313, 96
  %v2317 = vpop.permute.xlu0 %2316
  %2318 = vrot.lane.b32.xlu0 %v2312, 96
  %v2319 = vpop.permute.xlu0 %2318
  %v2321 = vunpack.c.l.b16 %v1797
  %v2322 = vpack.c.b16 %v2321, %v2266
  %v2323 = vrot.slane %v2322, 7
  %v2324 = vsel %vm322, %v2219, %v2323
  %2325 = vrot.lane.b32.xlu0 %v2324, 112
  %v2326 = vpop.permute.xlu0 %2325
  %2327 = vrot.lane.b32.xlu0 %v2323, 112
  %v2328 = vpop.permute.xlu0 %2327
  %v2331 = vsel %vm494, %v2125, %v2139
  %v2334 = vsel %vm494, %v2026, %v2141
  %v2337 = vsel %vm494, %v2126, %v2143
  %v2339 = vsel %vm504, %v2331, %v2156
  %v2341 = vsel %vm504, %v2334, %v2158
  %v2343 = vsel %vm504, %v2337, %v2160
  %v2344 = vsel %vm511, %v2339, %v1977
  %v2346 = vsel %vm511, %v2341, %v2167
  %v2348 = vsel %vm511, %v2343, %v2169
  %v2350 = vsel %vm518, %v2344, %v2177
  %v2352 = vsel %vm518, %v2346, %v2179
  %v2354 = vsel %vm518, %v2348, %v2181
  %v2356 = vsel %vm525, %v2350, %v2194
  %v2358 = vsel %vm525, %v2352, %v2196
  %v2360 = vsel %vm525, %v2354, %v2198
  %v2362 = vsel %vm532, %v2356, %v2211
  %v2364 = vsel %vm532, %v2358, %v2213
  %v2366 = vsel %vm532, %v2360, %v2215
  %v2367 = vsel %vm539, %v2362, %v2032
  %v2369 = vsel %vm539, %v2364, %v2222
  %v2371 = vsel %vm539, %v2366, %v2224
  %v2374 = vsel %vm494, %v2229, %v2243
  %v2377 = vsel %vm494, %v2218, %v2245
  %v2380 = vsel %vm494, %v2230, %v2247
  %v2382 = vsel %vm504, %v2374, %v2260
  %v2384 = vsel %vm504, %v2377, %v2262
  %v2386 = vsel %vm504, %v2380, %v2264
  %v2387 = vsel %vm511, %v2382, %v2169
  %v2389 = vsel %vm511, %v2384, %v2271
  %v2391 = vsel %vm511, %v2386, %v2273
  %v2393 = vsel %vm518, %v2387, %v2281
  %v2395 = vsel %vm518, %v2389, %v2283
  %v2397 = vsel %vm518, %v2391, %v2285
  %v2399 = vsel %vm525, %v2393, %v2298
  %v2401 = vsel %vm525, %v2395, %v2300
  %v2403 = vsel %vm525, %v2397, %v2302
  %v2405 = vsel %vm532, %v2399, %v2315
  %v2407 = vsel %vm532, %v2401, %v2317
  %v2409 = vsel %vm532, %v2403, %v2319
  %v2410 = vsel %vm539, %v2405, %v2224
  %v2412 = vsel %vm539, %v2407, %v2326
  %v2414 = vsel %vm539, %v2409, %v2328
  %v2417 = vunpack.c.l.b16 %v1798
  %v2418 = vunpack.c.l.b16 %v1799
  %v2419 = vpack.c.b16 %v2217, %v2417
  %v2420 = vpack.c.b16 %v2418, %v2418
  %v2423 = vunpack.c.l.b16 %v1800
  %v2424 = vunpack.c.l.b16 %v1801
  %v2425 = vpack.c.b16 %v2217, %v2423
  %v2426 = vpack.c.b16 %v2424, %v2424
  %v2427 = vrot.slane %v2425, 1
  %v2428 = vrot.slane %v2322, 1
  %v2429 = vsel %vm288, %v2427, %v2428
  %v2430 = vrot.slane %v2426, 1
  %v2431 = vsel %vm288, %v2428, %v2430
  %2432 = vrot.lane.b32.xlu0 %v2429, 16
  %v2433 = vpop.permute.xlu0 %2432
  %2434 = vrot.lane.b32.xlu0 %v2431, 16
  %v2435 = vpop.permute.xlu0 %2434
  %2436 = vrot.lane.b32.xlu0 %v2430, 16
  %v2437 = vpop.permute.xlu0 %2436
  %v2440 = vunpack.c.l.b16 %v1802
  %v2441 = vunpack.c.l.b16 %v1803
  %v2442 = vpack.c.b16 %v2217, %v2440
  %v2443 = vpack.c.b16 %v2441, %v2441
  %v2444 = vrot.slane %v2442, 2
  %v2445 = vrot.slane %v2322, 2
  %v2446 = vsel %vm306, %v2444, %v2445
  %v2447 = vrot.slane %v2443, 2
  %v2448 = vsel %vm306, %v2445, %v2447
  %2449 = vrot.lane.b32.xlu0 %v2446, 32
  %v2450 = vpop.permute.xlu0 %2449
  %2451 = vrot.lane.b32.xlu0 %v2448, 32
  %v2452 = vpop.permute.xlu0 %2451
  %2453 = vrot.lane.b32.xlu0 %v2447, 32
  %v2454 = vpop.permute.xlu0 %2453
  %v2456 = vunpack.c.l.b16 %v1804
  %v2457 = vpack.c.b16 %v2456, %v2321
  %v2458 = vrot.slane %v2457, 7
  %v2459 = vsel %vm322, %v2268, %v2458
  %2460 = vrot.lane.b32.xlu0 %v2459, 48
  %v2461 = vpop.permute.xlu0 %2460
  %2462 = vrot.lane.b32.xlu0 %v2458, 48
  %v2463 = vpop.permute.xlu0 %2462
  %v2466 = vunpack.c.l.b16 %v1805
  %v2467 = vunpack.c.l.b16 %v1806
  %v2468 = vpack.c.b16 %v2266, %v2466
  %v2469 = vpack.c.b16 %v2467, %v2467
  %2470 = vrot.lane.b32.xlu0 %v2468, 64
  %v2471 = vpop.permute.xlu0 %2470
  %2472 = vrot.lane.b32.xlu0 %v2457, 64
  %v2473 = vpop.permute.xlu0 %2472
  %2474 = vrot.lane.b32.xlu0 %v2469, 64
  %v2475 = vpop.permute.xlu0 %2474
  %v2478 = vunpack.c.l.b16 %v1807
  %v2479 = vunpack.c.l.b16 %v1808
  %v2480 = vpack.c.b16 %v2266, %v2478
  %v2481 = vpack.c.b16 %v2479, %v2479
  %v2482 = vrot.slane %v2480, 1
  %v2483 = vrot.slane %v2457, 1
  %v2484 = vsel %vm288, %v2482, %v2483
  %v2485 = vrot.slane %v2481, 1
  %v2486 = vsel %vm288, %v2483, %v2485
  %2487 = vrot.lane.b32.xlu0 %v2484, 80
  %v2488 = vpop.permute.xlu0 %2487
  %2489 = vrot.lane.b32.xlu0 %v2486, 80
  %v2490 = vpop.permute.xlu0 %2489
  %2491 = vrot.lane.b32.xlu0 %v2485, 80
  %v2492 = vpop.permute.xlu0 %2491
  %v2495 = vunpack.c.l.b16 %v1809
  %v2496 = vunpack.c.l.b16 %v1810
  %v2497 = vpack.c.b16 %v2266, %v2495
  %v2498 = vpack.c.b16 %v2496, %v2496
  %v2499 = vrot.slane %v2497, 2
  %v2500 = vrot.slane %v2457, 2
  %v2501 = vsel %vm306, %v2499, %v2500
  %v2502 = vrot.slane %v2498, 2
  %v2503 = vsel %vm306, %v2500, %v2502
  %2504 = vrot.lane.b32.xlu0 %v2501, 96
  %v2505 = vpop.permute.xlu0 %2504
  %2506 = vrot.lane.b32.xlu0 %v2503, 96
  %v2507 = vpop.permute.xlu0 %2506
  %2508 = vrot.lane.b32.xlu0 %v2502, 96
  %v2509 = vpop.permute.xlu0 %2508
  %v2514 = vunpack.c.l.b16 %v1735
  %v2515 = vunpack.c.l.b16 %v1736
  %v2516 = vunpack.c.l.b16 %v1737
  %v2517 = vunpack.c.l.b16 %v1738
  %v2518 = vpack.c.b16 %v2515, %v2514
  %v2519 = vpack.c.b16 %v2517, %v2516
  %v2520 = vrot.slane %v2518, 7
  %v2521 = vrot.slane %v2519, 7
  %v2522 = vsel %vm322, %v2520, %v2521
  %2523 = vrot.lane.b32.xlu0 %v2520, 112
  %v2524 = vpop.permute.xlu0 %2523
  %2525 = vrot.lane.b32.xlu0 %v2522, 112
  %v2526 = vpop.permute.xlu0 %2525
  %2527 = vrot.lane.b32.xlu0 %v2521, 112
  %v2528 = vpop.permute.xlu0 %2527
  %v2531 = vsel %vm494, %v2419, %v2433
  %v2534 = vsel %vm494, %v2322, %v2435
  %v2537 = vsel %vm494, %v2420, %v2437
  %v2539 = vsel %vm504, %v2531, %v2450
  %v2541 = vsel %vm504, %v2534, %v2452
  %v2543 = vsel %vm504, %v2537, %v2454
  %v2544 = vsel %vm511, %v2539, %v2273
  %v2546 = vsel %vm511, %v2541, %v2461
  %v2548 = vsel %vm511, %v2543, %v2463
  %v2550 = vsel %vm518, %v2544, %v2471
  %v2552 = vsel %vm518, %v2546, %v2473
  %v2554 = vsel %vm518, %v2548, %v2475
  %v2556 = vsel %vm525, %v2550, %v2488
  %v2558 = vsel %vm525, %v2552, %v2490
  %v2560 = vsel %vm525, %v2554, %v2492
  %v2562 = vsel %vm532, %v2556, %v2505
  %v2564 = vsel %vm532, %v2558, %v2507
  %v2566 = vsel %vm532, %v2560, %v2509
  %v2568 = vsel %vm539, %v2562, %v2524
  %v2570 = vsel %vm539, %v2564, %v2526
  %v2572 = vsel %vm539, %v2566, %v2528
  %s2573 = scalar_lea.vmem %s3, 376
  %v2574 = vld [vmem:[%s2573] sm:$0xf]
  %v2575 = vld [vmem:[%s2573 + $0x4] sm:$0xf]
  %v2576 = vld [vmem:[%s2573 + $0x8] sm:$0xf]
  %v2577 = vld [vmem:[%s2573 + $0xc] sm:$0xf]
  %v2578 = vld [vmem:[%s2573 + $0x10] sm:$0xf]
  %v2579 = vld [vmem:[%s2573 + $0x14] sm:$0xf]
  %v2580 = vld [vmem:[%s2573 + $0x18] sm:$0xf]
  %v2581 = vld [vmem:[%s2573 + $0x1c] sm:$0xf]
  %v2582 = vld [vmem:[%s2573 + $0x20] sm:$0xf]
  %v2583 = vld [vmem:[%s2573 + $0x24] sm:$0xf]
  %v2584 = vld [vmem:[%s2573 + $0x28] sm:$0xf]
  %v2585 = vld [vmem:[%s2573 + $0x2c] sm:$0xf]
  %v2586 = vld [vmem:[%s2573 + $0x30] sm:$0xf]
  %v2587 = vld [vmem:[%s2573 + $0x34] sm:$0xf]
  %v2588 = vld [vmem:[%s2573 + $0x38] sm:$0xf]
  %v2589 = vld [vmem:[%s2573 + $0x3c] sm:$0xf]
  %v2590 = vld [vmem:[%s2573 + $0x40] sm:$0xf]
  %v2591 = vld [vmem:[%s2573 + $0x44] sm:$0xf]
  %v2592 = vld [vmem:[%s2573 + $0x48] sm:$0xf]
  %v2593 = vld [vmem:[%s2573 + $0x4c] sm:$0xf]
  %v2594 = vld [vmem:[%s2573 + $0x50] sm:$0xf]
  %v2595 = vld [vmem:[%s2573 + $0x54] sm:$0xf]
  %v2596 = vld [vmem:[%s2573 + $0x58] sm:$0xf]
  %v2597 = vld [vmem:[%s2573 + $0x5c] sm:$0xf]
  %v2598 = vld [vmem:[%s2573 + $0x60] sm:$0xf]
  %v2599 = vld [vmem:[%s2573 + $0x64] sm:$0xf]
  %v2600 = vld [vmem:[%s2573 + $0x68] sm:$0xf]
  %v2601 = vld [vmem:[%s2573 + $0x6c] sm:$0xf]
  %v2602 = vld [vmem:[%s2573 + $0x70] sm:$0xf]
  %v2603 = vld [vmem:[%s2573 + $0x74] sm:$0xf]
  %v2604 = vld [vmem:[%s2573 + $0x78] sm:$0xf]
  %v2605 = vld [vmem:[%s2573 + $0x7c] sm:$0xf]
  %v2606 = vld [vmem:[%s2573 + $0x80] sm:$0xf]
  %v2607 = vld [vmem:[%s2573 + $0x84] sm:$0xf]
  %v2608 = vld [vmem:[%s2573 + $0x88] sm:$0xf]
  %v2609 = vld [vmem:[%s2573 + $0x8c] sm:$0xf]
  %v2610 = vld [vmem:[%s2573 + $0x90] sm:$0xf]
  %v2611 = vld [vmem:[%s2573 + $0x94] sm:$0xf]
  %v2612 = vld [vmem:[%s2573 + $0x98] sm:$0xf]
  %v2613 = vld [vmem:[%s2573 + $0x9c] sm:$0xf]
  %v2614 = vld [vmem:[%s2573 + $0xa0] sm:$0xf]
  %v2615 = vld [vmem:[%s2573 + $0xa4] sm:$0xf]
  %v2616 = vld [vmem:[%s2573 + $0xa8] sm:$0xf]
  %v2617 = vld [vmem:[%s2573 + $0xac] sm:$0xf]
  %v2618 = vld [vmem:[%s2573 + $0xb0] sm:$0xf]
  %v2619 = vld [vmem:[%s2573 + $0xb4] sm:$0xf]
  %v2620 = vld [vmem:[%s2573 + $0xb8] sm:$0xf]
  %v2621 = vld [vmem:[%s2573 + $0xbc] sm:$0xf]
  %v2622 = vld [vmem:[%s2573 + $0xc0] sm:$0xf]
  %v2623 = vld [vmem:[%s2573 + $0xc4] sm:$0xf]
  %v2624 = vld [vmem:[%s2573 + $0xc8] sm:$0xf]
  %v2625 = vld [vmem:[%s2573 + $0xcc] sm:$0xf]
  %v2626 = vld [vmem:[%s2573 + $0xd0] sm:$0xf]
  %v2627 = vld [vmem:[%s2573 + $0xd4] sm:$0xf]
  %v2628 = vld [vmem:[%s2573 + $0xd8] sm:$0xf]
  %v2629 = vld [vmem:[%s2573 + $0xdc] sm:$0xf]
  %v2630 = vld [vmem:[%s2573 + $0xe0] sm:$0xf]
  %v2631 = vld [vmem:[%s2573 + $0xe4] sm:$0xf]
  %v2632 = vld [vmem:[%s2573 + $0xe8] sm:$0xf]
  %v2633 = vld [vmem:[%s2573 + $0xec] sm:$0xf]
  %v2634 = vld [vmem:[%s2573 + $0xf0] sm:$0xf]
  %v2635 = vld [vmem:[%s2573 + $0xf4] sm:$0xf]
  %v2636 = vld [vmem:[%s2573 + $0xf8] sm:$0xf]
  %v2637 = vld [vmem:[%s2573 + $0xfc] sm:$0xf]
  %v2638 = vld [vmem:[%s2573 + $0x100] sm:$0xf]
  %v2639 = vld [vmem:[%s2573 + $0x104] sm:$0xf]
  %v2640 = vld [vmem:[%s2573 + $0x108] sm:$0xf]
  %v2641 = vld [vmem:[%s2573 + $0x10c] sm:$0xf]
  %v2642 = vld [vmem:[%s2573 + $0x110] sm:$0xf]
  %v2643 = vld [vmem:[%s2573 + $0x114] sm:$0xf]
  %v2644 = vld [vmem:[%s2573 + $0x118] sm:$0xf]
  %v2645 = vld [vmem:[%s2573 + $0x11c] sm:$0xf]
  %v2646 = vld [vmem:[%s2573 + $0x120] sm:$0xf]
  %v2647 = vld [vmem:[%s2573 + $0x124] sm:$0xf]
  %v2648 = vld [vmem:[%s2573 + $0x128] sm:$0xf]
  %v2649 = vld [vmem:[%s2573 + $0x12c] sm:$0xf]
  %v2650 = vld [vmem:[%s2573 + $0x130] sm:$0xf]
  %v2651 = vld [vmem:[%s2573 + $0x134] sm:$0xf]
  %v2652 = vld [vmem:[%s2573 + $0x138] sm:$0xf]
  %v2653 = vld [vmem:[%s2573 + $0x13c] sm:$0xf]
  %v2654 = vld [vmem:[%s2573 + $0x140] sm:$0xf]
  %v2655 = vld [vmem:[%s2573 + $0x144] sm:$0xf]
  %v2656 = vld [vmem:[%s2573 + $0x148] sm:$0xf]
  %v2657 = vld [vmem:[%s2573 + $0x14c] sm:$0xf]
  %v2658 = vld [vmem:[%s2573 + $0x150] sm:$0xf]
  %v2659 = vld [vmem:[%s2573 + $0x154] sm:$0xf]
  %v2660 = vld [vmem:[%s2573 + $0x158] sm:$0xf]
  %v2661 = vld [vmem:[%s2573 + $0x15c] sm:$0xf]
  %v2662 = vld [vmem:[%s2573 + $0x160] sm:$0xf]
  %v2663 = vld [vmem:[%s2573 + $0x164] sm:$0xf]
  %v2664 = vld [vmem:[%s2573 + $0x168] sm:$0xf]
  %v2665 = vld [vmem:[%s2573 + $0x16c] sm:$0xf]
  %v2666 = vld [vmem:[%s2573 + $0x170] sm:$0xf]
  %v2667 = vld [vmem:[%s2573 + $0x174] sm:$0xf]
  %s2668 = scalar_lea.vmem %s4, 1
  %v2669 = vld [vmem:[%s2668] sm:$0x1]
  %v2671 = vperm.slane %v2669, 0
  %v2688 = vrot.slane %v2073, 1
  %v2689 = vrot.slane %v2075, 1
  %v2690 = vsel %vm288, %v2688, %v2689
  %v2691 = vrot.slane %v2116, 1
  %v2692 = vrot.slane %v2118, 1
  %v2693 = vsel %vm288, %v2691, %v2692
  %v2694 = vrot.slane %v2367, 1
  %v2695 = vrot.slane %v2369, 1
  %v2696 = vsel %vm288, %v2694, %v2695
  %v2697 = vrot.slane %v2410, 1
  %v2698 = vrot.slane %v2412, 1
  %v2699 = vsel %vm288, %v2697, %v2698
  %v2700 = vrot.slane %v2568, 1
  %v2701 = vrot.slane %v2570, 1
  %v2702 = vsel %vm288, %v2700, %v2701
  %v2703 = vrot.slane %v2524, 1
  %v2704 = vrot.slane %v2526, 1
  %v2705 = vsel %vm288, %v2703, %v2704
  %v2706 = vrot.slane %v2077, 1
  %v2707 = vsel %vm288, %v2689, %v2706
  %v2708 = vrot.slane %v2120, 1
  %v2709 = vsel %vm288, %v2692, %v2708
  %v2710 = vrot.slane %v2371, 1
  %v2711 = vsel %vm288, %v2695, %v2710
  %v2712 = vrot.slane %v2414, 1
  %v2713 = vsel %vm288, %v2698, %v2712
  %v2714 = vrot.slane %v2572, 1
  %v2715 = vsel %vm288, %v2701, %v2714
  %v2716 = vrot.slane %v2528, 1
  %v2717 = vsel %vm288, %v2704, %v2716
  %v2822 = vunpack.c.l.b16 %v2574
  %v2823 = vunpack.c.l.b16 %v2575
  %v2824 = vunpack.c.l.b16 %v2576
  %v2825 = vunpack.c.l.b16 %v2577
  %v2826 = vunpack.c.l.b16 %v2578
  %v2827 = vunpack.c.l.b16 %v2579
  %v2828 = vunpack.c.l.b16 %v2580
  %v2829 = vunpack.c.l.b16 %v2581
  %v2830 = vunpack.c.l.b16 %v2582
  %v2831 = vunpack.c.l.b16 %v2583
  %v2832 = vunpack.c.l.b16 %v2584
  %v2833 = vunpack.c.l.b16 %v2585
  %v2834 = vunpack.c.l.b16 %v2586
  %v2835 = vunpack.c.l.b16 %v2587
  %v2836 = vunpack.c.l.b16 %v2588
  %v2837 = vunpack.c.l.b16 %v2589
  %v2838 = vunpack.c.l.b16 %v2590
  %v2839 = vunpack.c.l.b16 %v2591
  %v2840 = vunpack.c.l.b16 %v2592
  %v2841 = vunpack.c.l.b16 %v2593
  %v2842 = vunpack.c.l.b16 %v2594
  %v2843 = vunpack.c.l.b16 %v2595
  %v2844 = vunpack.c.l.b16 %v2596
  %v2845 = vunpack.c.l.b16 %v2597
  %v2846 = vunpack.c.l.b16 %v2598
  %v2847 = vunpack.c.l.b16 %v2599
  %v2848 = vunpack.c.l.b16 %v2600
  %v2849 = vunpack.c.l.b16 %v2601
  %v2850 = vunpack.c.l.b16 %v2602
  %v2851 = vunpack.c.l.b16 %v2603
  %v2852 = vunpack.c.l.b16 %v2604
  %v2853 = vunpack.c.l.b16 %v2605
  %v2854 = vunpack.c.l.b16 %v2606
  %v2855 = vunpack.c.l.b16 %v2607
  %v2856 = vunpack.c.l.b16 %v2608
  %v2857 = vunpack.c.l.b16 %v2609
  %v2858 = vunpack.c.l.b16 %v2610
  %v2859 = vunpack.c.l.b16 %v2611
  %v2860 = vunpack.c.l.b16 %v2612
  %v2861 = vunpack.c.l.b16 %v2613
  %v2862 = vunpack.c.l.b16 %v2614
  %v2863 = vunpack.c.l.b16 %v2615
  %v2864 = vunpack.c.l.b16 %v2616
  %v2865 = vunpack.c.l.b16 %v2617
  %v2866 = vunpack.c.l.b16 %v2618
  %v2867 = vunpack.c.l.b16 %v2619
  %v2868 = vunpack.c.l.b16 %v2620
  %v2869 = vunpack.c.l.b16 %v2621
  %v2870 = vunpack.c.l.b16 %v2622
  %v2871 = vunpack.c.l.b16 %v2623
  %v2872 = vunpack.c.l.b16 %v2624
  %v2873 = vunpack.c.l.b16 %v2625
  %v2874 = vunpack.c.l.b16 %v2626
  %v2875 = vunpack.c.l.b16 %v2627
  %v2876 = vunpack.c.l.b16 %v2628
  %v2877 = vunpack.c.l.b16 %v2629
  %v2878 = vunpack.c.l.b16 %v2630
  %v2879 = vunpack.c.l.b16 %v2631
  %v2880 = vunpack.c.l.b16 %v2632
  %v2881 = vunpack.c.l.b16 %v2633
  %v2882 = vunpack.c.l.b16 %v2634
  %v2883 = vunpack.c.l.b16 %v2635
  %v2884 = vunpack.c.l.b16 %v2636
  %v2885 = vunpack.c.l.b16 %v2637
  %v2886 = vunpack.c.l.b16 %v2638
  %v2887 = vunpack.c.l.b16 %v2639
  %v2888 = vunpack.c.l.b16 %v2640
  %v2889 = vunpack.c.l.b16 %v2641
  %v2890 = vunpack.c.l.b16 %v2642
  %v2891 = vunpack.c.l.b16 %v2643
  %v2892 = vunpack.c.l.b16 %v2644
  %v2893 = vunpack.c.l.b16 %v2645
  %v2894 = vunpack.c.l.b16 %v2646
  %v2895 = vunpack.c.l.b16 %v2647
  %v2896 = vunpack.c.l.b16 %v2648
  %v2897 = vunpack.c.l.b16 %v2649
  %v2898 = vunpack.c.l.b16 %v2650
  %v2899 = vunpack.c.l.b16 %v2651
  %v2900 = vunpack.c.l.b16 %v2652
  %v2901 = vunpack.c.l.b16 %v2653
  %v2902 = vunpack.c.l.b16 %v2654
  %v2903 = vunpack.c.l.b16 %v2655
  %v2904 = vunpack.c.l.b16 %v2656
  %v2905 = vunpack.c.l.b16 %v2657
  %v2906 = vunpack.c.l.b16 %v2658
  %v2907 = vunpack.c.l.b16 %v2659
  %v2908 = vunpack.c.l.b16 %v2660
  %v2909 = vunpack.c.l.b16 %v2661
  %v2910 = vunpack.c.l.b16 %v2662
  %v2911 = vunpack.c.l.b16 %v2663
  %v2912 = vunpack.c.l.b16 %v2664
  %v2913 = vunpack.c.l.b16 %v2665
  %v2914 = vunpack.c.l.b16 %v2666
  %v2915 = vunpack.c.l.b16 %v2667
  %v2916 = vpack.c.b16 %v2823, %v2822
  %v2917 = vpack.c.b16 %v2825, %v2824
  %v2918 = vpack.c.b16 %v2827, %v2826
  %v2919 = vpack.c.b16 %v2829, %v2828
  %v2920 = vpack.c.b16 %v2831, %v2830
  %v2921 = vpack.c.b16 %v2833, %v2832
  %v2922 = vpack.c.b16 %v2835, %v2834
  %v2923 = vpack.c.b16 %v2837, %v2836
  %v2924 = vpack.c.b16 %v2839, %v2838
  %v2925 = vpack.c.b16 %v2841, %v2840
  %v2926 = vpack.c.b16 %v2843, %v2842
  %v2927 = vpack.c.b16 %v2845, %v2844
  %v2928 = vpack.c.b16 %v2847, %v2846
  %v2929 = vpack.c.b16 %v2849, %v2848
  %v2930 = vpack.c.b16 %v2851, %v2850
  %v2931 = vpack.c.b16 %v2853, %v2852
  %v2932 = vpack.c.b16 %v2855, %v2854
  %v2933 = vpack.c.b16 %v2857, %v2856
  %v2934 = vpack.c.b16 %v2859, %v2858
  %v2935 = vpack.c.b16 %v2861, %v2860
  %v2936 = vpack.c.b16 %v2863, %v2862
  %v2937 = vpack.c.b16 %v2865, %v2864
  %v2938 = vpack.c.b16 %v2867, %v2866
  %v2939 = vpack.c.b16 %v2869, %v2868
  %v2940 = vpack.c.b16 %v2871, %v2870
  %v2941 = vpack.c.b16 %v2873, %v2872
  %v2942 = vpack.c.b16 %v2875, %v2874
  %v2943 = vpack.c.b16 %v2877, %v2876
  %v2944 = vpack.c.b16 %v2879, %v2878
  %v2945 = vpack.c.b16 %v2881, %v2880
  %v2946 = vpack.c.b16 %v2883, %v2882
  %v2947 = vpack.c.b16 %v2885, %v2884
  %v2948 = vpack.c.b16 %v2887, %v2886
  %v2949 = vpack.c.b16 %v2889, %v2888
  %v2950 = vpack.c.b16 %v2891, %v2890
  %v2951 = vpack.c.b16 %v2893, %v2892
  %v2952 = vpack.c.b16 %v2895, %v2894
  %v2953 = vpack.c.b16 %v2897, %v2896
  %v2954 = vpack.c.b16 %v2899, %v2898
  %v2955 = vpack.c.b16 %v2901, %v2900
  %v2956 = vpack.c.b16 %v2903, %v2902
  %v2957 = vpack.c.b16 %v2905, %v2904
  %v2958 = vpack.c.b16 %v2907, %v2906
  %v2959 = vpack.c.b16 %v2909, %v2908
  %v2960 = vpack.c.b16 %v2911, %v2910
  %v2961 = vpack.c.b16 %v2913, %v2912
  %v2962 = vpack.c.b16 %v2915, %v2914
  %v3011 = vsel %vm539, %v2705, 0
  %v3014 = vsel %vm539, %v2717, 0
  %3016 = vmatpush.bf16.msra.mxu0 %v2923
  %3017 = vmatpush.bf16.msra.mxu0 %v2922
  %3018 = vmatpush.bf16.msra.mxu0 %v2921
  %3019 = vmatpush.bf16.msra.mxu0 %v2920
  %3020 = vmatpush.bf16.msra.mxu0 %v2919
  %3021 = vmatpush.bf16.msra.mxu0 %v2918
  %3022 = vmatpush.bf16.msra.mxu0 %v2917
  %3023 = vmatpush.bf16.msra.mxu0 %v2916
  %3024 = vmatmul.bf16.gmra.mxu0 %v2690
  %v3025 = vpop.f32.mrf.mxu0
  %v3026 = vadd.f32 %v2671, %v3025
  %v3027 = vpop.f32.mrf.mxu0
  %v3028 = vadd.f32 %v2671, %v3027
  %3029 = vmatmul.bf16.gmra.mxu0 %v2707
  %v3030 = vpop.f32.mrf.mxu0
  %v3031 = vadd.f32 %v2671, %v3030
  %v3032 = vpop.f32.mrf.mxu0
  %v3033 = vadd.f32 %v2671, %v3032
  %3034 = vdwg.mxu0
  %3035 = vmatpush.bf16.msra.mxu0 %v2931
  %3036 = vmatpush.bf16.msra.mxu0 %v2930
  %3037 = vmatpush.bf16.msra.mxu0 %v2929
  %3038 = vmatpush.bf16.msra.mxu0 %v2928
  %3039 = vmatpush.bf16.msra.mxu0 %v2927
  %3040 = vmatpush.bf16.msra.mxu0 %v2926
  %3041 = vmatpush.bf16.msra.mxu0 %v2925
  %3042 = vmatpush.bf16.msra.mxu0 %v2924
  %3043 = vmatmul.bf16.gmra.mxu0 %v2693
  %v3044 = vpop.f32.mrf.mxu0
  %v3045 = vadd.f32 %v3026, %v3044
  %v3046 = vpop.f32.mrf.mxu0
  %v3047 = vadd.f32 %v3028, %v3046
  %3048 = vmatmul.bf16.gmra.mxu0 %v2709
  %v3049 = vpop.f32.mrf.mxu0
  %v3050 = vadd.f32 %v3031, %v3049
  %v3051 = vpop.f32.mrf.mxu0
  %v3052 = vadd.f32 %v3033, %v3051
  %3053 = vdwg.mxu0
  %3054 = vmatpush.bf16.msra.mxu0 %v2939
  %3055 = vmatpush.bf16.msra.mxu0 %v2938
  %3056 = vmatpush.bf16.msra.mxu0 %v2937
  %3057 = vmatpush.bf16.msra.mxu0 %v2936
  %3058 = vmatpush.bf16.msra.mxu0 %v2935
  %3059 = vmatpush.bf16.msra.mxu0 %v2934
  %3060 = vmatpush.bf16.msra.mxu0 %v2933
  %3061 = vmatpush.bf16.msra.mxu0 %v2932
  %3062 = vmatmul.bf16.gmra.mxu0 %v2696
  %v3063 = vpop.f32.mrf.mxu0
  %v3064 = vadd.f32 %v3045, %v3063
  %v3065 = vpop.f32.mrf.mxu0
  %v3066 = vadd.f32 %v3047, %v3065
  %3067 = vmatmul.bf16.gmra.mxu0 %v2711
  %v3068 = vpop.f32.mrf.mxu0
  %v3069 = vadd.f32 %v3050, %v3068
  %v3070 = vpop.f32.mrf.mxu0
  %v3071 = vadd.f32 %v3052, %v3070
  %3072 = vdwg.mxu0
  %3073 = vmatpush.bf16.msra.mxu0 %v2947
  %3074 = vmatpush.bf16.msra.mxu0 %v2946
  %3075 = vmatpush.bf16.msra.mxu0 %v2945
  %3076 = vmatpush.bf16.msra.mxu0 %v2944
  %3077 = vmatpush.bf16.msra.mxu0 %v2943
  %3078 = vmatpush.bf16.msra.mxu0 %v2942
  %3079 = vmatpush.bf16.msra.mxu0 %v2941
  %3080 = vmatpush.bf16.msra.mxu0 %v2940
  %3081 = vmatmul.bf16.gmra.mxu0 %v2699
  %v3082 = vpop.f32.mrf.mxu0
  %v3083 = vadd.f32 %v3064, %v3082
  %v3084 = vpop.f32.mrf.mxu0
  %v3085 = vadd.f32 %v3066, %v3084
  %3086 = vmatmul.bf16.gmra.mxu0 %v2713
  %v3087 = vpop.f32.mrf.mxu0
  %v3088 = vadd.f32 %v3069, %v3087
  %v3089 = vpop.f32.mrf.mxu0
  %v3090 = vadd.f32 %v3071, %v3089
  %3091 = vdwg.mxu0
  %3092 = vmatpush.bf16.msra.mxu0 %v2955
  %3093 = vmatpush.bf16.msra.mxu0 %v2954
  %3094 = vmatpush.bf16.msra.mxu0 %v2953
  %3095 = vmatpush.bf16.msra.mxu0 %v2952
  %3096 = vmatpush.bf16.msra.mxu0 %v2951
  %3097 = vmatpush.bf16.msra.mxu0 %v2950
  %3098 = vmatpush.bf16.msra.mxu0 %v2949
  %3099 = vmatpush.bf16.msra.mxu0 %v2948
  %3100 = vmatmul.bf16.gmra.mxu0 %v2702
  %v3101 = vpop.f32.mrf.mxu0
  %v3102 = vadd.f32 %v3083, %v3101
  %v3103 = vpop.f32.mrf.mxu0
  %v3104 = vadd.f32 %v3085, %v3103
  %3105 = vmatmul.bf16.gmra.mxu0 %v2715
  %v3106 = vpop.f32.mrf.mxu0
  %v3107 = vadd.f32 %v3088, %v3106
  %v3108 = vpop.f32.mrf.mxu0
  %v3109 = vadd.f32 %v3090, %v3108
  %3110 = vdwg.mxu0
  %3111 = vmatpush.bf16.msra.mxu0 0
  %3112 = vmatpush.bf16.msra.mxu0 %v2962
  %3113 = vmatpush.bf16.msra.mxu0 %v2961
  %3114 = vmatpush.bf16.msra.mxu0 %v2960
  %3115 = vmatpush.bf16.msra.mxu0 %v2959
  %3116 = vmatpush.bf16.msra.mxu0 %v2958
  %3117 = vmatpush.bf16.msra.mxu0 %v2957
  %3118 = vmatpush.bf16.msra.mxu0 %v2956
  %3119 = vmatmul.bf16.gmra.mxu0 %v3011
  %v3120 = vpop.f32.mrf.mxu0
  %v3121 = vadd.f32 %v3102, %v3120
  %v3122 = vpop.f32.mrf.mxu0
  %v3123 = vadd.f32 %v3104, %v3122
  %3124 = vmatmul.bf16.gmra.mxu0 %v3014
  %v3125 = vpop.f32.mrf.mxu0
  %v3126 = vadd.f32 %v3107, %v3125
  %v3127 = vpop.f32.mrf.mxu0
  %v3128 = vadd.f32 %v3109, %v3127
  %3129 = vdwg.mxu0
  %v3130 = vmax.f32 %v3121, 0.0
  %v3131 = vmax.f32 %v3123, 0.0
  %v3132 = vmax.f32 %v3126, 0.0
  %v3133 = vmax.f32 %v3128, 0.0
  %v3134 = vpack.c.bf16 %v3131, %v3130
  %v3135 = vpack.c.bf16 %v3133, %v3132
  %s3136 = scalar_lea.vmem %s1, 128
  %v3137 = vld [vmem:[%s3136] sm:$0xf]
  %v3138 = vld [vmem:[%s3136 + $0x4] sm:$0xf]
  %v3139 = vld [vmem:[%s3136 + $0x8] sm:$0xf]
  %v3140 = vld [vmem:[%s3136 + $0xc] sm:$0xf]
  %v3141 = vld [vmem:[%s3136 + $0x10] sm:$0xf]
  %v3142 = vld [vmem:[%s3136 + $0x14] sm:$0xf]
  %v3143 = vld [vmem:[%s3136 + $0x18] sm:$0xf]
  %v3144 = vld [vmem:[%s3136 + $0x1c] sm:$0xf]
  %v3145 = vld [vmem:[%s3136 + $0x20] sm:$0xf]
  %v3146 = vld [vmem:[%s3136 + $0x24] sm:$0xf]
  %v3147 = vld [vmem:[%s3136 + $0x28] sm:$0xf]
  %v3148 = vld [vmem:[%s3136 + $0x2c] sm:$0xf]
  %v3149 = vld [vmem:[%s3136 + $0x30] sm:$0xf]
  %v3150 = vld [vmem:[%s3136 + $0x34] sm:$0xf]
  %v3151 = vld [vmem:[%s3136 + $0x38] sm:$0xf]
  %v3152 = vld [vmem:[%s3136 + $0x3c] sm:$0xf]
  %s3153 = scalar_lea.vmem %s2, 2
  %v3154 = vld [vmem:[%s3153] sm:$0x1]
  %v3156 = vperm.slane %v3154, 0
  %v3174 = vunpack.c.l.b16 %v3137
  %v3175 = vunpack.c.l.b16 %v3138
  %v3176 = vunpack.c.l.b16 %v3139
  %v3177 = vunpack.c.l.b16 %v3140
  %v3178 = vunpack.c.l.b16 %v3141
  %v3179 = vunpack.c.l.b16 %v3142
  %v3180 = vunpack.c.l.b16 %v3143
  %v3181 = vunpack.c.l.b16 %v3144
  %v3182 = vunpack.c.l.b16 %v3145
  %v3183 = vunpack.c.l.b16 %v3146
  %v3184 = vunpack.c.l.b16 %v3147
  %v3185 = vunpack.c.l.b16 %v3148
  %v3186 = vunpack.c.l.b16 %v3149
  %v3187 = vunpack.c.l.b16 %v3150
  %v3188 = vunpack.c.l.b16 %v3151
  %v3189 = vunpack.c.l.b16 %v3152
  %v3190 = vpack.c.b16 %v3175, %v3174
  %v3191 = vpack.c.b16 %v3177, %v3176
  %v3192 = vpack.c.b16 %v3179, %v3178
  %v3193 = vpack.c.b16 %v3181, %v3180
  %v3194 = vpack.c.b16 %v3183, %v3182
  %v3195 = vpack.c.b16 %v3185, %v3184
  %v3196 = vpack.c.b16 %v3187, %v3186
  %v3197 = vpack.c.b16 %v3189, %v3188
  %3206 = vmatpush.bf16.msra.mxu0 %v3197
  %3207 = vmatpush.bf16.msra.mxu0 %v3196
  %3208 = vmatpush.bf16.msra.mxu0 %v3195
  %3209 = vmatpush.bf16.msra.mxu0 %v3194
  %3210 = vmatpush.bf16.msra.mxu0 %v3193
  %3211 = vmatpush.bf16.msra.mxu0 %v3192
  %3212 = vmatpush.bf16.msra.mxu0 %v3191
  %3213 = vmatpush.bf16.msra.mxu0 %v3190
  %3214 = vmatmul.bf16.gmra.mxu0 %v3134
  %v3215 = vpop.f32.mrf.mxu0
  %v3216 = vadd.f32 %v3156, %v3215
  %v3217 = vpop.f32.mrf.mxu0
  %v3218 = vadd.f32 %v3156, %v3217
  %3219 = vmatmul.bf16.gmra.mxu0 %v3135
  %v3220 = vpop.f32.mrf.mxu0
  %v3221 = vadd.f32 %v3156, %v3220
  %v3222 = vpop.f32.mrf.mxu0
  %v3223 = vadd.f32 %v3156, %v3222
  %3224 = vdwg.mxu0
  %v3225 = vpack.c.bf16 %v3216, %v3216
  %v3226 = vpack.c.bf16 %v3218, %v3218
  %v3227 = vpack.c.bf16 %v3221, %v3221
  %v3228 = vpack.c.bf16 %v3223, %v3223
  %3229 = vst.msk [vmem:[#allocation2 + $0x18] sm:$0xf] %vm33, %v3225
  %3230 = vst.msk [vmem:[#allocation2 + $0x1c] sm:$0xf] %vm33, %v3226
  %3231 = vst.msk [vmem:[#allocation2 + $0x20] sm:$0xf] %vm33, %v3227
  %3232 = vst.msk [vmem:[#allocation2 + $0x24] sm:$0xf] %vm33, %v3228
  %v3237 = vrot.slane %v3130, 6
  %v3238 = vrot.slane %v3131, 6
  %v3239 = vsel %vm159, %v3237, %v3238
  %v3240 = vrot.slane %v3132, 6
  %v3241 = vsel %vm159, %v3238, %v3240
  %v3242 = vrot.slane %v3133, 6
  %v3243 = vsel %vm159, %v3240, %v3242
  %v3248 = vsel %vm159, %v3130, %v3237
  %v3249 = vrot.slane %v3130, 2
  %v3250 = vrot.slane %v3131, 2
  %v3251 = vsel %vm172, %v3249, %v3250
  %v3252 = vrot.slane %v3132, 2
  %v3253 = vsel %vm172, %v3250, %v3252
  %v3254 = vrot.slane %v3133, 2
  %v3255 = vsel %vm172, %v3252, %v3254
  %v3260 = vsel %vm172, %v3254, %v3133
  %v3261 = vmax.f32 %v3248, %v3130
  %v3262 = vmax.f32 %v3239, %v3131
  %v3263 = vmax.f32 %v3241, %v3132
  %v3264 = vmax.f32 %v3243, %v3133
  %v3265 = vmax.f32 %v3261, %v3251
  %v3266 = vmax.f32 %v3262, %v3253
  %v3267 = vmax.f32 %v3263, %v3255
  %v3268 = vmax.f32 %v3264, %v3260
  %v3269 = vpack.c.bf16 %v3265, %v3265
  %v3270 = vpack.c.bf16 %v3266, %v3266
  %v3271 = vpack.c.bf16 %v3267, %v3267
  %v3272 = vpack.c.bf16 %v3268, %v3268
  %v3273 = vld [vmem:[#allocation2 + $0x4] sm:$0xe]
  %v3274 = vld [vmem:[#allocation2 + $0x8] sm:$0xf]
  %v3275 = vld [vmem:[#allocation2 + $0xc] sm:$0xf]
  %v3276 = vld [vmem:[#allocation2 + $0x10] sm:$0xf]
  %v3277 = vld [vmem:[#allocation2 + $0x14] sm:$0x1]
  %v3278 = vld [vmem:[#allocation2 + $0x4] sm:$0xc]
  %v3279 = vld [vmem:[#allocation2 + $0x14] sm:$0x3]
  %v3280 = vld [vmem:[#allocation2 + $0x4] sm:$0x8]
  %v3281 = vld [vmem:[#allocation2 + $0x14] sm:$0x7]
  %v3282 = vld [vmem:[#allocation2 + $0x14] sm:$0xf]
  %v3283 = vld [vmem:[#allocation2 + $0x8] sm:$0xe]
  %v3284 = vld [vmem:[#allocation2 + $0x18] sm:$0x1]
  %v3285 = vld [vmem:[#allocation2 + $0x8] sm:$0xc]
  %v3286 = vld [vmem:[#allocation2 + $0x18] sm:$0x3]
  %v3287 = vld [vmem:[#allocation2 + $0x8] sm:$0x8]
  %v3288 = vld [vmem:[#allocation2 + $0x18] sm:$0x7]
  %v3289 = vld [vmem:[#allocation2 + $0x18] sm:$0xf]
  %v3290 = vld [vmem:[#allocation2 + $0xc] sm:$0xe]
  %v3291 = vld [vmem:[#allocation2 + $0x1c] sm:$0x1]
  %v3292 = vld [vmem:[#allocation2 + $0xc] sm:$0xc]
  %v3293 = vld [vmem:[#allocation2 + $0x1c] sm:$0x3]
  %v3294 = vld [vmem:[#allocation2 + $0xc] sm:$0x8]
  %v3295 = vld [vmem:[#allocation2 + $0x1c] sm:$0x7]
  %v3296 = vld [vmem:[#allocation2 + $0x1c] sm:$0xf]
  %v3297 = vld [vmem:[#allocation2 + $0x10] sm:$0xe]
  %v3298 = vld [vmem:[#allocation2 + $0x20] sm:$0x1]
  %v3299 = vld [vmem:[#allocation2 + $0x10] sm:$0xc]
  %v3300 = vld [vmem:[#allocation2 + $0x20] sm:$0x3]
  %v3301 = vld [vmem:[#allocation2 + $0x10] sm:$0x8]
  %v3302 = vld [vmem:[#allocation2 + $0x20] sm:$0x7]
  %v3303 = vld [vmem:[#allocation2 + $0x20] sm:$0xf]
  %v3304 = vld [vmem:[#allocation2 + $0x14] sm:$0xe]
  %v3305 = vld [vmem:[#allocation2 + $0x24] sm:$0x1]
  %v3306 = vld [vmem:[#allocation2 + $0x14] sm:$0xc]
  %v3307 = vld [vmem:[#allocation2 + $0x24] sm:$0x3]
  %v3308 = vld [vmem:[#allocation2 + $0x14] sm:$0x8]
  %v3309 = vld [vmem:[#allocation2 + $0x24] sm:$0x7]
  %v3310 = vld [vmem:[#allocation2 + $0x24] sm:$0xf]
  %v3311 = vld [vmem:[#allocation2 + $0x18] sm:$0xe]
  %v3312 = vld [vmem:[#allocation2 + $0x28] sm:$0x1]
  %v3313 = vld [vmem:[#allocation2 + $0x18] sm:$0xc]
  %v3314 = vld [vmem:[#allocation2 + $0x28] sm:$0x3]
  %v3315 = vld [vmem:[#allocation2 + $0x18] sm:$0x8]
  %v3316 = vld [vmem:[#allocation2 + $0x28] sm:$0x7]
  %v3317 = vld [vmem:[#allocation2 + $0x28] sm:$0xf]
  %v3318 = vld [vmem:[#allocation2 + $0x1c] sm:$0xe]
  %v3319 = vld [vmem:[#allocation2 + $0x2c] sm:$0x1]
  %v3320 = vld [vmem:[#allocation2 + $0x1c] sm:$0xc]
  %v3321 = vld [vmem:[#allocation2 + $0x2c] sm:$0x3]
  %v3322 = vld [vmem:[#allocation2 + $0x1c] sm:$0x8]
  %v3323 = vld [vmem:[#allocation2 + $0x2c] sm:$0x7]
  %v3324 = vld [vmem:[#allocation2 + $0x2c] sm:$0xf]
  %v3325 = vld [vmem:[#allocation2 + $0x20] sm:$0xe]
  %v3326 = vld [vmem:[#allocation2 + $0x30] sm:$0x1]
  %v3327 = vld [vmem:[#allocation2 + $0x20] sm:$0xc]
  %v3328 = vld [vmem:[#allocation2 + $0x30] sm:$0x3]
  %v3329 = vld [vmem:[#allocation2 + $0x20] sm:$0x8]
  %v3330 = vld [vmem:[#allocation2 + $0x30] sm:$0x7]
  %v3331 = vld [vmem:[#allocation2 + $0x30] sm:$0xf]
  %v3332 = vld [vmem:[#allocation2 + $0x24] sm:$0xe]
  %v3333 = vld [vmem:[#allocation2 + $0x34] sm:$0x1]
  %v3334 = vld [vmem:[#allocation2 + $0x24] sm:$0xc]
  %v3335 = vld [vmem:[#allocation2 + $0x34] sm:$0x3]
  %v3336 = vld [vmem:[#allocation2 + $0x24] sm:$0x8]
  %v3337 = vld [vmem:[#allocation2 + $0x34] sm:$0x7]
  %v3338 = vld [vmem:[#allocation2 + $0x34] sm:$0xf]
  %v3339 = vld [vmem:[#allocation2 + $0x28] sm:$0xe]
  %v3340 = vld [vmem:[#allocation2 + $0x38] sm:$0x1]
  %v3341 = vld [vmem:[#allocation2 + $0x28] sm:$0xc]
  %v3342 = vld [vmem:[#allocation2 + $0x38] sm:$0x3]
  %v3343 = vld [vmem:[#allocation2 + $0x28] sm:$0x8]
  %v3344 = vld [vmem:[#allocation2 + $0x38] sm:$0x7]
  %v3350 = vunpack.c.l.b16 %v3273
  %v3351 = vunpack.c.l.b16 %v3274
  %v3352 = vunpack.c.l.b16 %v3275
  %v3353 = vunpack.c.l.b16 %v3276
  %v3354 = vunpack.c.l.b16 %v3277
  %v3355 = vpack.c.b16 %v3351, %v3350
  %v3356 = vpack.c.b16 %v3353, %v3352
  %v3357 = vpack.c.b16 %v3354, %v3354
  %v3360 = vunpack.c.l.b16 %v3278
  %v3361 = vunpack.c.l.b16 %v3279
  %v3362 = vpack.c.b16 %v3351, %v3360
  %v3363 = vpack.c.b16 %v3361, %v3361
  %v3364 = vrot.slane %v3362, 1
  %v3365 = vrot.slane %v3356, 1
  %v3366 = vsel %vm288, %v3364, %v3365
  %v3367 = vrot.slane %v3363, 1
  %v3368 = vsel %vm288, %v3365, %v3367
  %3369 = vrot.lane.b32.xlu0 %v3366, 16
  %v3370 = vpop.permute.xlu0 %3369
  %3371 = vrot.lane.b32.xlu0 %v3368, 16
  %v3372 = vpop.permute.xlu0 %3371
  %3373 = vrot.lane.b32.xlu0 %v3367, 16
  %v3374 = vpop.permute.xlu0 %3373
  %v3377 = vunpack.c.l.b16 %v3280
  %v3378 = vunpack.c.l.b16 %v3281
  %v3379 = vpack.c.b16 %v3351, %v3377
  %v3380 = vpack.c.b16 %v3378, %v3378
  %v3381 = vrot.slane %v3379, 2
  %v3382 = vrot.slane %v3356, 2
  %v3383 = vsel %vm306, %v3381, %v3382
  %v3384 = vrot.slane %v3380, 2
  %v3385 = vsel %vm306, %v3382, %v3384
  %3386 = vrot.lane.b32.xlu0 %v3383, 32
  %v3387 = vpop.permute.xlu0 %3386
  %3388 = vrot.lane.b32.xlu0 %v3385, 32
  %v3389 = vpop.permute.xlu0 %3388
  %3390 = vrot.lane.b32.xlu0 %v3384, 32
  %v3391 = vpop.permute.xlu0 %3390
  %v3393 = vunpack.c.l.b16 %v3282
  %v3394 = vpack.c.b16 %v3352, %v3351
  %v3395 = vpack.c.b16 %v3393, %v3353
  %v3396 = vrot.slane %v3394, 7
  %v3397 = vrot.slane %v3395, 7
  %v3398 = vsel %vm322, %v3396, %v3397
  %3399 = vrot.lane.b32.xlu0 %v3396, 48
  %v3400 = vpop.permute.xlu0 %3399
  %3401 = vrot.lane.b32.xlu0 %v3398, 48
  %v3402 = vpop.permute.xlu0 %3401
  %3403 = vrot.lane.b32.xlu0 %v3397, 48
  %v3404 = vpop.permute.xlu0 %3403
  %v3407 = vunpack.c.l.b16 %v3283
  %v3408 = vunpack.c.l.b16 %v3284
  %v3409 = vpack.c.b16 %v3352, %v3407
  %v3410 = vpack.c.b16 %v3408, %v3408
  %3411 = vrot.lane.b32.xlu0 %v3409, 64
  %v3412 = vpop.permute.xlu0 %3411
  %3413 = vrot.lane.b32.xlu0 %v3395, 64
  %v3414 = vpop.permute.xlu0 %3413
  %3415 = vrot.lane.b32.xlu0 %v3410, 64
  %v3416 = vpop.permute.xlu0 %3415
  %v3419 = vunpack.c.l.b16 %v3285
  %v3420 = vunpack.c.l.b16 %v3286
  %v3421 = vpack.c.b16 %v3352, %v3419
  %v3422 = vpack.c.b16 %v3420, %v3420
  %v3423 = vrot.slane %v3421, 1
  %v3424 = vrot.slane %v3395, 1
  %v3425 = vsel %vm288, %v3423, %v3424
  %v3426 = vrot.slane %v3422, 1
  %v3427 = vsel %vm288, %v3424, %v3426
  %3428 = vrot.lane.b32.xlu0 %v3425, 80
  %v3429 = vpop.permute.xlu0 %3428
  %3430 = vrot.lane.b32.xlu0 %v3427, 80
  %v3431 = vpop.permute.xlu0 %3430
  %3432 = vrot.lane.b32.xlu0 %v3426, 80
  %v3433 = vpop.permute.xlu0 %3432
  %v3436 = vunpack.c.l.b16 %v3287
  %v3437 = vunpack.c.l.b16 %v3288
  %v3438 = vpack.c.b16 %v3352, %v3436
  %v3439 = vpack.c.b16 %v3437, %v3437
  %v3440 = vrot.slane %v3438, 2
  %v3441 = vrot.slane %v3395, 2
  %v3442 = vsel %vm306, %v3440, %v3441
  %v3443 = vrot.slane %v3439, 2
  %v3444 = vsel %vm306, %v3441, %v3443
  %3445 = vrot.lane.b32.xlu0 %v3442, 96
  %v3446 = vpop.permute.xlu0 %3445
  %3447 = vrot.lane.b32.xlu0 %v3444, 96
  %v3448 = vpop.permute.xlu0 %3447
  %3449 = vrot.lane.b32.xlu0 %v3443, 96
  %v3450 = vpop.permute.xlu0 %3449
  %v3452 = vunpack.c.l.b16 %v3289
  %v3453 = vpack.c.b16 %v3452, %v3393
  %v3454 = vrot.slane %v3356, 7
  %v3455 = vrot.slane %v3453, 7
  %v3456 = vsel %vm322, %v3454, %v3455
  %3457 = vrot.lane.b32.xlu0 %v3454, 112
  %v3458 = vpop.permute.xlu0 %3457
  %3459 = vrot.lane.b32.xlu0 %v3456, 112
  %v3460 = vpop.permute.xlu0 %3459
  %3461 = vrot.lane.b32.xlu0 %v3455, 112
  %v3462 = vpop.permute.xlu0 %3461
  %v3465 = vunpack.c.l.b16 %v3290
  %v3466 = vunpack.c.l.b16 %v3291
  %v3467 = vpack.c.b16 %v3353, %v3465
  %v3468 = vpack.c.b16 %v3466, %v3466
  %v3471 = vunpack.c.l.b16 %v3292
  %v3472 = vunpack.c.l.b16 %v3293
  %v3473 = vpack.c.b16 %v3353, %v3471
  %v3474 = vpack.c.b16 %v3472, %v3472
  %v3475 = vrot.slane %v3473, 1
  %v3476 = vrot.slane %v3453, 1
  %v3477 = vsel %vm288, %v3475, %v3476
  %v3478 = vrot.slane %v3474, 1
  %v3479 = vsel %vm288, %v3476, %v3478
  %3480 = vrot.lane.b32.xlu0 %v3477, 16
  %v3481 = vpop.permute.xlu0 %3480
  %3482 = vrot.lane.b32.xlu0 %v3479, 16
  %v3483 = vpop.permute.xlu0 %3482
  %3484 = vrot.lane.b32.xlu0 %v3478, 16
  %v3485 = vpop.permute.xlu0 %3484
  %v3488 = vunpack.c.l.b16 %v3294
  %v3489 = vunpack.c.l.b16 %v3295
  %v3490 = vpack.c.b16 %v3353, %v3488
  %v3491 = vpack.c.b16 %v3489, %v3489
  %v3492 = vrot.slane %v3490, 2
  %v3493 = vrot.slane %v3453, 2
  %v3494 = vsel %vm306, %v3492, %v3493
  %v3495 = vrot.slane %v3491, 2
  %v3496 = vsel %vm306, %v3493, %v3495
  %3497 = vrot.lane.b32.xlu0 %v3494, 32
  %v3498 = vpop.permute.xlu0 %3497
  %3499 = vrot.lane.b32.xlu0 %v3496, 32
  %v3500 = vpop.permute.xlu0 %3499
  %3501 = vrot.lane.b32.xlu0 %v3495, 32
  %v3502 = vpop.permute.xlu0 %3501
  %v3504 = vunpack.c.l.b16 %v3296
  %v3505 = vpack.c.b16 %v3504, %v3452
  %v3506 = vrot.slane %v3505, 7
  %v3507 = vsel %vm322, %v3397, %v3506
  %3508 = vrot.lane.b32.xlu0 %v3507, 48
  %v3509 = vpop.permute.xlu0 %3508
  %3510 = vrot.lane.b32.xlu0 %v3506, 48
  %v3511 = vpop.permute.xlu0 %3510
  %v3514 = vunpack.c.l.b16 %v3297
  %v3515 = vunpack.c.l.b16 %v3298
  %v3516 = vpack.c.b16 %v3393, %v3514
  %v3517 = vpack.c.b16 %v3515, %v3515
  %3518 = vrot.lane.b32.xlu0 %v3516, 64
  %v3519 = vpop.permute.xlu0 %3518
  %3520 = vrot.lane.b32.xlu0 %v3505, 64
  %v3521 = vpop.permute.xlu0 %3520
  %3522 = vrot.lane.b32.xlu0 %v3517, 64
  %v3523 = vpop.permute.xlu0 %3522
  %v3526 = vunpack.c.l.b16 %v3299
  %v3527 = vunpack.c.l.b16 %v3300
  %v3528 = vpack.c.b16 %v3393, %v3526
  %v3529 = vpack.c.b16 %v3527, %v3527
  %v3530 = vrot.slane %v3528, 1
  %v3531 = vrot.slane %v3505, 1
  %v3532 = vsel %vm288, %v3530, %v3531
  %v3533 = vrot.slane %v3529, 1
  %v3534 = vsel %vm288, %v3531, %v3533
  %3535 = vrot.lane.b32.xlu0 %v3532, 80
  %v3536 = vpop.permute.xlu0 %3535
  %3537 = vrot.lane.b32.xlu0 %v3534, 80
  %v3538 = vpop.permute.xlu0 %3537
  %3539 = vrot.lane.b32.xlu0 %v3533, 80
  %v3540 = vpop.permute.xlu0 %3539
  %v3543 = vunpack.c.l.b16 %v3301
  %v3544 = vunpack.c.l.b16 %v3302
  %v3545 = vpack.c.b16 %v3393, %v3543
  %v3546 = vpack.c.b16 %v3544, %v3544
  %v3547 = vrot.slane %v3545, 2
  %v3548 = vrot.slane %v3505, 2
  %v3549 = vsel %vm306, %v3547, %v3548
  %v3550 = vrot.slane %v3546, 2
  %v3551 = vsel %vm306, %v3548, %v3550
  %3552 = vrot.lane.b32.xlu0 %v3549, 96
  %v3553 = vpop.permute.xlu0 %3552
  %3554 = vrot.lane.b32.xlu0 %v3551, 96
  %v3555 = vpop.permute.xlu0 %3554
  %3556 = vrot.lane.b32.xlu0 %v3550, 96
  %v3557 = vpop.permute.xlu0 %3556
  %v3559 = vunpack.c.l.b16 %v3303
  %v3560 = vpack.c.b16 %v3559, %v3504
  %v3561 = vrot.slane %v3560, 7
  %v3562 = vsel %vm322, %v3455, %v3561
  %3563 = vrot.lane.b32.xlu0 %v3562, 112
  %v3564 = vpop.permute.xlu0 %3563
  %3565 = vrot.lane.b32.xlu0 %v3561, 112
  %v3566 = vpop.permute.xlu0 %3565
  %v3569 = vsel %vm494, %v3355, %v3370
  %v3572 = vsel %vm494, %v3356, %v3372
  %v3575 = vsel %vm494, %v3357, %v3374
  %v3577 = vsel %vm504, %v3569, %v3387
  %v3579 = vsel %vm504, %v3572, %v3389
  %v3581 = vsel %vm504, %v3575, %v3391
  %v3583 = vsel %vm511, %v3577, %v3400
  %v3585 = vsel %vm511, %v3579, %v3402
  %v3587 = vsel %vm511, %v3581, %v3404
  %v3589 = vsel %vm518, %v3583, %v3412
  %v3591 = vsel %vm518, %v3585, %v3414
  %v3593 = vsel %vm518, %v3587, %v3416
  %v3595 = vsel %vm525, %v3589, %v3429
  %v3597 = vsel %vm525, %v3591, %v3431
  %v3599 = vsel %vm525, %v3593, %v3433
  %v3601 = vsel %vm532, %v3595, %v3446
  %v3603 = vsel %vm532, %v3597, %v3448
  %v3605 = vsel %vm532, %v3599, %v3450
  %v3607 = vsel %vm539, %v3601, %v3458
  %v3609 = vsel %vm539, %v3603, %v3460
  %v3611 = vsel %vm539, %v3605, %v3462
  %v3614 = vsel %vm494, %v3467, %v3481
  %v3617 = vsel %vm494, %v3453, %v3483
  %v3620 = vsel %vm494, %v3468, %v3485
  %v3622 = vsel %vm504, %v3614, %v3498
  %v3624 = vsel %vm504, %v3617, %v3500
  %v3626 = vsel %vm504, %v3620, %v3502
  %v3627 = vsel %vm511, %v3622, %v3404
  %v3629 = vsel %vm511, %v3624, %v3509
  %v3631 = vsel %vm511, %v3626, %v3511
  %v3633 = vsel %vm518, %v3627, %v3519
  %v3635 = vsel %vm518, %v3629, %v3521
  %v3637 = vsel %vm518, %v3631, %v3523
  %v3639 = vsel %vm525, %v3633, %v3536
  %v3641 = vsel %vm525, %v3635, %v3538
  %v3643 = vsel %vm525, %v3637, %v3540
  %v3645 = vsel %vm532, %v3639, %v3553
  %v3647 = vsel %vm532, %v3641, %v3555
  %v3649 = vsel %vm532, %v3643, %v3557
  %v3650 = vsel %vm539, %v3645, %v3462
  %v3652 = vsel %vm539, %v3647, %v3564
  %v3654 = vsel %vm539, %v3649, %v3566
  %v3657 = vunpack.c.l.b16 %v3304
  %v3658 = vunpack.c.l.b16 %v3305
  %v3659 = vpack.c.b16 %v3452, %v3657
  %v3660 = vpack.c.b16 %v3658, %v3658
  %v3663 = vunpack.c.l.b16 %v3306
  %v3664 = vunpack.c.l.b16 %v3307
  %v3665 = vpack.c.b16 %v3452, %v3663
  %v3666 = vpack.c.b16 %v3664, %v3664
  %v3667 = vrot.slane %v3665, 1
  %v3668 = vrot.slane %v3560, 1
  %v3669 = vsel %vm288, %v3667, %v3668
  %v3670 = vrot.slane %v3666, 1
  %v3671 = vsel %vm288, %v3668, %v3670
  %3672 = vrot.lane.b32.xlu0 %v3669, 16
  %v3673 = vpop.permute.xlu0 %3672
  %3674 = vrot.lane.b32.xlu0 %v3671, 16
  %v3675 = vpop.permute.xlu0 %3674
  %3676 = vrot.lane.b32.xlu0 %v3670, 16
  %v3677 = vpop.permute.xlu0 %3676
  %v3680 = vunpack.c.l.b16 %v3308
  %v3681 = vunpack.c.l.b16 %v3309
  %v3682 = vpack.c.b16 %v3452, %v3680
  %v3683 = vpack.c.b16 %v3681, %v3681
  %v3684 = vrot.slane %v3682, 2
  %v3685 = vrot.slane %v3560, 2
  %v3686 = vsel %vm306, %v3684, %v3685
  %v3687 = vrot.slane %v3683, 2
  %v3688 = vsel %vm306, %v3685, %v3687
  %3689 = vrot.lane.b32.xlu0 %v3686, 32
  %v3690 = vpop.permute.xlu0 %3689
  %3691 = vrot.lane.b32.xlu0 %v3688, 32
  %v3692 = vpop.permute.xlu0 %3691
  %3693 = vrot.lane.b32.xlu0 %v3687, 32
  %v3694 = vpop.permute.xlu0 %3693
  %v3696 = vunpack.c.l.b16 %v3310
  %v3697 = vpack.c.b16 %v3696, %v3559
  %v3698 = vrot.slane %v3697, 7
  %v3699 = vsel %vm322, %v3506, %v3698
  %3700 = vrot.lane.b32.xlu0 %v3699, 48
  %v3701 = vpop.permute.xlu0 %3700
  %3702 = vrot.lane.b32.xlu0 %v3698, 48
  %v3703 = vpop.permute.xlu0 %3702
  %v3706 = vunpack.c.l.b16 %v3311
  %v3707 = vunpack.c.l.b16 %v3312
  %v3708 = vpack.c.b16 %v3504, %v3706
  %v3709 = vpack.c.b16 %v3707, %v3707
  %3710 = vrot.lane.b32.xlu0 %v3708, 64
  %v3711 = vpop.permute.xlu0 %3710
  %3712 = vrot.lane.b32.xlu0 %v3697, 64
  %v3713 = vpop.permute.xlu0 %3712
  %3714 = vrot.lane.b32.xlu0 %v3709, 64
  %v3715 = vpop.permute.xlu0 %3714
  %v3718 = vunpack.c.l.b16 %v3313
  %v3719 = vunpack.c.l.b16 %v3314
  %v3720 = vpack.c.b16 %v3504, %v3718
  %v3721 = vpack.c.b16 %v3719, %v3719
  %v3722 = vrot.slane %v3720, 1
  %v3723 = vrot.slane %v3697, 1
  %v3724 = vsel %vm288, %v3722, %v3723
  %v3725 = vrot.slane %v3721, 1
  %v3726 = vsel %vm288, %v3723, %v3725
  %3727 = vrot.lane.b32.xlu0 %v3724, 80
  %v3728 = vpop.permute.xlu0 %3727
  %3729 = vrot.lane.b32.xlu0 %v3726, 80
  %v3730 = vpop.permute.xlu0 %3729
  %3731 = vrot.lane.b32.xlu0 %v3725, 80
  %v3732 = vpop.permute.xlu0 %3731
  %v3735 = vunpack.c.l.b16 %v3315
  %v3736 = vunpack.c.l.b16 %v3316
  %v3737 = vpack.c.b16 %v3504, %v3735
  %v3738 = vpack.c.b16 %v3736, %v3736
  %v3739 = vrot.slane %v3737, 2
  %v3740 = vrot.slane %v3697, 2
  %v3741 = vsel %vm306, %v3739, %v3740
  %v3742 = vrot.slane %v3738, 2
  %v3743 = vsel %vm306, %v3740, %v3742
  %3744 = vrot.lane.b32.xlu0 %v3741, 96
  %v3745 = vpop.permute.xlu0 %3744
  %3746 = vrot.lane.b32.xlu0 %v3743, 96
  %v3747 = vpop.permute.xlu0 %3746
  %3748 = vrot.lane.b32.xlu0 %v3742, 96
  %v3749 = vpop.permute.xlu0 %3748
  %v3751 = vunpack.c.l.b16 %v3317
  %v3752 = vpack.c.b16 %v3751, %v3696
  %v3753 = vrot.slane %v3752, 7
  %v3754 = vsel %vm322, %v3561, %v3753
  %3755 = vrot.lane.b32.xlu0 %v3754, 112
  %v3756 = vpop.permute.xlu0 %3755
  %3757 = vrot.lane.b32.xlu0 %v3753, 112
  %v3758 = vpop.permute.xlu0 %3757
  %v3761 = vunpack.c.l.b16 %v3318
  %v3762 = vunpack.c.l.b16 %v3319
  %v3763 = vpack.c.b16 %v3559, %v3761
  %v3764 = vpack.c.b16 %v3762, %v3762
  %v3767 = vunpack.c.l.b16 %v3320
  %v3768 = vunpack.c.l.b16 %v3321
  %v3769 = vpack.c.b16 %v3559, %v3767
  %v3770 = vpack.c.b16 %v3768, %v3768
  %v3771 = vrot.slane %v3769, 1
  %v3772 = vrot.slane %v3752, 1
  %v3773 = vsel %vm288, %v3771, %v3772
  %v3774 = vrot.slane %v3770, 1
  %v3775 = vsel %vm288, %v3772, %v3774
  %3776 = vrot.lane.b32.xlu0 %v3773, 16
  %v3777 = vpop.permute.xlu0 %3776
  %3778 = vrot.lane.b32.xlu0 %v3775, 16
  %v3779 = vpop.permute.xlu0 %3778
  %3780 = vrot.lane.b32.xlu0 %v3774, 16
  %v3781 = vpop.permute.xlu0 %3780
  %v3784 = vunpack.c.l.b16 %v3322
  %v3785 = vunpack.c.l.b16 %v3323
  %v3786 = vpack.c.b16 %v3559, %v3784
  %v3787 = vpack.c.b16 %v3785, %v3785
  %v3788 = vrot.slane %v3786, 2
  %v3789 = vrot.slane %v3752, 2
  %v3790 = vsel %vm306, %v3788, %v3789
  %v3791 = vrot.slane %v3787, 2
  %v3792 = vsel %vm306, %v3789, %v3791
  %3793 = vrot.lane.b32.xlu0 %v3790, 32
  %v3794 = vpop.permute.xlu0 %3793
  %3795 = vrot.lane.b32.xlu0 %v3792, 32
  %v3796 = vpop.permute.xlu0 %3795
  %3797 = vrot.lane.b32.xlu0 %v3791, 32
  %v3798 = vpop.permute.xlu0 %3797
  %v3800 = vunpack.c.l.b16 %v3324
  %v3801 = vpack.c.b16 %v3800, %v3751
  %v3802 = vrot.slane %v3801, 7
  %v3803 = vsel %vm322, %v3698, %v3802
  %3804 = vrot.lane.b32.xlu0 %v3803, 48
  %v3805 = vpop.permute.xlu0 %3804
  %3806 = vrot.lane.b32.xlu0 %v3802, 48
  %v3807 = vpop.permute.xlu0 %3806
  %v3810 = vunpack.c.l.b16 %v3325
  %v3811 = vunpack.c.l.b16 %v3326
  %v3812 = vpack.c.b16 %v3696, %v3810
  %v3813 = vpack.c.b16 %v3811, %v3811
  %3814 = vrot.lane.b32.xlu0 %v3812, 64
  %v3815 = vpop.permute.xlu0 %3814
  %3816 = vrot.lane.b32.xlu0 %v3801, 64
  %v3817 = vpop.permute.xlu0 %3816
  %3818 = vrot.lane.b32.xlu0 %v3813, 64
  %v3819 = vpop.permute.xlu0 %3818
  %v3822 = vunpack.c.l.b16 %v3327
  %v3823 = vunpack.c.l.b16 %v3328
  %v3824 = vpack.c.b16 %v3696, %v3822
  %v3825 = vpack.c.b16 %v3823, %v3823
  %v3826 = vrot.slane %v3824, 1
  %v3827 = vrot.slane %v3801, 1
  %v3828 = vsel %vm288, %v3826, %v3827
  %v3829 = vrot.slane %v3825, 1
  %v3830 = vsel %vm288, %v3827, %v3829
  %3831 = vrot.lane.b32.xlu0 %v3828, 80
  %v3832 = vpop.permute.xlu0 %3831
  %3833 = vrot.lane.b32.xlu0 %v3830, 80
  %v3834 = vpop.permute.xlu0 %3833
  %3835 = vrot.lane.b32.xlu0 %v3829, 80
  %v3836 = vpop.permute.xlu0 %3835
  %v3839 = vunpack.c.l.b16 %v3329
  %v3840 = vunpack.c.l.b16 %v3330
  %v3841 = vpack.c.b16 %v3696, %v3839
  %v3842 = vpack.c.b16 %v3840, %v3840
  %v3843 = vrot.slane %v3841, 2
  %v3844 = vrot.slane %v3801, 2
  %v3845 = vsel %vm306, %v3843, %v3844
  %v3846 = vrot.slane %v3842, 2
  %v3847 = vsel %vm306, %v3844, %v3846
  %3848 = vrot.lane.b32.xlu0 %v3845, 96
  %v3849 = vpop.permute.xlu0 %3848
  %3850 = vrot.lane.b32.xlu0 %v3847, 96
  %v3851 = vpop.permute.xlu0 %3850
  %3852 = vrot.lane.b32.xlu0 %v3846, 96
  %v3853 = vpop.permute.xlu0 %3852
  %v3855 = vunpack.c.l.b16 %v3331
  %v3856 = vpack.c.b16 %v3855, %v3800
  %v3857 = vrot.slane %v3856, 7
  %v3858 = vsel %vm322, %v3753, %v3857
  %3859 = vrot.lane.b32.xlu0 %v3858, 112
  %v3860 = vpop.permute.xlu0 %3859
  %3861 = vrot.lane.b32.xlu0 %v3857, 112
  %v3862 = vpop.permute.xlu0 %3861
  %v3865 = vsel %vm494, %v3659, %v3673
  %v3868 = vsel %vm494, %v3560, %v3675
  %v3871 = vsel %vm494, %v3660, %v3677
  %v3873 = vsel %vm504, %v3865, %v3690
  %v3875 = vsel %vm504, %v3868, %v3692
  %v3877 = vsel %vm504, %v3871, %v3694
  %v3878 = vsel %vm511, %v3873, %v3511
  %v3880 = vsel %vm511, %v3875, %v3701
  %v3882 = vsel %vm511, %v3877, %v3703
  %v3884 = vsel %vm518, %v3878, %v3711
  %v3886 = vsel %vm518, %v3880, %v3713
  %v3888 = vsel %vm518, %v3882, %v3715
  %v3890 = vsel %vm525, %v3884, %v3728
  %v3892 = vsel %vm525, %v3886, %v3730
  %v3894 = vsel %vm525, %v3888, %v3732
  %v3896 = vsel %vm532, %v3890, %v3745
  %v3898 = vsel %vm532, %v3892, %v3747
  %v3900 = vsel %vm532, %v3894, %v3749
  %v3901 = vsel %vm539, %v3896, %v3566
  %v3903 = vsel %vm539, %v3898, %v3756
  %v3905 = vsel %vm539, %v3900, %v3758
  %v3908 = vsel %vm494, %v3763, %v3777
  %v3911 = vsel %vm494, %v3752, %v3779
  %v3914 = vsel %vm494, %v3764, %v3781
  %v3916 = vsel %vm504, %v3908, %v3794
  %v3918 = vsel %vm504, %v3911, %v3796
  %v3920 = vsel %vm504, %v3914, %v3798
  %v3921 = vsel %vm511, %v3916, %v3703
  %v3923 = vsel %vm511, %v3918, %v3805
  %v3925 = vsel %vm511, %v3920, %v3807
  %v3927 = vsel %vm518, %v3921, %v3815
  %v3929 = vsel %vm518, %v3923, %v3817
  %v3931 = vsel %vm518, %v3925, %v3819
  %v3933 = vsel %vm525, %v3927, %v3832
  %v3935 = vsel %vm525, %v3929, %v3834
  %v3937 = vsel %vm525, %v3931, %v3836
  %v3939 = vsel %vm532, %v3933, %v3849
  %v3941 = vsel %vm532, %v3935, %v3851
  %v3943 = vsel %vm532, %v3937, %v3853
  %v3944 = vsel %vm539, %v3939, %v3758
  %v3946 = vsel %vm539, %v3941, %v3860
  %v3948 = vsel %vm539, %v3943, %v3862
  %v3951 = vunpack.c.l.b16 %v3332
  %v3952 = vunpack.c.l.b16 %v3333
  %v3953 = vpack.c.b16 %v3751, %v3951
  %v3954 = vpack.c.b16 %v3952, %v3952
  %v3957 = vunpack.c.l.b16 %v3334
  %v3958 = vunpack.c.l.b16 %v3335
  %v3959 = vpack.c.b16 %v3751, %v3957
  %v3960 = vpack.c.b16 %v3958, %v3958
  %v3961 = vrot.slane %v3959, 1
  %v3962 = vrot.slane %v3856, 1
  %v3963 = vsel %vm288, %v3961, %v3962
  %v3964 = vrot.slane %v3960, 1
  %v3965 = vsel %vm288, %v3962, %v3964
  %3966 = vrot.lane.b32.xlu0 %v3963, 16
  %v3967 = vpop.permute.xlu0 %3966
  %3968 = vrot.lane.b32.xlu0 %v3965, 16
  %v3969 = vpop.permute.xlu0 %3968
  %3970 = vrot.lane.b32.xlu0 %v3964, 16
  %v3971 = vpop.permute.xlu0 %3970
  %v3974 = vunpack.c.l.b16 %v3336
  %v3975 = vunpack.c.l.b16 %v3337
  %v3976 = vpack.c.b16 %v3751, %v3974
  %v3977 = vpack.c.b16 %v3975, %v3975
  %v3978 = vrot.slane %v3976, 2
  %v3979 = vrot.slane %v3856, 2
  %v3980 = vsel %vm306, %v3978, %v3979
  %v3981 = vrot.slane %v3977, 2
  %v3982 = vsel %vm306, %v3979, %v3981
  %3983 = vrot.lane.b32.xlu0 %v3980, 32
  %v3984 = vpop.permute.xlu0 %3983
  %3985 = vrot.lane.b32.xlu0 %v3982, 32
  %v3986 = vpop.permute.xlu0 %3985
  %3987 = vrot.lane.b32.xlu0 %v3981, 32
  %v3988 = vpop.permute.xlu0 %3987
  %v3990 = vunpack.c.l.b16 %v3338
  %v3991 = vpack.c.b16 %v3990, %v3855
  %v3992 = vrot.slane %v3991, 7
  %v3993 = vsel %vm322, %v3802, %v3992
  %3994 = vrot.lane.b32.xlu0 %v3993, 48
  %v3995 = vpop.permute.xlu0 %3994
  %3996 = vrot.lane.b32.xlu0 %v3992, 48
  %v3997 = vpop.permute.xlu0 %3996
  %v4000 = vunpack.c.l.b16 %v3339
  %v4001 = vunpack.c.l.b16 %v3340
  %v4002 = vpack.c.b16 %v3800, %v4000
  %v4003 = vpack.c.b16 %v4001, %v4001
  %4004 = vrot.lane.b32.xlu0 %v4002, 64
  %v4005 = vpop.permute.xlu0 %4004
  %4006 = vrot.lane.b32.xlu0 %v3991, 64
  %v4007 = vpop.permute.xlu0 %4006
  %4008 = vrot.lane.b32.xlu0 %v4003, 64
  %v4009 = vpop.permute.xlu0 %4008
  %v4012 = vunpack.c.l.b16 %v3341
  %v4013 = vunpack.c.l.b16 %v3342
  %v4014 = vpack.c.b16 %v3800, %v4012
  %v4015 = vpack.c.b16 %v4013, %v4013
  %v4016 = vrot.slane %v4014, 1
  %v4017 = vrot.slane %v3991, 1
  %v4018 = vsel %vm288, %v4016, %v4017
  %v4019 = vrot.slane %v4015, 1
  %v4020 = vsel %vm288, %v4017, %v4019
  %4021 = vrot.lane.b32.xlu0 %v4018, 80
  %v4022 = vpop.permute.xlu0 %4021
  %4023 = vrot.lane.b32.xlu0 %v4020, 80
  %v4024 = vpop.permute.xlu0 %4023
  %4025 = vrot.lane.b32.xlu0 %v4019, 80
  %v4026 = vpop.permute.xlu0 %4025
  %v4029 = vunpack.c.l.b16 %v3343
  %v4030 = vunpack.c.l.b16 %v3344
  %v4031 = vpack.c.b16 %v3800, %v4029
  %v4032 = vpack.c.b16 %v4030, %v4030
  %v4033 = vrot.slane %v4031, 2
  %v4034 = vrot.slane %v3991, 2
  %v4035 = vsel %vm306, %v4033, %v4034
  %v4036 = vrot.slane %v4032, 2
  %v4037 = vsel %vm306, %v4034, %v4036
  %4038 = vrot.lane.b32.xlu0 %v4035, 96
  %v4039 = vpop.permute.xlu0 %4038
  %4040 = vrot.lane.b32.xlu0 %v4037, 96
  %v4041 = vpop.permute.xlu0 %4040
  %4042 = vrot.lane.b32.xlu0 %v4036, 96
  %v4043 = vpop.permute.xlu0 %4042
  %v4048 = vunpack.c.l.b16 %v3269
  %v4049 = vunpack.c.l.b16 %v3270
  %v4050 = vunpack.c.l.b16 %v3271
  %v4051 = vunpack.c.l.b16 %v3272
  %v4052 = vpack.c.b16 %v4049, %v4048
  %v4053 = vpack.c.b16 %v4051, %v4050
  %v4054 = vrot.slane %v4052, 7
  %v4055 = vrot.slane %v4053, 7
  %v4056 = vsel %vm322, %v4054, %v4055
  %4057 = vrot.lane.b32.xlu0 %v4054, 112
  %v4058 = vpop.permute.xlu0 %4057
  %4059 = vrot.lane.b32.xlu0 %v4056, 112
  %v4060 = vpop.permute.xlu0 %4059
  %4061 = vrot.lane.b32.xlu0 %v4055, 112
  %v4062 = vpop.permute.xlu0 %4061
  %v4065 = vsel %vm494, %v3953, %v3967
  %v4068 = vsel %vm494, %v3856, %v3969
  %v4071 = vsel %vm494, %v3954, %v3971
  %v4073 = vsel %vm504, %v4065, %v3984
  %v4075 = vsel %vm504, %v4068, %v3986
  %v4077 = vsel %vm504, %v4071, %v3988
  %v4078 = vsel %vm511, %v4073, %v3807
  %v4080 = vsel %vm511, %v4075, %v3995
  %v4082 = vsel %vm511, %v4077, %v3997
  %v4084 = vsel %vm518, %v4078, %v4005
  %v4086 = vsel %vm518, %v4080, %v4007
  %v4088 = vsel %vm518, %v4082, %v4009
  %v4090 = vsel %vm525, %v4084, %v4022
  %v4092 = vsel %vm525, %v4086, %v4024
  %v4094 = vsel %vm525, %v4088, %v4026
  %v4096 = vsel %vm532, %v4090, %v4039
  %v4098 = vsel %vm532, %v4092, %v4041
  %v4100 = vsel %vm532, %v4094, %v4043
  %v4102 = vsel %vm539, %v4096, %v4058
  %v4104 = vsel %vm539, %v4098, %v4060
  %v4106 = vsel %vm539, %v4100, %v4062
  %s4107 = scalar_lea.vmem %s3, 752
  %v4108 = vld [vmem:[%s4107] sm:$0xf]
  %v4109 = vld [vmem:[%s4107 + $0x4] sm:$0xf]
  %v4110 = vld [vmem:[%s4107 + $0x8] sm:$0xf]
  %v4111 = vld [vmem:[%s4107 + $0xc] sm:$0xf]
  %v4112 = vld [vmem:[%s4107 + $0x10] sm:$0xf]
  %v4113 = vld [vmem:[%s4107 + $0x14] sm:$0xf]
  %v4114 = vld [vmem:[%s4107 + $0x18] sm:$0xf]
  %v4115 = vld [vmem:[%s4107 + $0x1c] sm:$0xf]
  %v4116 = vld [vmem:[%s4107 + $0x20] sm:$0xf]
  %v4117 = vld [vmem:[%s4107 + $0x24] sm:$0xf]
  %v4118 = vld [vmem:[%s4107 + $0x28] sm:$0xf]
  %v4119 = vld [vmem:[%s4107 + $0x2c] sm:$0xf]
  %v4120 = vld [vmem:[%s4107 + $0x30] sm:$0xf]
  %v4121 = vld [vmem:[%s4107 + $0x34] sm:$0xf]
  %v4122 = vld [vmem:[%s4107 + $0x38] sm:$0xf]
  %v4123 = vld [vmem:[%s4107 + $0x3c] sm:$0xf]
  %v4124 = vld [vmem:[%s4107 + $0x40] sm:$0xf]
  %v4125 = vld [vmem:[%s4107 + $0x44] sm:$0xf]
  %v4126 = vld [vmem:[%s4107 + $0x48] sm:$0xf]
  %v4127 = vld [vmem:[%s4107 + $0x4c] sm:$0xf]
  %v4128 = vld [vmem:[%s4107 + $0x50] sm:$0xf]
  %v4129 = vld [vmem:[%s4107 + $0x54] sm:$0xf]
  %v4130 = vld [vmem:[%s4107 + $0x58] sm:$0xf]
  %v4131 = vld [vmem:[%s4107 + $0x5c] sm:$0xf]
  %v4132 = vld [vmem:[%s4107 + $0x60] sm:$0xf]
  %v4133 = vld [vmem:[%s4107 + $0x64] sm:$0xf]
  %v4134 = vld [vmem:[%s4107 + $0x68] sm:$0xf]
  %v4135 = vld [vmem:[%s4107 + $0x6c] sm:$0xf]
  %v4136 = vld [vmem:[%s4107 + $0x70] sm:$0xf]
  %v4137 = vld [vmem:[%s4107 + $0x74] sm:$0xf]
  %v4138 = vld [vmem:[%s4107 + $0x78] sm:$0xf]
  %v4139 = vld [vmem:[%s4107 + $0x7c] sm:$0xf]
  %v4140 = vld [vmem:[%s4107 + $0x80] sm:$0xf]
  %v4141 = vld [vmem:[%s4107 + $0x84] sm:$0xf]
  %v4142 = vld [vmem:[%s4107 + $0x88] sm:$0xf]
  %v4143 = vld [vmem:[%s4107 + $0x8c] sm:$0xf]
  %v4144 = vld [vmem:[%s4107 + $0x90] sm:$0xf]
  %v4145 = vld [vmem:[%s4107 + $0x94] sm:$0xf]
  %v4146 = vld [vmem:[%s4107 + $0x98] sm:$0xf]
  %v4147 = vld [vmem:[%s4107 + $0x9c] sm:$0xf]
  %v4148 = vld [vmem:[%s4107 + $0xa0] sm:$0xf]
  %v4149 = vld [vmem:[%s4107 + $0xa4] sm:$0xf]
  %v4150 = vld [vmem:[%s4107 + $0xa8] sm:$0xf]
  %v4151 = vld [vmem:[%s4107 + $0xac] sm:$0xf]
  %v4152 = vld [vmem:[%s4107 + $0xb0] sm:$0xf]
  %v4153 = vld [vmem:[%s4107 + $0xb4] sm:$0xf]
  %v4154 = vld [vmem:[%s4107 + $0xb8] sm:$0xf]
  %v4155 = vld [vmem:[%s4107 + $0xbc] sm:$0xf]
  %v4156 = vld [vmem:[%s4107 + $0xc0] sm:$0xf]
  %v4157 = vld [vmem:[%s4107 + $0xc4] sm:$0xf]
  %v4158 = vld [vmem:[%s4107 + $0xc8] sm:$0xf]
  %v4159 = vld [vmem:[%s4107 + $0xcc] sm:$0xf]
  %v4160 = vld [vmem:[%s4107 + $0xd0] sm:$0xf]
  %v4161 = vld [vmem:[%s4107 + $0xd4] sm:$0xf]
  %v4162 = vld [vmem:[%s4107 + $0xd8] sm:$0xf]
  %v4163 = vld [vmem:[%s4107 + $0xdc] sm:$0xf]
  %v4164 = vld [vmem:[%s4107 + $0xe0] sm:$0xf]
  %v4165 = vld [vmem:[%s4107 + $0xe4] sm:$0xf]
  %v4166 = vld [vmem:[%s4107 + $0xe8] sm:$0xf]
  %v4167 = vld [vmem:[%s4107 + $0xec] sm:$0xf]
  %v4168 = vld [vmem:[%s4107 + $0xf0] sm:$0xf]
  %v4169 = vld [vmem:[%s4107 + $0xf4] sm:$0xf]
  %v4170 = vld [vmem:[%s4107 + $0xf8] sm:$0xf]
  %v4171 = vld [vmem:[%s4107 + $0xfc] sm:$0xf]
  %v4172 = vld [vmem:[%s4107 + $0x100] sm:$0xf]
  %v4173 = vld [vmem:[%s4107 + $0x104] sm:$0xf]
  %v4174 = vld [vmem:[%s4107 + $0x108] sm:$0xf]
  %v4175 = vld [vmem:[%s4107 + $0x10c] sm:$0xf]
  %v4176 = vld [vmem:[%s4107 + $0x110] sm:$0xf]
  %v4177 = vld [vmem:[%s4107 + $0x114] sm:$0xf]
  %v4178 = vld [vmem:[%s4107 + $0x118] sm:$0xf]
  %v4179 = vld [vmem:[%s4107 + $0x11c] sm:$0xf]
  %v4180 = vld [vmem:[%s4107 + $0x120] sm:$0xf]
  %v4181 = vld [vmem:[%s4107 + $0x124] sm:$0xf]
  %v4182 = vld [vmem:[%s4107 + $0x128] sm:$0xf]
  %v4183 = vld [vmem:[%s4107 + $0x12c] sm:$0xf]
  %v4184 = vld [vmem:[%s4107 + $0x130] sm:$0xf]
  %v4185 = vld [vmem:[%s4107 + $0x134] sm:$0xf]
  %v4186 = vld [vmem:[%s4107 + $0x138] sm:$0xf]
  %v4187 = vld [vmem:[%s4107 + $0x13c] sm:$0xf]
  %v4188 = vld [vmem:[%s4107 + $0x140] sm:$0xf]
  %v4189 = vld [vmem:[%s4107 + $0x144] sm:$0xf]
  %v4190 = vld [vmem:[%s4107 + $0x148] sm:$0xf]
  %v4191 = vld [vmem:[%s4107 + $0x14c] sm:$0xf]
  %v4192 = vld [vmem:[%s4107 + $0x150] sm:$0xf]
  %v4193 = vld [vmem:[%s4107 + $0x154] sm:$0xf]
  %v4194 = vld [vmem:[%s4107 + $0x158] sm:$0xf]
  %v4195 = vld [vmem:[%s4107 + $0x15c] sm:$0xf]
  %v4196 = vld [vmem:[%s4107 + $0x160] sm:$0xf]
  %v4197 = vld [vmem:[%s4107 + $0x164] sm:$0xf]
  %v4198 = vld [vmem:[%s4107 + $0x168] sm:$0xf]
  %v4199 = vld [vmem:[%s4107 + $0x16c] sm:$0xf]
  %v4200 = vld [vmem:[%s4107 + $0x170] sm:$0xf]
  %v4201 = vld [vmem:[%s4107 + $0x174] sm:$0xf]
  %s4202 = scalar_lea.vmem %s4, 2
  %v4203 = vld [vmem:[%s4202] sm:$0x1]
  %v4205 = vperm.slane %v4203, 0
  %v4222 = vrot.slane %v3607, 1
  %v4223 = vrot.slane %v3609, 1
  %v4224 = vsel %vm288, %v4222, %v4223
  %v4225 = vrot.slane %v3650, 1
  %v4226 = vrot.slane %v3652, 1
  %v4227 = vsel %vm288, %v4225, %v4226
  %v4228 = vrot.slane %v3901, 1
  %v4229 = vrot.slane %v3903, 1
  %v4230 = vsel %vm288, %v4228, %v4229
  %v4231 = vrot.slane %v3944, 1
  %v4232 = vrot.slane %v3946, 1
  %v4233 = vsel %vm288, %v4231, %v4232
  %v4234 = vrot.slane %v4102, 1
  %v4235 = vrot.slane %v4104, 1
  %v4236 = vsel %vm288, %v4234, %v4235
  %v4237 = vrot.slane %v4058, 1
  %v4238 = vrot.slane %v4060, 1
  %v4239 = vsel %vm288, %v4237, %v4238
  %v4240 = vrot.slane %v3611, 1
  %v4241 = vsel %vm288, %v4223, %v4240
  %v4242 = vrot.slane %v3654, 1
  %v4243 = vsel %vm288, %v4226, %v4242
  %v4244 = vrot.slane %v3905, 1
  %v4245 = vsel %vm288, %v4229, %v4244
  %v4246 = vrot.slane %v3948, 1
  %v4247 = vsel %vm288, %v4232, %v4246
  %v4248 = vrot.slane %v4106, 1
  %v4249 = vsel %vm288, %v4235, %v4248
  %v4250 = vrot.slane %v4062, 1
  %v4251 = vsel %vm288, %v4238, %v4250
  %v4356 = vunpack.c.l.b16 %v4108
  %v4357 = vunpack.c.l.b16 %v4109
  %v4358 = vunpack.c.l.b16 %v4110
  %v4359 = vunpack.c.l.b16 %v4111
  %v4360 = vunpack.c.l.b16 %v4112
  %v4361 = vunpack.c.l.b16 %v4113
  %v4362 = vunpack.c.l.b16 %v4114
  %v4363 = vunpack.c.l.b16 %v4115
  %v4364 = vunpack.c.l.b16 %v4116
  %v4365 = vunpack.c.l.b16 %v4117
  %v4366 = vunpack.c.l.b16 %v4118
  %v4367 = vunpack.c.l.b16 %v4119
  %v4368 = vunpack.c.l.b16 %v4120
  %v4369 = vunpack.c.l.b16 %v4121
  %v4370 = vunpack.c.l.b16 %v4122
  %v4371 = vunpack.c.l.b16 %v4123
  %v4372 = vunpack.c.l.b16 %v4124
  %v4373 = vunpack.c.l.b16 %v4125
  %v4374 = vunpack.c.l.b16 %v4126
  %v4375 = vunpack.c.l.b16 %v4127
  %v4376 = vunpack.c.l.b16 %v4128
  %v4377 = vunpack.c.l.b16 %v4129
  %v4378 = vunpack.c.l.b16 %v4130
  %v4379 = vunpack.c.l.b16 %v4131
  %v4380 = vunpack.c.l.b16 %v4132
  %v4381 = vunpack.c.l.b16 %v4133
  %v4382 = vunpack.c.l.b16 %v4134
  %v4383 = vunpack.c.l.b16 %v4135
  %v4384 = vunpack.c.l.b16 %v4136
  %v4385 = vunpack.c.l.b16 %v4137
  %v4386 = vunpack.c.l.b16 %v4138
  %v4387 = vunpack.c.l.b16 %v4139
  %v4388 = vunpack.c.l.b16 %v4140
  %v4389 = vunpack.c.l.b16 %v4141
  %v4390 = vunpack.c.l.b16 %v4142
  %v4391 = vunpack.c.l.b16 %v4143
  %v4392 = vunpack.c.l.b16 %v4144
  %v4393 = vunpack.c.l.b16 %v4145
  %v4394 = vunpack.c.l.b16 %v4146
  %v4395 = vunpack.c.l.b16 %v4147
  %v4396 = vunpack.c.l.b16 %v4148
  %v4397 = vunpack.c.l.b16 %v4149
  %v4398 = vunpack.c.l.b16 %v4150
  %v4399 = vunpack.c.l.b16 %v4151
  %v4400 = vunpack.c.l.b16 %v4152
  %v4401 = vunpack.c.l.b16 %v4153
  %v4402 = vunpack.c.l.b16 %v4154
  %v4403 = vunpack.c.l.b16 %v4155
  %v4404 = vunpack.c.l.b16 %v4156
  %v4405 = vunpack.c.l.b16 %v4157
  %v4406 = vunpack.c.l.b16 %v4158
  %v4407 = vunpack.c.l.b16 %v4159
  %v4408 = vunpack.c.l.b16 %v4160
  %v4409 = vunpack.c.l.b16 %v4161
  %v4410 = vunpack.c.l.b16 %v4162
  %v4411 = vunpack.c.l.b16 %v4163
  %v4412 = vunpack.c.l.b16 %v4164
  %v4413 = vunpack.c.l.b16 %v4165
  %v4414 = vunpack.c.l.b16 %v4166
  %v4415 = vunpack.c.l.b16 %v4167
  %v4416 = vunpack.c.l.b16 %v4168
  %v4417 = vunpack.c.l.b16 %v4169
  %v4418 = vunpack.c.l.b16 %v4170
  %v4419 = vunpack.c.l.b16 %v4171
  %v4420 = vunpack.c.l.b16 %v4172
  %v4421 = vunpack.c.l.b16 %v4173
  %v4422 = vunpack.c.l.b16 %v4174
  %v4423 = vunpack.c.l.b16 %v4175
  %v4424 = vunpack.c.l.b16 %v4176
  %v4425 = vunpack.c.l.b16 %v4177
  %v4426 = vunpack.c.l.b16 %v4178
  %v4427 = vunpack.c.l.b16 %v4179
  %v4428 = vunpack.c.l.b16 %v4180
  %v4429 = vunpack.c.l.b16 %v4181
  %v4430 = vunpack.c.l.b16 %v4182
  %v4431 = vunpack.c.l.b16 %v4183
  %v4432 = vunpack.c.l.b16 %v4184
  %v4433 = vunpack.c.l.b16 %v4185
  %v4434 = vunpack.c.l.b16 %v4186
  %v4435 = vunpack.c.l.b16 %v4187
  %v4436 = vunpack.c.l.b16 %v4188
  %v4437 = vunpack.c.l.b16 %v4189
  %v4438 = vunpack.c.l.b16 %v4190
  %v4439 = vunpack.c.l.b16 %v4191
  %v4440 = vunpack.c.l.b16 %v4192
  %v4441 = vunpack.c.l.b16 %v4193
  %v4442 = vunpack.c.l.b16 %v4194
  %v4443 = vunpack.c.l.b16 %v4195
  %v4444 = vunpack.c.l.b16 %v4196
  %v4445 = vunpack.c.l.b16 %v4197
  %v4446 = vunpack.c.l.b16 %v4198
  %v4447 = vunpack.c.l.b16 %v4199
  %v4448 = vunpack.c.l.b16 %v4200
  %v4449 = vunpack.c.l.b16 %v4201
  %v4450 = vpack.c.b16 %v4357, %v4356
  %v4451 = vpack.c.b16 %v4359, %v4358
  %v4452 = vpack.c.b16 %v4361, %v4360
  %v4453 = vpack.c.b16 %v4363, %v4362
  %v4454 = vpack.c.b16 %v4365, %v4364
  %v4455 = vpack.c.b16 %v4367, %v4366
  %v4456 = vpack.c.b16 %v4369, %v4368
  %v4457 = vpack.c.b16 %v4371, %v4370
  %v4458 = vpack.c.b16 %v4373, %v4372
  %v4459 = vpack.c.b16 %v4375, %v4374
  %v4460 = vpack.c.b16 %v4377, %v4376
  %v4461 = vpack.c.b16 %v4379, %v4378
  %v4462 = vpack.c.b16 %v4381, %v4380
  %v4463 = vpack.c.b16 %v4383, %v4382
  %v4464 = vpack.c.b16 %v4385, %v4384
  %v4465 = vpack.c.b16 %v4387, %v4386
  %v4466 = vpack.c.b16 %v4389, %v4388
  %v4467 = vpack.c.b16 %v4391, %v4390
  %v4468 = vpack.c.b16 %v4393, %v4392
  %v4469 = vpack.c.b16 %v4395, %v4394
  %v4470 = vpack.c.b16 %v4397, %v4396
  %v4471 = vpack.c.b16 %v4399, %v4398
  %v4472 = vpack.c.b16 %v4401, %v4400
  %v4473 = vpack.c.b16 %v4403, %v4402
  %v4474 = vpack.c.b16 %v4405, %v4404
  %v4475 = vpack.c.b16 %v4407, %v4406
  %v4476 = vpack.c.b16 %v4409, %v4408
  %v4477 = vpack.c.b16 %v4411, %v4410
  %v4478 = vpack.c.b16 %v4413, %v4412
  %v4479 = vpack.c.b16 %v4415, %v4414
  %v4480 = vpack.c.b16 %v4417, %v4416
  %v4481 = vpack.c.b16 %v4419, %v4418
  %v4482 = vpack.c.b16 %v4421, %v4420
  %v4483 = vpack.c.b16 %v4423, %v4422
  %v4484 = vpack.c.b16 %v4425, %v4424
  %v4485 = vpack.c.b16 %v4427, %v4426
  %v4486 = vpack.c.b16 %v4429, %v4428
  %v4487 = vpack.c.b16 %v4431, %v4430
  %v4488 = vpack.c.b16 %v4433, %v4432
  %v4489 = vpack.c.b16 %v4435, %v4434
  %v4490 = vpack.c.b16 %v4437, %v4436
  %v4491 = vpack.c.b16 %v4439, %v4438
  %v4492 = vpack.c.b16 %v4441, %v4440
  %v4493 = vpack.c.b16 %v4443, %v4442
  %v4494 = vpack.c.b16 %v4445, %v4444
  %v4495 = vpack.c.b16 %v4447, %v4446
  %v4496 = vpack.c.b16 %v4449, %v4448
  %v4545 = vsel %vm539, %v4239, 0
  %v4548 = vsel %vm539, %v4251, 0
  %4550 = vmatpush.bf16.msra.mxu0 %v4457
  %4551 = vmatpush.bf16.msra.mxu0 %v4456
  %4552 = vmatpush.bf16.msra.mxu0 %v4455
  %4553 = vmatpush.bf16.msra.mxu0 %v4454
  %4554 = vmatpush.bf16.msra.mxu0 %v4453
  %4555 = vmatpush.bf16.msra.mxu0 %v4452
  %4556 = vmatpush.bf16.msra.mxu0 %v4451
  %4557 = vmatpush.bf16.msra.mxu0 %v4450
  %4558 = vmatmul.bf16.gmra.mxu0 %v4224
  %v4559 = vpop.f32.mrf.mxu0
  %v4560 = vadd.f32 %v4205, %v4559
  %v4561 = vpop.f32.mrf.mxu0
  %v4562 = vadd.f32 %v4205, %v4561
  %4563 = vmatmul.bf16.gmra.mxu0 %v4241
  %v4564 = vpop.f32.mrf.mxu0
  %v4565 = vadd.f32 %v4205, %v4564
  %v4566 = vpop.f32.mrf.mxu0
  %v4567 = vadd.f32 %v4205, %v4566
  %4568 = vdwg.mxu0
  %4569 = vmatpush.bf16.msra.mxu0 %v4465
  %4570 = vmatpush.bf16.msra.mxu0 %v4464
  %4571 = vmatpush.bf16.msra.mxu0 %v4463
  %4572 = vmatpush.bf16.msra.mxu0 %v4462
  %4573 = vmatpush.bf16.msra.mxu0 %v4461
  %4574 = vmatpush.bf16.msra.mxu0 %v4460
  %4575 = vmatpush.bf16.msra.mxu0 %v4459
  %4576 = vmatpush.bf16.msra.mxu0 %v4458
  %4577 = vmatmul.bf16.gmra.mxu0 %v4227
  %v4578 = vpop.f32.mrf.mxu0
  %v4579 = vadd.f32 %v4560, %v4578
  %v4580 = vpop.f32.mrf.mxu0
  %v4581 = vadd.f32 %v4562, %v4580
  %4582 = vmatmul.bf16.gmra.mxu0 %v4243
  %v4583 = vpop.f32.mrf.mxu0
  %v4584 = vadd.f32 %v4565, %v4583
  %v4585 = vpop.f32.mrf.mxu0
  %v4586 = vadd.f32 %v4567, %v4585
  %4587 = vdwg.mxu0
  %4588 = vmatpush.bf16.msra.mxu0 %v4473
  %4589 = vmatpush.bf16.msra.mxu0 %v4472
  %4590 = vmatpush.bf16.msra.mxu0 %v4471
  %4591 = vmatpush.bf16.msra.mxu0 %v4470
  %4592 = vmatpush.bf16.msra.mxu0 %v4469
  %4593 = vmatpush.bf16.msra.mxu0 %v4468
  %4594 = vmatpush.bf16.msra.mxu0 %v4467
  %4595 = vmatpush.bf16.msra.mxu0 %v4466
  %4596 = vmatmul.bf16.gmra.mxu0 %v4230
  %v4597 = vpop.f32.mrf.mxu0
  %v4598 = vadd.f32 %v4579, %v4597
  %v4599 = vpop.f32.mrf.mxu0
  %v4600 = vadd.f32 %v4581, %v4599
  %4601 = vmatmul.bf16.gmra.mxu0 %v4245
  %v4602 = vpop.f32.mrf.mxu0
  %v4603 = vadd.f32 %v4584, %v4602
  %v4604 = vpop.f32.mrf.mxu0
  %v4605 = vadd.f32 %v4586, %v4604
  %4606 = vdwg.mxu0
  %4607 = vmatpush.bf16.msra.mxu0 %v4481
  %4608 = vmatpush.bf16.msra.mxu0 %v4480
  %4609 = vmatpush.bf16.msra.mxu0 %v4479
  %4610 = vmatpush.bf16.msra.mxu0 %v4478
  %4611 = vmatpush.bf16.msra.mxu0 %v4477
  %4612 = vmatpush.bf16.msra.mxu0 %v4476
  %4613 = vmatpush.bf16.msra.mxu0 %v4475
  %4614 = vmatpush.bf16.msra.mxu0 %v4474
  %4615 = vmatmul.bf16.gmra.mxu0 %v4233
  %v4616 = vpop.f32.mrf.mxu0
  %v4617 = vadd.f32 %v4598, %v4616
  %v4618 = vpop.f32.mrf.mxu0
  %v4619 = vadd.f32 %v4600, %v4618
  %4620 = vmatmul.bf16.gmra.mxu0 %v4247
  %v4621 = vpop.f32.mrf.mxu0
  %v4622 = vadd.f32 %v4603, %v4621
  %v4623 = vpop.f32.mrf.mxu0
  %v4624 = vadd.f32 %v4605, %v4623
  %4625 = vdwg.mxu0
  %4626 = vmatpush.bf16.msra.mxu0 %v4489
  %4627 = vmatpush.bf16.msra.mxu0 %v4488
  %4628 = vmatpush.bf16.msra.mxu0 %v4487
  %4629 = vmatpush.bf16.msra.mxu0 %v4486
  %4630 = vmatpush.bf16.msra.mxu0 %v4485
  %4631 = vmatpush.bf16.msra.mxu0 %v4484
  %4632 = vmatpush.bf16.msra.mxu0 %v4483
  %4633 = vmatpush.bf16.msra.mxu0 %v4482
  %4634 = vmatmul.bf16.gmra.mxu0 %v4236
  %v4635 = vpop.f32.mrf.mxu0
  %v4636 = vadd.f32 %v4617, %v4635
  %v4637 = vpop.f32.mrf.mxu0
  %v4638 = vadd.f32 %v4619, %v4637
  %4639 = vmatmul.bf16.gmra.mxu0 %v4249
  %v4640 = vpop.f32.mrf.mxu0
  %v4641 = vadd.f32 %v4622, %v4640
  %v4642 = vpop.f32.mrf.mxu0
  %v4643 = vadd.f32 %v4624, %v4642
  %4644 = vdwg.mxu0
  %4645 = vmatpush.bf16.msra.mxu0 0
  %4646 = vmatpush.bf16.msra.mxu0 %v4496
  %4647 = vmatpush.bf16.msra.mxu0 %v4495
  %4648 = vmatpush.bf16.msra.mxu0 %v4494
  %4649 = vmatpush.bf16.msra.mxu0 %v4493
  %4650 = vmatpush.bf16.msra.mxu0 %v4492
  %4651 = vmatpush.bf16.msra.mxu0 %v4491
  %4652 = vmatpush.bf16.msra.mxu0 %v4490
  %4653 = vmatmul.bf16.gmra.mxu0 %v4545
  %v4654 = vpop.f32.mrf.mxu0
  %v4655 = vadd.f32 %v4636, %v4654
  %v4656 = vpop.f32.mrf.mxu0
  %v4657 = vadd.f32 %v4638, %v4656
  %4658 = vmatmul.bf16.gmra.mxu0 %v4548
  %v4659 = vpop.f32.mrf.mxu0
  %v4660 = vadd.f32 %v4641, %v4659
  %v4661 = vpop.f32.mrf.mxu0
  %v4662 = vadd.f32 %v4643, %v4661
  %4663 = vdwg.mxu0
  %v4664 = vmax.f32 %v4655, 0.0
  %v4665 = vmax.f32 %v4657, 0.0
  %v4666 = vmax.f32 %v4660, 0.0
  %v4667 = vmax.f32 %v4662, 0.0
  %v4668 = vld [vmem:[#allocation3] sm:$0xff]
  %v4669 = vld [vmem:[#allocation3 + $0x8] sm:$0xff]
  %v4670 = vld [vmem:[#allocation3 + $0x10] sm:$0xff]
  %v4671 = vld [vmem:[#allocation3 + $0x18] sm:$0xff]
  %v4672 = vpack.c.bf16 %v4669, %v4668
  %v4673 = vpack.c.bf16 %v4671, %v4670
  %v4674 = vld [vmem:[%s5] sm:$0xf]
  %v4675 = vld [vmem:[%s5 + $0x4] sm:$0xf]
  %v4676 = vld [vmem:[%s5 + $0x8] sm:$0xf]
  %v4677 = vld [vmem:[%s5 + $0xc] sm:$0xf]
  %v4678 = vld [vmem:[%s5 + $0x10] sm:$0xf]
  %v4679 = vld [vmem:[%s5 + $0x14] sm:$0xf]
  %v4680 = vld [vmem:[%s5 + $0x18] sm:$0xf]
  %v4681 = vld [vmem:[%s5 + $0x1c] sm:$0xf]
  %v4682 = vld [vmem:[%s5 + $0x20] sm:$0xf]
  %v4683 = vld [vmem:[%s5 + $0x24] sm:$0xf]
  %v4684 = vld [vmem:[%s5 + $0x28] sm:$0xf]
  %v4685 = vld [vmem:[%s5 + $0x2c] sm:$0xf]
  %v4686 = vld [vmem:[%s5 + $0x30] sm:$0xf]
  %v4687 = vld [vmem:[%s5 + $0x34] sm:$0xf]
  %v4688 = vld [vmem:[%s5 + $0x38] sm:$0xf]
  %v4689 = vld [vmem:[%s5 + $0x3c] sm:$0xf]
  %v4690 = vld [vmem:[%s6] sm:$0x1]
  %v4692 = vperm.slane %v4690, 0
  %v4710 = vunpack.c.l.b16 %v4674
  %v4711 = vunpack.c.l.b16 %v4675
  %v4712 = vunpack.c.l.b16 %v4676
  %v4713 = vunpack.c.l.b16 %v4677
  %v4714 = vunpack.c.l.b16 %v4678
  %v4715 = vunpack.c.l.b16 %v4679
  %v4716 = vunpack.c.l.b16 %v4680
  %v4717 = vunpack.c.l.b16 %v4681
  %v4718 = vunpack.c.l.b16 %v4682
  %v4719 = vunpack.c.l.b16 %v4683
  %v4720 = vunpack.c.l.b16 %v4684
  %v4721 = vunpack.c.l.b16 %v4685
  %v4722 = vunpack.c.l.b16 %v4686
  %v4723 = vunpack.c.l.b16 %v4687
  %v4724 = vunpack.c.l.b16 %v4688
  %v4725 = vunpack.c.l.b16 %v4689
  %v4726 = vpack.c.b16 %v4711, %v4710
  %v4727 = vpack.c.b16 %v4713, %v4712
  %v4728 = vpack.c.b16 %v4715, %v4714
  %v4729 = vpack.c.b16 %v4717, %v4716
  %v4730 = vpack.c.b16 %v4719, %v4718
  %v4731 = vpack.c.b16 %v4721, %v4720
  %v4732 = vpack.c.b16 %v4723, %v4722
  %v4733 = vpack.c.b16 %v4725, %v4724
  %4742 = vmatpush.bf16.msra.mxu0 %v4733
  %4743 = vmatpush.bf16.msra.mxu0 %v4732
  %4744 = vmatpush.bf16.msra.mxu0 %v4731
  %4745 = vmatpush.bf16.msra.mxu0 %v4730
  %4746 = vmatpush.bf16.msra.mxu0 %v4729
  %4747 = vmatpush.bf16.msra.mxu0 %v4728
  %4748 = vmatpush.bf16.msra.mxu0 %v4727
  %4749 = vmatpush.bf16.msra.mxu0 %v4726
  %4750 = vmatmul.bf16.gmra.mxu0 %v4672
  %v4751 = vpop.f32.mrf.mxu0
  %v4752 = vadd.f32 %v4692, %v4751
  %v4753 = vpop.f32.mrf.mxu0
  %v4754 = vadd.f32 %v4692, %v4753
  %4755 = vmatmul.bf16.gmra.mxu0 %v4673
  %v4756 = vpop.f32.mrf.mxu0
  %v4757 = vadd.f32 %v4692, %v4756
  %v4758 = vpop.f32.mrf.mxu0
  %v4759 = vadd.f32 %v4692, %v4758
  %4760 = vdwg.mxu0
  %v4761 = vadd.f32 %v4664, %v4752
  %v4762 = vadd.f32 %v4665, %v4754
  %v4763 = vadd.f32 %v4666, %v4757
  %v4764 = vadd.f32 %v4667, %v4759
  %4765 = vst [vmem:[#allocation3] sm:$0xff] %v4761
  %4766 = vst [vmem:[#allocation3 + $0x8] sm:$0xff] %v4762
  %4767 = vst [vmem:[#allocation3 + $0x10] sm:$0xff] %v4763
  %4768 = vst [vmem:[#allocation3 + $0x18] sm:$0xff] %v4764
  %v4769 = vmax.f32 %v4761, 0.0
  %v4770 = vmax.f32 %v4762, 0.0
  %v4771 = vmax.f32 %v4763, 0.0
  %v4772 = vmax.f32 %v4764, 0.0
  %v4773 = vpack.c.bf16 %v4770, %v4769
  %v4774 = vpack.c.bf16 %v4772, %v4771
  %s4775 = scalar_lea.vmem %s1, 192
  %v4776 = vld [vmem:[%s4775] sm:$0xf]
  %v4777 = vld [vmem:[%s4775 + $0x4] sm:$0xf]
  %v4778 = vld [vmem:[%s4775 + $0x8] sm:$0xf]
  %v4779 = vld [vmem:[%s4775 + $0xc] sm:$0xf]
  %v4780 = vld [vmem:[%s4775 + $0x10] sm:$0xf]
  %v4781 = vld [vmem:[%s4775 + $0x14] sm:$0xf]
  %v4782 = vld [vmem:[%s4775 + $0x18] sm:$0xf]
  %v4783 = vld [vmem:[%s4775 + $0x1c] sm:$0xf]
  %v4784 = vld [vmem:[%s4775 + $0x20] sm:$0xf]
  %v4785 = vld [vmem:[%s4775 + $0x24] sm:$0xf]
  %v4786 = vld [vmem:[%s4775 + $0x28] sm:$0xf]
  %v4787 = vld [vmem:[%s4775 + $0x2c] sm:$0xf]
  %v4788 = vld [vmem:[%s4775 + $0x30] sm:$0xf]
  %v4789 = vld [vmem:[%s4775 + $0x34] sm:$0xf]
  %v4790 = vld [vmem:[%s4775 + $0x38] sm:$0xf]
  %v4791 = vld [vmem:[%s4775 + $0x3c] sm:$0xf]
  %s4792 = scalar_lea.vmem %s2, 3
  %v4793 = vld [vmem:[%s4792] sm:$0x1]
  %v4795 = vperm.slane %v4793, 0
  %v4813 = vunpack.c.l.b16 %v4776
  %v4814 = vunpack.c.l.b16 %v4777
  %v4815 = vunpack.c.l.b16 %v4778
  %v4816 = vunpack.c.l.b16 %v4779
  %v4817 = vunpack.c.l.b16 %v4780
  %v4818 = vunpack.c.l.b16 %v4781
  %v4819 = vunpack.c.l.b16 %v4782
  %v4820 = vunpack.c.l.b16 %v4783
  %v4821 = vunpack.c.l.b16 %v4784
  %v4822 = vunpack.c.l.b16 %v4785
  %v4823 = vunpack.c.l.b16 %v4786
  %v4824 = vunpack.c.l.b16 %v4787
  %v4825 = vunpack.c.l.b16 %v4788
  %v4826 = vunpack.c.l.b16 %v4789
  %v4827 = vunpack.c.l.b16 %v4790
  %v4828 = vunpack.c.l.b16 %v4791
  %v4829 = vpack.c.b16 %v4814, %v4813
  %v4830 = vpack.c.b16 %v4816, %v4815
  %v4831 = vpack.c.b16 %v4818, %v4817
  %v4832 = vpack.c.b16 %v4820, %v4819
  %v4833 = vpack.c.b16 %v4822, %v4821
  %v4834 = vpack.c.b16 %v4824, %v4823
  %v4835 = vpack.c.b16 %v4826, %v4825
  %v4836 = vpack.c.b16 %v4828, %v4827
  %4845 = vmatpush.bf16.msra.mxu0 %v4836
  %4846 = vmatpush.bf16.msra.mxu0 %v4835
  %4847 = vmatpush.bf16.msra.mxu0 %v4834
  %4848 = vmatpush.bf16.msra.mxu0 %v4833
  %4849 = vmatpush.bf16.msra.mxu0 %v4832
  %4850 = vmatpush.bf16.msra.mxu0 %v4831
  %4851 = vmatpush.bf16.msra.mxu0 %v4830
  %4852 = vmatpush.bf16.msra.mxu0 %v4829
  %4853 = vmatmul.bf16.gmra.mxu0 %v4773
  %v4854 = vpop.f32.mrf.mxu0
  %v4855 = vadd.f32 %v4795, %v4854
  %v4856 = vpop.f32.mrf.mxu0
  %v4857 = vadd.f32 %v4795, %v4856
  %4858 = vmatmul.bf16.gmra.mxu0 %v4774
  %v4859 = vpop.f32.mrf.mxu0
  %v4860 = vadd.f32 %v4795, %v4859
  %v4861 = vpop.f32.mrf.mxu0
  %v4862 = vadd.f32 %v4795, %v4861
  %4863 = vdwg.mxu0
  %v4864 = vpack.c.bf16 %v4855, %v4855
  %v4865 = vpack.c.bf16 %v4857, %v4857
  %v4866 = vpack.c.bf16 %v4860, %v4860
  %v4867 = vpack.c.bf16 %v4862, %v4862
  %4868 = vst.msk [vmem:[#allocation2 + $0x18] sm:$0xf] %vm33, %v4864
  %4869 = vst.msk [vmem:[#allocation2 + $0x1c] sm:$0xf] %vm33, %v4865
  %4870 = vst.msk [vmem:[#allocation2 + $0x20] sm:$0xf] %vm33, %v4866
  %4871 = vst.msk [vmem:[#allocation2 + $0x24] sm:$0xf] %vm33, %v4867
  %v4876 = vrot.slane %v4769, 6
  %v4877 = vrot.slane %v4770, 6
  %v4878 = vsel %vm159, %v4876, %v4877
  %v4879 = vrot.slane %v4771, 6
  %v4880 = vsel %vm159, %v4877, %v4879
  %v4881 = vrot.slane %v4772, 6
  %v4882 = vsel %vm159, %v4879, %v4881
  %v4887 = vsel %vm159, %v4769, %v4876
  %v4888 = vrot.slane %v4769, 2
  %v4889 = vrot.slane %v4770, 2
  %v4890 = vsel %vm172, %v4888, %v4889
  %v4891 = vrot.slane %v4771, 2
  %v4892 = vsel %vm172, %v4889, %v4891
  %v4893 = vrot.slane %v4772, 2
  %v4894 = vsel %vm172, %v4891, %v4893
  %v4899 = vsel %vm172, %v4893, %v4772
  %v4900 = vmax.f32 %v4887, %v4769
  %v4901 = vmax.f32 %v4878, %v4770
  %v4902 = vmax.f32 %v4880, %v4771
  %v4903 = vmax.f32 %v4882, %v4772
  %v4904 = vmax.f32 %v4900, %v4890
  %v4905 = vmax.f32 %v4901, %v4892
  %v4906 = vmax.f32 %v4902, %v4894
  %v4907 = vmax.f32 %v4903, %v4899
  %v4908 = vpack.c.bf16 %v4904, %v4904
  %v4909 = vpack.c.bf16 %v4905, %v4905
  %v4910 = vpack.c.bf16 %v4906, %v4906
  %v4911 = vpack.c.bf16 %v4907, %v4907
  %v4912 = vld [vmem:[#allocation2 + $0x4] sm:$0xe]
  %v4913 = vld [vmem:[#allocation2 + $0x8] sm:$0xf]
  %v4914 = vld [vmem:[#allocation2 + $0xc] sm:$0xf]
  %v4915 = vld [vmem:[#allocation2 + $0x10] sm:$0xf]
  %v4916 = vld [vmem:[#allocation2 + $0x14] sm:$0x1]
  %v4917 = vld [vmem:[#allocation2 + $0x4] sm:$0xc]
  %v4918 = vld [vmem:[#allocation2 + $0x14] sm:$0x3]
  %v4919 = vld [vmem:[#allocation2 + $0x4] sm:$0x8]
  %v4920 = vld [vmem:[#allocation2 + $0x14] sm:$0x7]
  %v4921 = vld [vmem:[#allocation2 + $0x14] sm:$0xf]
  %v4922 = vld [vmem:[#allocation2 + $0x8] sm:$0xe]
  %v4923 = vld [vmem:[#allocation2 + $0x18] sm:$0x1]
  %v4924 = vld [vmem:[#allocation2 + $0x8] sm:$0xc]
  %v4925 = vld [vmem:[#allocation2 + $0x18] sm:$0x3]
  %v4926 = vld [vmem:[#allocation2 + $0x8] sm:$0x8]
  %v4927 = vld [vmem:[#allocation2 + $0x18] sm:$0x7]
  %v4928 = vld [vmem:[#allocation2 + $0x18] sm:$0xf]
  %v4929 = vld [vmem:[#allocation2 + $0xc] sm:$0xe]
  %v4930 = vld [vmem:[#allocation2 + $0x1c] sm:$0x1]
  %v4931 = vld [vmem:[#allocation2 + $0xc] sm:$0xc]
  %v4932 = vld [vmem:[#allocation2 + $0x1c] sm:$0x3]
  %v4933 = vld [vmem:[#allocation2 + $0xc] sm:$0x8]
  %v4934 = vld [vmem:[#allocation2 + $0x1c] sm:$0x7]
  %v4935 = vld [vmem:[#allocation2 + $0x1c] sm:$0xf]
  %v4936 = vld [vmem:[#allocation2 + $0x10] sm:$0xe]
  %v4937 = vld [vmem:[#allocation2 + $0x20] sm:$0x1]
  %v4938 = vld [vmem:[#allocation2 + $0x10] sm:$0xc]
  %v4939 = vld [vmem:[#allocation2 + $0x20] sm:$0x3]
  %v4940 = vld [vmem:[#allocation2 + $0x10] sm:$0x8]
  %v4941 = vld [vmem:[#allocation2 + $0x20] sm:$0x7]
  %v4942 = vld [vmem:[#allocation2 + $0x20] sm:$0xf]
  %v4943 = vld [vmem:[#allocation2 + $0x14] sm:$0xe]
  %v4944 = vld [vmem:[#allocation2 + $0x24] sm:$0x1]
  %v4945 = vld [vmem:[#allocation2 + $0x14] sm:$0xc]
  %v4946 = vld [vmem:[#allocation2 + $0x24] sm:$0x3]
  %v4947 = vld [vmem:[#allocation2 + $0x14] sm:$0x8]
  %v4948 = vld [vmem:[#allocation2 + $0x24] sm:$0x7]
  %v4949 = vld [vmem:[#allocation2 + $0x24] sm:$0xf]
  %v4950 = vld [vmem:[#allocation2 + $0x18] sm:$0xe]
  %v4951 = vld [vmem:[#allocation2 + $0x28] sm:$0x1]
  %v4952 = vld [vmem:[#allocation2 + $0x18] sm:$0xc]
  %v4953 = vld [vmem:[#allocation2 + $0x28] sm:$0x3]
  %v4954 = vld [vmem:[#allocation2 + $0x18] sm:$0x8]
  %v4955 = vld [vmem:[#allocation2 + $0x28] sm:$0x7]
  %v4956 = vld [vmem:[#allocation2 + $0x28] sm:$0xf]
  %v4957 = vld [vmem:[#allocation2 + $0x1c] sm:$0xe]
  %v4958 = vld [vmem:[#allocation2 + $0x2c] sm:$0x1]
  %v4959 = vld [vmem:[#allocation2 + $0x1c] sm:$0xc]
  %v4960 = vld [vmem:[#allocation2 + $0x2c] sm:$0x3]
  %v4961 = vld [vmem:[#allocation2 + $0x1c] sm:$0x8]
  %v4962 = vld [vmem:[#allocation2 + $0x2c] sm:$0x7]
  %v4963 = vld [vmem:[#allocation2 + $0x2c] sm:$0xf]
  %v4964 = vld [vmem:[#allocation2 + $0x20] sm:$0xe]
  %v4965 = vld [vmem:[#allocation2 + $0x30] sm:$0x1]
  %v4966 = vld [vmem:[#allocation2 + $0x20] sm:$0xc]
  %v4967 = vld [vmem:[#allocation2 + $0x30] sm:$0x3]
  %v4968 = vld [vmem:[#allocation2 + $0x20] sm:$0x8]
  %v4969 = vld [vmem:[#allocation2 + $0x30] sm:$0x7]
  %v4970 = vld [vmem:[#allocation2 + $0x30] sm:$0xf]
  %v4971 = vld [vmem:[#allocation2 + $0x24] sm:$0xe]
  %v4972 = vld [vmem:[#allocation2 + $0x34] sm:$0x1]
  %v4973 = vld [vmem:[#allocation2 + $0x24] sm:$0xc]
  %v4974 = vld [vmem:[#allocation2 + $0x34] sm:$0x3]
  %v4975 = vld [vmem:[#allocation2 + $0x24] sm:$0x8]
  %v4976 = vld [vmem:[#allocation2 + $0x34] sm:$0x7]
  %v4977 = vld [vmem:[#allocation2 + $0x34] sm:$0xf]
  %v4978 = vld [vmem:[#allocation2 + $0x28] sm:$0xe]
  %v4979 = vld [vmem:[#allocation2 + $0x38] sm:$0x1]
  %v4980 = vld [vmem:[#allocation2 + $0x28] sm:$0xc]
  %v4981 = vld [vmem:[#allocation2 + $0x38] sm:$0x3]
  %v4982 = vld [vmem:[#allocation2 + $0x28] sm:$0x8]
  %v4983 = vld [vmem:[#allocation2 + $0x38] sm:$0x7]
  %v4989 = vunpack.c.l.b16 %v4912
  %v4990 = vunpack.c.l.b16 %v4913
  %v4991 = vunpack.c.l.b16 %v4914
  %v4992 = vunpack.c.l.b16 %v4915
  %v4993 = vunpack.c.l.b16 %v4916
  %v4994 = vpack.c.b16 %v4990, %v4989
  %v4995 = vpack.c.b16 %v4992, %v4991
  %v4996 = vpack.c.b16 %v4993, %v4993
  %v4999 = vunpack.c.l.b16 %v4917
  %v5000 = vunpack.c.l.b16 %v4918
  %v5001 = vpack.c.b16 %v4990, %v4999
  %v5002 = vpack.c.b16 %v5000, %v5000
  %v5003 = vrot.slane %v5001, 1
  %v5004 = vrot.slane %v4995, 1
  %v5005 = vsel %vm288, %v5003, %v5004
  %v5006 = vrot.slane %v5002, 1
  %v5007 = vsel %vm288, %v5004, %v5006
  %5008 = vrot.lane.b32.xlu0 %v5005, 16
  %v5009 = vpop.permute.xlu0 %5008
  %5010 = vrot.lane.b32.xlu0 %v5007, 16
  %v5011 = vpop.permute.xlu0 %5010
  %5012 = vrot.lane.b32.xlu0 %v5006, 16
  %v5013 = vpop.permute.xlu0 %5012
  %v5016 = vunpack.c.l.b16 %v4919
  %v5017 = vunpack.c.l.b16 %v4920
  %v5018 = vpack.c.b16 %v4990, %v5016
  %v5019 = vpack.c.b16 %v5017, %v5017
  %v5020 = vrot.slane %v5018, 2
  %v5021 = vrot.slane %v4995, 2
  %v5022 = vsel %vm306, %v5020, %v5021
  %v5023 = vrot.slane %v5019, 2
  %v5024 = vsel %vm306, %v5021, %v5023
  %5025 = vrot.lane.b32.xlu0 %v5022, 32
  %v5026 = vpop.permute.xlu0 %5025
  %5027 = vrot.lane.b32.xlu0 %v5024, 32
  %v5028 = vpop.permute.xlu0 %5027
  %5029 = vrot.lane.b32.xlu0 %v5023, 32
  %v5030 = vpop.permute.xlu0 %5029
  %v5032 = vunpack.c.l.b16 %v4921
  %v5033 = vpack.c.b16 %v4991, %v4990
  %v5034 = vpack.c.b16 %v5032, %v4992
  %v5035 = vrot.slane %v5033, 7
  %v5036 = vrot.slane %v5034, 7
  %v5037 = vsel %vm322, %v5035, %v5036
  %5038 = vrot.lane.b32.xlu0 %v5035, 48
  %v5039 = vpop.permute.xlu0 %5038
  %5040 = vrot.lane.b32.xlu0 %v5037, 48
  %v5041 = vpop.permute.xlu0 %5040
  %5042 = vrot.lane.b32.xlu0 %v5036, 48
  %v5043 = vpop.permute.xlu0 %5042
  %v5046 = vunpack.c.l.b16 %v4922
  %v5047 = vunpack.c.l.b16 %v4923
  %v5048 = vpack.c.b16 %v4991, %v5046
  %v5049 = vpack.c.b16 %v5047, %v5047
  %5050 = vrot.lane.b32.xlu0 %v5048, 64
  %v5051 = vpop.permute.xlu0 %5050
  %5052 = vrot.lane.b32.xlu0 %v5034, 64
  %v5053 = vpop.permute.xlu0 %5052
  %5054 = vrot.lane.b32.xlu0 %v5049, 64
  %v5055 = vpop.permute.xlu0 %5054
  %v5058 = vunpack.c.l.b16 %v4924
  %v5059 = vunpack.c.l.b16 %v4925
  %v5060 = vpack.c.b16 %v4991, %v5058
  %v5061 = vpack.c.b16 %v5059, %v5059
  %v5062 = vrot.slane %v5060, 1
  %v5063 = vrot.slane %v5034, 1
  %v5064 = vsel %vm288, %v5062, %v5063
  %v5065 = vrot.slane %v5061, 1
  %v5066 = vsel %vm288, %v5063, %v5065
  %5067 = vrot.lane.b32.xlu0 %v5064, 80
  %v5068 = vpop.permute.xlu0 %5067
  %5069 = vrot.lane.b32.xlu0 %v5066, 80
  %v5070 = vpop.permute.xlu0 %5069
  %5071 = vrot.lane.b32.xlu0 %v5065, 80
  %v5072 = vpop.permute.xlu0 %5071
  %v5075 = vunpack.c.l.b16 %v4926
  %v5076 = vunpack.c.l.b16 %v4927
  %v5077 = vpack.c.b16 %v4991, %v5075
  %v5078 = vpack.c.b16 %v5076, %v5076
  %v5079 = vrot.slane %v5077, 2
  %v5080 = vrot.slane %v5034, 2
  %v5081 = vsel %vm306, %v5079, %v5080
  %v5082 = vrot.slane %v5078, 2
  %v5083 = vsel %vm306, %v5080, %v5082
  %5084 = vrot.lane.b32.xlu0 %v5081, 96
  %v5085 = vpop.permute.xlu0 %5084
  %5086 = vrot.lane.b32.xlu0 %v5083, 96
  %v5087 = vpop.permute.xlu0 %5086
  %5088 = vrot.lane.b32.xlu0 %v5082, 96
  %v5089 = vpop.permute.xlu0 %5088
  %v5091 = vunpack.c.l.b16 %v4928
  %v5092 = vpack.c.b16 %v5091, %v5032
  %v5093 = vrot.slane %v4995, 7
  %v5094 = vrot.slane %v5092, 7
  %v5095 = vsel %vm322, %v5093, %v5094
  %5096 = vrot.lane.b32.xlu0 %v5093, 112
  %v5097 = vpop.permute.xlu0 %5096
  %5098 = vrot.lane.b32.xlu0 %v5095, 112
  %v5099 = vpop.permute.xlu0 %5098
  %5100 = vrot.lane.b32.xlu0 %v5094, 112
  %v5101 = vpop.permute.xlu0 %5100
  %v5104 = vunpack.c.l.b16 %v4929
  %v5105 = vunpack.c.l.b16 %v4930
  %v5106 = vpack.c.b16 %v4992, %v5104
  %v5107 = vpack.c.b16 %v5105, %v5105
  %v5110 = vunpack.c.l.b16 %v4931
  %v5111 = vunpack.c.l.b16 %v4932
  %v5112 = vpack.c.b16 %v4992, %v5110
  %v5113 = vpack.c.b16 %v5111, %v5111
  %v5114 = vrot.slane %v5112, 1
  %v5115 = vrot.slane %v5092, 1
  %v5116 = vsel %vm288, %v5114, %v5115
  %v5117 = vrot.slane %v5113, 1
  %v5118 = vsel %vm288, %v5115, %v5117
  %5119 = vrot.lane.b32.xlu0 %v5116, 16
  %v5120 = vpop.permute.xlu0 %5119
  %5121 = vrot.lane.b32.xlu0 %v5118, 16
  %v5122 = vpop.permute.xlu0 %5121
  %5123 = vrot.lane.b32.xlu0 %v5117, 16
  %v5124 = vpop.permute.xlu0 %5123
  %v5127 = vunpack.c.l.b16 %v4933
  %v5128 = vunpack.c.l.b16 %v4934
  %v5129 = vpack.c.b16 %v4992, %v5127
  %v5130 = vpack.c.b16 %v5128, %v5128
  %v5131 = vrot.slane %v5129, 2
  %v5132 = vrot.slane %v5092, 2
  %v5133 = vsel %vm306, %v5131, %v5132
  %v5134 = vrot.slane %v5130, 2
  %v5135 = vsel %vm306, %v5132, %v5134
  %5136 = vrot.lane.b32.xlu0 %v5133, 32
  %v5137 = vpop.permute.xlu0 %5136
  %5138 = vrot.lane.b32.xlu0 %v5135, 32
  %v5139 = vpop.permute.xlu0 %5138
  %5140 = vrot.lane.b32.xlu0 %v5134, 32
  %v5141 = vpop.permute.xlu0 %5140
  %v5143 = vunpack.c.l.b16 %v4935
  %v5144 = vpack.c.b16 %v5143, %v5091
  %v5145 = vrot.slane %v5144, 7
  %v5146 = vsel %vm322, %v5036, %v5145
  %5147 = vrot.lane.b32.xlu0 %v5146, 48
  %v5148 = vpop.permute.xlu0 %5147
  %5149 = vrot.lane.b32.xlu0 %v5145, 48
  %v5150 = vpop.permute.xlu0 %5149
  %v5153 = vunpack.c.l.b16 %v4936
  %v5154 = vunpack.c.l.b16 %v4937
  %v5155 = vpack.c.b16 %v5032, %v5153
  %v5156 = vpack.c.b16 %v5154, %v5154
  %5157 = vrot.lane.b32.xlu0 %v5155, 64
  %v5158 = vpop.permute.xlu0 %5157
  %5159 = vrot.lane.b32.xlu0 %v5144, 64
  %v5160 = vpop.permute.xlu0 %5159
  %5161 = vrot.lane.b32.xlu0 %v5156, 64
  %v5162 = vpop.permute.xlu0 %5161
  %v5165 = vunpack.c.l.b16 %v4938
  %v5166 = vunpack.c.l.b16 %v4939
  %v5167 = vpack.c.b16 %v5032, %v5165
  %v5168 = vpack.c.b16 %v5166, %v5166
  %v5169 = vrot.slane %v5167, 1
  %v5170 = vrot.slane %v5144, 1
  %v5171 = vsel %vm288, %v5169, %v5170
  %v5172 = vrot.slane %v5168, 1
  %v5173 = vsel %vm288, %v5170, %v5172
  %5174 = vrot.lane.b32.xlu0 %v5171, 80
  %v5175 = vpop.permute.xlu0 %5174
  %5176 = vrot.lane.b32.xlu0 %v5173, 80
  %v5177 = vpop.permute.xlu0 %5176
  %5178 = vrot.lane.b32.xlu0 %v5172, 80
  %v5179 = vpop.permute.xlu0 %5178
  %v5182 = vunpack.c.l.b16 %v4940
  %v5183 = vunpack.c.l.b16 %v4941
  %v5184 = vpack.c.b16 %v5032, %v5182
  %v5185 = vpack.c.b16 %v5183, %v5183
  %v5186 = vrot.slane %v5184, 2
  %v5187 = vrot.slane %v5144, 2
  %v5188 = vsel %vm306, %v5186, %v5187
  %v5189 = vrot.slane %v5185, 2
  %v5190 = vsel %vm306, %v5187, %v5189
  %5191 = vrot.lane.b32.xlu0 %v5188, 96
  %v5192 = vpop.permute.xlu0 %5191
  %5193 = vrot.lane.b32.xlu0 %v5190, 96
  %v5194 = vpop.permute.xlu0 %5193
  %5195 = vrot.lane.b32.xlu0 %v5189, 96
  %v5196 = vpop.permute.xlu0 %5195
  %v5198 = vunpack.c.l.b16 %v4942
  %v5199 = vpack.c.b16 %v5198, %v5143
  %v5200 = vrot.slane %v5199, 7
  %v5201 = vsel %vm322, %v5094, %v5200
  %5202 = vrot.lane.b32.xlu0 %v5201, 112
  %v5203 = vpop.permute.xlu0 %5202
  %5204 = vrot.lane.b32.xlu0 %v5200, 112
  %v5205 = vpop.permute.xlu0 %5204
  %v5208 = vsel %vm494, %v4994, %v5009
  %v5211 = vsel %vm494, %v4995, %v5011
  %v5214 = vsel %vm494, %v4996, %v5013
  %v5216 = vsel %vm504, %v5208, %v5026
  %v5218 = vsel %vm504, %v5211, %v5028
  %v5220 = vsel %vm504, %v5214, %v5030
  %v5222 = vsel %vm511, %v5216, %v5039
  %v5224 = vsel %vm511, %v5218, %v5041
  %v5226 = vsel %vm511, %v5220, %v5043
  %v5228 = vsel %vm518, %v5222, %v5051
  %v5230 = vsel %vm518, %v5224, %v5053
  %v5232 = vsel %vm518, %v5226, %v5055
  %v5234 = vsel %vm525, %v5228, %v5068
  %v5236 = vsel %vm525, %v5230, %v5070
  %v5238 = vsel %vm525, %v5232, %v5072
  %v5240 = vsel %vm532, %v5234, %v5085
  %v5242 = vsel %vm532, %v5236, %v5087
  %v5244 = vsel %vm532, %v5238, %v5089
  %v5246 = vsel %vm539, %v5240, %v5097
  %v5248 = vsel %vm539, %v5242, %v5099
  %v5250 = vsel %vm539, %v5244, %v5101
  %v5253 = vsel %vm494, %v5106, %v5120
  %v5256 = vsel %vm494, %v5092, %v5122
  %v5259 = vsel %vm494, %v5107, %v5124
  %v5261 = vsel %vm504, %v5253, %v5137
  %v5263 = vsel %vm504, %v5256, %v5139
  %v5265 = vsel %vm504, %v5259, %v5141
  %v5266 = vsel %vm511, %v5261, %v5043
  %v5268 = vsel %vm511, %v5263, %v5148
  %v5270 = vsel %vm511, %v5265, %v5150
  %v5272 = vsel %vm518, %v5266, %v5158
  %v5274 = vsel %vm518, %v5268, %v5160
  %v5276 = vsel %vm518, %v5270, %v5162
  %v5278 = vsel %vm525, %v5272, %v5175
  %v5280 = vsel %vm525, %v5274, %v5177
  %v5282 = vsel %vm525, %v5276, %v5179
  %v5284 = vsel %vm532, %v5278, %v5192
  %v5286 = vsel %vm532, %v5280, %v5194
  %v5288 = vsel %vm532, %v5282, %v5196
  %v5289 = vsel %vm539, %v5284, %v5101
  %v5291 = vsel %vm539, %v5286, %v5203
  %v5293 = vsel %vm539, %v5288, %v5205
  %v5296 = vunpack.c.l.b16 %v4943
  %v5297 = vunpack.c.l.b16 %v4944
  %v5298 = vpack.c.b16 %v5091, %v5296
  %v5299 = vpack.c.b16 %v5297, %v5297
  %v5302 = vunpack.c.l.b16 %v4945
  %v5303 = vunpack.c.l.b16 %v4946
  %v5304 = vpack.c.b16 %v5091, %v5302
  %v5305 = vpack.c.b16 %v5303, %v5303
  %v5306 = vrot.slane %v5304, 1
  %v5307 = vrot.slane %v5199, 1
  %v5308 = vsel %vm288, %v5306, %v5307
  %v5309 = vrot.slane %v5305, 1
  %v5310 = vsel %vm288, %v5307, %v5309
  %5311 = vrot.lane.b32.xlu0 %v5308, 16
  %v5312 = vpop.permute.xlu0 %5311
  %5313 = vrot.lane.b32.xlu0 %v5310, 16
  %v5314 = vpop.permute.xlu0 %5313
  %5315 = vrot.lane.b32.xlu0 %v5309, 16
  %v5316 = vpop.permute.xlu0 %5315
  %v5319 = vunpack.c.l.b16 %v4947
  %v5320 = vunpack.c.l.b16 %v4948
  %v5321 = vpack.c.b16 %v5091, %v5319
  %v5322 = vpack.c.b16 %v5320, %v5320
  %v5323 = vrot.slane %v5321, 2
  %v5324 = vrot.slane %v5199, 2
  %v5325 = vsel %vm306, %v5323, %v5324
  %v5326 = vrot.slane %v5322, 2
  %v5327 = vsel %vm306, %v5324, %v5326
  %5328 = vrot.lane.b32.xlu0 %v5325, 32
  %v5329 = vpop.permute.xlu0 %5328
  %5330 = vrot.lane.b32.xlu0 %v5327, 32
  %v5331 = vpop.permute.xlu0 %5330
  %5332 = vrot.lane.b32.xlu0 %v5326, 32
  %v5333 = vpop.permute.xlu0 %5332
  %v5335 = vunpack.c.l.b16 %v4949
  %v5336 = vpack.c.b16 %v5335, %v5198
  %v5337 = vrot.slane %v5336, 7
  %v5338 = vsel %vm322, %v5145, %v5337
  %5339 = vrot.lane.b32.xlu0 %v5338, 48
  %v5340 = vpop.permute.xlu0 %5339
  %5341 = vrot.lane.b32.xlu0 %v5337, 48
  %v5342 = vpop.permute.xlu0 %5341
  %v5345 = vunpack.c.l.b16 %v4950
  %v5346 = vunpack.c.l.b16 %v4951
  %v5347 = vpack.c.b16 %v5143, %v5345
  %v5348 = vpack.c.b16 %v5346, %v5346
  %5349 = vrot.lane.b32.xlu0 %v5347, 64
  %v5350 = vpop.permute.xlu0 %5349
  %5351 = vrot.lane.b32.xlu0 %v5336, 64
  %v5352 = vpop.permute.xlu0 %5351
  %5353 = vrot.lane.b32.xlu0 %v5348, 64
  %v5354 = vpop.permute.xlu0 %5353
  %v5357 = vunpack.c.l.b16 %v4952
  %v5358 = vunpack.c.l.b16 %v4953
  %v5359 = vpack.c.b16 %v5143, %v5357
  %v5360 = vpack.c.b16 %v5358, %v5358
  %v5361 = vrot.slane %v5359, 1
  %v5362 = vrot.slane %v5336, 1
  %v5363 = vsel %vm288, %v5361, %v5362
  %v5364 = vrot.slane %v5360, 1
  %v5365 = vsel %vm288, %v5362, %v5364
  %5366 = vrot.lane.b32.xlu0 %v5363, 80
  %v5367 = vpop.permute.xlu0 %5366
  %5368 = vrot.lane.b32.xlu0 %v5365, 80
  %v5369 = vpop.permute.xlu0 %5368
  %5370 = vrot.lane.b32.xlu0 %v5364, 80
  %v5371 = vpop.permute.xlu0 %5370
  %v5374 = vunpack.c.l.b16 %v4954
  %v5375 = vunpack.c.l.b16 %v4955
  %v5376 = vpack.c.b16 %v5143, %v5374
  %v5377 = vpack.c.b16 %v5375, %v5375
  %v5378 = vrot.slane %v5376, 2
  %v5379 = vrot.slane %v5336, 2
  %v5380 = vsel %vm306, %v5378, %v5379
  %v5381 = vrot.slane %v5377, 2
  %v5382 = vsel %vm306, %v5379, %v5381
  %5383 = vrot.lane.b32.xlu0 %v5380, 96
  %v5384 = vpop.permute.xlu0 %5383
  %5385 = vrot.lane.b32.xlu0 %v5382, 96
  %v5386 = vpop.permute.xlu0 %5385
  %5387 = vrot.lane.b32.xlu0 %v5381, 96
  %v5388 = vpop.permute.xlu0 %5387
  %v5390 = vunpack.c.l.b16 %v4956
  %v5391 = vpack.c.b16 %v5390, %v5335
  %v5392 = vrot.slane %v5391, 7
  %v5393 = vsel %vm322, %v5200, %v5392
  %5394 = vrot.lane.b32.xlu0 %v5393, 112
  %v5395 = vpop.permute.xlu0 %5394
  %5396 = vrot.lane.b32.xlu0 %v5392, 112
  %v5397 = vpop.permute.xlu0 %5396
  %v5400 = vunpack.c.l.b16 %v4957
  %v5401 = vunpack.c.l.b16 %v4958
  %v5402 = vpack.c.b16 %v5198, %v5400
  %v5403 = vpack.c.b16 %v5401, %v5401
  %v5406 = vunpack.c.l.b16 %v4959
  %v5407 = vunpack.c.l.b16 %v4960
  %v5408 = vpack.c.b16 %v5198, %v5406
  %v5409 = vpack.c.b16 %v5407, %v5407
  %v5410 = vrot.slane %v5408, 1
  %v5411 = vrot.slane %v5391, 1
  %v5412 = vsel %vm288, %v5410, %v5411
  %v5413 = vrot.slane %v5409, 1
  %v5414 = vsel %vm288, %v5411, %v5413
  %5415 = vrot.lane.b32.xlu0 %v5412, 16
  %v5416 = vpop.permute.xlu0 %5415
  %5417 = vrot.lane.b32.xlu0 %v5414, 16
  %v5418 = vpop.permute.xlu0 %5417
  %5419 = vrot.lane.b32.xlu0 %v5413, 16
  %v5420 = vpop.permute.xlu0 %5419
  %v5423 = vunpack.c.l.b16 %v4961
  %v5424 = vunpack.c.l.b16 %v4962
  %v5425 = vpack.c.b16 %v5198, %v5423
  %v5426 = vpack.c.b16 %v5424, %v5424
  %v5427 = vrot.slane %v5425, 2
  %v5428 = vrot.slane %v5391, 2
  %v5429 = vsel %vm306, %v5427, %v5428
  %v5430 = vrot.slane %v5426, 2
  %v5431 = vsel %vm306, %v5428, %v5430
  %5432 = vrot.lane.b32.xlu0 %v5429, 32
  %v5433 = vpop.permute.xlu0 %5432
  %5434 = vrot.lane.b32.xlu0 %v5431, 32
  %v5435 = vpop.permute.xlu0 %5434
  %5436 = vrot.lane.b32.xlu0 %v5430, 32
  %v5437 = vpop.permute.xlu0 %5436
  %v5439 = vunpack.c.l.b16 %v4963
  %v5440 = vpack.c.b16 %v5439, %v5390
  %v5441 = vrot.slane %v5440, 7
  %v5442 = vsel %vm322, %v5337, %v5441
  %5443 = vrot.lane.b32.xlu0 %v5442, 48
  %v5444 = vpop.permute.xlu0 %5443
  %5445 = vrot.lane.b32.xlu0 %v5441, 48
  %v5446 = vpop.permute.xlu0 %5445
  %v5449 = vunpack.c.l.b16 %v4964
  %v5450 = vunpack.c.l.b16 %v4965
  %v5451 = vpack.c.b16 %v5335, %v5449
  %v5452 = vpack.c.b16 %v5450, %v5450
  %5453 = vrot.lane.b32.xlu0 %v5451, 64
  %v5454 = vpop.permute.xlu0 %5453
  %5455 = vrot.lane.b32.xlu0 %v5440, 64
  %v5456 = vpop.permute.xlu0 %5455
  %5457 = vrot.lane.b32.xlu0 %v5452, 64
  %v5458 = vpop.permute.xlu0 %5457
  %v5461 = vunpack.c.l.b16 %v4966
  %v5462 = vunpack.c.l.b16 %v4967
  %v5463 = vpack.c.b16 %v5335, %v5461
  %v5464 = vpack.c.b16 %v5462, %v5462
  %v5465 = vrot.slane %v5463, 1
  %v5466 = vrot.slane %v5440, 1
  %v5467 = vsel %vm288, %v5465, %v5466
  %v5468 = vrot.slane %v5464, 1
  %v5469 = vsel %vm288, %v5466, %v5468
  %5470 = vrot.lane.b32.xlu0 %v5467, 80
  %v5471 = vpop.permute.xlu0 %5470
  %5472 = vrot.lane.b32.xlu0 %v5469, 80
  %v5473 = vpop.permute.xlu0 %5472
  %5474 = vrot.lane.b32.xlu0 %v5468, 80
  %v5475 = vpop.permute.xlu0 %5474
  %v5478 = vunpack.c.l.b16 %v4968
  %v5479 = vunpack.c.l.b16 %v4969
  %v5480 = vpack.c.b16 %v5335, %v5478
  %v5481 = vpack.c.b16 %v5479, %v5479
  %v5482 = vrot.slane %v5480, 2
  %v5483 = vrot.slane %v5440, 2
  %v5484 = vsel %vm306, %v5482, %v5483
  %v5485 = vrot.slane %v5481, 2
  %v5486 = vsel %vm306, %v5483, %v5485
  %5487 = vrot.lane.b32.xlu0 %v5484, 96
  %v5488 = vpop.permute.xlu0 %5487
  %5489 = vrot.lane.b32.xlu0 %v5486, 96
  %v5490 = vpop.permute.xlu0 %5489
  %5491 = vrot.lane.b32.xlu0 %v5485, 96
  %v5492 = vpop.permute.xlu0 %5491
  %v5494 = vunpack.c.l.b16 %v4970
  %v5495 = vpack.c.b16 %v5494, %v5439
  %v5496 = vrot.slane %v5495, 7
  %v5497 = vsel %vm322, %v5392, %v5496
  %5498 = vrot.lane.b32.xlu0 %v5497, 112
  %v5499 = vpop.permute.xlu0 %5498
  %5500 = vrot.lane.b32.xlu0 %v5496, 112
  %v5501 = vpop.permute.xlu0 %5500
  %v5504 = vsel %vm494, %v5298, %v5312
  %v5507 = vsel %vm494, %v5199, %v5314
  %v5510 = vsel %vm494, %v5299, %v5316
  %v5512 = vsel %vm504, %v5504, %v5329
  %v5514 = vsel %vm504, %v5507, %v5331
  %v5516 = vsel %vm504, %v5510, %v5333
  %v5517 = vsel %vm511, %v5512, %v5150
  %v5519 = vsel %vm511, %v5514, %v5340
  %v5521 = vsel %vm511, %v5516, %v5342
  %v5523 = vsel %vm518, %v5517, %v5350
  %v5525 = vsel %vm518, %v5519, %v5352
  %v5527 = vsel %vm518, %v5521, %v5354
  %v5529 = vsel %vm525, %v5523, %v5367
  %v5531 = vsel %vm525, %v5525, %v5369
  %v5533 = vsel %vm525, %v5527, %v5371
  %v5535 = vsel %vm532, %v5529, %v5384
  %v5537 = vsel %vm532, %v5531, %v5386
  %v5539 = vsel %vm532, %v5533, %v5388
  %v5540 = vsel %vm539, %v5535, %v5205
  %v5542 = vsel %vm539, %v5537, %v5395
  %v5544 = vsel %vm539, %v5539, %v5397
  %v5547 = vsel %vm494, %v5402, %v5416
  %v5550 = vsel %vm494, %v5391, %v5418
  %v5553 = vsel %vm494, %v5403, %v5420
  %v5555 = vsel %vm504, %v5547, %v5433
  %v5557 = vsel %vm504, %v5550, %v5435
  %v5559 = vsel %vm504, %v5553, %v5437
  %v5560 = vsel %vm511, %v5555, %v5342
  %v5562 = vsel %vm511, %v5557, %v5444
  %v5564 = vsel %vm511, %v5559, %v5446
  %v5566 = vsel %vm518, %v5560, %v5454
  %v5568 = vsel %vm518, %v5562, %v5456
  %v5570 = vsel %vm518, %v5564, %v5458
  %v5572 = vsel %vm525, %v5566, %v5471
  %v5574 = vsel %vm525, %v5568, %v5473
  %v5576 = vsel %vm525, %v5570, %v5475
  %v5578 = vsel %vm532, %v5572, %v5488
  %v5580 = vsel %vm532, %v5574, %v5490
  %v5582 = vsel %vm532, %v5576, %v5492
  %v5583 = vsel %vm539, %v5578, %v5397
  %v5585 = vsel %vm539, %v5580, %v5499
  %v5587 = vsel %vm539, %v5582, %v5501
  %v5590 = vunpack.c.l.b16 %v4971
  %v5591 = vunpack.c.l.b16 %v4972
  %v5592 = vpack.c.b16 %v5390, %v5590
  %v5593 = vpack.c.b16 %v5591, %v5591
  %v5596 = vunpack.c.l.b16 %v4973
  %v5597 = vunpack.c.l.b16 %v4974
  %v5598 = vpack.c.b16 %v5390, %v5596
  %v5599 = vpack.c.b16 %v5597, %v5597
  %v5600 = vrot.slane %v5598, 1
  %v5601 = vrot.slane %v5495, 1
  %v5602 = vsel %vm288, %v5600, %v5601
  %v5603 = vrot.slane %v5599, 1
  %v5604 = vsel %vm288, %v5601, %v5603
  %5605 = vrot.lane.b32.xlu0 %v5602, 16
  %v5606 = vpop.permute.xlu0 %5605
  %5607 = vrot.lane.b32.xlu0 %v5604, 16
  %v5608 = vpop.permute.xlu0 %5607
  %5609 = vrot.lane.b32.xlu0 %v5603, 16
  %v5610 = vpop.permute.xlu0 %5609
  %v5613 = vunpack.c.l.b16 %v4975
  %v5614 = vunpack.c.l.b16 %v4976
  %v5615 = vpack.c.b16 %v5390, %v5613
  %v5616 = vpack.c.b16 %v5614, %v5614
  %v5617 = vrot.slane %v5615, 2
  %v5618 = vrot.slane %v5495, 2
  %v5619 = vsel %vm306, %v5617, %v5618
  %v5620 = vrot.slane %v5616, 2
  %v5621 = vsel %vm306, %v5618, %v5620
  %5622 = vrot.lane.b32.xlu0 %v5619, 32
  %v5623 = vpop.permute.xlu0 %5622
  %5624 = vrot.lane.b32.xlu0 %v5621, 32
  %v5625 = vpop.permute.xlu0 %5624
  %5626 = vrot.lane.b32.xlu0 %v5620, 32
  %v5627 = vpop.permute.xlu0 %5626
  %v5629 = vunpack.c.l.b16 %v4977
  %v5630 = vpack.c.b16 %v5629, %v5494
  %v5631 = vrot.slane %v5630, 7
  %v5632 = vsel %vm322, %v5441, %v5631
  %5633 = vrot.lane.b32.xlu0 %v5632, 48
  %v5634 = vpop.permute.xlu0 %5633
  %5635 = vrot.lane.b32.xlu0 %v5631, 48
  %v5636 = vpop.permute.xlu0 %5635
  %v5639 = vunpack.c.l.b16 %v4978
  %v5640 = vunpack.c.l.b16 %v4979
  %v5641 = vpack.c.b16 %v5439, %v5639
  %v5642 = vpack.c.b16 %v5640, %v5640
  %5643 = vrot.lane.b32.xlu0 %v5641, 64
  %v5644 = vpop.permute.xlu0 %5643
  %5645 = vrot.lane.b32.xlu0 %v5630, 64
  %v5646 = vpop.permute.xlu0 %5645
  %5647 = vrot.lane.b32.xlu0 %v5642, 64
  %v5648 = vpop.permute.xlu0 %5647
  %v5651 = vunpack.c.l.b16 %v4980
  %v5652 = vunpack.c.l.b16 %v4981
  %v5653 = vpack.c.b16 %v5439, %v5651
  %v5654 = vpack.c.b16 %v5652, %v5652
  %v5655 = vrot.slane %v5653, 1
  %v5656 = vrot.slane %v5630, 1
  %v5657 = vsel %vm288, %v5655, %v5656
  %v5658 = vrot.slane %v5654, 1
  %v5659 = vsel %vm288, %v5656, %v5658
  %5660 = vrot.lane.b32.xlu0 %v5657, 80
  %v5661 = vpop.permute.xlu0 %5660
  %5662 = vrot.lane.b32.xlu0 %v5659, 80
  %v5663 = vpop.permute.xlu0 %5662
  %5664 = vrot.lane.b32.xlu0 %v5658, 80
  %v5665 = vpop.permute.xlu0 %5664
  %v5668 = vunpack.c.l.b16 %v4982
  %v5669 = vunpack.c.l.b16 %v4983
  %v5670 = vpack.c.b16 %v5439, %v5668
  %v5671 = vpack.c.b16 %v5669, %v5669
  %v5672 = vrot.slane %v5670, 2
  %v5673 = vrot.slane %v5630, 2
  %v5674 = vsel %vm306, %v5672, %v5673
  %v5675 = vrot.slane %v5671, 2
  %v5676 = vsel %vm306, %v5673, %v5675
  %5677 = vrot.lane.b32.xlu0 %v5674, 96
  %v5678 = vpop.permute.xlu0 %5677
  %5679 = vrot.lane.b32.xlu0 %v5676, 96
  %v5680 = vpop.permute.xlu0 %5679
  %5681 = vrot.lane.b32.xlu0 %v5675, 96
  %v5682 = vpop.permute.xlu0 %5681
  %v5687 = vunpack.c.l.b16 %v4908
  %v5688 = vunpack.c.l.b16 %v4909
  %v5689 = vunpack.c.l.b16 %v4910
  %v5690 = vunpack.c.l.b16 %v4911
  %v5691 = vpack.c.b16 %v5688, %v5687
  %v5692 = vpack.c.b16 %v5690, %v5689
  %v5693 = vrot.slane %v5691, 7
  %v5694 = vrot.slane %v5692, 7
  %v5695 = vsel %vm322, %v5693, %v5694
  %5696 = vrot.lane.b32.xlu0 %v5693, 112
  %v5697 = vpop.permute.xlu0 %5696
  %5698 = vrot.lane.b32.xlu0 %v5695, 112
  %v5699 = vpop.permute.xlu0 %5698
  %5700 = vrot.lane.b32.xlu0 %v5694, 112
  %v5701 = vpop.permute.xlu0 %5700
  %v5704 = vsel %vm494, %v5592, %v5606
  %v5707 = vsel %vm494, %v5495, %v5608
  %v5710 = vsel %vm494, %v5593, %v5610
  %v5712 = vsel %vm504, %v5704, %v5623
  %v5714 = vsel %vm504, %v5707, %v5625
  %v5716 = vsel %vm504, %v5710, %v5627
  %v5717 = vsel %vm511, %v5712, %v5446
  %v5719 = vsel %vm511, %v5714, %v5634
  %v5721 = vsel %vm511, %v5716, %v5636
  %v5723 = vsel %vm518, %v5717, %v5644
  %v5725 = vsel %vm518, %v5719, %v5646
  %v5727 = vsel %vm518, %v5721, %v5648
  %v5729 = vsel %vm525, %v5723, %v5661
  %v5731 = vsel %vm525, %v5725, %v5663
  %v5733 = vsel %vm525, %v5727, %v5665
  %v5735 = vsel %vm532, %v5729, %v5678
  %v5737 = vsel %vm532, %v5731, %v5680
  %v5739 = vsel %vm532, %v5733, %v5682
  %v5741 = vsel %vm539, %v5735, %v5697
  %v5743 = vsel %vm539, %v5737, %v5699
  %v5745 = vsel %vm539, %v5739, %v5701
  %s5746 = scalar_lea.vmem %s3, 1128
  %v5747 = vld [vmem:[%s5746] sm:$0xf]
  %v5748 = vld [vmem:[%s5746 + $0x4] sm:$0xf]
  %v5749 = vld [vmem:[%s5746 + $0x8] sm:$0xf]
  %v5750 = vld [vmem:[%s5746 + $0xc] sm:$0xf]
  %v5751 = vld [vmem:[%s5746 + $0x10] sm:$0xf]
  %v5752 = vld [vmem:[%s5746 + $0x14] sm:$0xf]
  %v5753 = vld [vmem:[%s5746 + $0x18] sm:$0xf]
  %v5754 = vld [vmem:[%s5746 + $0x1c] sm:$0xf]
  %v5755 = vld [vmem:[%s5746 + $0x20] sm:$0xf]
  %v5756 = vld [vmem:[%s5746 + $0x24] sm:$0xf]
  %v5757 = vld [vmem:[%s5746 + $0x28] sm:$0xf]
  %v5758 = vld [vmem:[%s5746 + $0x2c] sm:$0xf]
  %v5759 = vld [vmem:[%s5746 + $0x30] sm:$0xf]
  %v5760 = vld [vmem:[%s5746 + $0x34] sm:$0xf]
  %v5761 = vld [vmem:[%s5746 + $0x38] sm:$0xf]
  %v5762 = vld [vmem:[%s5746 + $0x3c] sm:$0xf]
  %v5763 = vld [vmem:[%s5746 + $0x40] sm:$0xf]
  %v5764 = vld [vmem:[%s5746 + $0x44] sm:$0xf]
  %v5765 = vld [vmem:[%s5746 + $0x48] sm:$0xf]
  %v5766 = vld [vmem:[%s5746 + $0x4c] sm:$0xf]
  %v5767 = vld [vmem:[%s5746 + $0x50] sm:$0xf]
  %v5768 = vld [vmem:[%s5746 + $0x54] sm:$0xf]
  %v5769 = vld [vmem:[%s5746 + $0x58] sm:$0xf]
  %v5770 = vld [vmem:[%s5746 + $0x5c] sm:$0xf]
  %v5771 = vld [vmem:[%s5746 + $0x60] sm:$0xf]
  %v5772 = vld [vmem:[%s5746 + $0x64] sm:$0xf]
  %v5773 = vld [vmem:[%s5746 + $0x68] sm:$0xf]
  %v5774 = vld [vmem:[%s5746 + $0x6c] sm:$0xf]
  %v5775 = vld [vmem:[%s5746 + $0x70] sm:$0xf]
  %v5776 = vld [vmem:[%s5746 + $0x74] sm:$0xf]
  %v5777 = vld [vmem:[%s5746 + $0x78] sm:$0xf]
  %v5778 = vld [vmem:[%s5746 + $0x7c] sm:$0xf]
  %v5779 = vld [vmem:[%s5746 + $0x80] sm:$0xf]
  %v5780 = vld [vmem:[%s5746 + $0x84] sm:$0xf]
  %v5781 = vld [vmem:[%s5746 + $0x88] sm:$0xf]
  %v5782 = vld [vmem:[%s5746 + $0x8c] sm:$0xf]
  %v5783 = vld [vmem:[%s5746 + $0x90] sm:$0xf]
  %v5784 = vld [vmem:[%s5746 + $0x94] sm:$0xf]
  %v5785 = vld [vmem:[%s5746 + $0x98] sm:$0xf]
  %v5786 = vld [vmem:[%s5746 + $0x9c] sm:$0xf]
  %v5787 = vld [vmem:[%s5746 + $0xa0] sm:$0xf]
  %v5788 = vld [vmem:[%s5746 + $0xa4] sm:$0xf]
  %v5789 = vld [vmem:[%s5746 + $0xa8] sm:$0xf]
  %v5790 = vld [vmem:[%s5746 + $0xac] sm:$0xf]
  %v5791 = vld [vmem:[%s5746 + $0xb0] sm:$0xf]
  %v5792 = vld [vmem:[%s5746 + $0xb4] sm:$0xf]
  %v5793 = vld [vmem:[%s5746 + $0xb8] sm:$0xf]
  %v5794 = vld [vmem:[%s5746 + $0xbc] sm:$0xf]
  %v5795 = vld [vmem:[%s5746 + $0xc0] sm:$0xf]
  %v5796 = vld [vmem:[%s5746 + $0xc4] sm:$0xf]
  %v5797 = vld [vmem:[%s5746 + $0xc8] sm:$0xf]
  %v5798 = vld [vmem:[%s5746 + $0xcc] sm:$0xf]
  %v5799 = vld [vmem:[%s5746 + $0xd0] sm:$0xf]
  %v5800 = vld [vmem:[%s5746 + $0xd4] sm:$0xf]
  %v5801 = vld [vmem:[%s5746 + $0xd8] sm:$0xf]
  %v5802 = vld [vmem:[%s5746 + $0xdc] sm:$0xf]
  %v5803 = vld [vmem:[%s5746 + $0xe0] sm:$0xf]
  %v5804 = vld [vmem:[%s5746 + $0xe4] sm:$0xf]
  %v5805 = vld [vmem:[%s5746 + $0xe8] sm:$0xf]
  %v5806 = vld [vmem:[%s5746 + $0xec] sm:$0xf]
  %v5807 = vld [vmem:[%s5746 + $0xf0] sm:$0xf]
  %v5808 = vld [vmem:[%s5746 + $0xf4] sm:$0xf]
  %v5809 = vld [vmem:[%s5746 + $0xf8] sm:$0xf]
  %v5810 = vld [vmem:[%s5746 + $0xfc] sm:$0xf]
  %v5811 = vld [vmem:[%s5746 + $0x100] sm:$0xf]
  %v5812 = vld [vmem:[%s5746 + $0x104] sm:$0xf]
  %v5813 = vld [vmem:[%s5746 + $0x108] sm:$0xf]
  %v5814 = vld [vmem:[%s5746 + $0x10c] sm:$0xf]
  %v5815 = vld [vmem:[%s5746 + $0x110] sm:$0xf]
  %v5816 = vld [vmem:[%s5746 + $0x114] sm:$0xf]
  %v5817 = vld [vmem:[%s5746 + $0x118] sm:$0xf]
  %v5818 = vld [vmem:[%s5746 + $0x11c] sm:$0xf]
  %v5819 = vld [vmem:[%s5746 + $0x120] sm:$0xf]
  %v5820 = vld [vmem:[%s5746 + $0x124] sm:$0xf]
  %v5821 = vld [vmem:[%s5746 + $0x128] sm:$0xf]
  %v5822 = vld [vmem:[%s5746 + $0x12c] sm:$0xf]
  %v5823 = vld [vmem:[%s5746 + $0x130] sm:$0xf]
  %v5824 = vld [vmem:[%s5746 + $0x134] sm:$0xf]
  %v5825 = vld [vmem:[%s5746 + $0x138] sm:$0xf]
  %v5826 = vld [vmem:[%s5746 + $0x13c] sm:$0xf]
  %v5827 = vld [vmem:[%s5746 + $0x140] sm:$0xf]
  %v5828 = vld [vmem:[%s5746 + $0x144] sm:$0xf]
  %v5829 = vld [vmem:[%s5746 + $0x148] sm:$0xf]
  %v5830 = vld [vmem:[%s5746 + $0x14c] sm:$0xf]
  %v5831 = vld [vmem:[%s5746 + $0x150] sm:$0xf]
  %v5832 = vld [vmem:[%s5746 + $0x154] sm:$0xf]
  %v5833 = vld [vmem:[%s5746 + $0x158] sm:$0xf]
  %v5834 = vld [vmem:[%s5746 + $0x15c] sm:$0xf]
  %v5835 = vld [vmem:[%s5746 + $0x160] sm:$0xf]
  %v5836 = vld [vmem:[%s5746 + $0x164] sm:$0xf]
  %v5837 = vld [vmem:[%s5746 + $0x168] sm:$0xf]
  %v5838 = vld [vmem:[%s5746 + $0x16c] sm:$0xf]
  %v5839 = vld [vmem:[%s5746 + $0x170] sm:$0xf]
  %v5840 = vld [vmem:[%s5746 + $0x174] sm:$0xf]
  %s5841 = scalar_lea.vmem %s4, 3
  %v5842 = vld [vmem:[%s5841] sm:$0x1]
  %v5844 = vperm.slane %v5842, 0
  %v5861 = vrot.slane %v5246, 1
  %v5862 = vrot.slane %v5248, 1
  %v5863 = vsel %vm288, %v5861, %v5862
  %v5864 = vrot.slane %v5289, 1
  %v5865 = vrot.slane %v5291, 1
  %v5866 = vsel %vm288, %v5864, %v5865
  %v5867 = vrot.slane %v5540, 1
  %v5868 = vrot.slane %v5542, 1
  %v5869 = vsel %vm288, %v5867, %v5868
  %v5870 = vrot.slane %v5583, 1
  %v5871 = vrot.slane %v5585, 1
  %v5872 = vsel %vm288, %v5870, %v5871
  %v5873 = vrot.slane %v5741, 1
  %v5874 = vrot.slane %v5743, 1
  %v5875 = vsel %vm288, %v5873, %v5874
  %v5876 = vrot.slane %v5697, 1
  %v5877 = vrot.slane %v5699, 1
  %v5878 = vsel %vm288, %v5876, %v5877
  %v5879 = vrot.slane %v5250, 1
  %v5880 = vsel %vm288, %v5862, %v5879
  %v5881 = vrot.slane %v5293, 1
  %v5882 = vsel %vm288, %v5865, %v5881
  %v5883 = vrot.slane %v5544, 1
  %v5884 = vsel %vm288, %v5868, %v5883
  %v5885 = vrot.slane %v5587, 1
  %v5886 = vsel %vm288, %v5871, %v5885
  %v5887 = vrot.slane %v5745, 1
  %v5888 = vsel %vm288, %v5874, %v5887
  %v5889 = vrot.slane %v5701, 1
  %v5890 = vsel %vm288, %v5877, %v5889
  %v5995 = vunpack.c.l.b16 %v5747
  %v5996 = vunpack.c.l.b16 %v5748
  %v5997 = vunpack.c.l.b16 %v5749
  %v5998 = vunpack.c.l.b16 %v5750
  %v5999 = vunpack.c.l.b16 %v5751
  %v6000 = vunpack.c.l.b16 %v5752
  %v6001 = vunpack.c.l.b16 %v5753
  %v6002 = vunpack.c.l.b16 %v5754
  %v6003 = vunpack.c.l.b16 %v5755
  %v6004 = vunpack.c.l.b16 %v5756
  %v6005 = vunpack.c.l.b16 %v5757
  %v6006 = vunpack.c.l.b16 %v5758
  %v6007 = vunpack.c.l.b16 %v5759
  %v6008 = vunpack.c.l.b16 %v5760
  %v6009 = vunpack.c.l.b16 %v5761
  %v6010 = vunpack.c.l.b16 %v5762
  %v6011 = vunpack.c.l.b16 %v5763
  %v6012 = vunpack.c.l.b16 %v5764
  %v6013 = vunpack.c.l.b16 %v5765
  %v6014 = vunpack.c.l.b16 %v5766
  %v6015 = vunpack.c.l.b16 %v5767
  %v6016 = vunpack.c.l.b16 %v5768
  %v6017 = vunpack.c.l.b16 %v5769
  %v6018 = vunpack.c.l.b16 %v5770
  %v6019 = vunpack.c.l.b16 %v5771
  %v6020 = vunpack.c.l.b16 %v5772
  %v6021 = vunpack.c.l.b16 %v5773
  %v6022 = vunpack.c.l.b16 %v5774
  %v6023 = vunpack.c.l.b16 %v5775
  %v6024 = vunpack.c.l.b16 %v5776
  %v6025 = vunpack.c.l.b16 %v5777
  %v6026 = vunpack.c.l.b16 %v5778
  %v6027 = vunpack.c.l.b16 %v5779
  %v6028 = vunpack.c.l.b16 %v5780
  %v6029 = vunpack.c.l.b16 %v5781
  %v6030 = vunpack.c.l.b16 %v5782
  %v6031 = vunpack.c.l.b16 %v5783
  %v6032 = vunpack.c.l.b16 %v5784
  %v6033 = vunpack.c.l.b16 %v5785
  %v6034 = vunpack.c.l.b16 %v5786
  %v6035 = vunpack.c.l.b16 %v5787
  %v6036 = vunpack.c.l.b16 %v5788
  %v6037 = vunpack.c.l.b16 %v5789
  %v6038 = vunpack.c.l.b16 %v5790
  %v6039 = vunpack.c.l.b16 %v5791
  %v6040 = vunpack.c.l.b16 %v5792
  %v6041 = vunpack.c.l.b16 %v5793
  %v6042 = vunpack.c.l.b16 %v5794
  %v6043 = vunpack.c.l.b16 %v5795
  %v6044 = vunpack.c.l.b16 %v5796
  %v6045 = vunpack.c.l.b16 %v5797
  %v6046 = vunpack.c.l.b16 %v5798
  %v6047 = vunpack.c.l.b16 %v5799
  %v6048 = vunpack.c.l.b16 %v5800
  %v6049 = vunpack.c.l.b16 %v5801
  %v6050 = vunpack.c.l.b16 %v5802
  %v6051 = vunpack.c.l.b16 %v5803
  %v6052 = vunpack.c.l.b16 %v5804
  %v6053 = vunpack.c.l.b16 %v5805
  %v6054 = vunpack.c.l.b16 %v5806
  %v6055 = vunpack.c.l.b16 %v5807
  %v6056 = vunpack.c.l.b16 %v5808
  %v6057 = vunpack.c.l.b16 %v5809
  %v6058 = vunpack.c.l.b16 %v5810
  %v6059 = vunpack.c.l.b16 %v5811
  %v6060 = vunpack.c.l.b16 %v5812
  %v6061 = vunpack.c.l.b16 %v5813
  %v6062 = vunpack.c.l.b16 %v5814
  %v6063 = vunpack.c.l.b16 %v5815
  %v6064 = vunpack.c.l.b16 %v5816
  %v6065 = vunpack.c.l.b16 %v5817
  %v6066 = vunpack.c.l.b16 %v5818
  %v6067 = vunpack.c.l.b16 %v5819
  %v6068 = vunpack.c.l.b16 %v5820
  %v6069 = vunpack.c.l.b16 %v5821
  %v6070 = vunpack.c.l.b16 %v5822
  %v6071 = vunpack.c.l.b16 %v5823
  %v6072 = vunpack.c.l.b16 %v5824
  %v6073 = vunpack.c.l.b16 %v5825
  %v6074 = vunpack.c.l.b16 %v5826
  %v6075 = vunpack.c.l.b16 %v5827
  %v6076 = vunpack.c.l.b16 %v5828
  %v6077 = vunpack.c.l.b16 %v5829
  %v6078 = vunpack.c.l.b16 %v5830
  %v6079 = vunpack.c.l.b16 %v5831
  %v6080 = vunpack.c.l.b16 %v5832
  %v6081 = vunpack.c.l.b16 %v5833
  %v6082 = vunpack.c.l.b16 %v5834
  %v6083 = vunpack.c.l.b16 %v5835
  %v6084 = vunpack.c.l.b16 %v5836
  %v6085 = vunpack.c.l.b16 %v5837
  %v6086 = vunpack.c.l.b16 %v5838
  %v6087 = vunpack.c.l.b16 %v5839
  %v6088 = vunpack.c.l.b16 %v5840
  %v6089 = vpack.c.b16 %v5996, %v5995
  %v6090 = vpack.c.b16 %v5998, %v5997
  %v6091 = vpack.c.b16 %v6000, %v5999
  %v6092 = vpack.c.b16 %v6002, %v6001
  %v6093 = vpack.c.b16 %v6004, %v6003
  %v6094 = vpack.c.b16 %v6006, %v6005
  %v6095 = vpack.c.b16 %v6008, %v6007
  %v6096 = vpack.c.b16 %v6010, %v6009
  %v6097 = vpack.c.b16 %v6012, %v6011
  %v6098 = vpack.c.b16 %v6014, %v6013
  %v6099 = vpack.c.b16 %v6016, %v6015
  %v6100 = vpack.c.b16 %v6018, %v6017
  %v6101 = vpack.c.b16 %v6020, %v6019
  %v6102 = vpack.c.b16 %v6022, %v6021
  %v6103 = vpack.c.b16 %v6024, %v6023
  %v6104 = vpack.c.b16 %v6026, %v6025
  %v6105 = vpack.c.b16 %v6028, %v6027
  %v6106 = vpack.c.b16 %v6030, %v6029
  %v6107 = vpack.c.b16 %v6032, %v6031
  %v6108 = vpack.c.b16 %v6034, %v6033
  %v6109 = vpack.c.b16 %v6036, %v6035
  %v6110 = vpack.c.b16 %v6038, %v6037
  %v6111 = vpack.c.b16 %v6040, %v6039
  %v6112 = vpack.c.b16 %v6042, %v6041
  %v6113 = vpack.c.b16 %v6044, %v6043
  %v6114 = vpack.c.b16 %v6046, %v6045
  %v6115 = vpack.c.b16 %v6048, %v6047
  %v6116 = vpack.c.b16 %v6050, %v6049
  %v6117 = vpack.c.b16 %v6052, %v6051
  %v6118 = vpack.c.b16 %v6054, %v6053
  %v6119 = vpack.c.b16 %v6056, %v6055
  %v6120 = vpack.c.b16 %v6058, %v6057
  %v6121 = vpack.c.b16 %v6060, %v6059
  %v6122 = vpack.c.b16 %v6062, %v6061
  %v6123 = vpack.c.b16 %v6064, %v6063
  %v6124 = vpack.c.b16 %v6066, %v6065
  %v6125 = vpack.c.b16 %v6068, %v6067
  %v6126 = vpack.c.b16 %v6070, %v6069
  %v6127 = vpack.c.b16 %v6072, %v6071
  %v6128 = vpack.c.b16 %v6074, %v6073
  %v6129 = vpack.c.b16 %v6076, %v6075
  %v6130 = vpack.c.b16 %v6078, %v6077
  %v6131 = vpack.c.b16 %v6080, %v6079
  %v6132 = vpack.c.b16 %v6082, %v6081
  %v6133 = vpack.c.b16 %v6084, %v6083
  %v6134 = vpack.c.b16 %v6086, %v6085
  %v6135 = vpack.c.b16 %v6088, %v6087
  %v6184 = vsel %vm539, %v5878, 0
  %v6187 = vsel %vm539, %v5890, 0
  %6189 = vmatpush.bf16.msra.mxu0 %v6096
  %6190 = vmatpush.bf16.msra.mxu0 %v6095
  %6191 = vmatpush.bf16.msra.mxu0 %v6094
  %6192 = vmatpush.bf16.msra.mxu0 %v6093
  %6193 = vmatpush.bf16.msra.mxu0 %v6092
  %6194 = vmatpush.bf16.msra.mxu0 %v6091
  %6195 = vmatpush.bf16.msra.mxu0 %v6090
  %6196 = vmatpush.bf16.msra.mxu0 %v6089
  %6197 = vmatmul.bf16.gmra.mxu0 %v5863
  %v6198 = vpop.f32.mrf.mxu0
  %v6199 = vadd.f32 %v5844, %v6198
  %v6200 = vpop.f32.mrf.mxu0
  %v6201 = vadd.f32 %v5844, %v6200
  %6202 = vmatmul.bf16.gmra.mxu0 %v5880
  %v6203 = vpop.f32.mrf.mxu0
  %v6204 = vadd.f32 %v5844, %v6203
  %v6205 = vpop.f32.mrf.mxu0
  %v6206 = vadd.f32 %v5844, %v6205
  %6207 = vdwg.mxu0
  %6208 = vmatpush.bf16.msra.mxu0 %v6104
  %6209 = vmatpush.bf16.msra.mxu0 %v6103
  %6210 = vmatpush.bf16.msra.mxu0 %v6102
  %6211 = vmatpush.bf16.msra.mxu0 %v6101
  %6212 = vmatpush.bf16.msra.mxu0 %v6100
  %6213 = vmatpush.bf16.msra.mxu0 %v6099
  %6214 = vmatpush.bf16.msra.mxu0 %v6098
  %6215 = vmatpush.bf16.msra.mxu0 %v6097
  %6216 = vmatmul.bf16.gmra.mxu0 %v5866
  %v6217 = vpop.f32.mrf.mxu0
  %v6218 = vadd.f32 %v6199, %v6217
  %v6219 = vpop.f32.mrf.mxu0
  %v6220 = vadd.f32 %v6201, %v6219
  %6221 = vmatmul.bf16.gmra.mxu0 %v5882
  %v6222 = vpop.f32.mrf.mxu0
  %v6223 = vadd.f32 %v6204, %v6222
  %v6224 = vpop.f32.mrf.mxu0
  %v6225 = vadd.f32 %v6206, %v6224
  %6226 = vdwg.mxu0
  %6227 = vmatpush.bf16.msra.mxu0 %v6112
  %6228 = vmatpush.bf16.msra.mxu0 %v6111
  %6229 = vmatpush.bf16.msra.mxu0 %v6110
  %6230 = vmatpush.bf16.msra.mxu0 %v6109
  %6231 = vmatpush.bf16.msra.mxu0 %v6108
  %6232 = vmatpush.bf16.msra.mxu0 %v6107
  %6233 = vmatpush.bf16.msra.mxu0 %v6106
  %6234 = vmatpush.bf16.msra.mxu0 %v6105
  %6235 = vmatmul.bf16.gmra.mxu0 %v5869
  %v6236 = vpop.f32.mrf.mxu0
  %v6237 = vadd.f32 %v6218, %v6236
  %v6238 = vpop.f32.mrf.mxu0
  %v6239 = vadd.f32 %v6220, %v6238
  %6240 = vmatmul.bf16.gmra.mxu0 %v5884
  %v6241 = vpop.f32.mrf.mxu0
  %v6242 = vadd.f32 %v6223, %v6241
  %v6243 = vpop.f32.mrf.mxu0
  %v6244 = vadd.f32 %v6225, %v6243
  %6245 = vdwg.mxu0
  %6246 = vmatpush.bf16.msra.mxu0 %v6120
  %6247 = vmatpush.bf16.msra.mxu0 %v6119
  %6248 = vmatpush.bf16.msra.mxu0 %v6118
  %6249 = vmatpush.bf16.msra.mxu0 %v6117
  %6250 = vmatpush.bf16.msra.mxu0 %v6116
  %6251 = vmatpush.bf16.msra.mxu0 %v6115
  %6252 = vmatpush.bf16.msra.mxu0 %v6114
  %6253 = vmatpush.bf16.msra.mxu0 %v6113
  %6254 = vmatmul.bf16.gmra.mxu0 %v5872
  %v6255 = vpop.f32.mrf.mxu0
  %v6256 = vadd.f32 %v6237, %v6255
  %v6257 = vpop.f32.mrf.mxu0
  %v6258 = vadd.f32 %v6239, %v6257
  %6259 = vmatmul.bf16.gmra.mxu0 %v5886
  %v6260 = vpop.f32.mrf.mxu0
  %v6261 = vadd.f32 %v6242, %v6260
  %v6262 = vpop.f32.mrf.mxu0
  %v6263 = vadd.f32 %v6244, %v6262
  %6264 = vdwg.mxu0
  %6265 = vmatpush.bf16.msra.mxu0 %v6128
  %6266 = vmatpush.bf16.msra.mxu0 %v6127
  %6267 = vmatpush.bf16.msra.mxu0 %v6126
  %6268 = vmatpush.bf16.msra.mxu0 %v6125
  %6269 = vmatpush.bf16.msra.mxu0 %v6124
  %6270 = vmatpush.bf16.msra.mxu0 %v6123
  %6271 = vmatpush.bf16.msra.mxu0 %v6122
  %6272 = vmatpush.bf16.msra.mxu0 %v6121
  %6273 = vmatmul.bf16.gmra.mxu0 %v5875
  %v6274 = vpop.f32.mrf.mxu0
  %v6275 = vadd.f32 %v6256, %v6274
  %v6276 = vpop.f32.mrf.mxu0
  %v6277 = vadd.f32 %v6258, %v6276
  %6278 = vmatmul.bf16.gmra.mxu0 %v5888
  %v6279 = vpop.f32.mrf.mxu0
  %v6280 = vadd.f32 %v6261, %v6279
  %v6281 = vpop.f32.mrf.mxu0
  %v6282 = vadd.f32 %v6263, %v6281
  %6283 = vdwg.mxu0
  %6284 = vmatpush.bf16.msra.mxu0 0
  %6285 = vmatpush.bf16.msra.mxu0 %v6135
  %6286 = vmatpush.bf16.msra.mxu0 %v6134
  %6287 = vmatpush.bf16.msra.mxu0 %v6133
  %6288 = vmatpush.bf16.msra.mxu0 %v6132
  %6289 = vmatpush.bf16.msra.mxu0 %v6131
  %6290 = vmatpush.bf16.msra.mxu0 %v6130
  %6291 = vmatpush.bf16.msra.mxu0 %v6129
  %6292 = vmatmul.bf16.gmra.mxu0 %v6184
  %v6293 = vpop.f32.mrf.mxu0
  %v6294 = vadd.f32 %v6275, %v6293
  %v6295 = vpop.f32.mrf.mxu0
  %v6296 = vadd.f32 %v6277, %v6295
  %6297 = vmatmul.bf16.gmra.mxu0 %v6187
  %v6298 = vpop.f32.mrf.mxu0
  %v6299 = vadd.f32 %v6280, %v6298
  %v6300 = vpop.f32.mrf.mxu0
  %v6301 = vadd.f32 %v6282, %v6300
  %6302 = vdwg.mxu0
  %v6303 = vmax.f32 %v6294, 0.0
  %v6304 = vmax.f32 %v6296, 0.0
  %v6305 = vmax.f32 %v6299, 0.0
  %v6306 = vmax.f32 %v6301, 0.0
  %v6307 = vpack.c.bf16 %v6304, %v6303
  %v6308 = vpack.c.bf16 %v6306, %v6305
  %s6309 = scalar_lea.vmem %s1, 256
  %v6310 = vld [vmem:[%s6309] sm:$0xf]
  %v6311 = vld [vmem:[%s6309 + $0x4] sm:$0xf]
  %v6312 = vld [vmem:[%s6309 + $0x8] sm:$0xf]
  %v6313 = vld [vmem:[%s6309 + $0xc] sm:$0xf]
  %v6314 = vld [vmem:[%s6309 + $0x10] sm:$0xf]
  %v6315 = vld [vmem:[%s6309 + $0x14] sm:$0xf]
  %v6316 = vld [vmem:[%s6309 + $0x18] sm:$0xf]
  %v6317 = vld [vmem:[%s6309 + $0x1c] sm:$0xf]
  %v6318 = vld [vmem:[%s6309 + $0x20] sm:$0xf]
  %v6319 = vld [vmem:[%s6309 + $0x24] sm:$0xf]
  %v6320 = vld [vmem:[%s6309 + $0x28] sm:$0xf]
  %v6321 = vld [vmem:[%s6309 + $0x2c] sm:$0xf]
  %v6322 = vld [vmem:[%s6309 + $0x30] sm:$0xf]
  %v6323 = vld [vmem:[%s6309 + $0x34] sm:$0xf]
  %v6324 = vld [vmem:[%s6309 + $0x38] sm:$0xf]
  %v6325 = vld [vmem:[%s6309 + $0x3c] sm:$0xf]
  %s6326 = scalar_lea.vmem %s2, 4
  %v6327 = vld [vmem:[%s6326] sm:$0x1]
  %v6329 = vperm.slane %v6327, 0
  %v6347 = vunpack.c.l.b16 %v6310
  %v6348 = vunpack.c.l.b16 %v6311
  %v6349 = vunpack.c.l.b16 %v6312
  %v6350 = vunpack.c.l.b16 %v6313
  %v6351 = vunpack.c.l.b16 %v6314
  %v6352 = vunpack.c.l.b16 %v6315
  %v6353 = vunpack.c.l.b16 %v6316
  %v6354 = vunpack.c.l.b16 %v6317
  %v6355 = vunpack.c.l.b16 %v6318
  %v6356 = vunpack.c.l.b16 %v6319
  %v6357 = vunpack.c.l.b16 %v6320
  %v6358 = vunpack.c.l.b16 %v6321
  %v6359 = vunpack.c.l.b16 %v6322
  %v6360 = vunpack.c.l.b16 %v6323
  %v6361 = vunpack.c.l.b16 %v6324
  %v6362 = vunpack.c.l.b16 %v6325
  %v6363 = vpack.c.b16 %v6348, %v6347
  %v6364 = vpack.c.b16 %v6350, %v6349
  %v6365 = vpack.c.b16 %v6352, %v6351
  %v6366 = vpack.c.b16 %v6354, %v6353
  %v6367 = vpack.c.b16 %v6356, %v6355
  %v6368 = vpack.c.b16 %v6358, %v6357
  %v6369 = vpack.c.b16 %v6360, %v6359
  %v6370 = vpack.c.b16 %v6362, %v6361
  %6379 = vmatpush.bf16.msra.mxu0 %v6370
  %6380 = vmatpush.bf16.msra.mxu0 %v6369
  %6381 = vmatpush.bf16.msra.mxu0 %v6368
  %6382 = vmatpush.bf16.msra.mxu0 %v6367
  %6383 = vmatpush.bf16.msra.mxu0 %v6366
  %6384 = vmatpush.bf16.msra.mxu0 %v6365
  %6385 = vmatpush.bf16.msra.mxu0 %v6364
  %6386 = vmatpush.bf16.msra.mxu0 %v6363
  %6387 = vmatmul.bf16.gmra.mxu0 %v6307
  %v6388 = vpop.f32.mrf.mxu0
  %v6389 = vadd.f32 %v6329, %v6388
  %v6390 = vpop.f32.mrf.mxu0
  %v6391 = vadd.f32 %v6329, %v6390
  %6392 = vmatmul.bf16.gmra.mxu0 %v6308
  %v6393 = vpop.f32.mrf.mxu0
  %v6394 = vadd.f32 %v6329, %v6393
  %v6395 = vpop.f32.mrf.mxu0
  %v6396 = vadd.f32 %v6329, %v6395
  %6397 = vdwg.mxu0
  %v6398 = vpack.c.bf16 %v6389, %v6389
  %v6399 = vpack.c.bf16 %v6391, %v6391
  %v6400 = vpack.c.bf16 %v6394, %v6394
  %v6401 = vpack.c.bf16 %v6396, %v6396
  %6402 = vst.msk [vmem:[#allocation2 + $0x18] sm:$0xf] %vm33, %v6398
  %6403 = vst.msk [vmem:[#allocation2 + $0x1c] sm:$0xf] %vm33, %v6399
  %6404 = vst.msk [vmem:[#allocation2 + $0x20] sm:$0xf] %vm33, %v6400
  %6405 = vst.msk [vmem:[#allocation2 + $0x24] sm:$0xf] %vm33, %v6401
  %v6410 = vrot.slane %v6303, 6
  %v6411 = vrot.slane %v6304, 6
  %v6412 = vsel %vm159, %v6410, %v6411
  %v6413 = vrot.slane %v6305, 6
  %v6414 = vsel %vm159, %v6411, %v6413
  %v6415 = vrot.slane %v6306, 6
  %v6416 = vsel %vm159, %v6413, %v6415
  %v6421 = vsel %vm159, %v6303, %v6410
  %v6422 = vrot.slane %v6303, 2
  %v6423 = vrot.slane %v6304, 2
  %v6424 = vsel %vm172, %v6422, %v6423
  %v6425 = vrot.slane %v6305, 2
  %v6426 = vsel %vm172, %v6423, %v6425
  %v6427 = vrot.slane %v6306, 2
  %v6428 = vsel %vm172, %v6425, %v6427
  %v6433 = vsel %vm172, %v6427, %v6306
  %v6434 = vmax.f32 %v6421, %v6303
  %v6435 = vmax.f32 %v6412, %v6304
  %v6436 = vmax.f32 %v6414, %v6305
  %v6437 = vmax.f32 %v6416, %v6306
  %v6438 = vmax.f32 %v6434, %v6424
  %v6439 = vmax.f32 %v6435, %v6426
  %v6440 = vmax.f32 %v6436, %v6428
  %v6441 = vmax.f32 %v6437, %v6433
  %v6442 = vpack.c.bf16 %v6438, %v6438
  %v6443 = vpack.c.bf16 %v6439, %v6439
  %v6444 = vpack.c.bf16 %v6440, %v6440
  %v6445 = vpack.c.bf16 %v6441, %v6441
  %v6446 = vld [vmem:[#allocation2 + $0x4] sm:$0xe]
  %v6447 = vld [vmem:[#allocation2 + $0x8] sm:$0xf]
  %v6448 = vld [vmem:[#allocation2 + $0xc] sm:$0xf]
  %v6449 = vld [vmem:[#allocation2 + $0x10] sm:$0xf]
  %v6450 = vld [vmem:[#allocation2 + $0x14] sm:$0x1]
  %v6451 = vld [vmem:[#allocation2 + $0x4] sm:$0xc]
  %v6452 = vld [vmem:[#allocation2 + $0x14] sm:$0x3]
  %v6453 = vld [vmem:[#allocation2 + $0x4] sm:$0x8]
  %v6454 = vld [vmem:[#allocation2 + $0x14] sm:$0x7]
  %v6455 = vld [vmem:[#allocation2 + $0x14] sm:$0xf]
  %v6456 = vld [vmem:[#allocation2 + $0x8] sm:$0xe]
  %v6457 = vld [vmem:[#allocation2 + $0x18] sm:$0x1]
  %v6458 = vld [vmem:[#allocation2 + $0x8] sm:$0xc]
  %v6459 = vld [vmem:[#allocation2 + $0x18] sm:$0x3]
  %v6460 = vld [vmem:[#allocation2 + $0x8] sm:$0x8]
  %v6461 = vld [vmem:[#allocation2 + $0x18] sm:$0x7]
  %v6462 = vld [vmem:[#allocation2 + $0x18] sm:$0xf]
  %v6463 = vld [vmem:[#allocation2 + $0xc] sm:$0xe]
  %v6464 = vld [vmem:[#allocation2 + $0x1c] sm:$0x1]
  %v6465 = vld [vmem:[#allocation2 + $0xc] sm:$0xc]
  %v6466 = vld [vmem:[#allocation2 + $0x1c] sm:$0x3]
  %v6467 = vld [vmem:[#allocation2 + $0xc] sm:$0x8]
  %v6468 = vld [vmem:[#allocation2 + $0x1c] sm:$0x7]
  %v6469 = vld [vmem:[#allocation2 + $0x1c] sm:$0xf]
  %v6470 = vld [vmem:[#allocation2 + $0x10] sm:$0xe]
  %v6471 = vld [vmem:[#allocation2 + $0x20] sm:$0x1]
  %v6472 = vld [vmem:[#allocation2 + $0x10] sm:$0xc]
  %v6473 = vld [vmem:[#allocation2 + $0x20] sm:$0x3]
  %v6474 = vld [vmem:[#allocation2 + $0x10] sm:$0x8]
  %v6475 = vld [vmem:[#allocation2 + $0x20] sm:$0x7]
  %v6476 = vld [vmem:[#allocation2 + $0x20] sm:$0xf]
  %v6477 = vld [vmem:[#allocation2 + $0x14] sm:$0xe]
  %v6478 = vld [vmem:[#allocation2 + $0x24] sm:$0x1]
  %v6479 = vld [vmem:[#allocation2 + $0x14] sm:$0xc]
  %v6480 = vld [vmem:[#allocation2 + $0x24] sm:$0x3]
  %v6481 = vld [vmem:[#allocation2 + $0x14] sm:$0x8]
  %v6482 = vld [vmem:[#allocation2 + $0x24] sm:$0x7]
  %v6483 = vld [vmem:[#allocation2 + $0x24] sm:$0xf]
  %v6484 = vld [vmem:[#allocation2 + $0x18] sm:$0xe]
  %v6485 = vld [vmem:[#allocation2 + $0x28] sm:$0x1]
  %v6486 = vld [vmem:[#allocation2 + $0x18] sm:$0xc]
  %v6487 = vld [vmem:[#allocation2 + $0x28] sm:$0x3]
  %v6488 = vld [vmem:[#allocation2 + $0x18] sm:$0x8]
  %v6489 = vld [vmem:[#allocation2 + $0x28] sm:$0x7]
  %v6490 = vld [vmem:[#allocation2 + $0x28] sm:$0xf]
  %v6491 = vld [vmem:[#allocation2 + $0x1c] sm:$0xe]
  %v6492 = vld [vmem:[#allocation2 + $0x2c] sm:$0x1]
  %v6493 = vld [vmem:[#allocation2 + $0x1c] sm:$0xc]
  %v6494 = vld [vmem:[#allocation2 + $0x2c] sm:$0x3]
  %v6495 = vld [vmem:[#allocation2 + $0x1c] sm:$0x8]
  %v6496 = vld [vmem:[#allocation2 + $0x2c] sm:$0x7]
  %v6497 = vld [vmem:[#allocation2 + $0x2c] sm:$0xf]
  %v6498 = vld [vmem:[#allocation2 + $0x20] sm:$0xe]
  %v6499 = vld [vmem:[#allocation2 + $0x30] sm:$0x1]
  %v6500 = vld [vmem:[#allocation2 + $0x20] sm:$0xc]
  %v6501 = vld [vmem:[#allocation2 + $0x30] sm:$0x3]
  %v6502 = vld [vmem:[#allocation2 + $0x20] sm:$0x8]
  %v6503 = vld [vmem:[#allocation2 + $0x30] sm:$0x7]
  %v6504 = vld [vmem:[#allocation2 + $0x30] sm:$0xf]
  %v6505 = vld [vmem:[#allocation2 + $0x24] sm:$0xe]
  %v6506 = vld [vmem:[#allocation2 + $0x34] sm:$0x1]
  %v6507 = vld [vmem:[#allocation2 + $0x24] sm:$0xc]
  %v6508 = vld [vmem:[#allocation2 + $0x34] sm:$0x3]
  %v6509 = vld [vmem:[#allocation2 + $0x24] sm:$0x8]
  %v6510 = vld [vmem:[#allocation2 + $0x34] sm:$0x7]
  %v6511 = vld [vmem:[#allocation2 + $0x34] sm:$0xf]
  %v6512 = vld [vmem:[#allocation2 + $0x28] sm:$0xe]
  %v6513 = vld [vmem:[#allocation2 + $0x38] sm:$0x1]
  %v6514 = vld [vmem:[#allocation2 + $0x28] sm:$0xc]
  %v6515 = vld [vmem:[#allocation2 + $0x38] sm:$0x3]
  %v6516 = vld [vmem:[#allocation2 + $0x28] sm:$0x8]
  %v6517 = vld [vmem:[#allocation2 + $0x38] sm:$0x7]
  %v6523 = vunpack.c.l.b16 %v6446
  %v6524 = vunpack.c.l.b16 %v6447
  %v6525 = vunpack.c.l.b16 %v6448
  %v6526 = vunpack.c.l.b16 %v6449
  %v6527 = vunpack.c.l.b16 %v6450
  %v6528 = vpack.c.b16 %v6524, %v6523
  %v6529 = vpack.c.b16 %v6526, %v6525
  %v6530 = vpack.c.b16 %v6527, %v6527
  %v6533 = vunpack.c.l.b16 %v6451
  %v6534 = vunpack.c.l.b16 %v6452
  %v6535 = vpack.c.b16 %v6524, %v6533
  %v6536 = vpack.c.b16 %v6534, %v6534
  %v6537 = vrot.slane %v6535, 1
  %v6538 = vrot.slane %v6529, 1
  %v6539 = vsel %vm288, %v6537, %v6538
  %v6540 = vrot.slane %v6536, 1
  %v6541 = vsel %vm288, %v6538, %v6540
  %6542 = vrot.lane.b32.xlu0 %v6539, 16
  %v6543 = vpop.permute.xlu0 %6542
  %6544 = vrot.lane.b32.xlu0 %v6541, 16
  %v6545 = vpop.permute.xlu0 %6544
  %6546 = vrot.lane.b32.xlu0 %v6540, 16
  %v6547 = vpop.permute.xlu0 %6546
  %v6550 = vunpack.c.l.b16 %v6453
  %v6551 = vunpack.c.l.b16 %v6454
  %v6552 = vpack.c.b16 %v6524, %v6550
  %v6553 = vpack.c.b16 %v6551, %v6551
  %v6554 = vrot.slane %v6552, 2
  %v6555 = vrot.slane %v6529, 2
  %v6556 = vsel %vm306, %v6554, %v6555
  %v6557 = vrot.slane %v6553, 2
  %v6558 = vsel %vm306, %v6555, %v6557
  %6559 = vrot.lane.b32.xlu0 %v6556, 32
  %v6560 = vpop.permute.xlu0 %6559
  %6561 = vrot.lane.b32.xlu0 %v6558, 32
  %v6562 = vpop.permute.xlu0 %6561
  %6563 = vrot.lane.b32.xlu0 %v6557, 32
  %v6564 = vpop.permute.xlu0 %6563
  %v6566 = vunpack.c.l.b16 %v6455
  %v6567 = vpack.c.b16 %v6525, %v6524
  %v6568 = vpack.c.b16 %v6566, %v6526
  %v6569 = vrot.slane %v6567, 7
  %v6570 = vrot.slane %v6568, 7
  %v6571 = vsel %vm322, %v6569, %v6570
  %6572 = vrot.lane.b32.xlu0 %v6569, 48
  %v6573 = vpop.permute.xlu0 %6572
  %6574 = vrot.lane.b32.xlu0 %v6571, 48
  %v6575 = vpop.permute.xlu0 %6574
  %6576 = vrot.lane.b32.xlu0 %v6570, 48
  %v6577 = vpop.permute.xlu0 %6576
  %v6580 = vunpack.c.l.b16 %v6456
  %v6581 = vunpack.c.l.b16 %v6457
  %v6582 = vpack.c.b16 %v6525, %v6580
  %v6583 = vpack.c.b16 %v6581, %v6581
  %6584 = vrot.lane.b32.xlu0 %v6582, 64
  %v6585 = vpop.permute.xlu0 %6584
  %6586 = vrot.lane.b32.xlu0 %v6568, 64
  %v6587 = vpop.permute.xlu0 %6586
  %6588 = vrot.lane.b32.xlu0 %v6583, 64
  %v6589 = vpop.permute.xlu0 %6588
  %v6592 = vunpack.c.l.b16 %v6458
  %v6593 = vunpack.c.l.b16 %v6459
  %v6594 = vpack.c.b16 %v6525, %v6592
  %v6595 = vpack.c.b16 %v6593, %v6593
  %v6596 = vrot.slane %v6594, 1
  %v6597 = vrot.slane %v6568, 1
  %v6598 = vsel %vm288, %v6596, %v6597
  %v6599 = vrot.slane %v6595, 1
  %v6600 = vsel %vm288, %v6597, %v6599
  %6601 = vrot.lane.b32.xlu0 %v6598, 80
  %v6602 = vpop.permute.xlu0 %6601
  %6603 = vrot.lane.b32.xlu0 %v6600, 80
  %v6604 = vpop.permute.xlu0 %6603
  %6605 = vrot.lane.b32.xlu0 %v6599, 80
  %v6606 = vpop.permute.xlu0 %6605
  %v6609 = vunpack.c.l.b16 %v6460
  %v6610 = vunpack.c.l.b16 %v6461
  %v6611 = vpack.c.b16 %v6525, %v6609
  %v6612 = vpack.c.b16 %v6610, %v6610
  %v6613 = vrot.slane %v6611, 2
  %v6614 = vrot.slane %v6568, 2
  %v6615 = vsel %vm306, %v6613, %v6614
  %v6616 = vrot.slane %v6612, 2
  %v6617 = vsel %vm306, %v6614, %v6616
  %6618 = vrot.lane.b32.xlu0 %v6615, 96
  %v6619 = vpop.permute.xlu0 %6618
  %6620 = vrot.lane.b32.xlu0 %v6617, 96
  %v6621 = vpop.permute.xlu0 %6620
  %6622 = vrot.lane.b32.xlu0 %v6616, 96
  %v6623 = vpop.permute.xlu0 %6622
  %v6625 = vunpack.c.l.b16 %v6462
  %v6626 = vpack.c.b16 %v6625, %v6566
  %v6627 = vrot.slane %v6529, 7
  %v6628 = vrot.slane %v6626, 7
  %v6629 = vsel %vm322, %v6627, %v6628
  %6630 = vrot.lane.b32.xlu0 %v6627, 112
  %v6631 = vpop.permute.xlu0 %6630
  %6632 = vrot.lane.b32.xlu0 %v6629, 112
  %v6633 = vpop.permute.xlu0 %6632
  %6634 = vrot.lane.b32.xlu0 %v6628, 112
  %v6635 = vpop.permute.xlu0 %6634
  %v6638 = vunpack.c.l.b16 %v6463
  %v6639 = vunpack.c.l.b16 %v6464
  %v6640 = vpack.c.b16 %v6526, %v6638
  %v6641 = vpack.c.b16 %v6639, %v6639
  %v6644 = vunpack.c.l.b16 %v6465
  %v6645 = vunpack.c.l.b16 %v6466
  %v6646 = vpack.c.b16 %v6526, %v6644
  %v6647 = vpack.c.b16 %v6645, %v6645
  %v6648 = vrot.slane %v6646, 1
  %v6649 = vrot.slane %v6626, 1
  %v6650 = vsel %vm288, %v6648, %v6649
  %v6651 = vrot.slane %v6647, 1
  %v6652 = vsel %vm288, %v6649, %v6651
  %6653 = vrot.lane.b32.xlu0 %v6650, 16
  %v6654 = vpop.permute.xlu0 %6653
  %6655 = vrot.lane.b32.xlu0 %v6652, 16
  %v6656 = vpop.permute.xlu0 %6655
  %6657 = vrot.lane.b32.xlu0 %v6651, 16
  %v6658 = vpop.permute.xlu0 %6657
  %v6661 = vunpack.c.l.b16 %v6467
  %v6662 = vunpack.c.l.b16 %v6468
  %v6663 = vpack.c.b16 %v6526, %v6661
  %v6664 = vpack.c.b16 %v6662, %v6662
  %v6665 = vrot.slane %v6663, 2
  %v6666 = vrot.slane %v6626, 2
  %v6667 = vsel %vm306, %v6665, %v6666
  %v6668 = vrot.slane %v6664, 2
  %v6669 = vsel %vm306, %v6666, %v6668
  %6670 = vrot.lane.b32.xlu0 %v6667, 32
  %v6671 = vpop.permute.xlu0 %6670
  %6672 = vrot.lane.b32.xlu0 %v6669, 32
  %v6673 = vpop.permute.xlu0 %6672
  %6674 = vrot.lane.b32.xlu0 %v6668, 32
  %v6675 = vpop.permute.xlu0 %6674
  %v6677 = vunpack.c.l.b16 %v6469
  %v6678 = vpack.c.b16 %v6677, %v6625
  %v6679 = vrot.slane %v6678, 7
  %v6680 = vsel %vm322, %v6570, %v6679
  %6681 = vrot.lane.b32.xlu0 %v6680, 48
  %v6682 = vpop.permute.xlu0 %6681
  %6683 = vrot.lane.b32.xlu0 %v6679, 48
  %v6684 = vpop.permute.xlu0 %6683
  %v6687 = vunpack.c.l.b16 %v6470
  %v6688 = vunpack.c.l.b16 %v6471
  %v6689 = vpack.c.b16 %v6566, %v6687
  %v6690 = vpack.c.b16 %v6688, %v6688
  %6691 = vrot.lane.b32.xlu0 %v6689, 64
  %v6692 = vpop.permute.xlu0 %6691
  %6693 = vrot.lane.b32.xlu0 %v6678, 64
  %v6694 = vpop.permute.xlu0 %6693
  %6695 = vrot.lane.b32.xlu0 %v6690, 64
  %v6696 = vpop.permute.xlu0 %6695
  %v6699 = vunpack.c.l.b16 %v6472
  %v6700 = vunpack.c.l.b16 %v6473
  %v6701 = vpack.c.b16 %v6566, %v6699
  %v6702 = vpack.c.b16 %v6700, %v6700
  %v6703 = vrot.slane %v6701, 1
  %v6704 = vrot.slane %v6678, 1
  %v6705 = vsel %vm288, %v6703, %v6704
  %v6706 = vrot.slane %v6702, 1
  %v6707 = vsel %vm288, %v6704, %v6706
  %6708 = vrot.lane.b32.xlu0 %v6705, 80
  %v6709 = vpop.permute.xlu0 %6708
  %6710 = vrot.lane.b32.xlu0 %v6707, 80
  %v6711 = vpop.permute.xlu0 %6710
  %6712 = vrot.lane.b32.xlu0 %v6706, 80
  %v6713 = vpop.permute.xlu0 %6712
  %v6716 = vunpack.c.l.b16 %v6474
  %v6717 = vunpack.c.l.b16 %v6475
  %v6718 = vpack.c.b16 %v6566, %v6716
  %v6719 = vpack.c.b16 %v6717, %v6717
  %v6720 = vrot.slane %v6718, 2
  %v6721 = vrot.slane %v6678, 2
  %v6722 = vsel %vm306, %v6720, %v6721
  %v6723 = vrot.slane %v6719, 2
  %v6724 = vsel %vm306, %v6721, %v6723
  %6725 = vrot.lane.b32.xlu0 %v6722, 96
  %v6726 = vpop.permute.xlu0 %6725
  %6727 = vrot.lane.b32.xlu0 %v6724, 96
  %v6728 = vpop.permute.xlu0 %6727
  %6729 = vrot.lane.b32.xlu0 %v6723, 96
  %v6730 = vpop.permute.xlu0 %6729
  %v6732 = vunpack.c.l.b16 %v6476
  %v6733 = vpack.c.b16 %v6732, %v6677
  %v6734 = vrot.slane %v6733, 7
  %v6735 = vsel %vm322, %v6628, %v6734
  %6736 = vrot.lane.b32.xlu0 %v6735, 112
  %v6737 = vpop.permute.xlu0 %6736
  %6738 = vrot.lane.b32.xlu0 %v6734, 112
  %v6739 = vpop.permute.xlu0 %6738
  %v6742 = vsel %vm494, %v6528, %v6543
  %v6745 = vsel %vm494, %v6529, %v6545
  %v6748 = vsel %vm494, %v6530, %v6547
  %v6750 = vsel %vm504, %v6742, %v6560
  %v6752 = vsel %vm504, %v6745, %v6562
  %v6754 = vsel %vm504, %v6748, %v6564
  %v6756 = vsel %vm511, %v6750, %v6573
  %v6758 = vsel %vm511, %v6752, %v6575
  %v6760 = vsel %vm511, %v6754, %v6577
  %v6762 = vsel %vm518, %v6756, %v6585
  %v6764 = vsel %vm518, %v6758, %v6587
  %v6766 = vsel %vm518, %v6760, %v6589
  %v6768 = vsel %vm525, %v6762, %v6602
  %v6770 = vsel %vm525, %v6764, %v6604
  %v6772 = vsel %vm525, %v6766, %v6606
  %v6774 = vsel %vm532, %v6768, %v6619
  %v6776 = vsel %vm532, %v6770, %v6621
  %v6778 = vsel %vm532, %v6772, %v6623
  %v6780 = vsel %vm539, %v6774, %v6631
  %v6782 = vsel %vm539, %v6776, %v6633
  %v6784 = vsel %vm539, %v6778, %v6635
  %v6787 = vsel %vm494, %v6640, %v6654
  %v6790 = vsel %vm494, %v6626, %v6656
  %v6793 = vsel %vm494, %v6641, %v6658
  %v6795 = vsel %vm504, %v6787, %v6671
  %v6797 = vsel %vm504, %v6790, %v6673
  %v6799 = vsel %vm504, %v6793, %v6675
  %v6800 = vsel %vm511, %v6795, %v6577
  %v6802 = vsel %vm511, %v6797, %v6682
  %v6804 = vsel %vm511, %v6799, %v6684
  %v6806 = vsel %vm518, %v6800, %v6692
  %v6808 = vsel %vm518, %v6802, %v6694
  %v6810 = vsel %vm518, %v6804, %v6696
  %v6812 = vsel %vm525, %v6806, %v6709
  %v6814 = vsel %vm525, %v6808, %v6711
  %v6816 = vsel %vm525, %v6810, %v6713
  %v6818 = vsel %vm532, %v6812, %v6726
  %v6820 = vsel %vm532, %v6814, %v6728
  %v6822 = vsel %vm532, %v6816, %v6730
  %v6823 = vsel %vm539, %v6818, %v6635
  %v6825 = vsel %vm539, %v6820, %v6737
  %v6827 = vsel %vm539, %v6822, %v6739
  %v6830 = vunpack.c.l.b16 %v6477
  %v6831 = vunpack.c.l.b16 %v6478
  %v6832 = vpack.c.b16 %v6625, %v6830
  %v6833 = vpack.c.b16 %v6831, %v6831
  %v6836 = vunpack.c.l.b16 %v6479
  %v6837 = vunpack.c.l.b16 %v6480
  %v6838 = vpack.c.b16 %v6625, %v6836
  %v6839 = vpack.c.b16 %v6837, %v6837
  %v6840 = vrot.slane %v6838, 1
  %v6841 = vrot.slane %v6733, 1
  %v6842 = vsel %vm288, %v6840, %v6841
  %v6843 = vrot.slane %v6839, 1
  %v6844 = vsel %vm288, %v6841, %v6843
  %6845 = vrot.lane.b32.xlu0 %v6842, 16
  %v6846 = vpop.permute.xlu0 %6845
  %6847 = vrot.lane.b32.xlu0 %v6844, 16
  %v6848 = vpop.permute.xlu0 %6847
  %6849 = vrot.lane.b32.xlu0 %v6843, 16
  %v6850 = vpop.permute.xlu0 %6849
  %v6853 = vunpack.c.l.b16 %v6481
  %v6854 = vunpack.c.l.b16 %v6482
  %v6855 = vpack.c.b16 %v6625, %v6853
  %v6856 = vpack.c.b16 %v6854, %v6854
  %v6857 = vrot.slane %v6855, 2
  %v6858 = vrot.slane %v6733, 2
  %v6859 = vsel %vm306, %v6857, %v6858
  %v6860 = vrot.slane %v6856, 2
  %v6861 = vsel %vm306, %v6858, %v6860
  %6862 = vrot.lane.b32.xlu0 %v6859, 32
  %v6863 = vpop.permute.xlu0 %6862
  %6864 = vrot.lane.b32.xlu0 %v6861, 32
  %v6865 = vpop.permute.xlu0 %6864
  %6866 = vrot.lane.b32.xlu0 %v6860, 32
  %v6867 = vpop.permute.xlu0 %6866
  %v6869 = vunpack.c.l.b16 %v6483
  %v6870 = vpack.c.b16 %v6869, %v6732
  %v6871 = vrot.slane %v6870, 7
  %v6872 = vsel %vm322, %v6679, %v6871
  %6873 = vrot.lane.b32.xlu0 %v6872, 48
  %v6874 = vpop.permute.xlu0 %6873
  %6875 = vrot.lane.b32.xlu0 %v6871, 48
  %v6876 = vpop.permute.xlu0 %6875
  %v6879 = vunpack.c.l.b16 %v6484
  %v6880 = vunpack.c.l.b16 %v6485
  %v6881 = vpack.c.b16 %v6677, %v6879
  %v6882 = vpack.c.b16 %v6880, %v6880
  %6883 = vrot.lane.b32.xlu0 %v6881, 64
  %v6884 = vpop.permute.xlu0 %6883
  %6885 = vrot.lane.b32.xlu0 %v6870, 64
  %v6886 = vpop.permute.xlu0 %6885
  %6887 = vrot.lane.b32.xlu0 %v6882, 64
  %v6888 = vpop.permute.xlu0 %6887
  %v6891 = vunpack.c.l.b16 %v6486
  %v6892 = vunpack.c.l.b16 %v6487
  %v6893 = vpack.c.b16 %v6677, %v6891
  %v6894 = vpack.c.b16 %v6892, %v6892
  %v6895 = vrot.slane %v6893, 1
  %v6896 = vrot.slane %v6870, 1
  %v6897 = vsel %vm288, %v6895, %v6896
  %v6898 = vrot.slane %v6894, 1
  %v6899 = vsel %vm288, %v6896, %v6898
  %6900 = vrot.lane.b32.xlu0 %v6897, 80
  %v6901 = vpop.permute.xlu0 %6900
  %6902 = vrot.lane.b32.xlu0 %v6899, 80
  %v6903 = vpop.permute.xlu0 %6902
  %6904 = vrot.lane.b32.xlu0 %v6898, 80
  %v6905 = vpop.permute.xlu0 %6904
  %v6908 = vunpack.c.l.b16 %v6488
  %v6909 = vunpack.c.l.b16 %v6489
  %v6910 = vpack.c.b16 %v6677, %v6908
  %v6911 = vpack.c.b16 %v6909, %v6909
  %v6912 = vrot.slane %v6910, 2
  %v6913 = vrot.slane %v6870, 2
  %v6914 = vsel %vm306, %v6912, %v6913
  %v6915 = vrot.slane %v6911, 2
  %v6916 = vsel %vm306, %v6913, %v6915
  %6917 = vrot.lane.b32.xlu0 %v6914, 96
  %v6918 = vpop.permute.xlu0 %6917
  %6919 = vrot.lane.b32.xlu0 %v6916, 96
  %v6920 = vpop.permute.xlu0 %6919
  %6921 = vrot.lane.b32.xlu0 %v6915, 96
  %v6922 = vpop.permute.xlu0 %6921
  %v6924 = vunpack.c.l.b16 %v6490
  %v6925 = vpack.c.b16 %v6924, %v6869
  %v6926 = vrot.slane %v6925, 7
  %v6927 = vsel %vm322, %v6734, %v6926
  %6928 = vrot.lane.b32.xlu0 %v6927, 112
  %v6929 = vpop.permute.xlu0 %6928
  %6930 = vrot.lane.b32.xlu0 %v6926, 112
  %v6931 = vpop.permute.xlu0 %6930
  %v6934 = vunpack.c.l.b16 %v6491
  %v6935 = vunpack.c.l.b16 %v6492
  %v6936 = vpack.c.b16 %v6732, %v6934
  %v6937 = vpack.c.b16 %v6935, %v6935
  %v6940 = vunpack.c.l.b16 %v6493
  %v6941 = vunpack.c.l.b16 %v6494
  %v6942 = vpack.c.b16 %v6732, %v6940
  %v6943 = vpack.c.b16 %v6941, %v6941
  %v6944 = vrot.slane %v6942, 1
  %v6945 = vrot.slane %v6925, 1
  %v6946 = vsel %vm288, %v6944, %v6945
  %v6947 = vrot.slane %v6943, 1
  %v6948 = vsel %vm288, %v6945, %v6947
  %6949 = vrot.lane.b32.xlu0 %v6946, 16
  %v6950 = vpop.permute.xlu0 %6949
  %6951 = vrot.lane.b32.xlu0 %v6948, 16
  %v6952 = vpop.permute.xlu0 %6951
  %6953 = vrot.lane.b32.xlu0 %v6947, 16
  %v6954 = vpop.permute.xlu0 %6953
  %v6957 = vunpack.c.l.b16 %v6495
  %v6958 = vunpack.c.l.b16 %v6496
  %v6959 = vpack.c.b16 %v6732, %v6957
  %v6960 = vpack.c.b16 %v6958, %v6958
  %v6961 = vrot.slane %v6959, 2
  %v6962 = vrot.slane %v6925, 2
  %v6963 = vsel %vm306, %v6961, %v6962
  %v6964 = vrot.slane %v6960, 2
  %v6965 = vsel %vm306, %v6962, %v6964
  %6966 = vrot.lane.b32.xlu0 %v6963, 32
  %v6967 = vpop.permute.xlu0 %6966
  %6968 = vrot.lane.b32.xlu0 %v6965, 32
  %v6969 = vpop.permute.xlu0 %6968
  %6970 = vrot.lane.b32.xlu0 %v6964, 32
  %v6971 = vpop.permute.xlu0 %6970
  %v6973 = vunpack.c.l.b16 %v6497
  %v6974 = vpack.c.b16 %v6973, %v6924
  %v6975 = vrot.slane %v6974, 7
  %v6976 = vsel %vm322, %v6871, %v6975
  %6977 = vrot.lane.b32.xlu0 %v6976, 48
  %v6978 = vpop.permute.xlu0 %6977
  %6979 = vrot.lane.b32.xlu0 %v6975, 48
  %v6980 = vpop.permute.xlu0 %6979
  %v6983 = vunpack.c.l.b16 %v6498
  %v6984 = vunpack.c.l.b16 %v6499
  %v6985 = vpack.c.b16 %v6869, %v6983
  %v6986 = vpack.c.b16 %v6984, %v6984
  %6987 = vrot.lane.b32.xlu0 %v6985, 64
  %v6988 = vpop.permute.xlu0 %6987
  %6989 = vrot.lane.b32.xlu0 %v6974, 64
  %v6990 = vpop.permute.xlu0 %6989
  %6991 = vrot.lane.b32.xlu0 %v6986, 64
  %v6992 = vpop.permute.xlu0 %6991
  %v6995 = vunpack.c.l.b16 %v6500
  %v6996 = vunpack.c.l.b16 %v6501
  %v6997 = vpack.c.b16 %v6869, %v6995
  %v6998 = vpack.c.b16 %v6996, %v6996
  %v6999 = vrot.slane %v6997, 1
  %v7000 = vrot.slane %v6974, 1
  %v7001 = vsel %vm288, %v6999, %v7000
  %v7002 = vrot.slane %v6998, 1
  %v7003 = vsel %vm288, %v7000, %v7002
  %7004 = vrot.lane.b32.xlu0 %v7001, 80
  %v7005 = vpop.permute.xlu0 %7004
  %7006 = vrot.lane.b32.xlu0 %v7003, 80
  %v7007 = vpop.permute.xlu0 %7006
  %7008 = vrot.lane.b32.xlu0 %v7002, 80
  %v7009 = vpop.permute.xlu0 %7008
  %v7012 = vunpack.c.l.b16 %v6502
  %v7013 = vunpack.c.l.b16 %v6503
  %v7014 = vpack.c.b16 %v6869, %v7012
  %v7015 = vpack.c.b16 %v7013, %v7013
  %v7016 = vrot.slane %v7014, 2
  %v7017 = vrot.slane %v6974, 2
  %v7018 = vsel %vm306, %v7016, %v7017
  %v7019 = vrot.slane %v7015, 2
  %v7020 = vsel %vm306, %v7017, %v7019
  %7021 = vrot.lane.b32.xlu0 %v7018, 96
  %v7022 = vpop.permute.xlu0 %7021
  %7023 = vrot.lane.b32.xlu0 %v7020, 96
  %v7024 = vpop.permute.xlu0 %7023
  %7025 = vrot.lane.b32.xlu0 %v7019, 96
  %v7026 = vpop.permute.xlu0 %7025
  %v7028 = vunpack.c.l.b16 %v6504
  %v7029 = vpack.c.b16 %v7028, %v6973
  %v7030 = vrot.slane %v7029, 7
  %v7031 = vsel %vm322, %v6926, %v7030
  %7032 = vrot.lane.b32.xlu0 %v7031, 112
  %v7033 = vpop.permute.xlu0 %7032
  %7034 = vrot.lane.b32.xlu0 %v7030, 112
  %v7035 = vpop.permute.xlu0 %7034
  %v7038 = vsel %vm494, %v6832, %v6846
  %v7041 = vsel %vm494, %v6733, %v6848
  %v7044 = vsel %vm494, %v6833, %v6850
  %v7046 = vsel %vm504, %v7038, %v6863
  %v7048 = vsel %vm504, %v7041, %v6865
  %v7050 = vsel %vm504, %v7044, %v6867
  %v7051 = vsel %vm511, %v7046, %v6684
  %v7053 = vsel %vm511, %v7048, %v6874
  %v7055 = vsel %vm511, %v7050, %v6876
  %v7057 = vsel %vm518, %v7051, %v6884
  %v7059 = vsel %vm518, %v7053, %v6886
  %v7061 = vsel %vm518, %v7055, %v6888
  %v7063 = vsel %vm525, %v7057, %v6901
  %v7065 = vsel %vm525, %v7059, %v6903
  %v7067 = vsel %vm525, %v7061, %v6905
  %v7069 = vsel %vm532, %v7063, %v6918
  %v7071 = vsel %vm532, %v7065, %v6920
  %v7073 = vsel %vm532, %v7067, %v6922
  %v7074 = vsel %vm539, %v7069, %v6739
  %v7076 = vsel %vm539, %v7071, %v6929
  %v7078 = vsel %vm539, %v7073, %v6931
  %v7081 = vsel %vm494, %v6936, %v6950
  %v7084 = vsel %vm494, %v6925, %v6952
  %v7087 = vsel %vm494, %v6937, %v6954
  %v7089 = vsel %vm504, %v7081, %v6967
  %v7091 = vsel %vm504, %v7084, %v6969
  %v7093 = vsel %vm504, %v7087, %v6971
  %v7094 = vsel %vm511, %v7089, %v6876
  %v7096 = vsel %vm511, %v7091, %v6978
  %v7098 = vsel %vm511, %v7093, %v6980
  %v7100 = vsel %vm518, %v7094, %v6988
  %v7102 = vsel %vm518, %v7096, %v6990
  %v7104 = vsel %vm518, %v7098, %v6992
  %v7106 = vsel %vm525, %v7100, %v7005
  %v7108 = vsel %vm525, %v7102, %v7007
  %v7110 = vsel %vm525, %v7104, %v7009
  %v7112 = vsel %vm532, %v7106, %v7022
  %v7114 = vsel %vm532, %v7108, %v7024
  %v7116 = vsel %vm532, %v7110, %v7026
  %v7117 = vsel %vm539, %v7112, %v6931
  %v7119 = vsel %vm539, %v7114, %v7033
  %v7121 = vsel %vm539, %v7116, %v7035
  %v7124 = vunpack.c.l.b16 %v6505
  %v7125 = vunpack.c.l.b16 %v6506
  %v7126 = vpack.c.b16 %v6924, %v7124
  %v7127 = vpack.c.b16 %v7125, %v7125
  %v7130 = vunpack.c.l.b16 %v6507
  %v7131 = vunpack.c.l.b16 %v6508
  %v7132 = vpack.c.b16 %v6924, %v7130
  %v7133 = vpack.c.b16 %v7131, %v7131
  %v7134 = vrot.slane %v7132, 1
  %v7135 = vrot.slane %v7029, 1
  %v7136 = vsel %vm288, %v7134, %v7135
  %v7137 = vrot.slane %v7133, 1
  %v7138 = vsel %vm288, %v7135, %v7137
  %7139 = vrot.lane.b32.xlu0 %v7136, 16
  %v7140 = vpop.permute.xlu0 %7139
  %7141 = vrot.lane.b32.xlu0 %v7138, 16
  %v7142 = vpop.permute.xlu0 %7141
  %7143 = vrot.lane.b32.xlu0 %v7137, 16
  %v7144 = vpop.permute.xlu0 %7143
  %v7147 = vunpack.c.l.b16 %v6509
  %v7148 = vunpack.c.l.b16 %v6510
  %v7149 = vpack.c.b16 %v6924, %v7147
  %v7150 = vpack.c.b16 %v7148, %v7148
  %v7151 = vrot.slane %v7149, 2
  %v7152 = vrot.slane %v7029, 2
  %v7153 = vsel %vm306, %v7151, %v7152
  %v7154 = vrot.slane %v7150, 2
  %v7155 = vsel %vm306, %v7152, %v7154
  %7156 = vrot.lane.b32.xlu0 %v7153, 32
  %v7157 = vpop.permute.xlu0 %7156
  %7158 = vrot.lane.b32.xlu0 %v7155, 32
  %v7159 = vpop.permute.xlu0 %7158
  %7160 = vrot.lane.b32.xlu0 %v7154, 32
  %v7161 = vpop.permute.xlu0 %7160
  %v7163 = vunpack.c.l.b16 %v6511
  %v7164 = vpack.c.b16 %v7163, %v7028
  %v7165 = vrot.slane %v7164, 7
  %v7166 = vsel %vm322, %v6975, %v7165
  %7167 = vrot.lane.b32.xlu0 %v7166, 48
  %v7168 = vpop.permute.xlu0 %7167
  %7169 = vrot.lane.b32.xlu0 %v7165, 48
  %v7170 = vpop.permute.xlu0 %7169
  %v7173 = vunpack.c.l.b16 %v6512
  %v7174 = vunpack.c.l.b16 %v6513
  %v7175 = vpack.c.b16 %v6973, %v7173
  %v7176 = vpack.c.b16 %v7174, %v7174
  %7177 = vrot.lane.b32.xlu0 %v7175, 64
  %v7178 = vpop.permute.xlu0 %7177
  %7179 = vrot.lane.b32.xlu0 %v7164, 64
  %v7180 = vpop.permute.xlu0 %7179
  %7181 = vrot.lane.b32.xlu0 %v7176, 64
  %v7182 = vpop.permute.xlu0 %7181
  %v7185 = vunpack.c.l.b16 %v6514
  %v7186 = vunpack.c.l.b16 %v6515
  %v7187 = vpack.c.b16 %v6973, %v7185
  %v7188 = vpack.c.b16 %v7186, %v7186
  %v7189 = vrot.slane %v7187, 1
  %v7190 = vrot.slane %v7164, 1
  %v7191 = vsel %vm288, %v7189, %v7190
  %v7192 = vrot.slane %v7188, 1
  %v7193 = vsel %vm288, %v7190, %v7192
  %7194 = vrot.lane.b32.xlu0 %v7191, 80
  %v7195 = vpop.permute.xlu0 %7194
  %7196 = vrot.lane.b32.xlu0 %v7193, 80
  %v7197 = vpop.permute.xlu0 %7196
  %7198 = vrot.lane.b32.xlu0 %v7192, 80
  %v7199 = vpop.permute.xlu0 %7198
  %v7202 = vunpack.c.l.b16 %v6516
  %v7203 = vunpack.c.l.b16 %v6517
  %v7204 = vpack.c.b16 %v6973, %v7202
  %v7205 = vpack.c.b16 %v7203, %v7203
  %v7206 = vrot.slane %v7204, 2
  %v7207 = vrot.slane %v7164, 2
  %v7208 = vsel %vm306, %v7206, %v7207
  %v7209 = vrot.slane %v7205, 2
  %v7210 = vsel %vm306, %v7207, %v7209
  %7211 = vrot.lane.b32.xlu0 %v7208, 96
  %v7212 = vpop.permute.xlu0 %7211
  %7213 = vrot.lane.b32.xlu0 %v7210, 96
  %v7214 = vpop.permute.xlu0 %7213
  %7215 = vrot.lane.b32.xlu0 %v7209, 96
  %v7216 = vpop.permute.xlu0 %7215
  %v7221 = vunpack.c.l.b16 %v6442
  %v7222 = vunpack.c.l.b16 %v6443
  %v7223 = vunpack.c.l.b16 %v6444
  %v7224 = vunpack.c.l.b16 %v6445
  %v7225 = vpack.c.b16 %v7222, %v7221
  %v7226 = vpack.c.b16 %v7224, %v7223
  %v7227 = vrot.slane %v7225, 7
  %v7228 = vrot.slane %v7226, 7
  %v7229 = vsel %vm322, %v7227, %v7228
  %7230 = vrot.lane.b32.xlu0 %v7227, 112
  %v7231 = vpop.permute.xlu0 %7230
  %7232 = vrot.lane.b32.xlu0 %v7229, 112
  %v7233 = vpop.permute.xlu0 %7232
  %7234 = vrot.lane.b32.xlu0 %v7228, 112
  %v7235 = vpop.permute.xlu0 %7234
  %v7238 = vsel %vm494, %v7126, %v7140
  %v7241 = vsel %vm494, %v7029, %v7142
  %v7244 = vsel %vm494, %v7127, %v7144
  %v7246 = vsel %vm504, %v7238, %v7157
  %v7248 = vsel %vm504, %v7241, %v7159
  %v7250 = vsel %vm504, %v7244, %v7161
  %v7251 = vsel %vm511, %v7246, %v6980
  %v7253 = vsel %vm511, %v7248, %v7168
  %v7255 = vsel %vm511, %v7250, %v7170
  %v7257 = vsel %vm518, %v7251, %v7178
  %v7259 = vsel %vm518, %v7253, %v7180
  %v7261 = vsel %vm518, %v7255, %v7182
  %v7263 = vsel %vm525, %v7257, %v7195
  %v7265 = vsel %vm525, %v7259, %v7197
  %v7267 = vsel %vm525, %v7261, %v7199
  %v7269 = vsel %vm532, %v7263, %v7212
  %v7271 = vsel %vm532, %v7265, %v7214
  %v7273 = vsel %vm532, %v7267, %v7216
  %v7275 = vsel %vm539, %v7269, %v7231
  %v7277 = vsel %vm539, %v7271, %v7233
  %v7279 = vsel %vm539, %v7273, %v7235
  %s7280 = scalar_lea.vmem %s3, 1504
  %v7281 = vld [vmem:[%s7280] sm:$0xf]
  %v7282 = vld [vmem:[%s7280 + $0x4] sm:$0xf]
  %v7283 = vld [vmem:[%s7280 + $0x8] sm:$0xf]
  %v7284 = vld [vmem:[%s7280 + $0xc] sm:$0xf]
  %v7285 = vld [vmem:[%s7280 + $0x10] sm:$0xf]
  %v7286 = vld [vmem:[%s7280 + $0x14] sm:$0xf]
  %v7287 = vld [vmem:[%s7280 + $0x18] sm:$0xf]
  %v7288 = vld [vmem:[%s7280 + $0x1c] sm:$0xf]
  %v7289 = vld [vmem:[%s7280 + $0x20] sm:$0xf]
  %v7290 = vld [vmem:[%s7280 + $0x24] sm:$0xf]
  %v7291 = vld [vmem:[%s7280 + $0x28] sm:$0xf]
  %v7292 = vld [vmem:[%s7280 + $0x2c] sm:$0xf]
  %v7293 = vld [vmem:[%s7280 + $0x30] sm:$0xf]
  %v7294 = vld [vmem:[%s7280 + $0x34] sm:$0xf]
  %v7295 = vld [vmem:[%s7280 + $0x38] sm:$0xf]
  %v7296 = vld [vmem:[%s7280 + $0x3c] sm:$0xf]
  %v7297 = vld [vmem:[%s7280 + $0x40] sm:$0xf]
  %v7298 = vld [vmem:[%s7280 + $0x44] sm:$0xf]
  %v7299 = vld [vmem:[%s7280 + $0x48] sm:$0xf]
  %v7300 = vld [vmem:[%s7280 + $0x4c] sm:$0xf]
  %v7301 = vld [vmem:[%s7280 + $0x50] sm:$0xf]
  %v7302 = vld [vmem:[%s7280 + $0x54] sm:$0xf]
  %v7303 = vld [vmem:[%s7280 + $0x58] sm:$0xf]
  %v7304 = vld [vmem:[%s7280 + $0x5c] sm:$0xf]
  %v7305 = vld [vmem:[%s7280 + $0x60] sm:$0xf]
  %v7306 = vld [vmem:[%s7280 + $0x64] sm:$0xf]
  %v7307 = vld [vmem:[%s7280 + $0x68] sm:$0xf]
  %v7308 = vld [vmem:[%s7280 + $0x6c] sm:$0xf]
  %v7309 = vld [vmem:[%s7280 + $0x70] sm:$0xf]
  %v7310 = vld [vmem:[%s7280 + $0x74] sm:$0xf]
  %v7311 = vld [vmem:[%s7280 + $0x78] sm:$0xf]
  %v7312 = vld [vmem:[%s7280 + $0x7c] sm:$0xf]
  %v7313 = vld [vmem:[%s7280 + $0x80] sm:$0xf]
  %v7314 = vld [vmem:[%s7280 + $0x84] sm:$0xf]
  %v7315 = vld [vmem:[%s7280 + $0x88] sm:$0xf]
  %v7316 = vld [vmem:[%s7280 + $0x8c] sm:$0xf]
  %v7317 = vld [vmem:[%s7280 + $0x90] sm:$0xf]
  %v7318 = vld [vmem:[%s7280 + $0x94] sm:$0xf]
  %v7319 = vld [vmem:[%s7280 + $0x98] sm:$0xf]
  %v7320 = vld [vmem:[%s7280 + $0x9c] sm:$0xf]
  %v7321 = vld [vmem:[%s7280 + $0xa0] sm:$0xf]
  %v7322 = vld [vmem:[%s7280 + $0xa4] sm:$0xf]
  %v7323 = vld [vmem:[%s7280 + $0xa8] sm:$0xf]
  %v7324 = vld [vmem:[%s7280 + $0xac] sm:$0xf]
  %v7325 = vld [vmem:[%s7280 + $0xb0] sm:$0xf]
  %v7326 = vld [vmem:[%s7280 + $0xb4] sm:$0xf]
  %v7327 = vld [vmem:[%s7280 + $0xb8] sm:$0xf]
  %v7328 = vld [vmem:[%s7280 + $0xbc] sm:$0xf]
  %v7329 = vld [vmem:[%s7280 + $0xc0] sm:$0xf]
  %v7330 = vld [vmem:[%s7280 + $0xc4] sm:$0xf]
  %v7331 = vld [vmem:[%s7280 + $0xc8] sm:$0xf]
  %v7332 = vld [vmem:[%s7280 + $0xcc] sm:$0xf]
  %v7333 = vld [vmem:[%s7280 + $0xd0] sm:$0xf]
  %v7334 = vld [vmem:[%s7280 + $0xd4] sm:$0xf]
  %v7335 = vld [vmem:[%s7280 + $0xd8] sm:$0xf]
  %v7336 = vld [vmem:[%s7280 + $0xdc] sm:$0xf]
  %v7337 = vld [vmem:[%s7280 + $0xe0] sm:$0xf]
  %v7338 = vld [vmem:[%s7280 + $0xe4] sm:$0xf]
  %v7339 = vld [vmem:[%s7280 + $0xe8] sm:$0xf]
  %v7340 = vld [vmem:[%s7280 + $0xec] sm:$0xf]
  %v7341 = vld [vmem:[%s7280 + $0xf0] sm:$0xf]
  %v7342 = vld [vmem:[%s7280 + $0xf4] sm:$0xf]
  %v7343 = vld [vmem:[%s7280 + $0xf8] sm:$0xf]
  %v7344 = vld [vmem:[%s7280 + $0xfc] sm:$0xf]
  %v7345 = vld [vmem:[%s7280 + $0x100] sm:$0xf]
  %v7346 = vld [vmem:[%s7280 + $0x104] sm:$0xf]
  %v7347 = vld [vmem:[%s7280 + $0x108] sm:$0xf]
  %v7348 = vld [vmem:[%s7280 + $0x10c] sm:$0xf]
  %v7349 = vld [vmem:[%s7280 + $0x110] sm:$0xf]
  %v7350 = vld [vmem:[%s7280 + $0x114] sm:$0xf]
  %v7351 = vld [vmem:[%s7280 + $0x118] sm:$0xf]
  %v7352 = vld [vmem:[%s7280 + $0x11c] sm:$0xf]
  %v7353 = vld [vmem:[%s7280 + $0x120] sm:$0xf]
  %v7354 = vld [vmem:[%s7280 + $0x124] sm:$0xf]
  %v7355 = vld [vmem:[%s7280 + $0x128] sm:$0xf]
  %v7356 = vld [vmem:[%s7280 + $0x12c] sm:$0xf]
  %v7357 = vld [vmem:[%s7280 + $0x130] sm:$0xf]
  %v7358 = vld [vmem:[%s7280 + $0x134] sm:$0xf]
  %v7359 = vld [vmem:[%s7280 + $0x138] sm:$0xf]
  %v7360 = vld [vmem:[%s7280 + $0x13c] sm:$0xf]
  %v7361 = vld [vmem:[%s7280 + $0x140] sm:$0xf]
  %v7362 = vld [vmem:[%s7280 + $0x144] sm:$0xf]
  %v7363 = vld [vmem:[%s7280 + $0x148] sm:$0xf]
  %v7364 = vld [vmem:[%s7280 + $0x14c] sm:$0xf]
  %v7365 = vld [vmem:[%s7280 + $0x150] sm:$0xf]
  %v7366 = vld [vmem:[%s7280 + $0x154] sm:$0xf]
  %v7367 = vld [vmem:[%s7280 + $0x158] sm:$0xf]
  %v7368 = vld [vmem:[%s7280 + $0x15c] sm:$0xf]
  %v7369 = vld [vmem:[%s7280 + $0x160] sm:$0xf]
  %v7370 = vld [vmem:[%s7280 + $0x164] sm:$0xf]
  %v7371 = vld [vmem:[%s7280 + $0x168] sm:$0xf]
  %v7372 = vld [vmem:[%s7280 + $0x16c] sm:$0xf]
  %v7373 = vld [vmem:[%s7280 + $0x170] sm:$0xf]
  %v7374 = vld [vmem:[%s7280 + $0x174] sm:$0xf]
  %s7375 = scalar_lea.vmem %s4, 4
  %v7376 = vld [vmem:[%s7375] sm:$0x1]
  %v7378 = vperm.slane %v7376, 0
  %v7395 = vrot.slane %v6780, 1
  %v7396 = vrot.slane %v6782, 1
  %v7397 = vsel %vm288, %v7395, %v7396
  %v7398 = vrot.slane %v6823, 1
  %v7399 = vrot.slane %v6825, 1
  %v7400 = vsel %vm288, %v7398, %v7399
  %v7401 = vrot.slane %v7074, 1
  %v7402 = vrot.slane %v7076, 1
  %v7403 = vsel %vm288, %v7401, %v7402
  %v7404 = vrot.slane %v7117, 1
  %v7405 = vrot.slane %v7119, 1
  %v7406 = vsel %vm288, %v7404, %v7405
  %v7407 = vrot.slane %v7275, 1
  %v7408 = vrot.slane %v7277, 1
  %v7409 = vsel %vm288, %v7407, %v7408
  %v7410 = vrot.slane %v7231, 1
  %v7411 = vrot.slane %v7233, 1
  %v7412 = vsel %vm288, %v7410, %v7411
  %v7413 = vrot.slane %v6784, 1
  %v7414 = vsel %vm288, %v7396, %v7413
  %v7415 = vrot.slane %v6827, 1
  %v7416 = vsel %vm288, %v7399, %v7415
  %v7417 = vrot.slane %v7078, 1
  %v7418 = vsel %vm288, %v7402, %v7417
  %v7419 = vrot.slane %v7121, 1
  %v7420 = vsel %vm288, %v7405, %v7419
  %v7421 = vrot.slane %v7279, 1
  %v7422 = vsel %vm288, %v7408, %v7421
  %v7423 = vrot.slane %v7235, 1
  %v7424 = vsel %vm288, %v7411, %v7423
  %v7529 = vunpack.c.l.b16 %v7281
  %v7530 = vunpack.c.l.b16 %v7282
  %v7531 = vunpack.c.l.b16 %v7283
  %v7532 = vunpack.c.l.b16 %v7284
  %v7533 = vunpack.c.l.b16 %v7285
  %v7534 = vunpack.c.l.b16 %v7286
  %v7535 = vunpack.c.l.b16 %v7287
  %v7536 = vunpack.c.l.b16 %v7288
  %v7537 = vunpack.c.l.b16 %v7289
  %v7538 = vunpack.c.l.b16 %v7290
  %v7539 = vunpack.c.l.b16 %v7291
  %v7540 = vunpack.c.l.b16 %v7292
  %v7541 = vunpack.c.l.b16 %v7293
  %v7542 = vunpack.c.l.b16 %v7294
  %v7543 = vunpack.c.l.b16 %v7295
  %v7544 = vunpack.c.l.b16 %v7296
  %v7545 = vunpack.c.l.b16 %v7297
  %v7546 = vunpack.c.l.b16 %v7298
  %v7547 = vunpack.c.l.b16 %v7299
  %v7548 = vunpack.c.l.b16 %v7300
  %v7549 = vunpack.c.l.b16 %v7301
  %v7550 = vunpack.c.l.b16 %v7302
  %v7551 = vunpack.c.l.b16 %v7303
  %v7552 = vunpack.c.l.b16 %v7304
  %v7553 = vunpack.c.l.b16 %v7305
  %v7554 = vunpack.c.l.b16 %v7306
  %v7555 = vunpack.c.l.b16 %v7307
  %v7556 = vunpack.c.l.b16 %v7308
  %v7557 = vunpack.c.l.b16 %v7309
  %v7558 = vunpack.c.l.b16 %v7310
  %v7559 = vunpack.c.l.b16 %v7311
  %v7560 = vunpack.c.l.b16 %v7312
  %v7561 = vunpack.c.l.b16 %v7313
  %v7562 = vunpack.c.l.b16 %v7314
  %v7563 = vunpack.c.l.b16 %v7315
  %v7564 = vunpack.c.l.b16 %v7316
  %v7565 = vunpack.c.l.b16 %v7317
  %v7566 = vunpack.c.l.b16 %v7318
  %v7567 = vunpack.c.l.b16 %v7319
  %v7568 = vunpack.c.l.b16 %v7320
  %v7569 = vunpack.c.l.b16 %v7321
  %v7570 = vunpack.c.l.b16 %v7322
  %v7571 = vunpack.c.l.b16 %v7323
  %v7572 = vunpack.c.l.b16 %v7324
  %v7573 = vunpack.c.l.b16 %v7325
  %v7574 = vunpack.c.l.b16 %v7326
  %v7575 = vunpack.c.l.b16 %v7327
  %v7576 = vunpack.c.l.b16 %v7328
  %v7577 = vunpack.c.l.b16 %v7329
  %v7578 = vunpack.c.l.b16 %v7330
  %v7579 = vunpack.c.l.b16 %v7331
  %v7580 = vunpack.c.l.b16 %v7332
  %v7581 = vunpack.c.l.b16 %v7333
  %v7582 = vunpack.c.l.b16 %v7334
  %v7583 = vunpack.c.l.b16 %v7335
  %v7584 = vunpack.c.l.b16 %v7336
  %v7585 = vunpack.c.l.b16 %v7337
  %v7586 = vunpack.c.l.b16 %v7338
  %v7587 = vunpack.c.l.b16 %v7339
  %v7588 = vunpack.c.l.b16 %v7340
  %v7589 = vunpack.c.l.b16 %v7341
  %v7590 = vunpack.c.l.b16 %v7342
  %v7591 = vunpack.c.l.b16 %v7343
  %v7592 = vunpack.c.l.b16 %v7344
  %v7593 = vunpack.c.l.b16 %v7345
  %v7594 = vunpack.c.l.b16 %v7346
  %v7595 = vunpack.c.l.b16 %v7347
  %v7596 = vunpack.c.l.b16 %v7348
  %v7597 = vunpack.c.l.b16 %v7349
  %v7598 = vunpack.c.l.b16 %v7350
  %v7599 = vunpack.c.l.b16 %v7351
  %v7600 = vunpack.c.l.b16 %v7352
  %v7601 = vunpack.c.l.b16 %v7353
  %v7602 = vunpack.c.l.b16 %v7354
  %v7603 = vunpack.c.l.b16 %v7355
  %v7604 = vunpack.c.l.b16 %v7356
  %v7605 = vunpack.c.l.b16 %v7357
  %v7606 = vunpack.c.l.b16 %v7358
  %v7607 = vunpack.c.l.b16 %v7359
  %v7608 = vunpack.c.l.b16 %v7360
  %v7609 = vunpack.c.l.b16 %v7361
  %v7610 = vunpack.c.l.b16 %v7362
  %v7611 = vunpack.c.l.b16 %v7363
  %v7612 = vunpack.c.l.b16 %v7364
  %v7613 = vunpack.c.l.b16 %v7365
  %v7614 = vunpack.c.l.b16 %v7366
  %v7615 = vunpack.c.l.b16 %v7367
  %v7616 = vunpack.c.l.b16 %v7368
  %v7617 = vunpack.c.l.b16 %v7369
  %v7618 = vunpack.c.l.b16 %v7370
  %v7619 = vunpack.c.l.b16 %v7371
  %v7620 = vunpack.c.l.b16 %v7372
  %v7621 = vunpack.c.l.b16 %v7373
  %v7622 = vunpack.c.l.b16 %v7374
  %v7623 = vpack.c.b16 %v7530, %v7529
  %v7624 = vpack.c.b16 %v7532, %v7531
  %v7625 = vpack.c.b16 %v7534, %v7533
  %v7626 = vpack.c.b16 %v7536, %v7535
  %v7627 = vpack.c.b16 %v7538, %v7537
  %v7628 = vpack.c.b16 %v7540, %v7539
  %v7629 = vpack.c.b16 %v7542, %v7541
  %v7630 = vpack.c.b16 %v7544, %v7543
  %v7631 = vpack.c.b16 %v7546, %v7545
  %v7632 = vpack.c.b16 %v7548, %v7547
  %v7633 = vpack.c.b16 %v7550, %v7549
  %v7634 = vpack.c.b16 %v7552, %v7551
  %v7635 = vpack.c.b16 %v7554, %v7553
  %v7636 = vpack.c.b16 %v7556, %v7555
  %v7637 = vpack.c.b16 %v7558, %v7557
  %v7638 = vpack.c.b16 %v7560, %v7559
  %v7639 = vpack.c.b16 %v7562, %v7561
  %v7640 = vpack.c.b16 %v7564, %v7563
  %v7641 = vpack.c.b16 %v7566, %v7565
  %v7642 = vpack.c.b16 %v7568, %v7567
  %v7643 = vpack.c.b16 %v7570, %v7569
  %v7644 = vpack.c.b16 %v7572, %v7571
  %v7645 = vpack.c.b16 %v7574, %v7573
  %v7646 = vpack.c.b16 %v7576, %v7575
  %v7647 = vpack.c.b16 %v7578, %v7577
  %v7648 = vpack.c.b16 %v7580, %v7579
  %v7649 = vpack.c.b16 %v7582, %v7581
  %v7650 = vpack.c.b16 %v7584, %v7583
  %v7651 = vpack.c.b16 %v7586, %v7585
  %v7652 = vpack.c.b16 %v7588, %v7587
  %v7653 = vpack.c.b16 %v7590, %v7589
  %v7654 = vpack.c.b16 %v7592, %v7591
  %v7655 = vpack.c.b16 %v7594, %v7593
  %v7656 = vpack.c.b16 %v7596, %v7595
  %v7657 = vpack.c.b16 %v7598, %v7597
  %v7658 = vpack.c.b16 %v7600, %v7599
  %v7659 = vpack.c.b16 %v7602, %v7601
  %v7660 = vpack.c.b16 %v7604, %v7603
  %v7661 = vpack.c.b16 %v7606, %v7605
  %v7662 = vpack.c.b16 %v7608, %v7607
  %v7663 = vpack.c.b16 %v7610, %v7609
  %v7664 = vpack.c.b16 %v7612, %v7611
  %v7665 = vpack.c.b16 %v7614, %v7613
  %v7666 = vpack.c.b16 %v7616, %v7615
  %v7667 = vpack.c.b16 %v7618, %v7617
  %v7668 = vpack.c.b16 %v7620, %v7619
  %v7669 = vpack.c.b16 %v7622, %v7621
  %v7718 = vsel %vm539, %v7412, 0
  %v7721 = vsel %vm539, %v7424, 0
  %7723 = vmatpush.bf16.msra.mxu0 %v7630
  %7724 = vmatpush.bf16.msra.mxu0 %v7629
  %7725 = vmatpush.bf16.msra.mxu0 %v7628
  %7726 = vmatpush.bf16.msra.mxu0 %v7627
  %7727 = vmatpush.bf16.msra.mxu0 %v7626
  %7728 = vmatpush.bf16.msra.mxu0 %v7625
  %7729 = vmatpush.bf16.msra.mxu0 %v7624
  %7730 = vmatpush.bf16.msra.mxu0 %v7623
  %7731 = vmatmul.bf16.gmra.mxu0 %v7397
  %v7732 = vpop.f32.mrf.mxu0
  %v7733 = vadd.f32 %v7378, %v7732
  %v7734 = vpop.f32.mrf.mxu0
  %v7735 = vadd.f32 %v7378, %v7734
  %7736 = vmatmul.bf16.gmra.mxu0 %v7414
  %v7737 = vpop.f32.mrf.mxu0
  %v7738 = vadd.f32 %v7378, %v7737
  %v7739 = vpop.f32.mrf.mxu0
  %v7740 = vadd.f32 %v7378, %v7739
  %7741 = vdwg.mxu0
  %7742 = vmatpush.bf16.msra.mxu0 %v7638
  %7743 = vmatpush.bf16.msra.mxu0 %v7637
  %7744 = vmatpush.bf16.msra.mxu0 %v7636
  %7745 = vmatpush.bf16.msra.mxu0 %v7635
  %7746 = vmatpush.bf16.msra.mxu0 %v7634
  %7747 = vmatpush.bf16.msra.mxu0 %v7633
  %7748 = vmatpush.bf16.msra.mxu0 %v7632
  %7749 = vmatpush.bf16.msra.mxu0 %v7631
  %7750 = vmatmul.bf16.gmra.mxu0 %v7400
  %v7751 = vpop.f32.mrf.mxu0
  %v7752 = vadd.f32 %v7733, %v7751
  %v7753 = vpop.f32.mrf.mxu0
  %v7754 = vadd.f32 %v7735, %v7753
  %7755 = vmatmul.bf16.gmra.mxu0 %v7416
  %v7756 = vpop.f32.mrf.mxu0
  %v7757 = vadd.f32 %v7738, %v7756
  %v7758 = vpop.f32.mrf.mxu0
  %v7759 = vadd.f32 %v7740, %v7758
  %7760 = vdwg.mxu0
  %7761 = vmatpush.bf16.msra.mxu0 %v7646
  %7762 = vmatpush.bf16.msra.mxu0 %v7645
  %7763 = vmatpush.bf16.msra.mxu0 %v7644
  %7764 = vmatpush.bf16.msra.mxu0 %v7643
  %7765 = vmatpush.bf16.msra.mxu0 %v7642
  %7766 = vmatpush.bf16.msra.mxu0 %v7641
  %7767 = vmatpush.bf16.msra.mxu0 %v7640
  %7768 = vmatpush.bf16.msra.mxu0 %v7639
  %7769 = vmatmul.bf16.gmra.mxu0 %v7403
  %v7770 = vpop.f32.mrf.mxu0
  %v7771 = vadd.f32 %v7752, %v7770
  %v7772 = vpop.f32.mrf.mxu0
  %v7773 = vadd.f32 %v7754, %v7772
  %7774 = vmatmul.bf16.gmra.mxu0 %v7418
  %v7775 = vpop.f32.mrf.mxu0
  %v7776 = vadd.f32 %v7757, %v7775
  %v7777 = vpop.f32.mrf.mxu0
  %v7778 = vadd.f32 %v7759, %v7777
  %7779 = vdwg.mxu0
  %7780 = vmatpush.bf16.msra.mxu0 %v7654
  %7781 = vmatpush.bf16.msra.mxu0 %v7653
  %7782 = vmatpush.bf16.msra.mxu0 %v7652
  %7783 = vmatpush.bf16.msra.mxu0 %v7651
  %7784 = vmatpush.bf16.msra.mxu0 %v7650
  %7785 = vmatpush.bf16.msra.mxu0 %v7649
  %7786 = vmatpush.bf16.msra.mxu0 %v7648
  %7787 = vmatpush.bf16.msra.mxu0 %v7647
  %7788 = vmatmul.bf16.gmra.mxu0 %v7406
  %v7789 = vpop.f32.mrf.mxu0
  %v7790 = vadd.f32 %v7771, %v7789
  %v7791 = vpop.f32.mrf.mxu0
  %v7792 = vadd.f32 %v7773, %v7791
  %7793 = vmatmul.bf16.gmra.mxu0 %v7420
  %v7794 = vpop.f32.mrf.mxu0
  %v7795 = vadd.f32 %v7776, %v7794
  %v7796 = vpop.f32.mrf.mxu0
  %v7797 = vadd.f32 %v7778, %v7796
  %7798 = vdwg.mxu0
  %7799 = vmatpush.bf16.msra.mxu0 %v7662
  %7800 = vmatpush.bf16.msra.mxu0 %v7661
  %7801 = vmatpush.bf16.msra.mxu0 %v7660
  %7802 = vmatpush.bf16.msra.mxu0 %v7659
  %7803 = vmatpush.bf16.msra.mxu0 %v7658
  %7804 = vmatpush.bf16.msra.mxu0 %v7657
  %7805 = vmatpush.bf16.msra.mxu0 %v7656
  %7806 = vmatpush.bf16.msra.mxu0 %v7655
  %7807 = vmatmul.bf16.gmra.mxu0 %v7409
  %v7808 = vpop.f32.mrf.mxu0
  %v7809 = vadd.f32 %v7790, %v7808
  %v7810 = vpop.f32.mrf.mxu0
  %v7811 = vadd.f32 %v7792, %v7810
  %7812 = vmatmul.bf16.gmra.mxu0 %v7422
  %v7813 = vpop.f32.mrf.mxu0
  %v7814 = vadd.f32 %v7795, %v7813
  %v7815 = vpop.f32.mrf.mxu0
  %v7816 = vadd.f32 %v7797, %v7815
  %7817 = vdwg.mxu0
  %7818 = vmatpush.bf16.msra.mxu0 0
  %7819 = vmatpush.bf16.msra.mxu0 %v7669
  %7820 = vmatpush.bf16.msra.mxu0 %v7668
  %7821 = vmatpush.bf16.msra.mxu0 %v7667
  %7822 = vmatpush.bf16.msra.mxu0 %v7666
  %7823 = vmatpush.bf16.msra.mxu0 %v7665
  %7824 = vmatpush.bf16.msra.mxu0 %v7664
  %7825 = vmatpush.bf16.msra.mxu0 %v7663
  %7826 = vmatmul.bf16.gmra.mxu0 %v7718
  %v7827 = vpop.f32.mrf.mxu0
  %v7828 = vadd.f32 %v7809, %v7827
  %v7829 = vpop.f32.mrf.mxu0
  %v7830 = vadd.f32 %v7811, %v7829
  %7831 = vmatmul.bf16.gmra.mxu0 %v7721
  %v7832 = vpop.f32.mrf.mxu0
  %v7833 = vadd.f32 %v7814, %v7832
  %v7834 = vpop.f32.mrf.mxu0
  %v7835 = vadd.f32 %v7816, %v7834
  %7836 = vdwg.mxu0
  %v7837 = vmax.f32 %v7828, 0.0
  %v7838 = vmax.f32 %v7830, 0.0
  %v7839 = vmax.f32 %v7833, 0.0
  %v7840 = vmax.f32 %v7835, 0.0
  %v7841 = vpack.c.bf16 %v7838, %v7837
  %v7842 = vpack.c.bf16 %v7840, %v7839
  %s7843 = scalar_lea.vmem %s1, 320
  %v7844 = vld [vmem:[%s7843] sm:$0xf]
  %v7845 = vld [vmem:[%s7843 + $0x4] sm:$0xf]
  %v7846 = vld [vmem:[%s7843 + $0x8] sm:$0xf]
  %v7847 = vld [vmem:[%s7843 + $0xc] sm:$0xf]
  %v7848 = vld [vmem:[%s7843 + $0x10] sm:$0xf]
  %v7849 = vld [vmem:[%s7843 + $0x14] sm:$0xf]
  %v7850 = vld [vmem:[%s7843 + $0x18] sm:$0xf]
  %v7851 = vld [vmem:[%s7843 + $0x1c] sm:$0xf]
  %v7852 = vld [vmem:[%s7843 + $0x20] sm:$0xf]
  %v7853 = vld [vmem:[%s7843 + $0x24] sm:$0xf]
  %v7854 = vld [vmem:[%s7843 + $0x28] sm:$0xf]
  %v7855 = vld [vmem:[%s7843 + $0x2c] sm:$0xf]
  %v7856 = vld [vmem:[%s7843 + $0x30] sm:$0xf]
  %v7857 = vld [vmem:[%s7843 + $0x34] sm:$0xf]
  %v7858 = vld [vmem:[%s7843 + $0x38] sm:$0xf]
  %v7859 = vld [vmem:[%s7843 + $0x3c] sm:$0xf]
  %s7860 = scalar_lea.vmem %s2, 5
  %v7861 = vld [vmem:[%s7860] sm:$0x1]
  %v7863 = vperm.slane %v7861, 0
  %v7881 = vunpack.c.l.b16 %v7844
  %v7882 = vunpack.c.l.b16 %v7845
  %v7883 = vunpack.c.l.b16 %v7846
  %v7884 = vunpack.c.l.b16 %v7847
  %v7885 = vunpack.c.l.b16 %v7848
  %v7886 = vunpack.c.l.b16 %v7849
  %v7887 = vunpack.c.l.b16 %v7850
  %v7888 = vunpack.c.l.b16 %v7851
  %v7889 = vunpack.c.l.b16 %v7852
  %v7890 = vunpack.c.l.b16 %v7853
  %v7891 = vunpack.c.l.b16 %v7854
  %v7892 = vunpack.c.l.b16 %v7855
  %v7893 = vunpack.c.l.b16 %v7856
  %v7894 = vunpack.c.l.b16 %v7857
  %v7895 = vunpack.c.l.b16 %v7858
  %v7896 = vunpack.c.l.b16 %v7859
  %v7897 = vpack.c.b16 %v7882, %v7881
  %v7898 = vpack.c.b16 %v7884, %v7883
  %v7899 = vpack.c.b16 %v7886, %v7885
  %v7900 = vpack.c.b16 %v7888, %v7887
  %v7901 = vpack.c.b16 %v7890, %v7889
  %v7902 = vpack.c.b16 %v7892, %v7891
  %v7903 = vpack.c.b16 %v7894, %v7893
  %v7904 = vpack.c.b16 %v7896, %v7895
  %7913 = vmatpush.bf16.msra.mxu0 %v7904
  %7914 = vmatpush.bf16.msra.mxu0 %v7903
  %7915 = vmatpush.bf16.msra.mxu0 %v7902
  %7916 = vmatpush.bf16.msra.mxu0 %v7901
  %7917 = vmatpush.bf16.msra.mxu0 %v7900
  %7918 = vmatpush.bf16.msra.mxu0 %v7899
  %7919 = vmatpush.bf16.msra.mxu0 %v7898
  %7920 = vmatpush.bf16.msra.mxu0 %v7897
  %7921 = vmatmul.bf16.gmra.mxu0 %v7841
  %v7922 = vpop.f32.mrf.mxu0
  %v7923 = vadd.f32 %v7863, %v7922
  %v7924 = vpop.f32.mrf.mxu0
  %v7925 = vadd.f32 %v7863, %v7924
  %7926 = vmatmul.bf16.gmra.mxu0 %v7842
  %v7927 = vpop.f32.mrf.mxu0
  %v7928 = vadd.f32 %v7863, %v7927
  %v7929 = vpop.f32.mrf.mxu0
  %v7930 = vadd.f32 %v7863, %v7929
  %7931 = vdwg.mxu0
  %v7932 = vpack.c.bf16 %v7923, %v7923
  %v7933 = vpack.c.bf16 %v7925, %v7925
  %v7934 = vpack.c.bf16 %v7928, %v7928
  %v7935 = vpack.c.bf16 %v7930, %v7930
  %7936 = vst.msk [vmem:[#allocation2 + $0x18] sm:$0xf] %vm33, %v7932
  %7937 = vst.msk [vmem:[#allocation2 + $0x1c] sm:$0xf] %vm33, %v7933
  %7938 = vst.msk [vmem:[#allocation2 + $0x20] sm:$0xf] %vm33, %v7934
  %7939 = vst.msk [vmem:[#allocation2 + $0x24] sm:$0xf] %vm33, %v7935
  %v7944 = vrot.slane %v7837, 6
  %v7945 = vrot.slane %v7838, 6
  %v7946 = vsel %vm159, %v7944, %v7945
  %v7947 = vrot.slane %v7839, 6
  %v7948 = vsel %vm159, %v7945, %v7947
  %v7949 = vrot.slane %v7840, 6
  %v7950 = vsel %vm159, %v7947, %v7949
  %v7955 = vsel %vm159, %v7837, %v7944
  %v7956 = vrot.slane %v7837, 2
  %v7957 = vrot.slane %v7838, 2
  %v7958 = vsel %vm172, %v7956, %v7957
  %v7959 = vrot.slane %v7839, 2
  %v7960 = vsel %vm172, %v7957, %v7959
  %v7961 = vrot.slane %v7840, 2
  %v7962 = vsel %vm172, %v7959, %v7961
  %v7967 = vsel %vm172, %v7961, %v7840
  %v7968 = vmax.f32 %v7955, %v7837
  %v7969 = vmax.f32 %v7946, %v7838
  %v7970 = vmax.f32 %v7948, %v7839
  %v7971 = vmax.f32 %v7950, %v7840
  %v7972 = vmax.f32 %v7968, %v7958
  %v7973 = vmax.f32 %v7969, %v7960
  %v7974 = vmax.f32 %v7970, %v7962
  %v7975 = vmax.f32 %v7971, %v7967
  %v7976 = vpack.c.bf16 %v7972, %v7972
  %v7977 = vpack.c.bf16 %v7973, %v7973
  %v7978 = vpack.c.bf16 %v7974, %v7974
  %v7979 = vpack.c.bf16 %v7975, %v7975
  %v7980 = vld [vmem:[#allocation2 + $0x4] sm:$0xe]
  %v7981 = vld [vmem:[#allocation2 + $0x8] sm:$0xf]
  %v7982 = vld [vmem:[#allocation2 + $0xc] sm:$0xf]
  %v7983 = vld [vmem:[#allocation2 + $0x10] sm:$0xf]
  %v7984 = vld [vmem:[#allocation2 + $0x14] sm:$0x1]
  %v7985 = vld [vmem:[#allocation2 + $0x4] sm:$0xc]
  %v7986 = vld [vmem:[#allocation2 + $0x14] sm:$0x3]
  %v7987 = vld [vmem:[#allocation2 + $0x4] sm:$0x8]
  %v7988 = vld [vmem:[#allocation2 + $0x14] sm:$0x7]
  %v7989 = vld [vmem:[#allocation2 + $0x14] sm:$0xf]
  %v7990 = vld [vmem:[#allocation2 + $0x8] sm:$0xe]
  %v7991 = vld [vmem:[#allocation2 + $0x18] sm:$0x1]
  %v7992 = vld [vmem:[#allocation2 + $0x8] sm:$0xc]
  %v7993 = vld [vmem:[#allocation2 + $0x18] sm:$0x3]
  %v7994 = vld [vmem:[#allocation2 + $0x8] sm:$0x8]
  %v7995 = vld [vmem:[#allocation2 + $0x18] sm:$0x7]
  %v7996 = vld [vmem:[#allocation2 + $0x18] sm:$0xf]
  %v7997 = vld [vmem:[#allocation2 + $0xc] sm:$0xe]
  %v7998 = vld [vmem:[#allocation2 + $0x1c] sm:$0x1]
  %v7999 = vld [vmem:[#allocation2 + $0xc] sm:$0xc]
  %v8000 = vld [vmem:[#allocation2 + $0x1c] sm:$0x3]
  %v8001 = vld [vmem:[#allocation2 + $0xc] sm:$0x8]
  %v8002 = vld [vmem:[#allocation2 + $0x1c] sm:$0x7]
  %v8003 = vld [vmem:[#allocation2 + $0x1c] sm:$0xf]
  %v8004 = vld [vmem:[#allocation2 + $0x10] sm:$0xe]
  %v8005 = vld [vmem:[#allocation2 + $0x20] sm:$0x1]
  %v8006 = vld [vmem:[#allocation2 + $0x10] sm:$0xc]
  %v8007 = vld [vmem:[#allocation2 + $0x20] sm:$0x3]
  %v8008 = vld [vmem:[#allocation2 + $0x10] sm:$0x8]
  %v8009 = vld [vmem:[#allocation2 + $0x20] sm:$0x7]
  %v8010 = vld [vmem:[#allocation2 + $0x20] sm:$0xf]
  %v8011 = vld [vmem:[#allocation2 + $0x14] sm:$0xe]
  %v8012 = vld [vmem:[#allocation2 + $0x24] sm:$0x1]
  %v8013 = vld [vmem:[#allocation2 + $0x14] sm:$0xc]
  %v8014 = vld [vmem:[#allocation2 + $0x24] sm:$0x3]
  %v8015 = vld [vmem:[#allocation2 + $0x14] sm:$0x8]
  %v8016 = vld [vmem:[#allocation2 + $0x24] sm:$0x7]
  %v8017 = vld [vmem:[#allocation2 + $0x24] sm:$0xf]
  %v8018 = vld [vmem:[#allocation2 + $0x18] sm:$0xe]
  %v8019 = vld [vmem:[#allocation2 + $0x28] sm:$0x1]
  %v8020 = vld [vmem:[#allocation2 + $0x18] sm:$0xc]
  %v8021 = vld [vmem:[#allocation2 + $0x28] sm:$0x3]
  %v8022 = vld [vmem:[#allocation2 + $0x18] sm:$0x8]
  %v8023 = vld [vmem:[#allocation2 + $0x28] sm:$0x7]
  %v8024 = vld [vmem:[#allocation2 + $0x28] sm:$0xf]
  %v8025 = vld [vmem:[#allocation2 + $0x1c] sm:$0xe]
  %v8026 = vld [vmem:[#allocation2 + $0x2c] sm:$0x1]
  %v8027 = vld [vmem:[#allocation2 + $0x1c] sm:$0xc]
  %v8028 = vld [vmem:[#allocation2 + $0x2c] sm:$0x3]
  %v8029 = vld [vmem:[#allocation2 + $0x1c] sm:$0x8]
  %v8030 = vld [vmem:[#allocation2 + $0x2c] sm:$0x7]
  %v8031 = vld [vmem:[#allocation2 + $0x2c] sm:$0xf]
  %v8032 = vld [vmem:[#allocation2 + $0x20] sm:$0xe]
  %v8033 = vld [vmem:[#allocation2 + $0x30] sm:$0x1]
  %v8034 = vld [vmem:[#allocation2 + $0x20] sm:$0xc]
  %v8035 = vld [vmem:[#allocation2 + $0x30] sm:$0x3]
  %v8036 = vld [vmem:[#allocation2 + $0x20] sm:$0x8]
  %v8037 = vld [vmem:[#allocation2 + $0x30] sm:$0x7]
  %v8038 = vld [vmem:[#allocation2 + $0x30] sm:$0xf]
  %v8039 = vld [vmem:[#allocation2 + $0x24] sm:$0xe]
  %v8040 = vld [vmem:[#allocation2 + $0x34] sm:$0x1]
  %v8041 = vld [vmem:[#allocation2 + $0x24] sm:$0xc]
  %v8042 = vld [vmem:[#allocation2 + $0x34] sm:$0x3]
  %v8043 = vld [vmem:[#allocation2 + $0x24] sm:$0x8]
  %v8044 = vld [vmem:[#allocation2 + $0x34] sm:$0x7]
  %v8045 = vld [vmem:[#allocation2 + $0x34] sm:$0xf]
  %v8046 = vld [vmem:[#allocation2 + $0x28] sm:$0xe]
  %v8047 = vld [vmem:[#allocation2 + $0x38] sm:$0x1]
  %v8048 = vld [vmem:[#allocation2 + $0x28] sm:$0xc]
  %v8049 = vld [vmem:[#allocation2 + $0x38] sm:$0x3]
  %v8050 = vld [vmem:[#allocation2 + $0x28] sm:$0x8]
  %v8051 = vld [vmem:[#allocation2 + $0x38] sm:$0x7]
  %v8057 = vunpack.c.l.b16 %v7980
  %v8058 = vunpack.c.l.b16 %v7981
  %v8059 = vunpack.c.l.b16 %v7982
  %v8060 = vunpack.c.l.b16 %v7983
  %v8061 = vunpack.c.l.b16 %v7984
  %v8062 = vpack.c.b16 %v8058, %v8057
  %v8063 = vpack.c.b16 %v8060, %v8059
  %v8064 = vpack.c.b16 %v8061, %v8061
  %v8067 = vunpack.c.l.b16 %v7985
  %v8068 = vunpack.c.l.b16 %v7986
  %v8069 = vpack.c.b16 %v8058, %v8067
  %v8070 = vpack.c.b16 %v8068, %v8068
  %v8071 = vrot.slane %v8069, 1
  %v8072 = vrot.slane %v8063, 1
  %v8073 = vsel %vm288, %v8071, %v8072
  %v8074 = vrot.slane %v8070, 1
  %v8075 = vsel %vm288, %v8072, %v8074
  %8076 = vrot.lane.b32.xlu0 %v8073, 16
  %v8077 = vpop.permute.xlu0 %8076
  %8078 = vrot.lane.b32.xlu0 %v8075, 16
  %v8079 = vpop.permute.xlu0 %8078
  %8080 = vrot.lane.b32.xlu0 %v8074, 16
  %v8081 = vpop.permute.xlu0 %8080
  %v8084 = vunpack.c.l.b16 %v7987
  %v8085 = vunpack.c.l.b16 %v7988
  %v8086 = vpack.c.b16 %v8058, %v8084
  %v8087 = vpack.c.b16 %v8085, %v8085
  %v8088 = vrot.slane %v8086, 2
  %v8089 = vrot.slane %v8063, 2
  %v8090 = vsel %vm306, %v8088, %v8089
  %v8091 = vrot.slane %v8087, 2
  %v8092 = vsel %vm306, %v8089, %v8091
  %8093 = vrot.lane.b32.xlu0 %v8090, 32
  %v8094 = vpop.permute.xlu0 %8093
  %8095 = vrot.lane.b32.xlu0 %v8092, 32
  %v8096 = vpop.permute.xlu0 %8095
  %8097 = vrot.lane.b32.xlu0 %v8091, 32
  %v8098 = vpop.permute.xlu0 %8097
  %v8100 = vunpack.c.l.b16 %v7989
  %v8101 = vpack.c.b16 %v8059, %v8058
  %v8102 = vpack.c.b16 %v8100, %v8060
  %v8103 = vrot.slane %v8101, 7
  %v8104 = vrot.slane %v8102, 7
  %v8105 = vsel %vm322, %v8103, %v8104
  %8106 = vrot.lane.b32.xlu0 %v8103, 48
  %v8107 = vpop.permute.xlu0 %8106
  %8108 = vrot.lane.b32.xlu0 %v8105, 48
  %v8109 = vpop.permute.xlu0 %8108
  %8110 = vrot.lane.b32.xlu0 %v8104, 48
  %v8111 = vpop.permute.xlu0 %8110
  %v8114 = vunpack.c.l.b16 %v7990
  %v8115 = vunpack.c.l.b16 %v7991
  %v8116 = vpack.c.b16 %v8059, %v8114
  %v8117 = vpack.c.b16 %v8115, %v8115
  %8118 = vrot.lane.b32.xlu0 %v8116, 64
  %v8119 = vpop.permute.xlu0 %8118
  %8120 = vrot.lane.b32.xlu0 %v8102, 64
  %v8121 = vpop.permute.xlu0 %8120
  %8122 = vrot.lane.b32.xlu0 %v8117, 64
  %v8123 = vpop.permute.xlu0 %8122
  %v8126 = vunpack.c.l.b16 %v7992
  %v8127 = vunpack.c.l.b16 %v7993
  %v8128 = vpack.c.b16 %v8059, %v8126
  %v8129 = vpack.c.b16 %v8127, %v8127
  %v8130 = vrot.slane %v8128, 1
  %v8131 = vrot.slane %v8102, 1
  %v8132 = vsel %vm288, %v8130, %v8131
  %v8133 = vrot.slane %v8129, 1
  %v8134 = vsel %vm288, %v8131, %v8133
  %8135 = vrot.lane.b32.xlu0 %v8132, 80
  %v8136 = vpop.permute.xlu0 %8135
  %8137 = vrot.lane.b32.xlu0 %v8134, 80
  %v8138 = vpop.permute.xlu0 %8137
  %8139 = vrot.lane.b32.xlu0 %v8133, 80
  %v8140 = vpop.permute.xlu0 %8139
  %v8143 = vunpack.c.l.b16 %v7994
  %v8144 = vunpack.c.l.b16 %v7995
  %v8145 = vpack.c.b16 %v8059, %v8143
  %v8146 = vpack.c.b16 %v8144, %v8144
  %v8147 = vrot.slane %v8145, 2
  %v8148 = vrot.slane %v8102, 2
  %v8149 = vsel %vm306, %v8147, %v8148
  %v8150 = vrot.slane %v8146, 2
  %v8151 = vsel %vm306, %v8148, %v8150
  %8152 = vrot.lane.b32.xlu0 %v8149, 96
  %v8153 = vpop.permute.xlu0 %8152
  %8154 = vrot.lane.b32.xlu0 %v8151, 96
  %v8155 = vpop.permute.xlu0 %8154
  %8156 = vrot.lane.b32.xlu0 %v8150, 96
  %v8157 = vpop.permute.xlu0 %8156
  %v8159 = vunpack.c.l.b16 %v7996
  %v8160 = vpack.c.b16 %v8159, %v8100
  %v8161 = vrot.slane %v8063, 7
  %v8162 = vrot.slane %v8160, 7
  %v8163 = vsel %vm322, %v8161, %v8162
  %8164 = vrot.lane.b32.xlu0 %v8161, 112
  %v8165 = vpop.permute.xlu0 %8164
  %8166 = vrot.lane.b32.xlu0 %v8163, 112
  %v8167 = vpop.permute.xlu0 %8166
  %8168 = vrot.lane.b32.xlu0 %v8162, 112
  %v8169 = vpop.permute.xlu0 %8168
  %v8172 = vunpack.c.l.b16 %v7997
  %v8173 = vunpack.c.l.b16 %v7998
  %v8174 = vpack.c.b16 %v8060, %v8172
  %v8175 = vpack.c.b16 %v8173, %v8173
  %v8178 = vunpack.c.l.b16 %v7999
  %v8179 = vunpack.c.l.b16 %v8000
  %v8180 = vpack.c.b16 %v8060, %v8178
  %v8181 = vpack.c.b16 %v8179, %v8179
  %v8182 = vrot.slane %v8180, 1
  %v8183 = vrot.slane %v8160, 1
  %v8184 = vsel %vm288, %v8182, %v8183
  %v8185 = vrot.slane %v8181, 1
  %v8186 = vsel %vm288, %v8183, %v8185
  %8187 = vrot.lane.b32.xlu0 %v8184, 16
  %v8188 = vpop.permute.xlu0 %8187
  %8189 = vrot.lane.b32.xlu0 %v8186, 16
  %v8190 = vpop.permute.xlu0 %8189
  %8191 = vrot.lane.b32.xlu0 %v8185, 16
  %v8192 = vpop.permute.xlu0 %8191
  %v8195 = vunpack.c.l.b16 %v8001
  %v8196 = vunpack.c.l.b16 %v8002
  %v8197 = vpack.c.b16 %v8060, %v8195
  %v8198 = vpack.c.b16 %v8196, %v8196
  %v8199 = vrot.slane %v8197, 2
  %v8200 = vrot.slane %v8160, 2
  %v8201 = vsel %vm306, %v8199, %v8200
  %v8202 = vrot.slane %v8198, 2
  %v8203 = vsel %vm306, %v8200, %v8202
  %8204 = vrot.lane.b32.xlu0 %v8201, 32
  %v8205 = vpop.permute.xlu0 %8204
  %8206 = vrot.lane.b32.xlu0 %v8203, 32
  %v8207 = vpop.permute.xlu0 %8206
  %8208 = vrot.lane.b32.xlu0 %v8202, 32
  %v8209 = vpop.permute.xlu0 %8208
  %v8211 = vunpack.c.l.b16 %v8003
  %v8212 = vpack.c.b16 %v8211, %v8159
  %v8213 = vrot.slane %v8212, 7
  %v8214 = vsel %vm322, %v8104, %v8213
  %8215 = vrot.lane.b32.xlu0 %v8214, 48
  %v8216 = vpop.permute.xlu0 %8215
  %8217 = vrot.lane.b32.xlu0 %v8213, 48
  %v8218 = vpop.permute.xlu0 %8217
  %v8221 = vunpack.c.l.b16 %v8004
  %v8222 = vunpack.c.l.b16 %v8005
  %v8223 = vpack.c.b16 %v8100, %v8221
  %v8224 = vpack.c.b16 %v8222, %v8222
  %8225 = vrot.lane.b32.xlu0 %v8223, 64
  %v8226 = vpop.permute.xlu0 %8225
  %8227 = vrot.lane.b32.xlu0 %v8212, 64
  %v8228 = vpop.permute.xlu0 %8227
  %8229 = vrot.lane.b32.xlu0 %v8224, 64
  %v8230 = vpop.permute.xlu0 %8229
  %v8233 = vunpack.c.l.b16 %v8006
  %v8234 = vunpack.c.l.b16 %v8007
  %v8235 = vpack.c.b16 %v8100, %v8233
  %v8236 = vpack.c.b16 %v8234, %v8234
  %v8237 = vrot.slane %v8235, 1
  %v8238 = vrot.slane %v8212, 1
  %v8239 = vsel %vm288, %v8237, %v8238
  %v8240 = vrot.slane %v8236, 1
  %v8241 = vsel %vm288, %v8238, %v8240
  %8242 = vrot.lane.b32.xlu0 %v8239, 80
  %v8243 = vpop.permute.xlu0 %8242
  %8244 = vrot.lane.b32.xlu0 %v8241, 80
  %v8245 = vpop.permute.xlu0 %8244
  %8246 = vrot.lane.b32.xlu0 %v8240, 80
  %v8247 = vpop.permute.xlu0 %8246
  %v8250 = vunpack.c.l.b16 %v8008
  %v8251 = vunpack.c.l.b16 %v8009
  %v8252 = vpack.c.b16 %v8100, %v8250
  %v8253 = vpack.c.b16 %v8251, %v8251
  %v8254 = vrot.slane %v8252, 2
  %v8255 = vrot.slane %v8212, 2
  %v8256 = vsel %vm306, %v8254, %v8255
  %v8257 = vrot.slane %v8253, 2
  %v8258 = vsel %vm306, %v8255, %v8257
  %8259 = vrot.lane.b32.xlu0 %v8256, 96
  %v8260 = vpop.permute.xlu0 %8259
  %8261 = vrot.lane.b32.xlu0 %v8258, 96
  %v8262 = vpop.permute.xlu0 %8261
  %8263 = vrot.lane.b32.xlu0 %v8257, 96
  %v8264 = vpop.permute.xlu0 %8263
  %v8266 = vunpack.c.l.b16 %v8010
  %v8267 = vpack.c.b16 %v8266, %v8211
  %v8268 = vrot.slane %v8267, 7
  %v8269 = vsel %vm322, %v8162, %v8268
  %8270 = vrot.lane.b32.xlu0 %v8269, 112
  %v8271 = vpop.permute.xlu0 %8270
  %8272 = vrot.lane.b32.xlu0 %v8268, 112
  %v8273 = vpop.permute.xlu0 %8272
  %v8276 = vsel %vm494, %v8062, %v8077
  %v8279 = vsel %vm494, %v8063, %v8079
  %v8282 = vsel %vm494, %v8064, %v8081
  %v8284 = vsel %vm504, %v8276, %v8094
  %v8286 = vsel %vm504, %v8279, %v8096
  %v8288 = vsel %vm504, %v8282, %v8098
  %v8290 = vsel %vm511, %v8284, %v8107
  %v8292 = vsel %vm511, %v8286, %v8109
  %v8294 = vsel %vm511, %v8288, %v8111
  %v8296 = vsel %vm518, %v8290, %v8119
  %v8298 = vsel %vm518, %v8292, %v8121
  %v8300 = vsel %vm518, %v8294, %v8123
  %v8302 = vsel %vm525, %v8296, %v8136
  %v8304 = vsel %vm525, %v8298, %v8138
  %v8306 = vsel %vm525, %v8300, %v8140
  %v8308 = vsel %vm532, %v8302, %v8153
  %v8310 = vsel %vm532, %v8304, %v8155
  %v8312 = vsel %vm532, %v8306, %v8157
  %v8314 = vsel %vm539, %v8308, %v8165
  %v8316 = vsel %vm539, %v8310, %v8167
  %v8318 = vsel %vm539, %v8312, %v8169
  %v8321 = vsel %vm494, %v8174, %v8188
  %v8324 = vsel %vm494, %v8160, %v8190
  %v8327 = vsel %vm494, %v8175, %v8192
  %v8329 = vsel %vm504, %v8321, %v8205
  %v8331 = vsel %vm504, %v8324, %v8207
  %v8333 = vsel %vm504, %v8327, %v8209
  %v8334 = vsel %vm511, %v8329, %v8111
  %v8336 = vsel %vm511, %v8331, %v8216
  %v8338 = vsel %vm511, %v8333, %v8218
  %v8340 = vsel %vm518, %v8334, %v8226
  %v8342 = vsel %vm518, %v8336, %v8228
  %v8344 = vsel %vm518, %v8338, %v8230
  %v8346 = vsel %vm525, %v8340, %v8243
  %v8348 = vsel %vm525, %v8342, %v8245
  %v8350 = vsel %vm525, %v8344, %v8247
  %v8352 = vsel %vm532, %v8346, %v8260
  %v8354 = vsel %vm532, %v8348, %v8262
  %v8356 = vsel %vm532, %v8350, %v8264
  %v8357 = vsel %vm539, %v8352, %v8169
  %v8359 = vsel %vm539, %v8354, %v8271
  %v8361 = vsel %vm539, %v8356, %v8273
  %v8364 = vunpack.c.l.b16 %v8011
  %v8365 = vunpack.c.l.b16 %v8012
  %v8366 = vpack.c.b16 %v8159, %v8364
  %v8367 = vpack.c.b16 %v8365, %v8365
  %v8370 = vunpack.c.l.b16 %v8013
  %v8371 = vunpack.c.l.b16 %v8014
  %v8372 = vpack.c.b16 %v8159, %v8370
  %v8373 = vpack.c.b16 %v8371, %v8371
  %v8374 = vrot.slane %v8372, 1
  %v8375 = vrot.slane %v8267, 1
  %v8376 = vsel %vm288, %v8374, %v8375
  %v8377 = vrot.slane %v8373, 1
  %v8378 = vsel %vm288, %v8375, %v8377
  %8379 = vrot.lane.b32.xlu0 %v8376, 16
  %v8380 = vpop.permute.xlu0 %8379
  %8381 = vrot.lane.b32.xlu0 %v8378, 16
  %v8382 = vpop.permute.xlu0 %8381
  %8383 = vrot.lane.b32.xlu0 %v8377, 16
  %v8384 = vpop.permute.xlu0 %8383
  %v8387 = vunpack.c.l.b16 %v8015
  %v8388 = vunpack.c.l.b16 %v8016
  %v8389 = vpack.c.b16 %v8159, %v8387
  %v8390 = vpack.c.b16 %v8388, %v8388
  %v8391 = vrot.slane %v8389, 2
  %v8392 = vrot.slane %v8267, 2
  %v8393 = vsel %vm306, %v8391, %v8392
  %v8394 = vrot.slane %v8390, 2
  %v8395 = vsel %vm306, %v8392, %v8394
  %8396 = vrot.lane.b32.xlu0 %v8393, 32
  %v8397 = vpop.permute.xlu0 %8396
  %8398 = vrot.lane.b32.xlu0 %v8395, 32
  %v8399 = vpop.permute.xlu0 %8398
  %8400 = vrot.lane.b32.xlu0 %v8394, 32
  %v8401 = vpop.permute.xlu0 %8400
  %v8403 = vunpack.c.l.b16 %v8017
  %v8404 = vpack.c.b16 %v8403, %v8266
  %v8405 = vrot.slane %v8404, 7
  %v8406 = vsel %vm322, %v8213, %v8405
  %8407 = vrot.lane.b32.xlu0 %v8406, 48
  %v8408 = vpop.permute.xlu0 %8407
  %8409 = vrot.lane.b32.xlu0 %v8405, 48
  %v8410 = vpop.permute.xlu0 %8409
  %v8413 = vunpack.c.l.b16 %v8018
  %v8414 = vunpack.c.l.b16 %v8019
  %v8415 = vpack.c.b16 %v8211, %v8413
  %v8416 = vpack.c.b16 %v8414, %v8414
  %8417 = vrot.lane.b32.xlu0 %v8415, 64
  %v8418 = vpop.permute.xlu0 %8417
  %8419 = vrot.lane.b32.xlu0 %v8404, 64
  %v8420 = vpop.permute.xlu0 %8419
  %8421 = vrot.lane.b32.xlu0 %v8416, 64
  %v8422 = vpop.permute.xlu0 %8421
  %v8425 = vunpack.c.l.b16 %v8020
  %v8426 = vunpack.c.l.b16 %v8021
  %v8427 = vpack.c.b16 %v8211, %v8425
  %v8428 = vpack.c.b16 %v8426, %v8426
  %v8429 = vrot.slane %v8427, 1
  %v8430 = vrot.slane %v8404, 1
  %v8431 = vsel %vm288, %v8429, %v8430
  %v8432 = vrot.slane %v8428, 1
  %v8433 = vsel %vm288, %v8430, %v8432
  %8434 = vrot.lane.b32.xlu0 %v8431, 80
  %v8435 = vpop.permute.xlu0 %8434
  %8436 = vrot.lane.b32.xlu0 %v8433, 80
  %v8437 = vpop.permute.xlu0 %8436
  %8438 = vrot.lane.b32.xlu0 %v8432, 80
  %v8439 = vpop.permute.xlu0 %8438
  %v8442 = vunpack.c.l.b16 %v8022
  %v8443 = vunpack.c.l.b16 %v8023
  %v8444 = vpack.c.b16 %v8211, %v8442
  %v8445 = vpack.c.b16 %v8443, %v8443
  %v8446 = vrot.slane %v8444, 2
  %v8447 = vrot.slane %v8404, 2
  %v8448 = vsel %vm306, %v8446, %v8447
  %v8449 = vrot.slane %v8445, 2
  %v8450 = vsel %vm306, %v8447, %v8449
  %8451 = vrot.lane.b32.xlu0 %v8448, 96
  %v8452 = vpop.permute.xlu0 %8451
  %8453 = vrot.lane.b32.xlu0 %v8450, 96
  %v8454 = vpop.permute.xlu0 %8453
  %8455 = vrot.lane.b32.xlu0 %v8449, 96
  %v8456 = vpop.permute.xlu0 %8455
  %v8458 = vunpack.c.l.b16 %v8024
  %v8459 = vpack.c.b16 %v8458, %v8403
  %v8460 = vrot.slane %v8459, 7
  %v8461 = vsel %vm322, %v8268, %v8460
  %8462 = vrot.lane.b32.xlu0 %v8461, 112
  %v8463 = vpop.permute.xlu0 %8462
  %8464 = vrot.lane.b32.xlu0 %v8460, 112
  %v8465 = vpop.permute.xlu0 %8464
  %v8468 = vunpack.c.l.b16 %v8025
  %v8469 = vunpack.c.l.b16 %v8026
  %v8470 = vpack.c.b16 %v8266, %v8468
  %v8471 = vpack.c.b16 %v8469, %v8469
  %v8474 = vunpack.c.l.b16 %v8027
  %v8475 = vunpack.c.l.b16 %v8028
  %v8476 = vpack.c.b16 %v8266, %v8474
  %v8477 = vpack.c.b16 %v8475, %v8475
  %v8478 = vrot.slane %v8476, 1
  %v8479 = vrot.slane %v8459, 1
  %v8480 = vsel %vm288, %v8478, %v8479
  %v8481 = vrot.slane %v8477, 1
  %v8482 = vsel %vm288, %v8479, %v8481
  %8483 = vrot.lane.b32.xlu0 %v8480, 16
  %v8484 = vpop.permute.xlu0 %8483
  %8485 = vrot.lane.b32.xlu0 %v8482, 16
  %v8486 = vpop.permute.xlu0 %8485
  %8487 = vrot.lane.b32.xlu0 %v8481, 16
  %v8488 = vpop.permute.xlu0 %8487
  %v8491 = vunpack.c.l.b16 %v8029
  %v8492 = vunpack.c.l.b16 %v8030
  %v8493 = vpack.c.b16 %v8266, %v8491
  %v8494 = vpack.c.b16 %v8492, %v8492
  %v8495 = vrot.slane %v8493, 2
  %v8496 = vrot.slane %v8459, 2
  %v8497 = vsel %vm306, %v8495, %v8496
  %v8498 = vrot.slane %v8494, 2
  %v8499 = vsel %vm306, %v8496, %v8498
  %8500 = vrot.lane.b32.xlu0 %v8497, 32
  %v8501 = vpop.permute.xlu0 %8500
  %8502 = vrot.lane.b32.xlu0 %v8499, 32
  %v8503 = vpop.permute.xlu0 %8502
  %8504 = vrot.lane.b32.xlu0 %v8498, 32
  %v8505 = vpop.permute.xlu0 %8504
  %v8507 = vunpack.c.l.b16 %v8031
  %v8508 = vpack.c.b16 %v8507, %v8458
  %v8509 = vrot.slane %v8508, 7
  %v8510 = vsel %vm322, %v8405, %v8509
  %8511 = vrot.lane.b32.xlu0 %v8510, 48
  %v8512 = vpop.permute.xlu0 %8511
  %8513 = vrot.lane.b32.xlu0 %v8509, 48
  %v8514 = vpop.permute.xlu0 %8513
  %v8517 = vunpack.c.l.b16 %v8032
  %v8518 = vunpack.c.l.b16 %v8033
  %v8519 = vpack.c.b16 %v8403, %v8517
  %v8520 = vpack.c.b16 %v8518, %v8518
  %8521 = vrot.lane.b32.xlu0 %v8519, 64
  %v8522 = vpop.permute.xlu0 %8521
  %8523 = vrot.lane.b32.xlu0 %v8508, 64
  %v8524 = vpop.permute.xlu0 %8523
  %8525 = vrot.lane.b32.xlu0 %v8520, 64
  %v8526 = vpop.permute.xlu0 %8525
  %v8529 = vunpack.c.l.b16 %v8034
  %v8530 = vunpack.c.l.b16 %v8035
  %v8531 = vpack.c.b16 %v8403, %v8529
  %v8532 = vpack.c.b16 %v8530, %v8530
  %v8533 = vrot.slane %v8531, 1
  %v8534 = vrot.slane %v8508, 1
  %v8535 = vsel %vm288, %v8533, %v8534
  %v8536 = vrot.slane %v8532, 1
  %v8537 = vsel %vm288, %v8534, %v8536
  %8538 = vrot.lane.b32.xlu0 %v8535, 80
  %v8539 = vpop.permute.xlu0 %8538
  %8540 = vrot.lane.b32.xlu0 %v8537, 80
  %v8541 = vpop.permute.xlu0 %8540
  %8542 = vrot.lane.b32.xlu0 %v8536, 80
  %v8543 = vpop.permute.xlu0 %8542
  %v8546 = vunpack.c.l.b16 %v8036
  %v8547 = vunpack.c.l.b16 %v8037
  %v8548 = vpack.c.b16 %v8403, %v8546
  %v8549 = vpack.c.b16 %v8547, %v8547
  %v8550 = vrot.slane %v8548, 2
  %v8551 = vrot.slane %v8508, 2
  %v8552 = vsel %vm306, %v8550, %v8551
  %v8553 = vrot.slane %v8549, 2
  %v8554 = vsel %vm306, %v8551, %v8553
  %8555 = vrot.lane.b32.xlu0 %v8552, 96
  %v8556 = vpop.permute.xlu0 %8555
  %8557 = vrot.lane.b32.xlu0 %v8554, 96
  %v8558 = vpop.permute.xlu0 %8557
  %8559 = vrot.lane.b32.xlu0 %v8553, 96
  %v8560 = vpop.permute.xlu0 %8559
  %v8562 = vunpack.c.l.b16 %v8038
  %v8563 = vpack.c.b16 %v8562, %v8507
  %v8564 = vrot.slane %v8563, 7
  %v8565 = vsel %vm322, %v8460, %v8564
  %8566 = vrot.lane.b32.xlu0 %v8565, 112
  %v8567 = vpop.permute.xlu0 %8566
  %8568 = vrot.lane.b32.xlu0 %v8564, 112
  %v8569 = vpop.permute.xlu0 %8568
  %v8572 = vsel %vm494, %v8366, %v8380
  %v8575 = vsel %vm494, %v8267, %v8382
  %v8578 = vsel %vm494, %v8367, %v8384
  %v8580 = vsel %vm504, %v8572, %v8397
  %v8582 = vsel %vm504, %v8575, %v8399
  %v8584 = vsel %vm504, %v8578, %v8401
  %v8585 = vsel %vm511, %v8580, %v8218
  %v8587 = vsel %vm511, %v8582, %v8408
  %v8589 = vsel %vm511, %v8584, %v8410
  %v8591 = vsel %vm518, %v8585, %v8418
  %v8593 = vsel %vm518, %v8587, %v8420
  %v8595 = vsel %vm518, %v8589, %v8422
  %v8597 = vsel %vm525, %v8591, %v8435
  %v8599 = vsel %vm525, %v8593, %v8437
  %v8601 = vsel %vm525, %v8595, %v8439
  %v8603 = vsel %vm532, %v8597, %v8452
  %v8605 = vsel %vm532, %v8599, %v8454
  %v8607 = vsel %vm532, %v8601, %v8456
  %v8608 = vsel %vm539, %v8603, %v8273
  %v8610 = vsel %vm539, %v8605, %v8463
  %v8612 = vsel %vm539, %v8607, %v8465
  %v8615 = vsel %vm494, %v8470, %v8484
  %v8618 = vsel %vm494, %v8459, %v8486
  %v8621 = vsel %vm494, %v8471, %v8488
  %v8623 = vsel %vm504, %v8615, %v8501
  %v8625 = vsel %vm504, %v8618, %v8503
  %v8627 = vsel %vm504, %v8621, %v8505
  %v8628 = vsel %vm511, %v8623, %v8410
  %v8630 = vsel %vm511, %v8625, %v8512
  %v8632 = vsel %vm511, %v8627, %v8514
  %v8634 = vsel %vm518, %v8628, %v8522
  %v8636 = vsel %vm518, %v8630, %v8524
  %v8638 = vsel %vm518, %v8632, %v8526
  %v8640 = vsel %vm525, %v8634, %v8539
  %v8642 = vsel %vm525, %v8636, %v8541
  %v8644 = vsel %vm525, %v8638, %v8543
  %v8646 = vsel %vm532, %v8640, %v8556
  %v8648 = vsel %vm532, %v8642, %v8558
  %v8650 = vsel %vm532, %v8644, %v8560
  %v8651 = vsel %vm539, %v8646, %v8465
  %v8653 = vsel %vm539, %v8648, %v8567
  %v8655 = vsel %vm539, %v8650, %v8569
  %v8658 = vunpack.c.l.b16 %v8039
  %v8659 = vunpack.c.l.b16 %v8040
  %v8660 = vpack.c.b16 %v8458, %v8658
  %v8661 = vpack.c.b16 %v8659, %v8659
  %v8664 = vunpack.c.l.b16 %v8041
  %v8665 = vunpack.c.l.b16 %v8042
  %v8666 = vpack.c.b16 %v8458, %v8664
  %v8667 = vpack.c.b16 %v8665, %v8665
  %v8668 = vrot.slane %v8666, 1
  %v8669 = vrot.slane %v8563, 1
  %v8670 = vsel %vm288, %v8668, %v8669
  %v8671 = vrot.slane %v8667, 1
  %v8672 = vsel %vm288, %v8669, %v8671
  %8673 = vrot.lane.b32.xlu0 %v8670, 16
  %v8674 = vpop.permute.xlu0 %8673
  %8675 = vrot.lane.b32.xlu0 %v8672, 16
  %v8676 = vpop.permute.xlu0 %8675
  %8677 = vrot.lane.b32.xlu0 %v8671, 16
  %v8678 = vpop.permute.xlu0 %8677
  %v8681 = vunpack.c.l.b16 %v8043
  %v8682 = vunpack.c.l.b16 %v8044
  %v8683 = vpack.c.b16 %v8458, %v8681
  %v8684 = vpack.c.b16 %v8682, %v8682
  %v8685 = vrot.slane %v8683, 2
  %v8686 = vrot.slane %v8563, 2
  %v8687 = vsel %vm306, %v8685, %v8686
  %v8688 = vrot.slane %v8684, 2
  %v8689 = vsel %vm306, %v8686, %v8688
  %8690 = vrot.lane.b32.xlu0 %v8687, 32
  %v8691 = vpop.permute.xlu0 %8690
  %8692 = vrot.lane.b32.xlu0 %v8689, 32
  %v8693 = vpop.permute.xlu0 %8692
  %8694 = vrot.lane.b32.xlu0 %v8688, 32
  %v8695 = vpop.permute.xlu0 %8694
  %v8697 = vunpack.c.l.b16 %v8045
  %v8698 = vpack.c.b16 %v8697, %v8562
  %v8699 = vrot.slane %v8698, 7
  %v8700 = vsel %vm322, %v8509, %v8699
  %8701 = vrot.lane.b32.xlu0 %v8700, 48
  %v8702 = vpop.permute.xlu0 %8701
  %8703 = vrot.lane.b32.xlu0 %v8699, 48
  %v8704 = vpop.permute.xlu0 %8703
  %v8707 = vunpack.c.l.b16 %v8046
  %v8708 = vunpack.c.l.b16 %v8047
  %v8709 = vpack.c.b16 %v8507, %v8707
  %v8710 = vpack.c.b16 %v8708, %v8708
  %8711 = vrot.lane.b32.xlu0 %v8709, 64
  %v8712 = vpop.permute.xlu0 %8711
  %8713 = vrot.lane.b32.xlu0 %v8698, 64
  %v8714 = vpop.permute.xlu0 %8713
  %8715 = vrot.lane.b32.xlu0 %v8710, 64
  %v8716 = vpop.permute.xlu0 %8715
  %v8719 = vunpack.c.l.b16 %v8048
  %v8720 = vunpack.c.l.b16 %v8049
  %v8721 = vpack.c.b16 %v8507, %v8719
  %v8722 = vpack.c.b16 %v8720, %v8720
  %v8723 = vrot.slane %v8721, 1
  %v8724 = vrot.slane %v8698, 1
  %v8725 = vsel %vm288, %v8723, %v8724
  %v8726 = vrot.slane %v8722, 1
  %v8727 = vsel %vm288, %v8724, %v8726
  %8728 = vrot.lane.b32.xlu0 %v8725, 80
  %v8729 = vpop.permute.xlu0 %8728
  %8730 = vrot.lane.b32.xlu0 %v8727, 80
  %v8731 = vpop.permute.xlu0 %8730
  %8732 = vrot.lane.b32.xlu0 %v8726, 80
  %v8733 = vpop.permute.xlu0 %8732
  %v8736 = vunpack.c.l.b16 %v8050
  %v8737 = vunpack.c.l.b16 %v8051
  %v8738 = vpack.c.b16 %v8507, %v8736
  %v8739 = vpack.c.b16 %v8737, %v8737
  %v8740 = vrot.slane %v8738, 2
  %v8741 = vrot.slane %v8698, 2
  %v8742 = vsel %vm306, %v8740, %v8741
  %v8743 = vrot.slane %v8739, 2
  %v8744 = vsel %vm306, %v8741, %v8743
  %8745 = vrot.lane.b32.xlu0 %v8742, 96
  %v8746 = vpop.permute.xlu0 %8745
  %8747 = vrot.lane.b32.xlu0 %v8744, 96
  %v8748 = vpop.permute.xlu0 %8747
  %8749 = vrot.lane.b32.xlu0 %v8743, 96
  %v8750 = vpop.permute.xlu0 %8749
  %v8755 = vunpack.c.l.b16 %v7976
  %v8756 = vunpack.c.l.b16 %v7977
  %v8757 = vunpack.c.l.b16 %v7978
  %v8758 = vunpack.c.l.b16 %v7979
  %v8759 = vpack.c.b16 %v8756, %v8755
  %v8760 = vpack.c.b16 %v8758, %v8757
  %v8761 = vrot.slane %v8759, 7
  %v8762 = vrot.slane %v8760, 7
  %v8763 = vsel %vm322, %v8761, %v8762
  %8764 = vrot.lane.b32.xlu0 %v8761, 112
  %v8765 = vpop.permute.xlu0 %8764
  %8766 = vrot.lane.b32.xlu0 %v8763, 112
  %v8767 = vpop.permute.xlu0 %8766
  %8768 = vrot.lane.b32.xlu0 %v8762, 112
  %v8769 = vpop.permute.xlu0 %8768
  %v8772 = vsel %vm494, %v8660, %v8674
  %v8775 = vsel %vm494, %v8563, %v8676
  %v8778 = vsel %vm494, %v8661, %v8678
  %v8780 = vsel %vm504, %v8772, %v8691
  %v8782 = vsel %vm504, %v8775, %v8693
  %v8784 = vsel %vm504, %v8778, %v8695
  %v8785 = vsel %vm511, %v8780, %v8514
  %v8787 = vsel %vm511, %v8782, %v8702
  %v8789 = vsel %vm511, %v8784, %v8704
  %v8791 = vsel %vm518, %v8785, %v8712
  %v8793 = vsel %vm518, %v8787, %v8714
  %v8795 = vsel %vm518, %v8789, %v8716
  %v8797 = vsel %vm525, %v8791, %v8729
  %v8799 = vsel %vm525, %v8793, %v8731
  %v8801 = vsel %vm525, %v8795, %v8733
  %v8803 = vsel %vm532, %v8797, %v8746
  %v8805 = vsel %vm532, %v8799, %v8748
  %v8807 = vsel %vm532, %v8801, %v8750
  %v8809 = vsel %vm539, %v8803, %v8765
  %v8811 = vsel %vm539, %v8805, %v8767
  %v8813 = vsel %vm539, %v8807, %v8769
  %s8814 = scalar_lea.vmem %s3, 1880
  %v8815 = vld [vmem:[%s8814] sm:$0xf]
  %v8816 = vld [vmem:[%s8814 + $0x4] sm:$0xf]
  %v8817 = vld [vmem:[%s8814 + $0x8] sm:$0xf]
  %v8818 = vld [vmem:[%s8814 + $0xc] sm:$0xf]
  %v8819 = vld [vmem:[%s8814 + $0x10] sm:$0xf]
  %v8820 = vld [vmem:[%s8814 + $0x14] sm:$0xf]
  %v8821 = vld [vmem:[%s8814 + $0x18] sm:$0xf]
  %v8822 = vld [vmem:[%s8814 + $0x1c] sm:$0xf]
  %v8823 = vld [vmem:[%s8814 + $0x20] sm:$0xf]
  %v8824 = vld [vmem:[%s8814 + $0x24] sm:$0xf]
  %v8825 = vld [vmem:[%s8814 + $0x28] sm:$0xf]
  %v8826 = vld [vmem:[%s8814 + $0x2c] sm:$0xf]
  %v8827 = vld [vmem:[%s8814 + $0x30] sm:$0xf]
  %v8828 = vld [vmem:[%s8814 + $0x34] sm:$0xf]
  %v8829 = vld [vmem:[%s8814 + $0x38] sm:$0xf]
  %v8830 = vld [vmem:[%s8814 + $0x3c] sm:$0xf]
  %v8831 = vld [vmem:[%s8814 + $0x40] sm:$0xf]
  %v8832 = vld [vmem:[%s8814 + $0x44] sm:$0xf]
  %v8833 = vld [vmem:[%s8814 + $0x48] sm:$0xf]
  %v8834 = vld [vmem:[%s8814 + $0x4c] sm:$0xf]
  %v8835 = vld [vmem:[%s8814 + $0x50] sm:$0xf]
  %v8836 = vld [vmem:[%s8814 + $0x54] sm:$0xf]
  %v8837 = vld [vmem:[%s8814 + $0x58] sm:$0xf]
  %v8838 = vld [vmem:[%s8814 + $0x5c] sm:$0xf]
  %v8839 = vld [vmem:[%s8814 + $0x60] sm:$0xf]
  %v8840 = vld [vmem:[%s8814 + $0x64] sm:$0xf]
  %v8841 = vld [vmem:[%s8814 + $0x68] sm:$0xf]
  %v8842 = vld [vmem:[%s8814 + $0x6c] sm:$0xf]
  %v8843 = vld [vmem:[%s8814 + $0x70] sm:$0xf]
  %v8844 = vld [vmem:[%s8814 + $0x74] sm:$0xf]
  %v8845 = vld [vmem:[%s8814 + $0x78] sm:$0xf]
  %v8846 = vld [vmem:[%s8814 + $0x7c] sm:$0xf]
  %v8847 = vld [vmem:[%s8814 + $0x80] sm:$0xf]
  %v8848 = vld [vmem:[%s8814 + $0x84] sm:$0xf]
  %v8849 = vld [vmem:[%s8814 + $0x88] sm:$0xf]
  %v8850 = vld [vmem:[%s8814 + $0x8c] sm:$0xf]
  %v8851 = vld [vmem:[%s8814 + $0x90] sm:$0xf]
  %v8852 = vld [vmem:[%s8814 + $0x94] sm:$0xf]
  %v8853 = vld [vmem:[%s8814 + $0x98] sm:$0xf]
  %v8854 = vld [vmem:[%s8814 + $0x9c] sm:$0xf]
  %v8855 = vld [vmem:[%s8814 + $0xa0] sm:$0xf]
  %v8856 = vld [vmem:[%s8814 + $0xa4] sm:$0xf]
  %v8857 = vld [vmem:[%s8814 + $0xa8] sm:$0xf]
  %v8858 = vld [vmem:[%s8814 + $0xac] sm:$0xf]
  %v8859 = vld [vmem:[%s8814 + $0xb0] sm:$0xf]
  %v8860 = vld [vmem:[%s8814 + $0xb4] sm:$0xf]
  %v8861 = vld [vmem:[%s8814 + $0xb8] sm:$0xf]
  %v8862 = vld [vmem:[%s8814 + $0xbc] sm:$0xf]
  %v8863 = vld [vmem:[%s8814 + $0xc0] sm:$0xf]
  %v8864 = vld [vmem:[%s8814 + $0xc4] sm:$0xf]
  %v8865 = vld [vmem:[%s8814 + $0xc8] sm:$0xf]
  %v8866 = vld [vmem:[%s8814 + $0xcc] sm:$0xf]
  %v8867 = vld [vmem:[%s8814 + $0xd0] sm:$0xf]
  %v8868 = vld [vmem:[%s8814 + $0xd4] sm:$0xf]
  %v8869 = vld [vmem:[%s8814 + $0xd8] sm:$0xf]
  %v8870 = vld [vmem:[%s8814 + $0xdc] sm:$0xf]
  %v8871 = vld [vmem:[%s8814 + $0xe0] sm:$0xf]
  %v8872 = vld [vmem:[%s8814 + $0xe4] sm:$0xf]
  %v8873 = vld [vmem:[%s8814 + $0xe8] sm:$0xf]
  %v8874 = vld [vmem:[%s8814 + $0xec] sm:$0xf]
  %v8875 = vld [vmem:[%s8814 + $0xf0] sm:$0xf]
  %v8876 = vld [vmem:[%s8814 + $0xf4] sm:$0xf]
  %v8877 = vld [vmem:[%s8814 + $0xf8] sm:$0xf]
  %v8878 = vld [vmem:[%s8814 + $0xfc] sm:$0xf]
  %v8879 = vld [vmem:[%s8814 + $0x100] sm:$0xf]
  %v8880 = vld [vmem:[%s8814 + $0x104] sm:$0xf]
  %v8881 = vld [vmem:[%s8814 + $0x108] sm:$0xf]
  %v8882 = vld [vmem:[%s8814 + $0x10c] sm:$0xf]
  %v8883 = vld [vmem:[%s8814 + $0x110] sm:$0xf]
  %v8884 = vld [vmem:[%s8814 + $0x114] sm:$0xf]
  %v8885 = vld [vmem:[%s8814 + $0x118] sm:$0xf]
  %v8886 = vld [vmem:[%s8814 + $0x11c] sm:$0xf]
  %v8887 = vld [vmem:[%s8814 + $0x120] sm:$0xf]
  %v8888 = vld [vmem:[%s8814 + $0x124] sm:$0xf]
  %v8889 = vld [vmem:[%s8814 + $0x128] sm:$0xf]
  %v8890 = vld [vmem:[%s8814 + $0x12c] sm:$0xf]
  %v8891 = vld [vmem:[%s8814 + $0x130] sm:$0xf]
  %v8892 = vld [vmem:[%s8814 + $0x134] sm:$0xf]
  %v8893 = vld [vmem:[%s8814 + $0x138] sm:$0xf]
  %v8894 = vld [vmem:[%s8814 + $0x13c] sm:$0xf]
  %v8895 = vld [vmem:[%s8814 + $0x140] sm:$0xf]
  %v8896 = vld [vmem:[%s8814 + $0x144] sm:$0xf]
  %v8897 = vld [vmem:[%s8814 + $0x148] sm:$0xf]
  %v8898 = vld [vmem:[%s8814 + $0x14c] sm:$0xf]
  %v8899 = vld [vmem:[%s8814 + $0x150] sm:$0xf]
  %v8900 = vld [vmem:[%s8814 + $0x154] sm:$0xf]
  %v8901 = vld [vmem:[%s8814 + $0x158] sm:$0xf]
  %v8902 = vld [vmem:[%s8814 + $0x15c] sm:$0xf]
  %v8903 = vld [vmem:[%s8814 + $0x160] sm:$0xf]
  %v8904 = vld [vmem:[%s8814 + $0x164] sm:$0xf]
  %v8905 = vld [vmem:[%s8814 + $0x168] sm:$0xf]
  %v8906 = vld [vmem:[%s8814 + $0x16c] sm:$0xf]
  %v8907 = vld [vmem:[%s8814 + $0x170] sm:$0xf]
  %v8908 = vld [vmem:[%s8814 + $0x174] sm:$0xf]
  %s8909 = scalar_lea.vmem %s4, 5
  %v8910 = vld [vmem:[%s8909] sm:$0x1]
  %v8912 = vperm.slane %v8910, 0
  %v8929 = vrot.slane %v8314, 1
  %v8930 = vrot.slane %v8316, 1
  %v8931 = vsel %vm288, %v8929, %v8930
  %v8932 = vrot.slane %v8357, 1
  %v8933 = vrot.slane %v8359, 1
  %v8934 = vsel %vm288, %v8932, %v8933
  %v8935 = vrot.slane %v8608, 1
  %v8936 = vrot.slane %v8610, 1
  %v8937 = vsel %vm288, %v8935, %v8936
  %v8938 = vrot.slane %v8651, 1
  %v8939 = vrot.slane %v8653, 1
  %v8940 = vsel %vm288, %v8938, %v8939
  %v8941 = vrot.slane %v8809, 1
  %v8942 = vrot.slane %v8811, 1
  %v8943 = vsel %vm288, %v8941, %v8942
  %v8944 = vrot.slane %v8765, 1
  %v8945 = vrot.slane %v8767, 1
  %v8946 = vsel %vm288, %v8944, %v8945
  %v8947 = vrot.slane %v8318, 1
  %v8948 = vsel %vm288, %v8930, %v8947
  %v8949 = vrot.slane %v8361, 1
  %v8950 = vsel %vm288, %v8933, %v8949
  %v8951 = vrot.slane %v8612, 1
  %v8952 = vsel %vm288, %v8936, %v8951
  %v8953 = vrot.slane %v8655, 1
  %v8954 = vsel %vm288, %v8939, %v8953
  %v8955 = vrot.slane %v8813, 1
  %v8956 = vsel %vm288, %v8942, %v8955
  %v8957 = vrot.slane %v8769, 1
  %v8958 = vsel %vm288, %v8945, %v8957
  %v9063 = vunpack.c.l.b16 %v8815
  %v9064 = vunpack.c.l.b16 %v8816
  %v9065 = vunpack.c.l.b16 %v8817
  %v9066 = vunpack.c.l.b16 %v8818
  %v9067 = vunpack.c.l.b16 %v8819
  %v9068 = vunpack.c.l.b16 %v8820
  %v9069 = vunpack.c.l.b16 %v8821
  %v9070 = vunpack.c.l.b16 %v8822
  %v9071 = vunpack.c.l.b16 %v8823
  %v9072 = vunpack.c.l.b16 %v8824
  %v9073 = vunpack.c.l.b16 %v8825
  %v9074 = vunpack.c.l.b16 %v8826
  %v9075 = vunpack.c.l.b16 %v8827
  %v9076 = vunpack.c.l.b16 %v8828
  %v9077 = vunpack.c.l.b16 %v8829
  %v9078 = vunpack.c.l.b16 %v8830
  %v9079 = vunpack.c.l.b16 %v8831
  %v9080 = vunpack.c.l.b16 %v8832
  %v9081 = vunpack.c.l.b16 %v8833
  %v9082 = vunpack.c.l.b16 %v8834
  %v9083 = vunpack.c.l.b16 %v8835
  %v9084 = vunpack.c.l.b16 %v8836
  %v9085 = vunpack.c.l.b16 %v8837
  %v9086 = vunpack.c.l.b16 %v8838
  %v9087 = vunpack.c.l.b16 %v8839
  %v9088 = vunpack.c.l.b16 %v8840
  %v9089 = vunpack.c.l.b16 %v8841
  %v9090 = vunpack.c.l.b16 %v8842
  %v9091 = vunpack.c.l.b16 %v8843
  %v9092 = vunpack.c.l.b16 %v8844
  %v9093 = vunpack.c.l.b16 %v8845
  %v9094 = vunpack.c.l.b16 %v8846
  %v9095 = vunpack.c.l.b16 %v8847
  %v9096 = vunpack.c.l.b16 %v8848
  %v9097 = vunpack.c.l.b16 %v8849
  %v9098 = vunpack.c.l.b16 %v8850
  %v9099 = vunpack.c.l.b16 %v8851
  %v9100 = vunpack.c.l.b16 %v8852
  %v9101 = vunpack.c.l.b16 %v8853
  %v9102 = vunpack.c.l.b16 %v8854
  %v9103 = vunpack.c.l.b16 %v8855
  %v9104 = vunpack.c.l.b16 %v8856
  %v9105 = vunpack.c.l.b16 %v8857
  %v9106 = vunpack.c.l.b16 %v8858
  %v9107 = vunpack.c.l.b16 %v8859
  %v9108 = vunpack.c.l.b16 %v8860
  %v9109 = vunpack.c.l.b16 %v8861
  %v9110 = vunpack.c.l.b16 %v8862
  %v9111 = vunpack.c.l.b16 %v8863
  %v9112 = vunpack.c.l.b16 %v8864
  %v9113 = vunpack.c.l.b16 %v8865
  %v9114 = vunpack.c.l.b16 %v8866
  %v9115 = vunpack.c.l.b16 %v8867
  %v9116 = vunpack.c.l.b16 %v8868
  %v9117 = vunpack.c.l.b16 %v8869
  %v9118 = vunpack.c.l.b16 %v8870
  %v9119 = vunpack.c.l.b16 %v8871
  %v9120 = vunpack.c.l.b16 %v8872
  %v9121 = vunpack.c.l.b16 %v8873
  %v9122 = vunpack.c.l.b16 %v8874
  %v9123 = vunpack.c.l.b16 %v8875
  %v9124 = vunpack.c.l.b16 %v8876
  %v9125 = vunpack.c.l.b16 %v8877
  %v9126 = vunpack.c.l.b16 %v8878
  %v9127 = vunpack.c.l.b16 %v8879
  %v9128 = vunpack.c.l.b16 %v8880
  %v9129 = vunpack.c.l.b16 %v8881
  %v9130 = vunpack.c.l.b16 %v8882
  %v9131 = vunpack.c.l.b16 %v8883
  %v9132 = vunpack.c.l.b16 %v8884
  %v9133 = vunpack.c.l.b16 %v8885
  %v9134 = vunpack.c.l.b16 %v8886
  %v9135 = vunpack.c.l.b16 %v8887
  %v9136 = vunpack.c.l.b16 %v8888
  %v9137 = vunpack.c.l.b16 %v8889
  %v9138 = vunpack.c.l.b16 %v8890
  %v9139 = vunpack.c.l.b16 %v8891
  %v9140 = vunpack.c.l.b16 %v8892
  %v9141 = vunpack.c.l.b16 %v8893
  %v9142 = vunpack.c.l.b16 %v8894
  %v9143 = vunpack.c.l.b16 %v8895
  %v9144 = vunpack.c.l.b16 %v8896
  %v9145 = vunpack.c.l.b16 %v8897
  %v9146 = vunpack.c.l.b16 %v8898
  %v9147 = vunpack.c.l.b16 %v8899
  %v9148 = vunpack.c.l.b16 %v8900
  %v9149 = vunpack.c.l.b16 %v8901
  %v9150 = vunpack.c.l.b16 %v8902
  %v9151 = vunpack.c.l.b16 %v8903
  %v9152 = vunpack.c.l.b16 %v8904
  %v9153 = vunpack.c.l.b16 %v8905
  %v9154 = vunpack.c.l.b16 %v8906
  %v9155 = vunpack.c.l.b16 %v8907
  %v9156 = vunpack.c.l.b16 %v8908
  %v9157 = vpack.c.b16 %v9064, %v9063
  %v9158 = vpack.c.b16 %v9066, %v9065
  %v9159 = vpack.c.b16 %v9068, %v9067
  %v9160 = vpack.c.b16 %v9070, %v9069
  %v9161 = vpack.c.b16 %v9072, %v9071
  %v9162 = vpack.c.b16 %v9074, %v9073
  %v9163 = vpack.c.b16 %v9076, %v9075
  %v9164 = vpack.c.b16 %v9078, %v9077
  %v9165 = vpack.c.b16 %v9080, %v9079
  %v9166 = vpack.c.b16 %v9082, %v9081
  %v9167 = vpack.c.b16 %v9084, %v9083
  %v9168 = vpack.c.b16 %v9086, %v9085
  %v9169 = vpack.c.b16 %v9088, %v9087
  %v9170 = vpack.c.b16 %v9090, %v9089
  %v9171 = vpack.c.b16 %v9092, %v9091
  %v9172 = vpack.c.b16 %v9094, %v9093
  %v9173 = vpack.c.b16 %v9096, %v9095
  %v9174 = vpack.c.b16 %v9098, %v9097
  %v9175 = vpack.c.b16 %v9100, %v9099
  %v9176 = vpack.c.b16 %v9102, %v9101
  %v9177 = vpack.c.b16 %v9104, %v9103
  %v9178 = vpack.c.b16 %v9106, %v9105
  %v9179 = vpack.c.b16 %v9108, %v9107
  %v9180 = vpack.c.b16 %v9110, %v9109
  %v9181 = vpack.c.b16 %v9112, %v9111
  %v9182 = vpack.c.b16 %v9114, %v9113
  %v9183 = vpack.c.b16 %v9116, %v9115
  %v9184 = vpack.c.b16 %v9118, %v9117
  %v9185 = vpack.c.b16 %v9120, %v9119
  %v9186 = vpack.c.b16 %v9122, %v9121
  %v9187 = vpack.c.b16 %v9124, %v9123
  %v9188 = vpack.c.b16 %v9126, %v9125
  %v9189 = vpack.c.b16 %v9128, %v9127
  %v9190 = vpack.c.b16 %v9130, %v9129
  %v9191 = vpack.c.b16 %v9132, %v9131
  %v9192 = vpack.c.b16 %v9134, %v9133
  %v9193 = vpack.c.b16 %v9136, %v9135
  %v9194 = vpack.c.b16 %v9138, %v9137
  %v9195 = vpack.c.b16 %v9140, %v9139
  %v9196 = vpack.c.b16 %v9142, %v9141
  %v9197 = vpack.c.b16 %v9144, %v9143
  %v9198 = vpack.c.b16 %v9146, %v9145
  %v9199 = vpack.c.b16 %v9148, %v9147
  %v9200 = vpack.c.b16 %v9150, %v9149
  %v9201 = vpack.c.b16 %v9152, %v9151
  %v9202 = vpack.c.b16 %v9154, %v9153
  %v9203 = vpack.c.b16 %v9156, %v9155
  %v9252 = vsel %vm539, %v8946, 0
  %v9255 = vsel %vm539, %v8958, 0
  %9257 = vmatpush.bf16.msra.mxu0 %v9164
  %9258 = vmatpush.bf16.msra.mxu0 %v9163
  %9259 = vmatpush.bf16.msra.mxu0 %v9162
  %9260 = vmatpush.bf16.msra.mxu0 %v9161
  %9261 = vmatpush.bf16.msra.mxu0 %v9160
  %9262 = vmatpush.bf16.msra.mxu0 %v9159
  %9263 = vmatpush.bf16.msra.mxu0 %v9158
  %9264 = vmatpush.bf16.msra.mxu0 %v9157
  %9265 = vmatmul.bf16.gmra.mxu0 %v8931
  %v9266 = vpop.f32.mrf.mxu0
  %v9267 = vadd.f32 %v8912, %v9266
  %v9268 = vpop.f32.mrf.mxu0
  %v9269 = vadd.f32 %v8912, %v9268
  %9270 = vmatmul.bf16.gmra.mxu0 %v8948
  %v9271 = vpop.f32.mrf.mxu0
  %v9272 = vadd.f32 %v8912, %v9271
  %v9273 = vpop.f32.mrf.mxu0
  %v9274 = vadd.f32 %v8912, %v9273
  %9275 = vdwg.mxu0
  %9276 = vmatpush.bf16.msra.mxu0 %v9172
  %9277 = vmatpush.bf16.msra.mxu0 %v9171
  %9278 = vmatpush.bf16.msra.mxu0 %v9170
  %9279 = vmatpush.bf16.msra.mxu0 %v9169
  %9280 = vmatpush.bf16.msra.mxu0 %v9168
  %9281 = vmatpush.bf16.msra.mxu0 %v9167
  %9282 = vmatpush.bf16.msra.mxu0 %v9166
  %9283 = vmatpush.bf16.msra.mxu0 %v9165
  %9284 = vmatmul.bf16.gmra.mxu0 %v8934
  %v9285 = vpop.f32.mrf.mxu0
  %v9286 = vadd.f32 %v9267, %v9285
  %v9287 = vpop.f32.mrf.mxu0
  %v9288 = vadd.f32 %v9269, %v9287
  %9289 = vmatmul.bf16.gmra.mxu0 %v8950
  %v9290 = vpop.f32.mrf.mxu0
  %v9291 = vadd.f32 %v9272, %v9290
  %v9292 = vpop.f32.mrf.mxu0
  %v9293 = vadd.f32 %v9274, %v9292
  %9294 = vdwg.mxu0
  %9295 = vmatpush.bf16.msra.mxu0 %v9180
  %9296 = vmatpush.bf16.msra.mxu0 %v9179
  %9297 = vmatpush.bf16.msra.mxu0 %v9178
  %9298 = vmatpush.bf16.msra.mxu0 %v9177
  %9299 = vmatpush.bf16.msra.mxu0 %v9176
  %9300 = vmatpush.bf16.msra.mxu0 %v9175
  %9301 = vmatpush.bf16.msra.mxu0 %v9174
  %9302 = vmatpush.bf16.msra.mxu0 %v9173
  %9303 = vmatmul.bf16.gmra.mxu0 %v8937
  %v9304 = vpop.f32.mrf.mxu0
  %v9305 = vadd.f32 %v9286, %v9304
  %v9306 = vpop.f32.mrf.mxu0
  %v9307 = vadd.f32 %v9288, %v9306
  %9308 = vmatmul.bf16.gmra.mxu0 %v8952
  %v9309 = vpop.f32.mrf.mxu0
  %v9310 = vadd.f32 %v9291, %v9309
  %v9311 = vpop.f32.mrf.mxu0
  %v9312 = vadd.f32 %v9293, %v9311
  %9313 = vdwg.mxu0
  %9314 = vmatpush.bf16.msra.mxu0 %v9188
  %9315 = vmatpush.bf16.msra.mxu0 %v9187
  %9316 = vmatpush.bf16.msra.mxu0 %v9186
  %9317 = vmatpush.bf16.msra.mxu0 %v9185
  %9318 = vmatpush.bf16.msra.mxu0 %v9184
  %9319 = vmatpush.bf16.msra.mxu0 %v9183
  %9320 = vmatpush.bf16.msra.mxu0 %v9182
  %9321 = vmatpush.bf16.msra.mxu0 %v9181
  %9322 = vmatmul.bf16.gmra.mxu0 %v8940
  %v9323 = vpop.f32.mrf.mxu0
  %v9324 = vadd.f32 %v9305, %v9323
  %v9325 = vpop.f32.mrf.mxu0
  %v9326 = vadd.f32 %v9307, %v9325
  %9327 = vmatmul.bf16.gmra.mxu0 %v8954
  %v9328 = vpop.f32.mrf.mxu0
  %v9329 = vadd.f32 %v9310, %v9328
  %v9330 = vpop.f32.mrf.mxu0
  %v9331 = vadd.f32 %v9312, %v9330
  %9332 = vdwg.mxu0
  %9333 = vmatpush.bf16.msra.mxu0 %v9196
  %9334 = vmatpush.bf16.msra.mxu0 %v9195
  %9335 = vmatpush.bf16.msra.mxu0 %v9194
  %9336 = vmatpush.bf16.msra.mxu0 %v9193
  %9337 = vmatpush.bf16.msra.mxu0 %v9192
  %9338 = vmatpush.bf16.msra.mxu0 %v9191
  %9339 = vmatpush.bf16.msra.mxu0 %v9190
  %9340 = vmatpush.bf16.msra.mxu0 %v9189
  %9341 = vmatmul.bf16.gmra.mxu0 %v8943
  %v9342 = vpop.f32.mrf.mxu0
  %v9343 = vadd.f32 %v9324, %v9342
  %v9344 = vpop.f32.mrf.mxu0
  %v9345 = vadd.f32 %v9326, %v9344
  %9346 = vmatmul.bf16.gmra.mxu0 %v8956
  %v9347 = vpop.f32.mrf.mxu0
  %v9348 = vadd.f32 %v9329, %v9347
  %v9349 = vpop.f32.mrf.mxu0
  %v9350 = vadd.f32 %v9331, %v9349
  %9351 = vdwg.mxu0
  %9352 = vmatpush.bf16.msra.mxu0 0
  %9353 = vmatpush.bf16.msra.mxu0 %v9203
  %9354 = vmatpush.bf16.msra.mxu0 %v9202
  %9355 = vmatpush.bf16.msra.mxu0 %v9201
  %9356 = vmatpush.bf16.msra.mxu0 %v9200
  %9357 = vmatpush.bf16.msra.mxu0 %v9199
  %9358 = vmatpush.bf16.msra.mxu0 %v9198
  %9359 = vmatpush.bf16.msra.mxu0 %v9197
  %9360 = vmatmul.bf16.gmra.mxu0 %v9252
  %v9361 = vpop.f32.mrf.mxu0
  %v9362 = vadd.f32 %v9343, %v9361
  %v9363 = vpop.f32.mrf.mxu0
  %v9364 = vadd.f32 %v9345, %v9363
  %9365 = vmatmul.bf16.gmra.mxu0 %v9255
  %v9366 = vpop.f32.mrf.mxu0
  %v9367 = vadd.f32 %v9348, %v9366
  %v9368 = vpop.f32.mrf.mxu0
  %v9369 = vadd.f32 %v9350, %v9368
  %9370 = vdwg.mxu0
  %v9371 = vmax.f32 %v9362, 0.0
  %v9372 = vmax.f32 %v9364, 0.0
  %v9373 = vmax.f32 %v9367, 0.0
  %v9374 = vmax.f32 %v9369, 0.0
  %v9375 = vld [vmem:[#allocation3] sm:$0xff]
  %v9376 = vld [vmem:[#allocation3 + $0x8] sm:$0xff]
  %v9377 = vld [vmem:[#allocation3 + $0x10] sm:$0xff]
  %v9378 = vld [vmem:[#allocation3 + $0x18] sm:$0xff]
  %v9379 = vpack.c.bf16 %v9376, %v9375
  %v9380 = vpack.c.bf16 %v9378, %v9377
  %s9381 = scalar_lea.vmem %s5, 64
  %v9382 = vld [vmem:[%s9381] sm:$0xf]
  %v9383 = vld [vmem:[%s9381 + $0x4] sm:$0xf]
  %v9384 = vld [vmem:[%s9381 + $0x8] sm:$0xf]
  %v9385 = vld [vmem:[%s9381 + $0xc] sm:$0xf]
  %v9386 = vld [vmem:[%s9381 + $0x10] sm:$0xf]
  %v9387 = vld [vmem:[%s9381 + $0x14] sm:$0xf]
  %v9388 = vld [vmem:[%s9381 + $0x18] sm:$0xf]
  %v9389 = vld [vmem:[%s9381 + $0x1c] sm:$0xf]
  %v9390 = vld [vmem:[%s9381 + $0x20] sm:$0xf]
  %v9391 = vld [vmem:[%s9381 + $0x24] sm:$0xf]
  %v9392 = vld [vmem:[%s9381 + $0x28] sm:$0xf]
  %v9393 = vld [vmem:[%s9381 + $0x2c] sm:$0xf]
  %v9394 = vld [vmem:[%s9381 + $0x30] sm:$0xf]
  %v9395 = vld [vmem:[%s9381 + $0x34] sm:$0xf]
  %v9396 = vld [vmem:[%s9381 + $0x38] sm:$0xf]
  %v9397 = vld [vmem:[%s9381 + $0x3c] sm:$0xf]
  %s9398 = scalar_lea.vmem %s6, 1
  %v9399 = vld [vmem:[%s9398] sm:$0x1]
  %v9401 = vperm.slane %v9399, 0
  %v9419 = vunpack.c.l.b16 %v9382
  %v9420 = vunpack.c.l.b16 %v9383
  %v9421 = vunpack.c.l.b16 %v9384
  %v9422 = vunpack.c.l.b16 %v9385
  %v9423 = vunpack.c.l.b16 %v9386
  %v9424 = vunpack.c.l.b16 %v9387
  %v9425 = vunpack.c.l.b16 %v9388
  %v9426 = vunpack.c.l.b16 %v9389
  %v9427 = vunpack.c.l.b16 %v9390
  %v9428 = vunpack.c.l.b16 %v9391
  %v9429 = vunpack.c.l.b16 %v9392
  %v9430 = vunpack.c.l.b16 %v9393
  %v9431 = vunpack.c.l.b16 %v9394
  %v9432 = vunpack.c.l.b16 %v9395
  %v9433 = vunpack.c.l.b16 %v9396
  %v9434 = vunpack.c.l.b16 %v9397
  %v9435 = vpack.c.b16 %v9420, %v9419
  %v9436 = vpack.c.b16 %v9422, %v9421
  %v9437 = vpack.c.b16 %v9424, %v9423
  %v9438 = vpack.c.b16 %v9426, %v9425
  %v9439 = vpack.c.b16 %v9428, %v9427
  %v9440 = vpack.c.b16 %v9430, %v9429
  %v9441 = vpack.c.b16 %v9432, %v9431
  %v9442 = vpack.c.b16 %v9434, %v9433
  %9451 = vmatpush.bf16.msra.mxu0 %v9442
  %9452 = vmatpush.bf16.msra.mxu0 %v9441
  %9453 = vmatpush.bf16.msra.mxu0 %v9440
  %9454 = vmatpush.bf16.msra.mxu0 %v9439
  %9455 = vmatpush.bf16.msra.mxu0 %v9438
  %9456 = vmatpush.bf16.msra.mxu0 %v9437
  %9457 = vmatpush.bf16.msra.mxu0 %v9436
  %9458 = vmatpush.bf16.msra.mxu0 %v9435
  %9459 = vmatmul.bf16.gmra.mxu0 %v9379
  %v9460 = vpop.f32.mrf.mxu0
  %v9461 = vadd.f32 %v9401, %v9460
  %v9462 = vpop.f32.mrf.mxu0
  %v9463 = vadd.f32 %v9401, %v9462
  %9464 = vmatmul.bf16.gmra.mxu0 %v9380
  %v9465 = vpop.f32.mrf.mxu0
  %v9466 = vadd.f32 %v9401, %v9465
  %v9467 = vpop.f32.mrf.mxu0
  %v9468 = vadd.f32 %v9401, %v9467
  %9469 = vdwg.mxu0
  %v9470 = vadd.f32 %v9371, %v9461
  %v9471 = vadd.f32 %v9372, %v9463
  %v9472 = vadd.f32 %v9373, %v9466
  %v9473 = vadd.f32 %v9374, %v9468
  %9474 = vst [vmem:[#allocation3] sm:$0xff] %v9470
  %9475 = vst [vmem:[#allocation3 + $0x8] sm:$0xff] %v9471
  %9476 = vst [vmem:[#allocation3 + $0x10] sm:$0xff] %v9472
  %9477 = vst [vmem:[#allocation3 + $0x18] sm:$0xff] %v9473
  %v9478 = vmax.f32 %v9472, 0.0
  %v9479 = vmax.f32 %v9473, 0.0
  %v9480 = vpack.c.bf16 %v9479, %v9478
  %v9481 = vld [vmem:[%s7] sm:$0xf]
  %v9482 = vld [vmem:[%s7 + $0x4] sm:$0xf]
  %v9483 = vld [vmem:[%s7 + $0x8] sm:$0xf]
  %v9484 = vld [vmem:[%s7 + $0xc] sm:$0xf]
  %v9485 = vld [vmem:[%s7 + $0x10] sm:$0xf]
  %v9486 = vld [vmem:[%s7 + $0x14] sm:$0xf]
  %v9487 = vld [vmem:[%s7 + $0x18] sm:$0xf]
  %v9488 = vld [vmem:[%s7 + $0x1c] sm:$0xf]
  %v9489 = vld [vmem:[%s7 + $0x20] sm:$0xf]
  %v9490 = vld [vmem:[%s7 + $0x24] sm:$0xf]
  %v9491 = vld [vmem:[%s7 + $0x28] sm:$0xf]
  %v9492 = vld [vmem:[%s7 + $0x2c] sm:$0xf]
  %v9493 = vld [vmem:[%s7 + $0x30] sm:$0xf]
  %v9494 = vld [vmem:[%s7 + $0x34] sm:$0xf]
  %v9495 = vld [vmem:[%s7 + $0x38] sm:$0xf]
  %v9496 = vld [vmem:[%s7 + $0x3c] sm:$0xf]
  %v9497 = vld [vmem:[%s8] sm:$0x1]
  %v9499 = vperm.slane %v9497, 0
  %v9517 = vunpack.c.l.b16 %v9481
  %v9518 = vunpack.c.l.b16 %v9482
  %v9519 = vunpack.c.l.b16 %v9483
  %v9520 = vunpack.c.l.b16 %v9484
  %v9521 = vunpack.c.l.b16 %v9485
  %v9522 = vunpack.c.l.b16 %v9486
  %v9523 = vunpack.c.l.b16 %v9487
  %v9524 = vunpack.c.l.b16 %v9488
  %v9525 = vunpack.c.l.b16 %v9489
  %v9526 = vunpack.c.l.b16 %v9490
  %v9527 = vunpack.c.l.b16 %v9491
  %v9528 = vunpack.c.l.b16 %v9492
  %v9529 = vunpack.c.l.b16 %v9493
  %v9530 = vunpack.c.l.b16 %v9494
  %v9531 = vunpack.c.l.b16 %v9495
  %v9532 = vunpack.c.l.b16 %v9496
  %v9533 = vpack.c.b16 %v9518, %v9517
  %v9534 = vpack.c.b16 %v9520, %v9519
  %v9535 = vpack.c.b16 %v9522, %v9521
  %v9536 = vpack.c.b16 %v9524, %v9523
  %v9537 = vpack.c.b16 %v9526, %v9525
  %v9538 = vpack.c.b16 %v9528, %v9527
  %v9539 = vpack.c.b16 %v9530, %v9529
  %v9540 = vpack.c.b16 %v9532, %v9531
  %9549 = vmatpush.bf16.msra.mxu0 %v9540
  %9550 = vmatpush.bf16.msra.mxu0 %v9539
  %9551 = vmatpush.bf16.msra.mxu0 %v9538
  %9552 = vmatpush.bf16.msra.mxu0 %v9537
  %9553 = vmatpush.bf16.msra.mxu0 %v9536
  %9554 = vmatpush.bf16.msra.mxu0 %v9535
  %9555 = vmatpush.bf16.msra.mxu0 %v9534
  %9556 = vmatpush.bf16.msra.mxu0 %v9533
  %9557 = vmatmul.bf16.gmra.mxu0 %v9480
  %v9558 = vpop.f32.mrf.mxu0
  %v9559 = vadd.f32 %v9499, %v9558
  %v9560 = vpop.f32.mrf.mxu0
  %v9561 = vadd.f32 %v9499, %v9560
  %9562 = vdwg.mxu0
  %v9563 = vmax.f32 %v9559, 0.0
  %v9564 = vmax.f32 %v9561, 0.0
  %v9565 = vand.u32 2147483647, %v9559
  %v9566 = vand.u32 2147483647, %v9561
  %v9567 = vsub.f32 0.0, %v9565
  %v9568 = vsub.f32 0.0, %v9566
  %v9569 = vmul.f32 %v9567, 1.442695
  %v9570 = vpow.pop %v9569
  %v9571 = vmul.f32 %v9568, 1.442695
  %v9572 = vpow.pop %v9571
  %v9573 = vadd.f32 %v9570, 1.0
  %v9574 = vadd.f32 %v9572, 1.0
  %v9575 = vlog2.pop %v9573
  %v9576 = vmul.f32 %v9575, 0.6931472
  %v9577 = vlog2.pop %v9574
  %v9578 = vmul.f32 %v9577, 0.6931472
  %v9579 = vadd.f32 %v9563, %v9576
  %v9580 = vadd.f32 %v9564, %v9578
  %v9581 = vmul.f32 %v9579, 0.99
  %v9582 = vmul.f32 %v9580, 0.99
  %v9583 = vadd.f32 %v9581, 0.01
  %v9584 = vadd.f32 %v9582, 0.01
  %v9585 = vlaneseq
  %v9586 = vand.u32 %v9585, 127
  %vm9587 = vcmp.lt.s32.totalorder %v9586, 2
  %v9588 = vsel %vm9587, %v9559, %v9583
  %v9589 = vsel %vm9587, %v9561, %v9584
  %9590 = vst [vmem:[%s9] sm:$0xff] %v9588
  %9591 = vst [vmem:[%s9 + $0x8] sm:$0xff] %v9589
  // Predicated region
  $region38: #{inception_time_seq_forward.1} parent=0 // pred_check
    _
  $region39: #{inception_time_seq_forward.1} parent=0 // pred_check_branch
    %9593 = sbr.rel (0) target = $region41
  $region40: #{inception_time_seq_forward.1} parent=0 // pred_region
    _
  $region41: #{inception_time_seq_forward.1} parent=0 // pred_fallthru
    _
  // Predicated region
  $region42: #{inception_time_seq_forward.1} parent=0 // pred_check
    _
  $region43: #{inception_time_seq_forward.1} parent=0 // pred_check_branch
    %9595 = sbr.rel (0) target = $region45
  $region44: #{inception_time_seq_forward.1} parent=0 // pred_region
    _
  $region45: #{inception_time_seq_forward.1} parent=0 // pred_fallthru
    _

</llo_original>
